<compile_context>
chip_gen: v7x
topology: tpu7x:2x2x1
jax: 0.10.0
libtpu: 0.0.40
codegen_flags: <defaults>
</compile_context>

<pallas_src>
import functools

import jax
import jax.numpy as jnp
from jax.experimental import pallas as pl
from jax.experimental.pallas import tpu as pltpu

# ----------------------------- configuration --------------------------------
SEQ_CHAR_LEN = 21                                   # vocab size of Seq_Encoder
VOCAB_PAD = ((SEQ_CHAR_LEN + 31) // 32) * 32        # pad table rows for a clean MXU K dim
EMB = 256                                           # embedding_size
D_MODEL = 256                                       # output_dim
D_FF = 128
N_HEADS = 8
D_HEAD = D_MODEL // N_HEADS                         # 32
CONV_FILTERS = [(1, 32), (3, 32), (3, 64), (5, 128)]
NUM_FILTERS = sum(oc for _, oc in CONV_FILTERS)     # 256
MAX_PAD = max((k - 1) // 2 for k, _ in CONV_FILTERS)  # 2
NUM_TAPS = 2 * MAX_PAD + 1                          # tap offsets -2..+2
LN_EPS = 1e-5


def _layer_norm(x, g, b):
    mu = jnp.mean(x, axis=-1, keepdims=True)
    var = jnp.mean(jnp.square(x - mu), axis=-1, keepdims=True)
    return (x - mu) * jax.lax.rsqrt(var + LN_EPS) * g + b


# ------------------------------ fused kernel ---------------------------------
def seq_encoder_kernel(tok_ref, table_ref,
                       wconv_ref, bconv_ref, wproj_ref, bproj_ref,
                       wqkv_ref, bqkv_ref, wo_ref, bo_ref,
                       ln1g_ref, ln1b_ref,
                       wf1_ref, bf1_ref, wf2_ref, bf2_ref,
                       ln2g_ref, ln2b_ref,
                       out_ref, *, seq_len, pad_len, n_seq):
    """One tile = n_seq whole sequences, flattened to R = n_seq * pad_len rows."""
    R = out_ref.shape[0]
    vocab = table_ref.shape[0]
    bf16, f32 = jnp.bfloat16, jnp.float32

    # ---- 1) embedding lookup as a one-hot matmul (keeps the gather on the MXU)
    tok = tok_ref[...]                                               # [R, 1] int32
    vocab_ids = jax.lax.broadcasted_iota(jnp.int32, (1, vocab), 1)   # [1, Vp]
    one_hot = jnp.where(tok == vocab_ids, 1.0, 0.0).astype(bf16)     # [R, Vp]
    x_emb = jnp.dot(one_hot, table_ref[...],
                    preferred_element_type=f32)                      # [R, EMB] f32

    # position of each flattened row inside its (padded) sequence, built in-kernel
    pos = jax.lax.broadcasted_iota(jnp.int32, (R, 1), 0) % pad_len   # [R, 1]

    # ---- 2) LongConvEmbedding: 5 tap offsets via pltpu.roll (XLU), masked at the
    #         sequence boundaries, fused into ONE [R, 5*EMB] x [5*EMB, 256] matmul,
    #         then ReLU + projection to d_model.
    taps = []
    for j in range(NUM_TAPS):
        d = j - MAX_PAD                                              # -2..+2
        if d == 0:
            xs = x_emb
        else:
            xs = pltpu.roll(x_emb, shift=(-d) % R, axis=0)           # row r -> x_emb[r + d]
            valid = ((pos + d >= 0) & (pos + d < seq_len)).astype(f32)
            xs = xs * valid                                          # kill cross-seq / pad taps
        taps.append(xs)
    xcat = jnp.concatenate(taps, axis=-1).astype(bf16)               # [R, 5*EMB]
    y = jnp.dot(xcat, wconv_ref[...], preferred_element_type=f32) + bconv_ref[...]
    y = jnp.maximum(y, 0.0)                                          # ReLU (f32)
    x0 = jnp.dot(y.astype(bf16), wproj_ref[...],
                 preferred_element_type=f32) + bproj_ref[...]        # [R, D_MODEL]

    # ---- 3) multi-head self-attention, computed per sequence (no [R, R] waste).
    #         1/sqrt(d_head) is pre-folded into Wq/bq at pack time.
    qkv = jnp.dot(x0.astype(bf16), wqkv_ref[...],
                  preferred_element_type=f32) + bqkv_ref[...]        # [R, 3*D_MODEL]
    qkv3 = qkv.reshape(n_seq, pad_len, 3 * D_MODEL)                  # pad_len % 8 == 0

    if pad_len != seq_len:                                           # key-padding bias (static)
        kpos = jax.lax.broadcasted_iota(jnp.int32, (1, 1, pad_len), 2)
        key_bias = jnp.where(kpos < seq_len, 0.0, -1e9).astype(f32)
    else:
        key_bias = None

    ctx_heads = []
    # NOTE: per-head temporaries are only [n_seq, L, L]; static unroll keeps vreg
    # pressure low now that the quadratic [R, R] buffers are gone.
    for h in range(N_HEADS):
        lo = h * D_HEAD
        qh = qkv3[:, :, lo:lo + D_HEAD].astype(bf16)
        kh = qkv3[:, :, D_MODEL + lo:D_MODEL + lo + D_HEAD].astype(bf16)
        vh = qkv3[:, :, 2 * D_MODEL + lo:2 * D_MODEL + lo + D_HEAD].astype(bf16)
        s = jnp.einsum('bqd,bkd->bqk', qh, kh,
                       preferred_element_type=f32)                   # [n_seq, L, L]
        if key_bias is not None:
            s = s + key_bias
        m = jnp.max(s, axis=-1, keepdims=True)
        p = jnp.exp(s - m)
        attn = p * pl.reciprocal(jnp.sum(p, axis=-1, keepdims=True), approx=True)
        ctx_heads.append(jnp.einsum('bqk,bkd->bqd', attn.astype(bf16), vh,
                                    preferred_element_type=f32))     # [n_seq, L, 32]
    ctx = jnp.concatenate(ctx_heads, axis=-1).reshape(R, D_MODEL)    # [R, 256] f32
    attn_out = jnp.dot(ctx.astype(bf16), wo_ref[...],
                       preferred_element_type=f32) + bo_ref[...]     # single Wo matmul

    # ---- 4) residual + LN, FFN(256->128->256 ReLU), residual + LN (post-LN, eval)
    h1 = _layer_norm(x0 + attn_out, ln1g_ref[...], ln1b_ref[...])
    ff = jnp.maximum(jnp.dot(h1.astype(bf16), wf1_ref[...],
                             preferred_element_type=f32) + bf1_ref[...], 0.0)
    ff = jnp.dot(ff.astype(bf16), wf2_ref[...],
                 preferred_element_type=f32) + bf2_ref[...]
    h2 = _layer_norm(h1 + ff, ln2g_ref[...], ln2b_ref[...])

    out_ref[...] = h2.astype(out_ref.dtype)                          # single lane-dense store


# ------------------------------ wrapper --------------------------------------
def _choose_tb(B, Lp, target_rows=512):
    """Sequences per grid step: biggest divisor of B with TB*Lp <= target_rows,
    preferring >= 2 grid steps so v7x's two TensorCores both get work."""
    divs = [tb for tb in range(1, B + 1) if B % tb == 0]
    fits = [tb for tb in divs if tb * Lp <= target_rows]
    if not fits:
        return 1                     # one (possibly long) sequence per step
    multi = [tb for tb in fits if B // tb >= 2]
    return max(multi) if multi else max(fits)


def _winv(shape):
    """Grid-invariant weight: full-array block, single-buffered."""
    return pl.BlockSpec(shape, lambda b: (0, 0), pipeline_mode=pl.Buffered(1))


@jax.jit
def seq_encoder(seq_input, params):
    """seq_input: [B, L] int32 in [0, SEQ_CHAR_LEN). Returns [B, L, D_MODEL] float32."""
    B, L = seq_input.shape
    Lp = ((L + 7) // 8) * 8          # sublane-align the per-sequence length
    TB = _choose_tb(B, Lp)
    R = TB * Lp
    grid = (B // TB,)

    tok = seq_input.astype(jnp.int32)
    if Lp != L:
        tok = jnp.pad(tok, ((0, 0), (0, Lp - L)))   # pad positions are masked in-kernel
    tok = tok.reshape(B * Lp, 1)

    kernel = functools.partial(seq_encoder_kernel, seq_len=L, pad_len=Lp, n_seq=TB)

    in_specs = [
        pl.BlockSpec((R, 1), lambda b: (b, 0)),                    # tokens (per tile)
        _winv((VOCAB_PAD, EMB)),                                   # embedding table (bf16)
        _winv((NUM_TAPS * EMB, NUM_FILTERS)),                      # fused conv weights
        _winv((1, NUM_FILTERS)),                                   # fused conv biases
        _winv((NUM_FILTERS, D_MODEL)), _winv((1, D_MODEL)),        # projection
        _winv((D_MODEL, 3 * D_MODEL)), _winv((1, 3 * D_MODEL)),    # fused Wqkv / bqkv (scaled)
        _winv((D_MODEL, D_MODEL)), _winv((1, D_MODEL)),            # Wo, bo
        _winv((1, D_MODEL)), _winv((1, D_MODEL)),                  # LN1 gamma/beta
        _winv((D_MODEL, D_FF)), _winv((1, D_FF)),                  # FFN W1, b1
        _winv((D_FF, D_MODEL)), _winv((1, D_MODEL)),               # FFN W2, b2
        _winv((1, D_MODEL)), _winv((1, D_MODEL)),                  # LN2 gamma/beta
    ]
    grid_spec = pltpu.PrefetchScalarGridSpec(
        num_scalar_prefetch=0, grid=grid,
        in_specs=in_specs,
        out_specs=pl.BlockSpec((R, D_MODEL), lambda b: (b, 0)),
    )
    out_flat = pl.pallas_call(
        kernel,
        out_shape=jax.ShapeDtypeStruct((B * Lp, D_MODEL), jnp.float32),
        grid_spec=grid_spec,
        compiler_params=pltpu.CompilerParams(
            dimension_semantics=("parallel",),
            vmem_limit_bytes=48 * 1024 * 1024,
        ),
    )(tok,
      params["table"], params["wconv"], params["bconv"],
      params["wproj"], params["bproj"],
      params["wqkv"], params["bqkv"], params["wo"], params["bo"],
      params["ln1_g"], params["ln1_b"],
      params["ffn_w1"], params["ffn_b1"], params["ffn_w2"], params["ffn_b2"],
      params["ln2_g"], params["ln2_b"])

    out = out_flat.reshape(B, Lp, D_MODEL)
    if Lp != L:
        out = out[:, :L, :]
    return out


# ---------------------------- parameter init ---------------------------------
def init_raw_params(key):
    ks = iter(jax.random.split(key, 64))

    def norm(shape, scale=0.02):
        return (scale * jax.random.normal(next(ks), shape)).astype(jnp.float32)

    emb = {
        # conv weights stored as [k, in_c, out_c] (PyTorch [out_c, in_c, k] transposed)
        "w1": norm((1, EMB, 32)),  "b1": norm((1, 32)),
        "w3a": norm((3, EMB, 32)), "b3a": norm((1, 32)),
        "w3b": norm((3, EMB, 64)), "b3b": norm((1, 64)),
        "w5": norm((5, EMB, 128)), "b5": norm((1, 128)),
        "wproj": norm((NUM_FILTERS, D_MODEL)), "bproj": norm((1, D_MODEL)),
    }
    enc = {
        "wq": norm((D_MODEL, D_MODEL)), "bq": norm((1, D_MODEL)),
        "wk": norm((D_MODEL, D_MODEL)), "bk": norm((1, D_MODEL)),
        "wv": norm((D_MODEL, D_MODEL)), "bv": norm((1, D_MODEL)),
        "wo": norm((D_MODEL, D_MODEL)), "bo": norm((1, D_MODEL)),
        "ln1_g": jnp.ones((1, D_MODEL), jnp.float32),
        "ln1_b": jnp.zeros((1, D_MODEL), jnp.float32),
        "ffn_w1": norm((D_MODEL, D_FF)), "ffn_b1": norm((1, D_FF)),
        "ffn_w2": norm((D_FF, D_MODEL)), "ffn_b2": norm((1, D_MODEL)),
        "ln2_g": jnp.ones((1, D_MODEL), jnp.float32),
        "ln2_b": jnp.zeros((1, D_MODEL), jnp.float32),
    }
    return {"embed_table": norm((SEQ_CHAR_LEN, EMB), scale=1.0), "emb": emb, "enc": enc}


def pack_params(raw):
    """Merge the 4 conv filters per tap offset (flattened to one matmul operand), fuse QKV
    (with 1/sqrt(d_head) folded into the Q slice), cast matmul weights to bf16."""
    e, enc = raw["emb"], raw["enc"]
    bf16, f32 = jnp.bfloat16, jnp.float32

    # per-offset merged conv weight: W[d + MAX_PAD][:, cols(filter)] = w_filter[tap]
    conv_ws = [e["w1"], e["w3a"], e["w3b"], e["w5"]]
    wconv = jnp.zeros((NUM_TAPS, EMB, NUM_FILTERS), f32)
    col = 0
    for (k, oc), w in zip(CONV_FILTERS, conv_ws):
        pad = (k - 1) // 2
        for j in range(k):                           # tap j -> output offset d = j - pad
            wconv = wconv.at[j - pad + MAX_PAD, :, col:col + oc].set(w[j])
        col += oc
    wconv = wconv.reshape(NUM_TAPS * EMB, NUM_FILTERS)   # rows j*EMB:(j+1)*EMB = tap j
    bconv = jnp.concatenate([e["b1"], e["b3a"], e["b3b"], e["b5"]], axis=-1)

    scale = D_HEAD ** -0.5                               # fold softmax scale into Q
    wqkv = jnp.concatenate([enc["wq"] * scale, enc["wk"], enc["wv"]], axis=1)
    bqkv = jnp.concatenate([enc["bq"] * scale, enc["bk"], enc["bv"]], axis=1)

    table = jnp.zeros((VOCAB_PAD, EMB), f32).at[:SEQ_CHAR_LEN].set(raw["embed_table"])

    return {
        "table": table.astype(bf16),
        "wconv": wconv.astype(bf16), "bconv": bconv.astype(f32),
        "wproj": e["wproj"].astype(bf16), "bproj": e["bproj"].astype(f32),
        "wqkv": wqkv.astype(bf16), "bqkv": bqkv.astype(f32),
        "wo": enc["wo"].astype(bf16), "bo": enc["bo"].astype(f32),
        "ln1_g": enc["ln1_g"].astype(f32), "ln1_b": enc["ln1_b"].astype(f32),
        "ffn_w1": enc["ffn_w1"].astype(bf16), "ffn_b1": enc["ffn_b1"].astype(f32),
        "ffn_w2": enc["ffn_w2"].astype(bf16), "ffn_b2": enc["ffn_b2"].astype(f32),
        "ln2_g": enc["ln2_g"].astype(f32), "ln2_b": enc["ln2_b"].astype(f32),
    }


# --------------------------------- main ---------------------------------------
if __name__ == "__main__":
    key = jax.random.PRNGKey(0)
    pkey, tkey = jax.random.split(key)

    B, L = 4, 16                      # small protein-sequence batch: [batch, seq]
    params = pack_params(init_raw_params(pkey))
    seq_input = jax.random.randint(tkey, (B, L), 0, SEQ_CHAR_LEN, dtype=jnp.int32)

    out = seq_encoder(seq_input, params)
    jax.block_until_ready(out)
    assert out.shape == (B, L, D_MODEL) and out.dtype == jnp.float32
    assert bool(jnp.all(jnp.isfinite(out)))
    print("KERNEL_OK")
</pallas_src>

<mosaic_0001>
module attributes {stable_mosaic.version = 11 : i64} {
  func.func @seq_encoder_kernel(%arg0: i32, %arg1: memref<32x1xi32, #tpu.memory_space<vmem>>, %arg2: memref<32x256xbf16, #tpu.memory_space<vmem>>, %arg3: memref<1280x256xbf16, #tpu.memory_space<vmem>>, %arg4: memref<1x256xf32, #tpu.memory_space<vmem>>, %arg5: memref<256x256xbf16, #tpu.memory_space<vmem>>, %arg6: memref<1x256xf32, #tpu.memory_space<vmem>>, %arg7: memref<256x768xbf16, #tpu.memory_space<vmem>>, %arg8: memref<1x768xf32, #tpu.memory_space<vmem>>, %arg9: memref<256x256xbf16, #tpu.memory_space<vmem>>, %arg10: memref<1x256xf32, #tpu.memory_space<vmem>>, %arg11: memref<1x256xf32, #tpu.memory_space<vmem>>, %arg12: memref<1x256xf32, #tpu.memory_space<vmem>>, %arg13: memref<256x128xbf16, #tpu.memory_space<vmem>>, %arg14: memref<1x128xf32, #tpu.memory_space<vmem>>, %arg15: memref<128x256xbf16, #tpu.memory_space<vmem>>, %arg16: memref<1x256xf32, #tpu.memory_space<vmem>>, %arg17: memref<1x256xf32, #tpu.memory_space<vmem>>, %arg18: memref<1x256xf32, #tpu.memory_space<vmem>>, %arg19: memref<32x256xf32, #tpu.memory_space<vmem>>) attributes {dimension_semantics = [#tpu.dimension_semantics<parallel>], iteration_bounds = array<i64: 2>, scalar_prefetch = 0 : i64, scratch_operands = 0 : i64, tpu.core_type = #tpu.core_type<tc>, window_params = [{transform_indices = @transform_0, window_bounds = array<i64: 32, 1>}, {pipeline_mode = #tpu.pipeline_mode<synchronous>, transform_indices = @transform_1, window_bounds = array<i64: 32, 256>}, {pipeline_mode = #tpu.pipeline_mode<synchronous>, transform_indices = @transform_2, window_bounds = array<i64: 1280, 256>}, {pipeline_mode = #tpu.pipeline_mode<synchronous>, transform_indices = @transform_3, window_bounds = array<i64: 1, 256>}, {pipeline_mode = #tpu.pipeline_mode<synchronous>, transform_indices = @transform_4, window_bounds = array<i64: 256, 256>}, {pipeline_mode = #tpu.pipeline_mode<synchronous>, transform_indices = @transform_5, window_bounds = array<i64: 1, 256>}, {pipeline_mode = #tpu.pipeline_mode<synchronous>, transform_indices = @transform_6, window_bounds = array<i64: 256, 768>}, {pipeline_mode = #tpu.pipeline_mode<synchronous>, transform_indices = @transform_7, window_bounds = array<i64: 1, 768>}, {pipeline_mode = #tpu.pipeline_mode<synchronous>, transform_indices = @transform_8, window_bounds = array<i64: 256, 256>}, {pipeline_mode = #tpu.pipeline_mode<synchronous>, transform_indices = @transform_9, window_bounds = array<i64: 1, 256>}, {pipeline_mode = #tpu.pipeline_mode<synchronous>, transform_indices = @transform_10, window_bounds = array<i64: 1, 256>}, {pipeline_mode = #tpu.pipeline_mode<synchronous>, transform_indices = @transform_11, window_bounds = array<i64: 1, 256>}, {pipeline_mode = #tpu.pipeline_mode<synchronous>, transform_indices = @transform_12, window_bounds = array<i64: 256, 128>}, {pipeline_mode = #tpu.pipeline_mode<synchronous>, transform_indices = @transform_13, window_bounds = array<i64: 1, 128>}, {pipeline_mode = #tpu.pipeline_mode<synchronous>, transform_indices = @transform_14, window_bounds = array<i64: 128, 256>}, {pipeline_mode = #tpu.pipeline_mode<synchronous>, transform_indices = @transform_15, window_bounds = array<i64: 1, 256>}, {pipeline_mode = #tpu.pipeline_mode<synchronous>, transform_indices = @transform_16, window_bounds = array<i64: 1, 256>}, {pipeline_mode = #tpu.pipeline_mode<synchronous>, transform_indices = @transform_17, window_bounds = array<i64: 1, 256>}, {transform_indices = @transform_18, window_bounds = array<i64: 32, 256>}]} {
    %c0 = arith.constant 0 : index
    %c0_0 = arith.constant 0 : index
    %0 = vector.load %arg1[%c0, %c0_0] : memref<32x1xi32, #tpu.memory_space<vmem>>, vector<32x1xi32>
    %1 = tpu.iota {dimensions = array<i32: 1>} : vector<1x32xi32>
    %2 = vector.broadcast %0 : vector<32x1xi32> to vector<32x32xi32>
    %3 = vector.broadcast %1 : vector<1x32xi32> to vector<32x32xi32>
    %4 = arith.cmpi eq, %2, %3 : vector<32x32xi32>
    %cst = arith.constant 1.000000e+00 : f32
    %cst_1 = arith.constant 0.000000e+00 : f32
    %5 = vector.broadcast %cst : f32 to vector<32x32xf32>
    %6 = vector.broadcast %cst_1 : f32 to vector<32x32xf32>
    %7 = arith.select %4, %5, %6 : vector<32x32xi1>, vector<32x32xf32>
    %8 = arith.truncf %7 : vector<32x32xf32> to vector<32x32xbf16>
    %c0_2 = arith.constant 0 : index
    %c0_3 = arith.constant 0 : index
    %9 = vector.load %arg2[%c0_2, %c0_3] : memref<32x256xbf16, #tpu.memory_space<vmem>>, vector<32x256xbf16>
    %cst_4 = arith.constant dense<0.000000e+00> : vector<32x256xf32>
    %10 = tpu.matmul %8, %9, %cst_4 {dimension_numbers = #tpu.dot_dimension_numbers<[1], [0], [0], [1], [0, 0, 1, 1], [], []>} : vector<32x32xbf16>, vector<32x256xbf16>, vector<32x256xf32> -> vector<32x256xf32>
    %11 = tpu.iota {dimensions = array<i32: 0>} : vector<32x1xi32>
    %c16_i32 = arith.constant 16 : i32
    %c0_i32 = arith.constant 0 : i32
    %12 = arith.cmpi eq, %c16_i32, %c0_i32 : i32
    %c1_i32 = arith.constant 1 : i32
    %13 = arith.select %12, %c1_i32, %c16_i32 : i32
    %14 = vector.broadcast %13 : i32 to vector<32x1xi32>
    %15 = arith.remsi %11, %14 : vector<32x1xi32>
    %c0_i32_5 = arith.constant 0 : i32
    %16 = vector.broadcast %c0_i32_5 : i32 to vector<32x1xi32>
    %17 = arith.cmpi ne, %15, %16 : vector<32x1xi32>
    %c0_i32_6 = arith.constant 0 : i32
    %18 = vector.broadcast %c0_i32_6 : i32 to vector<32x1xi32>
    %19 = arith.cmpi slt, %15, %18 : vector<32x1xi32>
    %c0_i32_7 = arith.constant 0 : i32
    %20 = arith.cmpi slt, %13, %c0_i32_7 : i32
    %21 = vector.broadcast %20 : i1 to vector<32x1xi1>
    %22 = vector.broadcast %21 : vector<32x1xi1> to vector<32x1xi1>
    %23 = arith.xori %19, %22 : vector<32x1xi1>
    %24 = arith.andi %23, %17 : vector<32x1xi1>
    %25 = vector.broadcast %13 : i32 to vector<32x1xi32>
    %26 = arith.addi %15, %25 : vector<32x1xi32>
    %27 = arith.select %24, %26, %15 : vector<32x1xi1>, vector<32x1xi32>
    %c2_i32 = arith.constant 2 : i32
    %28 = tpu.dynamic_rotate %10 by %c2_i32 dim 0 : vector<32x256xf32>, i32 -> vector<32x256xf32>
    %c-2_i32 = arith.constant -2 : i32
    %29 = vector.broadcast %c-2_i32 : i32 to vector<32x1xi32>
    %30 = arith.addi %27, %29 : vector<32x1xi32>
    %c0_i32_8 = arith.constant 0 : i32
    %31 = vector.broadcast %c0_i32_8 : i32 to vector<32x1xi32>
    %32 = arith.cmpi sge, %30, %31 : vector<32x1xi32>
    %c-2_i32_9 = arith.constant -2 : i32
    %33 = vector.broadcast %c-2_i32_9 : i32 to vector<32x1xi32>
    %34 = arith.addi %27, %33 : vector<32x1xi32>
    %c16_i32_10 = arith.constant 16 : i32
    %35 = vector.broadcast %c16_i32_10 : i32 to vector<32x1xi32>
    %36 = arith.cmpi slt, %34, %35 : vector<32x1xi32>
    %37 = arith.andi %32, %36 : vector<32x1xi1>
    %38 = arith.extui %37 : vector<32x1xi1> to vector<32x1xi32>
    %39 = arith.sitofp %38 : vector<32x1xi32> to vector<32x1xf32>
    %40 = vector.broadcast %39 : vector<32x1xf32> to vector<32x256xf32>
    %41 = arith.mulf %28, %40 : vector<32x256xf32>
    %c1_i32_11 = arith.constant 1 : i32
    %42 = tpu.dynamic_rotate %10 by %c1_i32_11 dim 0 : vector<32x256xf32>, i32 -> vector<32x256xf32>
    %c-1_i32 = arith.constant -1 : i32
    %43 = vector.broadcast %c-1_i32 : i32 to vector<32x1xi32>
    %44 = arith.addi %27, %43 : vector<32x1xi32>
    %c0_i32_12 = arith.constant 0 : i32
    %45 = vector.broadcast %c0_i32_12 : i32 to vector<32x1xi32>
    %46 = arith.cmpi sge, %44, %45 : vector<32x1xi32>
    %c-1_i32_13 = arith.constant -1 : i32
    %47 = vector.broadcast %c-1_i32_13 : i32 to vector<32x1xi32>
    %48 = arith.addi %27, %47 : vector<32x1xi32>
    %c16_i32_14 = arith.constant 16 : i32
    %49 = vector.broadcast %c16_i32_14 : i32 to vector<32x1xi32>
    %50 = arith.cmpi slt, %48, %49 : vector<32x1xi32>
    %51 = arith.andi %46, %50 : vector<32x1xi1>
    %52 = arith.extui %51 : vector<32x1xi1> to vector<32x1xi32>
    %53 = arith.sitofp %52 : vector<32x1xi32> to vector<32x1xf32>
    %54 = vector.broadcast %53 : vector<32x1xf32> to vector<32x256xf32>
    %55 = arith.mulf %42, %54 : vector<32x256xf32>
    %c31_i32 = arith.constant 31 : i32
    %56 = tpu.dynamic_rotate %10 by %c31_i32 dim 0 : vector<32x256xf32>, i32 -> vector<32x256xf32>
    %c1_i32_15 = arith.constant 1 : i32
    %57 = vector.broadcast %c1_i32_15 : i32 to vector<32x1xi32>
    %58 = arith.addi %27, %57 : vector<32x1xi32>
    %c0_i32_16 = arith.constant 0 : i32
    %59 = vector.broadcast %c0_i32_16 : i32 to vector<32x1xi32>
    %60 = arith.cmpi sge, %58, %59 : vector<32x1xi32>
    %c1_i32_17 = arith.constant 1 : i32
    %61 = vector.broadcast %c1_i32_17 : i32 to vector<32x1xi32>
    %62 = arith.addi %27, %61 : vector<32x1xi32>
    %c16_i32_18 = arith.constant 16 : i32
    %63 = vector.broadcast %c16_i32_18 : i32 to vector<32x1xi32>
    %64 = arith.cmpi slt, %62, %63 : vector<32x1xi32>
    %65 = arith.andi %60, %64 : vector<32x1xi1>
    %66 = arith.extui %65 : vector<32x1xi1> to vector<32x1xi32>
    %67 = arith.sitofp %66 : vector<32x1xi32> to vector<32x1xf32>
    %68 = vector.broadcast %67 : vector<32x1xf32> to vector<32x256xf32>
    %69 = arith.mulf %56, %68 : vector<32x256xf32>
    %c30_i32 = arith.constant 30 : i32
    %70 = tpu.dynamic_rotate %10 by %c30_i32 dim 0 : vector<32x256xf32>, i32 -> vector<32x256xf32>
    %c2_i32_19 = arith.constant 2 : i32
    %71 = vector.broadcast %c2_i32_19 : i32 to vector<32x1xi32>
    %72 = arith.addi %27, %71 : vector<32x1xi32>
    %c0_i32_20 = arith.constant 0 : i32
    %73 = vector.broadcast %c0_i32_20 : i32 to vector<32x1xi32>
    %74 = arith.cmpi sge, %72, %73 : vector<32x1xi32>
    %c2_i32_21 = arith.constant 2 : i32
    %75 = vector.broadcast %c2_i32_21 : i32 to vector<32x1xi32>
    %76 = arith.addi %27, %75 : vector<32x1xi32>
    %c16_i32_22 = arith.constant 16 : i32
    %77 = vector.broadcast %c16_i32_22 : i32 to vector<32x1xi32>
    %78 = arith.cmpi slt, %76, %77 : vector<32x1xi32>
    %79 = arith.andi %74, %78 : vector<32x1xi1>
    %80 = arith.extui %79 : vector<32x1xi1> to vector<32x1xi32>
    %81 = arith.sitofp %80 : vector<32x1xi32> to vector<32x1xf32>
    %82 = vector.broadcast %81 : vector<32x1xf32> to vector<32x256xf32>
    %83 = arith.mulf %70, %82 : vector<32x256xf32>
    %84 = tpu.concatenate %41, %55, %10, %69, %83 in 1 : vector<32x256xf32>, vector<32x256xf32>, vector<32x256xf32>, vector<32x256xf32>, vector<32x256xf32> -> vector<32x1280xf32>
    %85 = arith.truncf %84 : vector<32x1280xf32> to vector<32x1280xbf16>
    %c0_23 = arith.constant 0 : index
    %c0_24 = arith.constant 0 : index
    %86 = vector.load %arg3[%c0_23, %c0_24] : memref<1280x256xbf16, #tpu.memory_space<vmem>>, vector<1280x256xbf16>
    %cst_25 = arith.constant dense<0.000000e+00> : vector<32x256xf32>
    %87 = tpu.matmul %85, %86, %cst_25 {dimension_numbers = #tpu.dot_dimension_numbers<[1], [0], [0], [1], [0, 0, 1, 1], [], []>} : vector<32x1280xbf16>, vector<1280x256xbf16>, vector<32x256xf32> -> vector<32x256xf32>
    %c0_26 = arith.constant 0 : index
    %c0_27 = arith.constant 0 : index
    %88 = vector.load %arg4[%c0_26, %c0_27] : memref<1x256xf32, #tpu.memory_space<vmem>>, vector<1x256xf32>
    %89 = vector.broadcast %88 : vector<1x256xf32> to vector<32x256xf32>
    %90 = arith.addf %87, %89 : vector<32x256xf32>
    %cst_28 = arith.constant 0.000000e+00 : f32
    %91 = vector.broadcast %cst_28 : f32 to vector<32x256xf32>
    %92 = arith.maximumf %90, %91 : vector<32x256xf32>
    %93 = arith.truncf %92 : vector<32x256xf32> to vector<32x256xbf16>
    %c0_29 = arith.constant 0 : index
    %c0_30 = arith.constant 0 : index
    %94 = vector.load %arg5[%c0_29, %c0_30] : memref<256x256xbf16, #tpu.memory_space<vmem>>, vector<256x256xbf16>
    %cst_31 = arith.constant dense<0.000000e+00> : vector<32x256xf32>
    %95 = tpu.matmul %93, %94, %cst_31 {dimension_numbers = #tpu.dot_dimension_numbers<[1], [0], [0], [1], [0, 0, 1, 1], [], []>} : vector<32x256xbf16>, vector<256x256xbf16>, vector<32x256xf32> -> vector<32x256xf32>
    %c0_32 = arith.constant 0 : index
    %c0_33 = arith.constant 0 : index
    %96 = vector.load %arg6[%c0_32, %c0_33] : memref<1x256xf32, #tpu.memory_space<vmem>>, vector<1x256xf32>
    %97 = vector.broadcast %96 : vector<1x256xf32> to vector<32x256xf32>
    %98 = arith.addf %95, %97 : vector<32x256xf32>
    %99 = arith.truncf %98 : vector<32x256xf32> to vector<32x256xbf16>
    %c0_34 = arith.constant 0 : index
    %c0_35 = arith.constant 0 : index
    %100 = vector.load %arg7[%c0_34, %c0_35] : memref<256x768xbf16, #tpu.memory_space<vmem>>, vector<256x768xbf16>
    %cst_36 = arith.constant dense<0.000000e+00> : vector<32x768xf32>
    %101 = tpu.matmul %99, %100, %cst_36 {dimension_numbers = #tpu.dot_dimension_numbers<[1], [0], [0], [1], [0, 0, 1, 1], [], []>} : vector<32x256xbf16>, vector<256x768xbf16>, vector<32x768xf32> -> vector<32x768xf32>
    %c0_37 = arith.constant 0 : index
    %c0_38 = arith.constant 0 : index
    %102 = vector.load %arg8[%c0_37, %c0_38] : memref<1x768xf32, #tpu.memory_space<vmem>>, vector<1x768xf32>
    %103 = vector.broadcast %102 : vector<1x768xf32> to vector<32x768xf32>
    %104 = arith.addf %101, %103 : vector<32x768xf32>
    %105 = vector.shape_cast %104 : vector<32x768xf32> to vector<2x16x768xf32>
    %106 = vector.extract_strided_slice %105 {offsets = [0, 0, 0], sizes = [2, 16, 32], strides = [1, 1, 1]} : vector<2x16x768xf32> to vector<2x16x32xf32>
    %107 = arith.truncf %106 : vector<2x16x32xf32> to vector<2x16x32xbf16>
    %108 = vector.extract_strided_slice %105 {offsets = [0, 0, 256], sizes = [2, 16, 32], strides = [1, 1, 1]} : vector<2x16x768xf32> to vector<2x16x32xf32>
    %109 = arith.truncf %108 : vector<2x16x32xf32> to vector<2x16x32xbf16>
    %110 = vector.extract_strided_slice %105 {offsets = [0, 0, 512], sizes = [2, 16, 32], strides = [1, 1, 1]} : vector<2x16x768xf32> to vector<2x16x32xf32>
    %111 = arith.truncf %110 : vector<2x16x32xf32> to vector<2x16x32xbf16>
    "tpu.trace_start"() <{level = 10 : i32, message = "bqd,bkd->bqk"}> : () -> ()
    %cst_39 = arith.constant dense<0.000000e+00> : vector<2x16x16xf32>
    %112 = tpu.matmul %107, %109, %cst_39 {dimension_numbers = #tpu.dot_dimension_numbers<[2], [2], [1], [1], [0, 0, 0, 1, 1, 1], [0], [0]>} : vector<2x16x32xbf16>, vector<2x16x32xbf16>, vector<2x16x16xf32> -> vector<2x16x16xf32>
    "tpu.trace_stop"() : () -> ()
    %cst_40 = arith.constant dense<0xFF800000> : vector<2x16xf32>
    %113 = vector.multi_reduction <maximumf>, %112, %cst_40 [2] : vector<2x16x16xf32> to vector<2x16xf32>
    %114 = vector.shape_cast %113 : vector<2x16xf32> to vector<2x16x1xf32>
    %115 = vector.broadcast %114 : vector<2x16x1xf32> to vector<2x16x16xf32>
    %116 = arith.subf %112, %115 : vector<2x16x16xf32>
    %117 = math.exp %116 : vector<2x16x16xf32>
    %cst_41 = arith.constant dense<0.000000e+00> : vector<2x16xf32>
    %118 = vector.multi_reduction <add>, %117, %cst_41 [2] : vector<2x16x16xf32> to vector<2x16xf32>
    %119 = vector.shape_cast %118 : vector<2x16xf32> to vector<2x16x1xf32>
    %120 = tpu.reciprocal %119 {approx = true} : vector<2x16x1xf32> -> vector<2x16x1xf32>
    %121 = vector.broadcast %120 : vector<2x16x1xf32> to vector<2x16x16xf32>
    %122 = arith.mulf %117, %121 : vector<2x16x16xf32>
    %123 = arith.truncf %122 : vector<2x16x16xf32> to vector<2x16x16xbf16>
    "tpu.trace_start"() <{level = 10 : i32, message = "bqk,bkd->bqd"}> : () -> ()
    %cst_42 = arith.constant dense<0.000000e+00> : vector<2x16x32xf32>
    %124 = tpu.matmul %123, %111, %cst_42 {dimension_numbers = #tpu.dot_dimension_numbers<[2], [1], [1], [2], [0, 0, 0, 1, 1, 2], [0], [0]>} : vector<2x16x16xbf16>, vector<2x16x32xbf16>, vector<2x16x32xf32> -> vector<2x16x32xf32>
    "tpu.trace_stop"() : () -> ()
    %125 = vector.extract_strided_slice %105 {offsets = [0, 0, 32], sizes = [2, 16, 32], strides = [1, 1, 1]} : vector<2x16x768xf32> to vector<2x16x32xf32>
    %126 = arith.truncf %125 : vector<2x16x32xf32> to vector<2x16x32xbf16>
    %127 = vector.extract_strided_slice %105 {offsets = [0, 0, 288], sizes = [2, 16, 32], strides = [1, 1, 1]} : vector<2x16x768xf32> to vector<2x16x32xf32>
    %128 = arith.truncf %127 : vector<2x16x32xf32> to vector<2x16x32xbf16>
    %129 = vector.extract_strided_slice %105 {offsets = [0, 0, 544], sizes = [2, 16, 32], strides = [1, 1, 1]} : vector<2x16x768xf32> to vector<2x16x32xf32>
    %130 = arith.truncf %129 : vector<2x16x32xf32> to vector<2x16x32xbf16>
    "tpu.trace_start"() <{level = 10 : i32, message = "bqd,bkd->bqk"}> : () -> ()
    %cst_43 = arith.constant dense<0.000000e+00> : vector<2x16x16xf32>
    %131 = tpu.matmul %126, %128, %cst_43 {dimension_numbers = #tpu.dot_dimension_numbers<[2], [2], [1], [1], [0, 0, 0, 1, 1, 1], [0], [0]>} : vector<2x16x32xbf16>, vector<2x16x32xbf16>, vector<2x16x16xf32> -> vector<2x16x16xf32>
    "tpu.trace_stop"() : () -> ()
    %cst_44 = arith.constant dense<0xFF800000> : vector<2x16xf32>
    %132 = vector.multi_reduction <maximumf>, %131, %cst_44 [2] : vector<2x16x16xf32> to vector<2x16xf32>
    %133 = vector.shape_cast %132 : vector<2x16xf32> to vector<2x16x1xf32>
    %134 = vector.broadcast %133 : vector<2x16x1xf32> to vector<2x16x16xf32>
    %135 = arith.subf %131, %134 : vector<2x16x16xf32>
    %136 = math.exp %135 : vector<2x16x16xf32>
    %cst_45 = arith.constant dense<0.000000e+00> : vector<2x16xf32>
    %137 = vector.multi_reduction <add>, %136, %cst_45 [2] : vector<2x16x16xf32> to vector<2x16xf32>
    %138 = vector.shape_cast %137 : vector<2x16xf32> to vector<2x16x1xf32>
    %139 = tpu.reciprocal %138 {approx = true} : vector<2x16x1xf32> -> vector<2x16x1xf32>
    %140 = vector.broadcast %139 : vector<2x16x1xf32> to vector<2x16x16xf32>
    %141 = arith.mulf %136, %140 : vector<2x16x16xf32>
    %142 = arith.truncf %141 : vector<2x16x16xf32> to vector<2x16x16xbf16>
    "tpu.trace_start"() <{level = 10 : i32, message = "bqk,bkd->bqd"}> : () -> ()
    %cst_46 = arith.constant dense<0.000000e+00> : vector<2x16x32xf32>
    %143 = tpu.matmul %142, %130, %cst_46 {dimension_numbers = #tpu.dot_dimension_numbers<[2], [1], [1], [2], [0, 0, 0, 1, 1, 2], [0], [0]>} : vector<2x16x16xbf16>, vector<2x16x32xbf16>, vector<2x16x32xf32> -> vector<2x16x32xf32>
    "tpu.trace_stop"() : () -> ()
    %144 = vector.extract_strided_slice %105 {offsets = [0, 0, 64], sizes = [2, 16, 32], strides = [1, 1, 1]} : vector<2x16x768xf32> to vector<2x16x32xf32>
    %145 = arith.truncf %144 : vector<2x16x32xf32> to vector<2x16x32xbf16>
    %146 = vector.extract_strided_slice %105 {offsets = [0, 0, 320], sizes = [2, 16, 32], strides = [1, 1, 1]} : vector<2x16x768xf32> to vector<2x16x32xf32>
    %147 = arith.truncf %146 : vector<2x16x32xf32> to vector<2x16x32xbf16>
    %148 = vector.extract_strided_slice %105 {offsets = [0, 0, 576], sizes = [2, 16, 32], strides = [1, 1, 1]} : vector<2x16x768xf32> to vector<2x16x32xf32>
    %149 = arith.truncf %148 : vector<2x16x32xf32> to vector<2x16x32xbf16>
    "tpu.trace_start"() <{level = 10 : i32, message = "bqd,bkd->bqk"}> : () -> ()
    %cst_47 = arith.constant dense<0.000000e+00> : vector<2x16x16xf32>
    %150 = tpu.matmul %145, %147, %cst_47 {dimension_numbers = #tpu.dot_dimension_numbers<[2], [2], [1], [1], [0, 0, 0, 1, 1, 1], [0], [0]>} : vector<2x16x32xbf16>, vector<2x16x32xbf16>, vector<2x16x16xf32> -> vector<2x16x16xf32>
    "tpu.trace_stop"() : () -> ()
    %cst_48 = arith.constant dense<0xFF800000> : vector<2x16xf32>
    %151 = vector.multi_reduction <maximumf>, %150, %cst_48 [2] : vector<2x16x16xf32> to vector<2x16xf32>
    %152 = vector.shape_cast %151 : vector<2x16xf32> to vector<2x16x1xf32>
    %153 = vector.broadcast %152 : vector<2x16x1xf32> to vector<2x16x16xf32>
    %154 = arith.subf %150, %153 : vector<2x16x16xf32>
    %155 = math.exp %154 : vector<2x16x16xf32>
    %cst_49 = arith.constant dense<0.000000e+00> : vector<2x16xf32>
    %156 = vector.multi_reduction <add>, %155, %cst_49 [2] : vector<2x16x16xf32> to vector<2x16xf32>
    %157 = vector.shape_cast %156 : vector<2x16xf32> to vector<2x16x1xf32>
    %158 = tpu.reciprocal %157 {approx = true} : vector<2x16x1xf32> -> vector<2x16x1xf32>
    %159 = vector.broadcast %158 : vector<2x16x1xf32> to vector<2x16x16xf32>
    %160 = arith.mulf %155, %159 : vector<2x16x16xf32>
    %161 = arith.truncf %160 : vector<2x16x16xf32> to vector<2x16x16xbf16>
    "tpu.trace_start"() <{level = 10 : i32, message = "bqk,bkd->bqd"}> : () -> ()
    %cst_50 = arith.constant dense<0.000000e+00> : vector<2x16x32xf32>
    %162 = tpu.matmul %161, %149, %cst_50 {dimension_numbers = #tpu.dot_dimension_numbers<[2], [1], [1], [2], [0, 0, 0, 1, 1, 2], [0], [0]>} : vector<2x16x16xbf16>, vector<2x16x32xbf16>, vector<2x16x32xf32> -> vector<2x16x32xf32>
    "tpu.trace_stop"() : () -> ()
    %163 = vector.extract_strided_slice %105 {offsets = [0, 0, 96], sizes = [2, 16, 32], strides = [1, 1, 1]} : vector<2x16x768xf32> to vector<2x16x32xf32>
    %164 = arith.truncf %163 : vector<2x16x32xf32> to vector<2x16x32xbf16>
    %165 = vector.extract_strided_slice %105 {offsets = [0, 0, 352], sizes = [2, 16, 32], strides = [1, 1, 1]} : vector<2x16x768xf32> to vector<2x16x32xf32>
    %166 = arith.truncf %165 : vector<2x16x32xf32> to vector<2x16x32xbf16>
    %167 = vector.extract_strided_slice %105 {offsets = [0, 0, 608], sizes = [2, 16, 32], strides = [1, 1, 1]} : vector<2x16x768xf32> to vector<2x16x32xf32>
    %168 = arith.truncf %167 : vector<2x16x32xf32> to vector<2x16x32xbf16>
    "tpu.trace_start"() <{level = 10 : i32, message = "bqd,bkd->bqk"}> : () -> ()
    %cst_51 = arith.constant dense<0.000000e+00> : vector<2x16x16xf32>
    %169 = tpu.matmul %164, %166, %cst_51 {dimension_numbers = #tpu.dot_dimension_numbers<[2], [2], [1], [1], [0, 0, 0, 1, 1, 1], [0], [0]>} : vector<2x16x32xbf16>, vector<2x16x32xbf16>, vector<2x16x16xf32> -> vector<2x16x16xf32>
    "tpu.trace_stop"() : () -> ()
    %cst_52 = arith.constant dense<0xFF800000> : vector<2x16xf32>
    %170 = vector.multi_reduction <maximumf>, %169, %cst_52 [2] : vector<2x16x16xf32> to vector<2x16xf32>
    %171 = vector.shape_cast %170 : vector<2x16xf32> to vector<2x16x1xf32>
    %172 = vector.broadcast %171 : vector<2x16x1xf32> to vector<2x16x16xf32>
    %173 = arith.subf %169, %172 : vector<2x16x16xf32>
    %174 = math.exp %173 : vector<2x16x16xf32>
    %cst_53 = arith.constant dense<0.000000e+00> : vector<2x16xf32>
    %175 = vector.multi_reduction <add>, %174, %cst_53 [2] : vector<2x16x16xf32> to vector<2x16xf32>
    %176 = vector.shape_cast %175 : vector<2x16xf32> to vector<2x16x1xf32>
    %177 = tpu.reciprocal %176 {approx = true} : vector<2x16x1xf32> -> vector<2x16x1xf32>
    %178 = vector.broadcast %177 : vector<2x16x1xf32> to vector<2x16x16xf32>
    %179 = arith.mulf %174, %178 : vector<2x16x16xf32>
    %180 = arith.truncf %179 : vector<2x16x16xf32> to vector<2x16x16xbf16>
    "tpu.trace_start"() <{level = 10 : i32, message = "bqk,bkd->bqd"}> : () -> ()
    %cst_54 = arith.constant dense<0.000000e+00> : vector<2x16x32xf32>
    %181 = tpu.matmul %180, %168, %cst_54 {dimension_numbers = #tpu.dot_dimension_numbers<[2], [1], [1], [2], [0, 0, 0, 1, 1, 2], [0], [0]>} : vector<2x16x16xbf16>, vector<2x16x32xbf16>, vector<2x16x32xf32> -> vector<2x16x32xf32>
    "tpu.trace_stop"() : () -> ()
    %182 = vector.extract_strided_slice %105 {offsets = [0, 0, 128], sizes = [2, 16, 32], strides = [1, 1, 1]} : vector<2x16x768xf32> to vector<2x16x32xf32>
    %183 = arith.truncf %182 : vector<2x16x32xf32> to vector<2x16x32xbf16>
    %184 = vector.extract_strided_slice %105 {offsets = [0, 0, 384], sizes = [2, 16, 32], strides = [1, 1, 1]} : vector<2x16x768xf32> to vector<2x16x32xf32>
    %185 = arith.truncf %184 : vector<2x16x32xf32> to vector<2x16x32xbf16>
    %186 = vector.extract_strided_slice %105 {offsets = [0, 0, 640], sizes = [2, 16, 32], strides = [1, 1, 1]} : vector<2x16x768xf32> to vector<2x16x32xf32>
    %187 = arith.truncf %186 : vector<2x16x32xf32> to vector<2x16x32xbf16>
    "tpu.trace_start"() <{level = 10 : i32, message = "bqd,bkd->bqk"}> : () -> ()
    %cst_55 = arith.constant dense<0.000000e+00> : vector<2x16x16xf32>
    %188 = tpu.matmul %183, %185, %cst_55 {dimension_numbers = #tpu.dot_dimension_numbers<[2], [2], [1], [1], [0, 0, 0, 1, 1, 1], [0], [0]>} : vector<2x16x32xbf16>, vector<2x16x32xbf16>, vector<2x16x16xf32> -> vector<2x16x16xf32>
    "tpu.trace_stop"() : () -> ()
    %cst_56 = arith.constant dense<0xFF800000> : vector<2x16xf32>
    %189 = vector.multi_reduction <maximumf>, %188, %cst_56 [2] : vector<2x16x16xf32> to vector<2x16xf32>
    %190 = vector.shape_cast %189 : vector<2x16xf32> to vector<2x16x1xf32>
    %191 = vector.broadcast %190 : vector<2x16x1xf32> to vector<2x16x16xf32>
    %192 = arith.subf %188, %191 : vector<2x16x16xf32>
    %193 = math.exp %192 : vector<2x16x16xf32>
    %cst_57 = arith.constant dense<0.000000e+00> : vector<2x16xf32>
    %194 = vector.multi_reduction <add>, %193, %cst_57 [2] : vector<2x16x16xf32> to vector<2x16xf32>
    %195 = vector.shape_cast %194 : vector<2x16xf32> to vector<2x16x1xf32>
    %196 = tpu.reciprocal %195 {approx = true} : vector<2x16x1xf32> -> vector<2x16x1xf32>
    %197 = vector.broadcast %196 : vector<2x16x1xf32> to vector<2x16x16xf32>
    %198 = arith.mulf %193, %197 : vector<2x16x16xf32>
    %199 = arith.truncf %198 : vector<2x16x16xf32> to vector<2x16x16xbf16>
    "tpu.trace_start"() <{level = 10 : i32, message = "bqk,bkd->bqd"}> : () -> ()
    %cst_58 = arith.constant dense<0.000000e+00> : vector<2x16x32xf32>
    %200 = tpu.matmul %199, %187, %cst_58 {dimension_numbers = #tpu.dot_dimension_numbers<[2], [1], [1], [2], [0, 0, 0, 1, 1, 2], [0], [0]>} : vector<2x16x16xbf16>, vector<2x16x32xbf16>, vector<2x16x32xf32> -> vector<2x16x32xf32>
    "tpu.trace_stop"() : () -> ()
    %201 = vector.extract_strided_slice %105 {offsets = [0, 0, 160], sizes = [2, 16, 32], strides = [1, 1, 1]} : vector<2x16x768xf32> to vector<2x16x32xf32>
    %202 = arith.truncf %201 : vector<2x16x32xf32> to vector<2x16x32xbf16>
    %203 = vector.extract_strided_slice %105 {offsets = [0, 0, 416], sizes = [2, 16, 32], strides = [1, 1, 1]} : vector<2x16x768xf32> to vector<2x16x32xf32>
    %204 = arith.truncf %203 : vector<2x16x32xf32> to vector<2x16x32xbf16>
    %205 = vector.extract_strided_slice %105 {offsets = [0, 0, 672], sizes = [2, 16, 32], strides = [1, 1, 1]} : vector<2x16x768xf32> to vector<2x16x32xf32>
    %206 = arith.truncf %205 : vector<2x16x32xf32> to vector<2x16x32xbf16>
    "tpu.trace_start"() <{level = 10 : i32, message = "bqd,bkd->bqk"}> : () -> ()
    %cst_59 = arith.constant dense<0.000000e+00> : vector<2x16x16xf32>
    %207 = tpu.matmul %202, %204, %cst_59 {dimension_numbers = #tpu.dot_dimension_numbers<[2], [2], [1], [1], [0, 0, 0, 1, 1, 1], [0], [0]>} : vector<2x16x32xbf16>, vector<2x16x32xbf16>, vector<2x16x16xf32> -> vector<2x16x16xf32>
    "tpu.trace_stop"() : () -> ()
    %cst_60 = arith.constant dense<0xFF800000> : vector<2x16xf32>
    %208 = vector.multi_reduction <maximumf>, %207, %cst_60 [2] : vector<2x16x16xf32> to vector<2x16xf32>
    %209 = vector.shape_cast %208 : vector<2x16xf32> to vector<2x16x1xf32>
    %210 = vector.broadcast %209 : vector<2x16x1xf32> to vector<2x16x16xf32>
    %211 = arith.subf %207, %210 : vector<2x16x16xf32>
    %212 = math.exp %211 : vector<2x16x16xf32>
    %cst_61 = arith.constant dense<0.000000e+00> : vector<2x16xf32>
    %213 = vector.multi_reduction <add>, %212, %cst_61 [2] : vector<2x16x16xf32> to vector<2x16xf32>
    %214 = vector.shape_cast %213 : vector<2x16xf32> to vector<2x16x1xf32>
    %215 = tpu.reciprocal %214 {approx = true} : vector<2x16x1xf32> -> vector<2x16x1xf32>
    %216 = vector.broadcast %215 : vector<2x16x1xf32> to vector<2x16x16xf32>
    %217 = arith.mulf %212, %216 : vector<2x16x16xf32>
    %218 = arith.truncf %217 : vector<2x16x16xf32> to vector<2x16x16xbf16>
    "tpu.trace_start"() <{level = 10 : i32, message = "bqk,bkd->bqd"}> : () -> ()
    %cst_62 = arith.constant dense<0.000000e+00> : vector<2x16x32xf32>
    %219 = tpu.matmul %218, %206, %cst_62 {dimension_numbers = #tpu.dot_dimension_numbers<[2], [1], [1], [2], [0, 0, 0, 1, 1, 2], [0], [0]>} : vector<2x16x16xbf16>, vector<2x16x32xbf16>, vector<2x16x32xf32> -> vector<2x16x32xf32>
    "tpu.trace_stop"() : () -> ()
    %220 = vector.extract_strided_slice %105 {offsets = [0, 0, 192], sizes = [2, 16, 32], strides = [1, 1, 1]} : vector<2x16x768xf32> to vector<2x16x32xf32>
    %221 = arith.truncf %220 : vector<2x16x32xf32> to vector<2x16x32xbf16>
    %222 = vector.extract_strided_slice %105 {offsets = [0, 0, 448], sizes = [2, 16, 32], strides = [1, 1, 1]} : vector<2x16x768xf32> to vector<2x16x32xf32>
    %223 = arith.truncf %222 : vector<2x16x32xf32> to vector<2x16x32xbf16>
    %224 = vector.extract_strided_slice %105 {offsets = [0, 0, 704], sizes = [2, 16, 32], strides = [1, 1, 1]} : vector<2x16x768xf32> to vector<2x16x32xf32>
    %225 = arith.truncf %224 : vector<2x16x32xf32> to vector<2x16x32xbf16>
    "tpu.trace_start"() <{level = 10 : i32, message = "bqd,bkd->bqk"}> : () -> ()
    %cst_63 = arith.constant dense<0.000000e+00> : vector<2x16x16xf32>
    %226 = tpu.matmul %221, %223, %cst_63 {dimension_numbers = #tpu.dot_dimension_numbers<[2], [2], [1], [1], [0, 0, 0, 1, 1, 1], [0], [0]>} : vector<2x16x32xbf16>, vector<2x16x32xbf16>, vector<2x16x16xf32> -> vector<2x16x16xf32>
    "tpu.trace_stop"() : () -> ()
    %cst_64 = arith.constant dense<0xFF800000> : vector<2x16xf32>
    %227 = vector.multi_reduction <maximumf>, %226, %cst_64 [2] : vector<2x16x16xf32> to vector<2x16xf32>
    %228 = vector.shape_cast %227 : vector<2x16xf32> to vector<2x16x1xf32>
    %229 = vector.broadcast %228 : vector<2x16x1xf32> to vector<2x16x16xf32>
    %230 = arith.subf %226, %229 : vector<2x16x16xf32>
    %231 = math.exp %230 : vector<2x16x16xf32>
    %cst_65 = arith.constant dense<0.000000e+00> : vector<2x16xf32>
    %232 = vector.multi_reduction <add>, %231, %cst_65 [2] : vector<2x16x16xf32> to vector<2x16xf32>
    %233 = vector.shape_cast %232 : vector<2x16xf32> to vector<2x16x1xf32>
    %234 = tpu.reciprocal %233 {approx = true} : vector<2x16x1xf32> -> vector<2x16x1xf32>
    %235 = vector.broadcast %234 : vector<2x16x1xf32> to vector<2x16x16xf32>
    %236 = arith.mulf %231, %235 : vector<2x16x16xf32>
    %237 = arith.truncf %236 : vector<2x16x16xf32> to vector<2x16x16xbf16>
    "tpu.trace_start"() <{level = 10 : i32, message = "bqk,bkd->bqd"}> : () -> ()
    %cst_66 = arith.constant dense<0.000000e+00> : vector<2x16x32xf32>
    %238 = tpu.matmul %237, %225, %cst_66 {dimension_numbers = #tpu.dot_dimension_numbers<[2], [1], [1], [2], [0, 0, 0, 1, 1, 2], [0], [0]>} : vector<2x16x16xbf16>, vector<2x16x32xbf16>, vector<2x16x32xf32> -> vector<2x16x32xf32>
    "tpu.trace_stop"() : () -> ()
    %239 = vector.extract_strided_slice %105 {offsets = [0, 0, 224], sizes = [2, 16, 32], strides = [1, 1, 1]} : vector<2x16x768xf32> to vector<2x16x32xf32>
    %240 = arith.truncf %239 : vector<2x16x32xf32> to vector<2x16x32xbf16>
    %241 = vector.extract_strided_slice %105 {offsets = [0, 0, 480], sizes = [2, 16, 32], strides = [1, 1, 1]} : vector<2x16x768xf32> to vector<2x16x32xf32>
    %242 = arith.truncf %241 : vector<2x16x32xf32> to vector<2x16x32xbf16>
    %243 = vector.extract_strided_slice %105 {offsets = [0, 0, 736], sizes = [2, 16, 32], strides = [1, 1, 1]} : vector<2x16x768xf32> to vector<2x16x32xf32>
    %244 = arith.truncf %243 : vector<2x16x32xf32> to vector<2x16x32xbf16>
    "tpu.trace_start"() <{level = 10 : i32, message = "bqd,bkd->bqk"}> : () -> ()
    %cst_67 = arith.constant dense<0.000000e+00> : vector<2x16x16xf32>
    %245 = tpu.matmul %240, %242, %cst_67 {dimension_numbers = #tpu.dot_dimension_numbers<[2], [2], [1], [1], [0, 0, 0, 1, 1, 1], [0], [0]>} : vector<2x16x32xbf16>, vector<2x16x32xbf16>, vector<2x16x16xf32> -> vector<2x16x16xf32>
    "tpu.trace_stop"() : () -> ()
    %cst_68 = arith.constant dense<0xFF800000> : vector<2x16xf32>
    %246 = vector.multi_reduction <maximumf>, %245, %cst_68 [2] : vector<2x16x16xf32> to vector<2x16xf32>
    %247 = vector.shape_cast %246 : vector<2x16xf32> to vector<2x16x1xf32>
    %248 = vector.broadcast %247 : vector<2x16x1xf32> to vector<2x16x16xf32>
    %249 = arith.subf %245, %248 : vector<2x16x16xf32>
    %250 = math.exp %249 : vector<2x16x16xf32>
    %cst_69 = arith.constant dense<0.000000e+00> : vector<2x16xf32>
    %251 = vector.multi_reduction <add>, %250, %cst_69 [2] : vector<2x16x16xf32> to vector<2x16xf32>
    %252 = vector.shape_cast %251 : vector<2x16xf32> to vector<2x16x1xf32>
    %253 = tpu.reciprocal %252 {approx = true} : vector<2x16x1xf32> -> vector<2x16x1xf32>
    %254 = vector.broadcast %253 : vector<2x16x1xf32> to vector<2x16x16xf32>
    %255 = arith.mulf %250, %254 : vector<2x16x16xf32>
    %256 = arith.truncf %255 : vector<2x16x16xf32> to vector<2x16x16xbf16>
    "tpu.trace_start"() <{level = 10 : i32, message = "bqk,bkd->bqd"}> : () -> ()
    %cst_70 = arith.constant dense<0.000000e+00> : vector<2x16x32xf32>
    %257 = tpu.matmul %256, %244, %cst_70 {dimension_numbers = #tpu.dot_dimension_numbers<[2], [1], [1], [2], [0, 0, 0, 1, 1, 2], [0], [0]>} : vector<2x16x16xbf16>, vector<2x16x32xbf16>, vector<2x16x32xf32> -> vector<2x16x32xf32>
    "tpu.trace_stop"() : () -> ()
    %258 = tpu.concatenate %124, %143, %162, %181, %200, %219, %238, %257 in 2 : vector<2x16x32xf32>, vector<2x16x32xf32>, vector<2x16x32xf32>, vector<2x16x32xf32>, vector<2x16x32xf32>, vector<2x16x32xf32>, vector<2x16x32xf32>, vector<2x16x32xf32> -> vector<2x16x256xf32>
    %259 = vector.shape_cast %258 : vector<2x16x256xf32> to vector<32x256xf32>
    %260 = arith.truncf %259 : vector<32x256xf32> to vector<32x256xbf16>
    %c0_71 = arith.constant 0 : index
    %c0_72 = arith.constant 0 : index
    %261 = vector.load %arg9[%c0_71, %c0_72] : memref<256x256xbf16, #tpu.memory_space<vmem>>, vector<256x256xbf16>
    %cst_73 = arith.constant dense<0.000000e+00> : vector<32x256xf32>
    %262 = tpu.matmul %260, %261, %cst_73 {dimension_numbers = #tpu.dot_dimension_numbers<[1], [0], [0], [1], [0, 0, 1, 1], [], []>} : vector<32x256xbf16>, vector<256x256xbf16>, vector<32x256xf32> -> vector<32x256xf32>
    %c0_74 = arith.constant 0 : index
    %c0_75 = arith.constant 0 : index
    %263 = vector.load %arg10[%c0_74, %c0_75] : memref<1x256xf32, #tpu.memory_space<vmem>>, vector<1x256xf32>
    %264 = vector.broadcast %263 : vector<1x256xf32> to vector<32x256xf32>
    %265 = arith.addf %262, %264 : vector<32x256xf32>
    %266 = arith.addf %98, %265 : vector<32x256xf32>
    %c0_76 = arith.constant 0 : index
    %c0_77 = arith.constant 0 : index
    %267 = vector.load %arg11[%c0_76, %c0_77] : memref<1x256xf32, #tpu.memory_space<vmem>>, vector<1x256xf32>
    %c0_78 = arith.constant 0 : index
    %c0_79 = arith.constant 0 : index
    %268 = vector.load %arg12[%c0_78, %c0_79] : memref<1x256xf32, #tpu.memory_space<vmem>>, vector<1x256xf32>
    %cst_80 = arith.constant dense<0.000000e+00> : vector<32xf32>
    %269 = vector.multi_reduction <add>, %266, %cst_80 [1] : vector<32x256xf32> to vector<32xf32>
    %270 = vector.shape_cast %269 : vector<32xf32> to vector<32x1xf32>
    %cst_81 = arith.constant 2.560000e+02 : f32
    %271 = vector.broadcast %cst_81 : f32 to vector<32x1xf32>
    %272 = arith.divf %270, %271 : vector<32x1xf32>
    %273 = vector.broadcast %272 : vector<32x1xf32> to vector<32x256xf32>
    %274 = arith.subf %266, %273 : vector<32x256xf32>
    %275 = arith.mulf %274, %274 : vector<32x256xf32>
    %cst_82 = arith.constant dense<0.000000e+00> : vector<32xf32>
    %276 = vector.multi_reduction <add>, %275, %cst_82 [1] : vector<32x256xf32> to vector<32xf32>
    %277 = vector.shape_cast %276 : vector<32xf32> to vector<32x1xf32>
    %cst_83 = arith.constant 2.560000e+02 : f32
    %278 = vector.broadcast %cst_83 : f32 to vector<32x1xf32>
    %279 = arith.divf %277, %278 : vector<32x1xf32>
    %280 = vector.broadcast %272 : vector<32x1xf32> to vector<32x256xf32>
    %281 = arith.subf %266, %280 : vector<32x256xf32>
    %cst_84 = arith.constant 9.99999974E-6 : f32
    %282 = vector.broadcast %cst_84 : f32 to vector<32x1xf32>
    %283 = arith.addf %279, %282 : vector<32x1xf32>
    %284 = math.rsqrt %283 : vector<32x1xf32>
    %285 = vector.broadcast %284 : vector<32x1xf32> to vector<32x256xf32>
    %286 = arith.mulf %281, %285 : vector<32x256xf32>
    %287 = vector.broadcast %267 : vector<1x256xf32> to vector<32x256xf32>
    %288 = arith.mulf %286, %287 : vector<32x256xf32>
    %289 = vector.broadcast %268 : vector<1x256xf32> to vector<32x256xf32>
    %290 = arith.addf %288, %289 : vector<32x256xf32>
    %291 = arith.truncf %290 : vector<32x256xf32> to vector<32x256xbf16>
    %c0_85 = arith.constant 0 : index
    %c0_86 = arith.constant 0 : index
    %292 = vector.load %arg13[%c0_85, %c0_86] : memref<256x128xbf16, #tpu.memory_space<vmem>>, vector<256x128xbf16>
    %cst_87 = arith.constant dense<0.000000e+00> : vector<32x128xf32>
    %293 = tpu.matmul %291, %292, %cst_87 {dimension_numbers = #tpu.dot_dimension_numbers<[1], [0], [0], [1], [0, 0, 1, 1], [], []>} : vector<32x256xbf16>, vector<256x128xbf16>, vector<32x128xf32> -> vector<32x128xf32>
    %c0_88 = arith.constant 0 : index
    %c0_89 = arith.constant 0 : index
    %294 = vector.load %arg14[%c0_88, %c0_89] : memref<1x128xf32, #tpu.memory_space<vmem>>, vector<1x128xf32>
    %295 = vector.broadcast %294 : vector<1x128xf32> to vector<32x128xf32>
    %296 = arith.addf %293, %295 : vector<32x128xf32>
    %cst_90 = arith.constant 0.000000e+00 : f32
    %297 = vector.broadcast %cst_90 : f32 to vector<32x128xf32>
    %298 = arith.maximumf %296, %297 : vector<32x128xf32>
    %299 = arith.truncf %298 : vector<32x128xf32> to vector<32x128xbf16>
    %c0_91 = arith.constant 0 : index
    %c0_92 = arith.constant 0 : index
    %300 = vector.load %arg15[%c0_91, %c0_92] : memref<128x256xbf16, #tpu.memory_space<vmem>>, vector<128x256xbf16>
    %cst_93 = arith.constant dense<0.000000e+00> : vector<32x256xf32>
    %301 = tpu.matmul %299, %300, %cst_93 {dimension_numbers = #tpu.dot_dimension_numbers<[1], [0], [0], [1], [0, 0, 1, 1], [], []>} : vector<32x128xbf16>, vector<128x256xbf16>, vector<32x256xf32> -> vector<32x256xf32>
    %c0_94 = arith.constant 0 : index
    %c0_95 = arith.constant 0 : index
    %302 = vector.load %arg16[%c0_94, %c0_95] : memref<1x256xf32, #tpu.memory_space<vmem>>, vector<1x256xf32>
    %303 = vector.broadcast %302 : vector<1x256xf32> to vector<32x256xf32>
    %304 = arith.addf %301, %303 : vector<32x256xf32>
    %305 = arith.addf %290, %304 : vector<32x256xf32>
    %c0_96 = arith.constant 0 : index
    %c0_97 = arith.constant 0 : index
    %306 = vector.load %arg17[%c0_96, %c0_97] : memref<1x256xf32, #tpu.memory_space<vmem>>, vector<1x256xf32>
    %c0_98 = arith.constant 0 : index
    %c0_99 = arith.constant 0 : index
    %307 = vector.load %arg18[%c0_98, %c0_99] : memref<1x256xf32, #tpu.memory_space<vmem>>, vector<1x256xf32>
    %cst_100 = arith.constant dense<0.000000e+00> : vector<32xf32>
    %308 = vector.multi_reduction <add>, %305, %cst_100 [1] : vector<32x256xf32> to vector<32xf32>
    %309 = vector.shape_cast %308 : vector<32xf32> to vector<32x1xf32>
    %cst_101 = arith.constant 2.560000e+02 : f32
    %310 = vector.broadcast %cst_101 : f32 to vector<32x1xf32>
    %311 = arith.divf %309, %310 : vector<32x1xf32>
    %312 = vector.broadcast %311 : vector<32x1xf32> to vector<32x256xf32>
    %313 = arith.subf %305, %312 : vector<32x256xf32>
    %314 = arith.mulf %313, %313 : vector<32x256xf32>
    %cst_102 = arith.constant dense<0.000000e+00> : vector<32xf32>
    %315 = vector.multi_reduction <add>, %314, %cst_102 [1] : vector<32x256xf32> to vector<32xf32>
    %316 = vector.shape_cast %315 : vector<32xf32> to vector<32x1xf32>
    %cst_103 = arith.constant 2.560000e+02 : f32
    %317 = vector.broadcast %cst_103 : f32 to vector<32x1xf32>
    %318 = arith.divf %316, %317 : vector<32x1xf32>
    %319 = vector.broadcast %311 : vector<32x1xf32> to vector<32x256xf32>
    %320 = arith.subf %305, %319 : vector<32x256xf32>
    %cst_104 = arith.constant 9.99999974E-6 : f32
    %321 = vector.broadcast %cst_104 : f32 to vector<32x1xf32>
    %322 = arith.addf %318, %321 : vector<32x1xf32>
    %323 = math.rsqrt %322 : vector<32x1xf32>
    %324 = vector.broadcast %323 : vector<32x1xf32> to vector<32x256xf32>
    %325 = arith.mulf %320, %324 : vector<32x256xf32>
    %326 = vector.broadcast %306 : vector<1x256xf32> to vector<32x256xf32>
    %327 = arith.mulf %325, %326 : vector<32x256xf32>
    %328 = vector.broadcast %307 : vector<1x256xf32> to vector<32x256xf32>
    %329 = arith.addf %327, %328 : vector<32x256xf32>
    %c0_105 = arith.constant 0 : index
    %c0_106 = arith.constant 0 : index
    %330 = vector.load %arg19[%c0_105, %c0_106] : memref<32x256xf32, #tpu.memory_space<vmem>>, vector<32x256xf32>
    tpu.vector_store %arg19[%c0_105, %c0_106], %329 {strides = array<i32>} : memref<32x256xf32, #tpu.memory_space<vmem>>, vector<32x256xf32>,
    return
  }
  func.func @transform_0(%arg0: i32) -> (i32, i32) {
    %c0_i32 = arith.constant 0 : i32
    %c0_i32_0 = arith.constant 0 : i32
    return %arg0, %c0_i32 : i32, i32
  }
  func.func @transform_1(%arg0: i32) -> (i32, i32) {
    %c0_i32 = arith.constant 0 : i32
    %c0_i32_0 = arith.constant 0 : i32
    %c0_i32_1 = arith.constant 0 : i32
    return %c0_i32, %c0_i32_0 : i32, i32
  }
  func.func @transform_2(%arg0: i32) -> (i32, i32) {
    %c0_i32 = arith.constant 0 : i32
    %c0_i32_0 = arith.constant 0 : i32
    %c0_i32_1 = arith.constant 0 : i32
    return %c0_i32, %c0_i32_0 : i32, i32
  }
  func.func @transform_3(%arg0: i32) -> (i32, i32) {
    %c0_i32 = arith.constant 0 : i32
    %c0_i32_0 = arith.constant 0 : i32
    %c0_i32_1 = arith.constant 0 : i32
    return %c0_i32, %c0_i32_0 : i32, i32
  }
  func.func @transform_4(%arg0: i32) -> (i32, i32) {
    %c0_i32 = arith.constant 0 : i32
    %c0_i32_0 = arith.constant 0 : i32
    %c0_i32_1 = arith.constant 0 : i32
    return %c0_i32, %c0_i32_0 : i32, i32
  }
  func.func @transform_5(%arg0: i32) -> (i32, i32) {
    %c0_i32 = arith.constant 0 : i32
    %c0_i32_0 = arith.constant 0 : i32
    %c0_i32_1 = arith.constant 0 : i32
    return %c0_i32, %c0_i32_0 : i32, i32
  }
  func.func @transform_6(%arg0: i32) -> (i32, i32) {
    %c0_i32 = arith.constant 0 : i32
    %c0_i32_0 = arith.constant 0 : i32
    %c0_i32_1 = arith.constant 0 : i32
    return %c0_i32, %c0_i32_0 : i32, i32
  }
  func.func @transform_7(%arg0: i32) -> (i32, i32) {
    %c0_i32 = arith.constant 0 : i32
    %c0_i32_0 = arith.constant 0 : i32
    %c0_i32_1 = arith.constant 0 : i32
    return %c0_i32, %c0_i32_0 : i32, i32
  }
  func.func @transform_8(%arg0: i32) -> (i32, i32) {
    %c0_i32 = arith.constant 0 : i32
    %c0_i32_0 = arith.constant 0 : i32
    %c0_i32_1 = arith.constant 0 : i32
    return %c0_i32, %c0_i32_0 : i32, i32
  }
  func.func @transform_9(%arg0: i32) -> (i32, i32) {
    %c0_i32 = arith.constant 0 : i32
    %c0_i32_0 = arith.constant 0 : i32
    %c0_i32_1 = arith.constant 0 : i32
    return %c0_i32, %c0_i32_0 : i32, i32
  }
  func.func @transform_10(%arg0: i32) -> (i32, i32) {
    %c0_i32 = arith.constant 0 : i32
    %c0_i32_0 = arith.constant 0 : i32
    %c0_i32_1 = arith.constant 0 : i32
    return %c0_i32, %c0_i32_0 : i32, i32
  }
  func.func @transform_11(%arg0: i32) -> (i32, i32) {
    %c0_i32 = arith.constant 0 : i32
    %c0_i32_0 = arith.constant 0 : i32
    %c0_i32_1 = arith.constant 0 : i32
    return %c0_i32, %c0_i32_0 : i32, i32
  }
  func.func @transform_12(%arg0: i32) -> (i32, i32) {
    %c0_i32 = arith.constant 0 : i32
    %c0_i32_0 = arith.constant 0 : i32
    %c0_i32_1 = arith.constant 0 : i32
    return %c0_i32, %c0_i32_0 : i32, i32
  }
  func.func @transform_13(%arg0: i32) -> (i32, i32) {
    %c0_i32 = arith.constant 0 : i32
    %c0_i32_0 = arith.constant 0 : i32
    %c0_i32_1 = arith.constant 0 : i32
    return %c0_i32, %c0_i32_0 : i32, i32
  }
  func.func @transform_14(%arg0: i32) -> (i32, i32) {
    %c0_i32 = arith.constant 0 : i32
    %c0_i32_0 = arith.constant 0 : i32
    %c0_i32_1 = arith.constant 0 : i32
    return %c0_i32, %c0_i32_0 : i32, i32
  }
  func.func @transform_15(%arg0: i32) -> (i32, i32) {
    %c0_i32 = arith.constant 0 : i32
    %c0_i32_0 = arith.constant 0 : i32
    %c0_i32_1 = arith.constant 0 : i32
    return %c0_i32, %c0_i32_0 : i32, i32
  }
  func.func @transform_16(%arg0: i32) -> (i32, i32) {
    %c0_i32 = arith.constant 0 : i32
    %c0_i32_0 = arith.constant 0 : i32
    %c0_i32_1 = arith.constant 0 : i32
    return %c0_i32, %c0_i32_0 : i32, i32
  }
  func.func @transform_17(%arg0: i32) -> (i32, i32) {
    %c0_i32 = arith.constant 0 : i32
    %c0_i32_0 = arith.constant 0 : i32
    %c0_i32_1 = arith.constant 0 : i32
    return %c0_i32, %c0_i32_0 : i32, i32
  }
  func.func @transform_18(%arg0: i32) -> (i32, i32) {
    %c0_i32 = arith.constant 0 : i32
    %c0_i32_0 = arith.constant 0 : i32
    return %arg0, %c0_i32 : i32, i32
  }
}

</mosaic_0001>

<llo_original>
// kernel: seq_encoder.1
$region0: #{seq_encoder.1}
  #allocation0 [shape = 'u32[]', space=smem, size = 0x4, offset = 0x4, fixed_abs, tag = 'smem constant byte address 0x4 - core index']
  #allocation1 [shape = 'u32[144,128]{1,0:T(1,128)}', space=vmem, size = 0x12000, scoped, tag = 'internal scratch']
  %s0 = inlined_call_operand.vmem [shape: s32[64,1], index: 0, kind: input, shape index: {}]
  %s1 = inlined_call_operand.vmem [shape: bf16[32,256], index: 1, kind: input, shape index: {}]
  %s2 = inlined_call_operand.hbm [shape: bf16[1280,256], index: 2, kind: input, shape index: {}]
  %s3 = inlined_call_operand.vmem [shape: f32[1,256], index: 3, kind: input, shape index: {}]
  %s4 = inlined_call_operand.hbm [shape: bf16[256,256], index: 4, kind: input, shape index: {}]
  %s5 = inlined_call_operand.vmem [shape: f32[1,256], index: 5, kind: input, shape index: {}]
  %s6 = inlined_call_operand.hbm [shape: bf16[256,768], index: 6, kind: input, shape index: {}]
  %s7 = inlined_call_operand.vmem [shape: f32[1,768], index: 7, kind: input, shape index: {}]
  %s8 = inlined_call_operand.hbm [shape: bf16[256,256], index: 8, kind: input, shape index: {}]
  %s9 = inlined_call_operand.vmem [shape: f32[1,256], index: 9, kind: input, shape index: {}]
  %s10 = inlined_call_operand.vmem [shape: f32[1,256], index: 10, kind: input, shape index: {}]
  %s11 = inlined_call_operand.vmem [shape: f32[1,256], index: 11, kind: input, shape index: {}]
  %s12 = inlined_call_operand.hbm [shape: bf16[256,128], index: 12, kind: input, shape index: {}]
  %s13 = inlined_call_operand.vmem [shape: f32[1,128], index: 13, kind: input, shape index: {}]
  %s14 = inlined_call_operand.hbm [shape: bf16[128,256], index: 14, kind: input, shape index: {}]
  %s15 = inlined_call_operand.vmem [shape: f32[1,256], index: 15, kind: input, shape index: {}]
  %s16 = inlined_call_operand.vmem [shape: f32[1,256], index: 16, kind: input, shape index: {}]
  %s17 = inlined_call_operand.vmem [shape: f32[1,256], index: 17, kind: input, shape index: {}]
  %s18 = inlined_call_operand.hbm [shape: f32[64,256], index: 18, kind: output, shape index: {}]
  %s19 = sld [smem:[#allocation0]]
  $region129: #{seq_encoder.1} parent=0
    _
  %s21 = ssub.s32 1, %s19
  %s22 = scalar_select 0, %s21, %s19
  $region1: #{seq_encoder.1} parent=0
    #allocation2 [shape = 'u8[655360]{0}', space=vmem, size = 0xa0000, scoped, tag = 'input window, operand 2, single buffered']
    #allocation3 [shape = 's32[2]{0}', space=sflag, size = 0x8, scoped, tag = 'scoped memory for seq_encoder.1']
    #allocation4 [shape = 's32[2]{0}', space=sflag, size = 0x8, scoped, tag = 'scoped memory for seq_encoder.1']
    #allocation5 [shape = 'u8[131072]{0}', space=vmem, size = 0x20000, scoped, tag = 'input window, operand 4, single buffered']
    #allocation6 [shape = 's32[1]{0}', space=sflag, size = 0x4, scoped, tag = 'scoped memory for seq_encoder.1']
    #allocation7 [shape = 'u8[393216]{0}', space=vmem, size = 0x60000, scoped, tag = 'input window, operand 6, single buffered']
    #allocation8 [shape = 'u8[131072]{0}', space=vmem, size = 0x20000, scoped, tag = 'input window, operand 8, single buffered']
    #allocation9 [shape = 's32[1]{0}', space=sflag, size = 0x4, scoped, tag = 'scoped memory for seq_encoder.1']
    #allocation10 [shape = 'u8[65536]{0}', space=vmem, size = 0x10000, scoped, tag = 'input window, operand 12, single buffered']
    #allocation11 [shape = 'u8[65536]{0}', space=vmem, size = 0x10000, scoped, tag = 'input window, operand 14, single buffered']
    #allocation12 [shape = 's32[1]{0}', space=sflag, size = 0x4, scoped, tag = 'scoped memory for seq_encoder.1']
    #allocation13 [shape = 'u8[65536]{0}', space=vmem, size = 0x10000, scoped, tag = 'output window, operand 0']
    %23 = vsyncpa [#allocation3], 0
    %24 = vsyncpa [#allocation6], 0
    %25 = vsyncpa [#allocation9], 0
    %26 = vsyncpa [#allocation12], 0
    %27 = vsyncpa [#allocation4], 0
    %s28 = scalar_lea.sflag [#allocation4], 1
    %29 = vsyncpa %s28, 0
    loop: start=0, step=1, limit=4
    $region2: #{seq_encoder.1} parent=1 // loop_pre_header
      _
    $region3: #{seq_encoder.1} parent=1 // loop_header
      %s31 = sphi 0, %s35
      %p32 = scmp.ge.s32.totalorder %s31, 4
      %s41 = sphi 0, %s43
      %s44 = sphi 0, %s41
      %s45 = sphi 0, %s44
      %s61 = sphi 0, %s45
      %s65 = sphi 0, %s65
      %s67 = sphi 0, %s65
      %s68 = sphi 0, %s67
      %s82 = sphi 0, %s68
      %s86 = sphi 0, %s86
      %s88 = sphi 0, %s86
      %s89 = sphi 0, %s88
      %s103 = sphi 0, %s89
      %s107 = sphi 0, %s107
      %s109 = sphi 0, %s107
      %s110 = sphi 0, %s109
      %s124 = sphi 0, %s110
      %s128 = sphi 0, %s128
      %s130 = sphi 0, %s128
      %s131 = sphi 0, %s130
      %s145 = sphi 0, %s131
      %s149 = sphi 0, %s149
      %s151 = sphi 0, %s149
      %s152 = sphi 0, %s151
      %s166 = sphi 0, %s152
      %s170 = sphi 0, %s170
      %s172 = sphi 0, %s170
      %s173 = sphi 0, %s172
      %s187 = sphi 0, %s173
      %s191 = sphi 0, %s191
      %s193 = sphi 0, %s191
      %s194 = sphi 0, %s193
      %s208 = sphi 0, %s194
      %s212 = sphi 0, %s212
      %s214 = sphi 0, %s212
      %s215 = sphi 0, %s214
      %s229 = sphi 0, %s215
      %s233 = sphi 0, %s233
      %s235 = sphi 0, %s233
      %s236 = sphi 0, %s235
      %s250 = sphi 0, %s236
      %s254 = sphi 0, %s254
      %s256 = sphi 0, %s254
      %s257 = sphi 0, %s256
      %s271 = sphi 0, %s257
      %s275 = sphi 0, %s275
      %s277 = sphi 0, %s275
      %s278 = sphi 0, %s277
      %s292 = sphi 0, %s278
      %s296 = sphi 0, %s296
      %s298 = sphi 0, %s296
      %s299 = sphi 0, %s298
      %s313 = sphi 0, %s299
      %s317 = sphi 0, %s317
      %s319 = sphi 0, %s317
      %s320 = sphi 0, %s319
      %s334 = sphi 0, %s320
      %s338 = sphi 0, %s338
      %s340 = sphi 0, %s338
      %s341 = sphi 0, %s340
      %s355 = sphi 0, %s341
      %s359 = sphi 0, %s359
      %s361 = sphi 0, %s359
      %s362 = sphi 0, %s361
      %s376 = sphi 0, %s362
      %s380 = sphi 0, %s380
      %s382 = sphi 0, %s380
      %s383 = sphi 0, %s382
      %s397 = sphi 0, %s383
      %s401 = sphi 0, %s401
      %s403 = sphi 0, %s401
      %s404 = sphi 0, %s403
      %s418 = sphi 0, %s404
      %s424 = sphi 0, %s426
      %s427 = sphi 0, %s424
      %s428 = sphi 0, %s427
      %s444 = sphi 0, %s428
    $region4: #{seq_encoder.1} parent=1 // loop_header_branch
      %34 = sbr.rel (%p32) target = $region8
    $region5: #{seq_encoder.1} parent=1 // loop_body
      %s36 = ssub.s32 %s31, 1
      %s37 = ssub.s32 %s31, 2
      %s38 = sadd.s32 %s31, 1
      %s39 = ssub.s32 %s31, %s38
      %p40 = scmp.eq.s32.totalorder %s39, 0
      %s42 = sadd.s32 %s41, 1
      %s43 = scalar_select %p40, %s41, %s42
      %p46 = pneg %p40
      %p47 = scmp.eq.s32.totalorder %s31, 1
      %p48 = por %p46, %p47
      %p49 = scmp.ne.s32.totalorder %s41, %s44
      %p50 = scmp.eq.s32.totalorder %s31, 0
      %p51 = por %p49, %p50
      %p52 = scmp.ne.s32.totalorder %s41, %s44
      %p53 = scmp.eq.s32.totalorder %s36, 1
      %p54 = por %p52, %p53
      %p55 = scmp.ne.s32.totalorder %s44, %s45
      %p56 = scmp.eq.s32.totalorder %s36, 0
      %p57 = por %p55, %p56
      %p58 = scmp.ne.s32.totalorder %s44, %s45
      %p59 = scmp.eq.s32.totalorder %s37, 1
      %p60 = por %p58, %p59
      %p62 = scmp.ne.s32.totalorder %s45, %s61
      %p63 = scmp.eq.s32.totalorder %s37, 0
      %p64 = por %p62, %p63
      %s66 = sadd.s32 %s65, 1
      %p69 = scmp.eq.s32.totalorder %s31, 1
      %p70 = scmp.ne.s32.totalorder %s65, %s67
      %p71 = scmp.eq.s32.totalorder %s31, 0
      %p72 = por %p70, %p71
      %p73 = scmp.ne.s32.totalorder %s65, %s67
      %p74 = scmp.eq.s32.totalorder %s36, 1
      %p75 = por %p73, %p74
      %p76 = scmp.ne.s32.totalorder %s67, %s68
      %p77 = scmp.eq.s32.totalorder %s36, 0
      %p78 = por %p76, %p77
      %p79 = scmp.ne.s32.totalorder %s67, %s68
      %p80 = scmp.eq.s32.totalorder %s37, 1
      %p81 = por %p79, %p80
      %p83 = scmp.ne.s32.totalorder %s68, %s82
      %p84 = scmp.eq.s32.totalorder %s37, 0
      %p85 = por %p83, %p84
      %s87 = sadd.s32 %s86, 1
      %p90 = scmp.eq.s32.totalorder %s31, 1
      %p91 = scmp.ne.s32.totalorder %s86, %s88
      %p92 = scmp.eq.s32.totalorder %s31, 0
      %p93 = por %p91, %p92
      %p94 = scmp.ne.s32.totalorder %s86, %s88
      %p95 = scmp.eq.s32.totalorder %s36, 1
      %p96 = por %p94, %p95
      %p97 = scmp.ne.s32.totalorder %s88, %s89
      %p98 = scmp.eq.s32.totalorder %s36, 0
      %p99 = por %p97, %p98
      %p100 = scmp.ne.s32.totalorder %s88, %s89
      %p101 = scmp.eq.s32.totalorder %s37, 1
      %p102 = por %p100, %p101
      %p104 = scmp.ne.s32.totalorder %s89, %s103
      %p105 = scmp.eq.s32.totalorder %s37, 0
      %p106 = por %p104, %p105
      %s108 = sadd.s32 %s107, 1
      %p111 = scmp.eq.s32.totalorder %s31, 1
      %p112 = scmp.ne.s32.totalorder %s107, %s109
      %p113 = scmp.eq.s32.totalorder %s31, 0
      %p114 = por %p112, %p113
      %p115 = scmp.ne.s32.totalorder %s107, %s109
      %p116 = scmp.eq.s32.totalorder %s36, 1
      %p117 = por %p115, %p116
      %p118 = scmp.ne.s32.totalorder %s109, %s110
      %p119 = scmp.eq.s32.totalorder %s36, 0
      %p120 = por %p118, %p119
      %p121 = scmp.ne.s32.totalorder %s109, %s110
      %p122 = scmp.eq.s32.totalorder %s37, 1
      %p123 = por %p121, %p122
      %p125 = scmp.ne.s32.totalorder %s110, %s124
      %p126 = scmp.eq.s32.totalorder %s37, 0
      %p127 = por %p125, %p126
      %s129 = sadd.s32 %s128, 1
      %p132 = scmp.eq.s32.totalorder %s31, 1
      %p133 = scmp.ne.s32.totalorder %s128, %s130
      %p134 = scmp.eq.s32.totalorder %s31, 0
      %p135 = por %p133, %p134
      %p136 = scmp.ne.s32.totalorder %s128, %s130
      %p137 = scmp.eq.s32.totalorder %s36, 1
      %p138 = por %p136, %p137
      %p139 = scmp.ne.s32.totalorder %s130, %s131
      %p140 = scmp.eq.s32.totalorder %s36, 0
      %p141 = por %p139, %p140
      %p142 = scmp.ne.s32.totalorder %s130, %s131
      %p143 = scmp.eq.s32.totalorder %s37, 1
      %p144 = por %p142, %p143
      %p146 = scmp.ne.s32.totalorder %s131, %s145
      %p147 = scmp.eq.s32.totalorder %s37, 0
      %p148 = por %p146, %p147
      %s150 = sadd.s32 %s149, 1
      %p153 = scmp.eq.s32.totalorder %s31, 1
      %p154 = scmp.ne.s32.totalorder %s149, %s151
      %p155 = scmp.eq.s32.totalorder %s31, 0
      %p156 = por %p154, %p155
      %p157 = scmp.ne.s32.totalorder %s149, %s151
      %p158 = scmp.eq.s32.totalorder %s36, 1
      %p159 = por %p157, %p158
      %p160 = scmp.ne.s32.totalorder %s151, %s152
      %p161 = scmp.eq.s32.totalorder %s36, 0
      %p162 = por %p160, %p161
      %p163 = scmp.ne.s32.totalorder %s151, %s152
      %p164 = scmp.eq.s32.totalorder %s37, 1
      %p165 = por %p163, %p164
      %p167 = scmp.ne.s32.totalorder %s152, %s166
      %p168 = scmp.eq.s32.totalorder %s37, 0
      %p169 = por %p167, %p168
      %s171 = sadd.s32 %s170, 1
      %p174 = scmp.eq.s32.totalorder %s31, 1
      %p175 = scmp.ne.s32.totalorder %s170, %s172
      %p176 = scmp.eq.s32.totalorder %s31, 0
      %p177 = por %p175, %p176
      %p178 = scmp.ne.s32.totalorder %s170, %s172
      %p179 = scmp.eq.s32.totalorder %s36, 1
      %p180 = por %p178, %p179
      %p181 = scmp.ne.s32.totalorder %s172, %s173
      %p182 = scmp.eq.s32.totalorder %s36, 0
      %p183 = por %p181, %p182
      %p184 = scmp.ne.s32.totalorder %s172, %s173
      %p185 = scmp.eq.s32.totalorder %s37, 1
      %p186 = por %p184, %p185
      %p188 = scmp.ne.s32.totalorder %s173, %s187
      %p189 = scmp.eq.s32.totalorder %s37, 0
      %p190 = por %p188, %p189
      %s192 = sadd.s32 %s191, 1
      %p195 = scmp.eq.s32.totalorder %s31, 1
      %p196 = scmp.ne.s32.totalorder %s191, %s193
      %p197 = scmp.eq.s32.totalorder %s31, 0
      %p198 = por %p196, %p197
      %p199 = scmp.ne.s32.totalorder %s191, %s193
      %p200 = scmp.eq.s32.totalorder %s36, 1
      %p201 = por %p199, %p200
      %p202 = scmp.ne.s32.totalorder %s193, %s194
      %p203 = scmp.eq.s32.totalorder %s36, 0
      %p204 = por %p202, %p203
      %p205 = scmp.ne.s32.totalorder %s193, %s194
      %p206 = scmp.eq.s32.totalorder %s37, 1
      %p207 = por %p205, %p206
      %p209 = scmp.ne.s32.totalorder %s194, %s208
      %p210 = scmp.eq.s32.totalorder %s37, 0
      %p211 = por %p209, %p210
      %s213 = sadd.s32 %s212, 1
      %p216 = scmp.eq.s32.totalorder %s31, 1
      %p217 = scmp.ne.s32.totalorder %s212, %s214
      %p218 = scmp.eq.s32.totalorder %s31, 0
      %p219 = por %p217, %p218
      %p220 = scmp.ne.s32.totalorder %s212, %s214
      %p221 = scmp.eq.s32.totalorder %s36, 1
      %p222 = por %p220, %p221
      %p223 = scmp.ne.s32.totalorder %s214, %s215
      %p224 = scmp.eq.s32.totalorder %s36, 0
      %p225 = por %p223, %p224
      %p226 = scmp.ne.s32.totalorder %s214, %s215
      %p227 = scmp.eq.s32.totalorder %s37, 1
      %p228 = por %p226, %p227
      %p230 = scmp.ne.s32.totalorder %s215, %s229
      %p231 = scmp.eq.s32.totalorder %s37, 0
      %p232 = por %p230, %p231
      %s234 = sadd.s32 %s233, 1
      %p237 = scmp.eq.s32.totalorder %s31, 1
      %p238 = scmp.ne.s32.totalorder %s233, %s235
      %p239 = scmp.eq.s32.totalorder %s31, 0
      %p240 = por %p238, %p239
      %p241 = scmp.ne.s32.totalorder %s233, %s235
      %p242 = scmp.eq.s32.totalorder %s36, 1
      %p243 = por %p241, %p242
      %p244 = scmp.ne.s32.totalorder %s235, %s236
      %p245 = scmp.eq.s32.totalorder %s36, 0
      %p246 = por %p244, %p245
      %p247 = scmp.ne.s32.totalorder %s235, %s236
      %p248 = scmp.eq.s32.totalorder %s37, 1
      %p249 = por %p247, %p248
      %p251 = scmp.ne.s32.totalorder %s236, %s250
      %p252 = scmp.eq.s32.totalorder %s37, 0
      %p253 = por %p251, %p252
      %s255 = sadd.s32 %s254, 1
      %p258 = scmp.eq.s32.totalorder %s31, 1
      %p259 = scmp.ne.s32.totalorder %s254, %s256
      %p260 = scmp.eq.s32.totalorder %s31, 0
      %p261 = por %p259, %p260
      %p262 = scmp.ne.s32.totalorder %s254, %s256
      %p263 = scmp.eq.s32.totalorder %s36, 1
      %p264 = por %p262, %p263
      %p265 = scmp.ne.s32.totalorder %s256, %s257
      %p266 = scmp.eq.s32.totalorder %s36, 0
      %p267 = por %p265, %p266
      %p268 = scmp.ne.s32.totalorder %s256, %s257
      %p269 = scmp.eq.s32.totalorder %s37, 1
      %p270 = por %p268, %p269
      %p272 = scmp.ne.s32.totalorder %s257, %s271
      %p273 = scmp.eq.s32.totalorder %s37, 0
      %p274 = por %p272, %p273
      %s276 = sadd.s32 %s275, 1
      %p279 = scmp.eq.s32.totalorder %s31, 1
      %p280 = scmp.ne.s32.totalorder %s275, %s277
      %p281 = scmp.eq.s32.totalorder %s31, 0
      %p282 = por %p280, %p281
      %p283 = scmp.ne.s32.totalorder %s275, %s277
      %p284 = scmp.eq.s32.totalorder %s36, 1
      %p285 = por %p283, %p284
      %p286 = scmp.ne.s32.totalorder %s277, %s278
      %p287 = scmp.eq.s32.totalorder %s36, 0
      %p288 = por %p286, %p287
      %p289 = scmp.ne.s32.totalorder %s277, %s278
      %p290 = scmp.eq.s32.totalorder %s37, 1
      %p291 = por %p289, %p290
      %p293 = scmp.ne.s32.totalorder %s278, %s292
      %p294 = scmp.eq.s32.totalorder %s37, 0
      %p295 = por %p293, %p294
      %s297 = sadd.s32 %s296, 1
      %p300 = scmp.eq.s32.totalorder %s31, 1
      %p301 = scmp.ne.s32.totalorder %s296, %s298
      %p302 = scmp.eq.s32.totalorder %s31, 0
      %p303 = por %p301, %p302
      %p304 = scmp.ne.s32.totalorder %s296, %s298
      %p305 = scmp.eq.s32.totalorder %s36, 1
      %p306 = por %p304, %p305
      %p307 = scmp.ne.s32.totalorder %s298, %s299
      %p308 = scmp.eq.s32.totalorder %s36, 0
      %p309 = por %p307, %p308
      %p310 = scmp.ne.s32.totalorder %s298, %s299
      %p311 = scmp.eq.s32.totalorder %s37, 1
      %p312 = por %p310, %p311
      %p314 = scmp.ne.s32.totalorder %s299, %s313
      %p315 = scmp.eq.s32.totalorder %s37, 0
      %p316 = por %p314, %p315
      %s318 = sadd.s32 %s317, 1
      %p321 = scmp.eq.s32.totalorder %s31, 1
      %p322 = scmp.ne.s32.totalorder %s317, %s319
      %p323 = scmp.eq.s32.totalorder %s31, 0
      %p324 = por %p322, %p323
      %p325 = scmp.ne.s32.totalorder %s317, %s319
      %p326 = scmp.eq.s32.totalorder %s36, 1
      %p327 = por %p325, %p326
      %p328 = scmp.ne.s32.totalorder %s319, %s320
      %p329 = scmp.eq.s32.totalorder %s36, 0
      %p330 = por %p328, %p329
      %p331 = scmp.ne.s32.totalorder %s319, %s320
      %p332 = scmp.eq.s32.totalorder %s37, 1
      %p333 = por %p331, %p332
      %p335 = scmp.ne.s32.totalorder %s320, %s334
      %p336 = scmp.eq.s32.totalorder %s37, 0
      %p337 = por %p335, %p336
      %s339 = sadd.s32 %s338, 1
      %p342 = scmp.eq.s32.totalorder %s31, 1
      %p343 = scmp.ne.s32.totalorder %s338, %s340
      %p344 = scmp.eq.s32.totalorder %s31, 0
      %p345 = por %p343, %p344
      %p346 = scmp.ne.s32.totalorder %s338, %s340
      %p347 = scmp.eq.s32.totalorder %s36, 1
      %p348 = por %p346, %p347
      %p349 = scmp.ne.s32.totalorder %s340, %s341
      %p350 = scmp.eq.s32.totalorder %s36, 0
      %p351 = por %p349, %p350
      %p352 = scmp.ne.s32.totalorder %s340, %s341
      %p353 = scmp.eq.s32.totalorder %s37, 1
      %p354 = por %p352, %p353
      %p356 = scmp.ne.s32.totalorder %s341, %s355
      %p357 = scmp.eq.s32.totalorder %s37, 0
      %p358 = por %p356, %p357
      %s360 = sadd.s32 %s359, 1
      %p363 = scmp.eq.s32.totalorder %s31, 1
      %p364 = scmp.ne.s32.totalorder %s359, %s361
      %p365 = scmp.eq.s32.totalorder %s31, 0
      %p366 = por %p364, %p365
      %p367 = scmp.ne.s32.totalorder %s359, %s361
      %p368 = scmp.eq.s32.totalorder %s36, 1
      %p369 = por %p367, %p368
      %p370 = scmp.ne.s32.totalorder %s361, %s362
      %p371 = scmp.eq.s32.totalorder %s36, 0
      %p372 = por %p370, %p371
      %p373 = scmp.ne.s32.totalorder %s361, %s362
      %p374 = scmp.eq.s32.totalorder %s37, 1
      %p375 = por %p373, %p374
      %p377 = scmp.ne.s32.totalorder %s362, %s376
      %p378 = scmp.eq.s32.totalorder %s37, 0
      %p379 = por %p377, %p378
      %s381 = sadd.s32 %s380, 1
      %p384 = scmp.eq.s32.totalorder %s31, 1
      %p385 = scmp.ne.s32.totalorder %s380, %s382
      %p386 = scmp.eq.s32.totalorder %s31, 0
      %p387 = por %p385, %p386
      %p388 = scmp.ne.s32.totalorder %s380, %s382
      %p389 = scmp.eq.s32.totalorder %s36, 1
      %p390 = por %p388, %p389
      %p391 = scmp.ne.s32.totalorder %s382, %s383
      %p392 = scmp.eq.s32.totalorder %s36, 0
      %p393 = por %p391, %p392
      %p394 = scmp.ne.s32.totalorder %s382, %s383
      %p395 = scmp.eq.s32.totalorder %s37, 1
      %p396 = por %p394, %p395
      %p398 = scmp.ne.s32.totalorder %s383, %s397
      %p399 = scmp.eq.s32.totalorder %s37, 0
      %p400 = por %p398, %p399
      %s402 = sadd.s32 %s401, 1
      %p405 = scmp.eq.s32.totalorder %s31, 1
      %p406 = scmp.ne.s32.totalorder %s401, %s403
      %p407 = scmp.eq.s32.totalorder %s31, 0
      %p408 = por %p406, %p407
      %p409 = scmp.ne.s32.totalorder %s401, %s403
      %p410 = scmp.eq.s32.totalorder %s36, 1
      %p411 = por %p409, %p410
      %p412 = scmp.ne.s32.totalorder %s403, %s404
      %p413 = scmp.eq.s32.totalorder %s36, 0
      %p414 = por %p412, %p413
      %p415 = scmp.ne.s32.totalorder %s403, %s404
      %p416 = scmp.eq.s32.totalorder %s37, 1
      %p417 = por %p415, %p416
      %p419 = scmp.ne.s32.totalorder %s404, %s418
      %p420 = scmp.eq.s32.totalorder %s37, 0
      %p421 = por %p419, %p420
      %s422 = ssub.s32 %s31, %s38
      %p423 = scmp.eq.s32.totalorder %s422, 0
      %s425 = sadd.s32 %s424, 1
      %s426 = scalar_select %p423, %s424, %s425
      %p429 = pneg %p423
      %p430 = scmp.eq.s32.totalorder %s31, 1
      %p431 = por %p429, %p430
      %p432 = scmp.ne.s32.totalorder %s424, %s427
      %p433 = scmp.eq.s32.totalorder %s31, 0
      %p434 = por %p432, %p433
      %p435 = scmp.ne.s32.totalorder %s424, %s427
      %p436 = scmp.eq.s32.totalorder %s36, 1
      %p437 = por %p435, %p436
      %p438 = scmp.ne.s32.totalorder %s427, %s428
      %p439 = scmp.eq.s32.totalorder %s36, 0
      %p440 = por %p438, %p439
      %p441 = scmp.ne.s32.totalorder %s427, %s428
      %p442 = scmp.eq.s32.totalorder %s37, 1
      %p443 = por %p441, %p442
      %p445 = scmp.ne.s32.totalorder %s428, %s444
      %p446 = scmp.eq.s32.totalorder %s37, 0
      %p447 = por %p445, %p446
      %p448 = scmp.le.s32.totalorder 1, %s31
      %p449 = scmp.lt.s32.totalorder %s31, 3
      %p450 = pnand %p448, %p449
      %p451 = pneg %p450
      // Predicated region
      $region9: #{seq_encoder.1} parent=5 // pred_check
        _
      $region10: #{seq_encoder.1} parent=5 // pred_check_branch
        %453 = sbr.rel (%p450) target = $region12
      $region11: #{seq_encoder.1} parent=5 // pred_region
        %s454 = ssub.s32 %s31, 1
        // Predicated region
        $region13: #{seq_encoder.1} parent=11 // pred_check
          %p455 = pneg %p78
        $region14: #{seq_encoder.1} parent=11 // pred_check_branch
          %457 = sbr.rel (%p455) target = $region16
        $region15: #{seq_encoder.1} parent=11 // pred_region
          _
        $region16: #{seq_encoder.1} parent=11 // pred_fallthru
          _
        // Predicated region
        $region17: #{seq_encoder.1} parent=11 // pred_check
          %p458 = pneg %p99
        $region18: #{seq_encoder.1} parent=11 // pred_check_branch
          %460 = sbr.rel (%p458) target = $region20
        $region19: #{seq_encoder.1} parent=11 // pred_region
          %s462 = ssub.s32 20480, 20480
          %463 = vsyncadd [#allocation3], %s462
          %s464 = sshll.u32 [#allocation2], 4
          %s465 = int_to_ptr.vmem [resolvable:$true] %s464
          %470 = dma.hbm_to_vmem [thread:$0]  %s2, 20480, %s465, [#allocation3], 128, 128, 8
        $region20: #{seq_encoder.1} parent=11 // pred_fallthru
          _
        // Predicated region
        $region21: #{seq_encoder.1} parent=11 // pred_check
          %p471 = pneg %p120
        $region22: #{seq_encoder.1} parent=11 // pred_check_branch
          %473 = sbr.rel (%p471) target = $region24
        $region23: #{seq_encoder.1} parent=11 // pred_region
          _
        $region24: #{seq_encoder.1} parent=11 // pred_fallthru
          _
        // Predicated region
        $region25: #{seq_encoder.1} parent=11 // pred_check
          %p474 = pneg %p141
        $region26: #{seq_encoder.1} parent=11 // pred_check_branch
          %476 = sbr.rel (%p474) target = $region28
        $region27: #{seq_encoder.1} parent=11 // pred_region
          %s478 = ssub.s32 4096, 4096
          %479 = vsyncadd [#allocation6], %s478
          %s480 = sshll.u32 [#allocation5], 4
          %s481 = int_to_ptr.vmem [resolvable:$true] %s480
          %486 = dma.hbm_to_vmem [thread:$0]  %s4, 4096, %s481, [#allocation6], 128, 128, 8
        $region28: #{seq_encoder.1} parent=11 // pred_fallthru
          _
        // Predicated region
        $region29: #{seq_encoder.1} parent=11 // pred_check
          %p487 = pneg %p162
        $region30: #{seq_encoder.1} parent=11 // pred_check_branch
          %489 = sbr.rel (%p487) target = $region32
        $region31: #{seq_encoder.1} parent=11 // pred_region
          _
        $region32: #{seq_encoder.1} parent=11 // pred_fallthru
          _
        // Predicated region
        $region33: #{seq_encoder.1} parent=11 // pred_check
          %p490 = pneg %p183
        $region34: #{seq_encoder.1} parent=11 // pred_check_branch
          %492 = sbr.rel (%p490) target = $region36
        $region35: #{seq_encoder.1} parent=11 // pred_region
          %s494 = ssub.s32 12288, 12288
          %495 = vsyncadd [#allocation6], %s494
          %s496 = sshll.u32 [#allocation7], 4
          %s497 = int_to_ptr.vmem [resolvable:$true] %s496
          %502 = dma.hbm_to_vmem [thread:$0]  %s6, 12288, %s497, [#allocation6], 384, 384, 24
        $region36: #{seq_encoder.1} parent=11 // pred_fallthru
          _
        // Predicated region
        $region37: #{seq_encoder.1} parent=11 // pred_check
          %p503 = pneg %p204
        $region38: #{seq_encoder.1} parent=11 // pred_check_branch
          %505 = sbr.rel (%p503) target = $region40
        $region39: #{seq_encoder.1} parent=11 // pred_region
          _
        $region40: #{seq_encoder.1} parent=11 // pred_fallthru
          _
        // Predicated region
        $region41: #{seq_encoder.1} parent=11 // pred_check
          %p506 = pneg %p225
        $region42: #{seq_encoder.1} parent=11 // pred_check_branch
          %508 = sbr.rel (%p506) target = $region44
        $region43: #{seq_encoder.1} parent=11 // pred_region
          %s510 = ssub.s32 4096, 4096
          %511 = vsyncadd [#allocation9], %s510
          %s512 = sshll.u32 [#allocation8], 4
          %s513 = int_to_ptr.vmem [resolvable:$true] %s512
          %518 = dma.hbm_to_vmem [thread:$0]  %s8, 4096, %s513, [#allocation9], 128, 128, 8
        $region44: #{seq_encoder.1} parent=11 // pred_fallthru
          _
        // Predicated region
        $region45: #{seq_encoder.1} parent=11 // pred_check
          %p519 = pneg %p246
        $region46: #{seq_encoder.1} parent=11 // pred_check_branch
          %521 = sbr.rel (%p519) target = $region48
        $region47: #{seq_encoder.1} parent=11 // pred_region
          _
        $region48: #{seq_encoder.1} parent=11 // pred_fallthru
          _
        // Predicated region
        $region49: #{seq_encoder.1} parent=11 // pred_check
          %p522 = pneg %p267
        $region50: #{seq_encoder.1} parent=11 // pred_check_branch
          %524 = sbr.rel (%p522) target = $region52
        $region51: #{seq_encoder.1} parent=11 // pred_region
          _
        $region52: #{seq_encoder.1} parent=11 // pred_fallthru
          _
        // Predicated region
        $region53: #{seq_encoder.1} parent=11 // pred_check
          %p525 = pneg %p288
        $region54: #{seq_encoder.1} parent=11 // pred_check_branch
          %527 = sbr.rel (%p525) target = $region56
        $region55: #{seq_encoder.1} parent=11 // pred_region
          _
        $region56: #{seq_encoder.1} parent=11 // pred_fallthru
          _
        // Predicated region
        $region57: #{seq_encoder.1} parent=11 // pred_check
          %p528 = pneg %p309
        $region58: #{seq_encoder.1} parent=11 // pred_check_branch
          %530 = sbr.rel (%p528) target = $region60
        $region59: #{seq_encoder.1} parent=11 // pred_region
          %s532 = ssub.s32 2048, 2048
          %533 = vsyncadd [#allocation9], %s532
          %s534 = sshll.u32 [#allocation10], 4
          %s535 = int_to_ptr.vmem [resolvable:$true] %s534
          %540 = dma.hbm_to_vmem [thread:$0]  %s12, 2048, %s535, [#allocation9], 64, 64, 4
        $region60: #{seq_encoder.1} parent=11 // pred_fallthru
          _
        // Predicated region
        $region61: #{seq_encoder.1} parent=11 // pred_check
          %p541 = pneg %p330
        $region62: #{seq_encoder.1} parent=11 // pred_check_branch
          %543 = sbr.rel (%p541) target = $region64
        $region63: #{seq_encoder.1} parent=11 // pred_region
          _
        $region64: #{seq_encoder.1} parent=11 // pred_fallthru
          _
        // Predicated region
        $region65: #{seq_encoder.1} parent=11 // pred_check
          %p544 = pneg %p351
        $region66: #{seq_encoder.1} parent=11 // pred_check_branch
          %546 = sbr.rel (%p544) target = $region68
        $region67: #{seq_encoder.1} parent=11 // pred_region
          %s548 = ssub.s32 2048, 2048
          %549 = vsyncadd [#allocation12], %s548
          %s550 = sshll.u32 [#allocation11], 4
          %s551 = int_to_ptr.vmem [resolvable:$true] %s550
          %556 = dma.hbm_to_vmem [thread:$0]  %s14, 2048, %s551, [#allocation12], 128, 128, 8
        $region68: #{seq_encoder.1} parent=11 // pred_fallthru
          _
        // Predicated region
        $region69: #{seq_encoder.1} parent=11 // pred_check
          %p557 = pneg %p372
        $region70: #{seq_encoder.1} parent=11 // pred_check_branch
          %559 = sbr.rel (%p557) target = $region72
        $region71: #{seq_encoder.1} parent=11 // pred_region
          _
        $region72: #{seq_encoder.1} parent=11 // pred_fallthru
          _
        // Predicated region
        $region73: #{seq_encoder.1} parent=11 // pred_check
          %p560 = pneg %p393
        $region74: #{seq_encoder.1} parent=11 // pred_check_branch
          %562 = sbr.rel (%p560) target = $region76
        $region75: #{seq_encoder.1} parent=11 // pred_region
          _
        $region76: #{seq_encoder.1} parent=11 // pred_fallthru
          _
        // Predicated region
        $region77: #{seq_encoder.1} parent=11 // pred_check
          %p563 = pneg %p414
        $region78: #{seq_encoder.1} parent=11 // pred_check_branch
          %565 = sbr.rel (%p563) target = $region80
        $region79: #{seq_encoder.1} parent=11 // pred_region
          _
        $region80: #{seq_encoder.1} parent=11 // pred_fallthru
          _
      $region12: #{seq_encoder.1} parent=5 // pred_fallthru
        _
      %p566 = scmp.lt.s32.totalorder %s31, 2
      // Predicated region
      $region81: #{seq_encoder.1} parent=5 // pred_check
        %p567 = pneg %p566
      $region82: #{seq_encoder.1} parent=5 // pred_check_branch
        %569 = sbr.rel (%p567) target = $region84
      $region83: #{seq_encoder.1} parent=5 // pred_region
        // Predicated region
        $region85: #{seq_encoder.1} parent=83 // pred_check
          %p570 = pneg %p51
        $region86: #{seq_encoder.1} parent=83 // pred_check_branch
          %572 = sbr.rel (%p570) target = $region88
        $region87: #{seq_encoder.1} parent=83 // pred_region
          %s573 = smul.u32 4, %s31
          %p574 = scmp.lt.s32.totalorder %s573, 7
          %s575 = scalar_select %p574, %s573, 7
          %s576 = smul.addr %s575, 8
          %s577 = scalar_lea.vmem %s0, %s576
          %s578 = smul.u32 4, %s31
        $region88: #{seq_encoder.1} parent=83 // pred_fallthru
          _
      $region84: #{seq_encoder.1} parent=5 // pred_fallthru
        _
      %p579 = scmp.le.s32.totalorder 1, %s31
      %p580 = scmp.lt.s32.totalorder %s31, 3
      %p581 = pnand %p579, %p580
      %p582 = pneg %p581
      // Predicated region
      $region89: #{seq_encoder.1} parent=5 // pred_check
        _
      $region90: #{seq_encoder.1} parent=5 // pred_check_branch
        %584 = sbr.rel (%p581) target = $region92
      $region91: #{seq_encoder.1} parent=5 // pred_region
        %s585 = ssub.s32 %s31, 1
        // Predicated region
        $region93: #{seq_encoder.1} parent=91 // pred_check
          %p586 = pneg %p99
        $region94: #{seq_encoder.1} parent=91 // pred_check_branch
          %588 = sbr.rel (%p586) target = $region96
        $region95: #{seq_encoder.1} parent=91 // pred_region
          %589 = dma.done [#allocation3], 20480
        $region96: #{seq_encoder.1} parent=91 // pred_fallthru
          _
        // Predicated region
        $region97: #{seq_encoder.1} parent=91 // pred_check
          %p590 = pneg %p141
        $region98: #{seq_encoder.1} parent=91 // pred_check_branch
          %592 = sbr.rel (%p590) target = $region100
        $region99: #{seq_encoder.1} parent=91 // pred_region
          %593 = dma.done [#allocation6], 4096
        $region100: #{seq_encoder.1} parent=91 // pred_fallthru
          _
        // Predicated region
        $region101: #{seq_encoder.1} parent=91 // pred_check
          %p594 = pneg %p183
        $region102: #{seq_encoder.1} parent=91 // pred_check_branch
          %596 = sbr.rel (%p594) target = $region104
        $region103: #{seq_encoder.1} parent=91 // pred_region
          %597 = dma.done [#allocation6], 12288
        $region104: #{seq_encoder.1} parent=91 // pred_fallthru
          _
        // Predicated region
        $region105: #{seq_encoder.1} parent=91 // pred_check
          %p598 = pneg %p225
        $region106: #{seq_encoder.1} parent=91 // pred_check_branch
          %600 = sbr.rel (%p598) target = $region108
        $region107: #{seq_encoder.1} parent=91 // pred_region
          %601 = dma.done [#allocation9], 4096
        $region108: #{seq_encoder.1} parent=91 // pred_fallthru
          _
        // Predicated region
        $region109: #{seq_encoder.1} parent=91 // pred_check
          %p602 = pneg %p309
        $region110: #{seq_encoder.1} parent=91 // pred_check_branch
          %604 = sbr.rel (%p602) target = $region112
        $region111: #{seq_encoder.1} parent=91 // pred_region
          %605 = dma.done [#allocation9], 2048
        $region112: #{seq_encoder.1} parent=91 // pred_fallthru
          _
        // Predicated region
        $region113: #{seq_encoder.1} parent=91 // pred_check
          %p606 = pneg %p351
        $region114: #{seq_encoder.1} parent=91 // pred_check_branch
          %608 = sbr.rel (%p606) target = $region116
        $region115: #{seq_encoder.1} parent=91 // pred_region
          %609 = dma.done [#allocation12], 2048
        $region116: #{seq_encoder.1} parent=91 // pred_fallthru
          _
        %s610 = smul.u32 4, %s36
        %p611 = scmp.lt.s32.totalorder %s610, 7
        %s612 = scalar_select %p611, %s610, 7
        %s613 = smul.addr %s612, 8
        %s614 = scalar_lea.vmem %s0, %s613
        %p615 = pneg %p57
        %p616 = pneg %p54
        %p617 = pneg %p78
        %p618 = pneg %p75
        %p619 = pneg %p99
        %p620 = pneg %p96
        %p621 = pneg %p120
        %p622 = pneg %p117
        %p623 = pneg %p141
        %p624 = pneg %p138
        %p625 = pneg %p162
        %p626 = pneg %p159
        %p627 = pneg %p183
        %p628 = pneg %p180
        %p629 = pneg %p204
        %p630 = pneg %p201
        %p631 = pneg %p225
        %p632 = pneg %p222
        %p633 = pneg %p246
        %p634 = pneg %p243
        %p635 = pneg %p267
        %p636 = pneg %p264
        %p637 = pneg %p288
        %p638 = pneg %p285
        %p639 = pneg %p309
        %p640 = pneg %p306
        %p641 = pneg %p330
        %p642 = pneg %p327
        %p643 = pneg %p351
        %p644 = pneg %p348
        %p645 = pneg %p372
        %p646 = pneg %p369
        %p647 = pneg %p393
        %p648 = pneg %p390
        %p649 = pneg %p414
        %p650 = pneg %p411
        %p651 = pneg %p440
        %p652 = pneg %p437
        %s653 = sand.u32 %s427, 1
        %s654 = scalar_lea.sflag [#allocation4], %s653
        %s655 = sand.u32 %s427, 1
        %s656 = smul.addr %s655, 64
        %s657 = scalar_lea.vmem [#allocation13], %s656
        %s658 = smul.u32 4, %s36
        %p659 = scmp.lt.s32.totalorder %s658, 7
        %s660 = scalar_select %p659, %s658, 7
        %s661 = smul.addr %s660, 8
        %s662 = scalar_lea.vmem %s0, %s661
        %s663 = smul.u32 4, %s36
        %s664 = smul.u32 4, %s36
        %v666 = vld [vmem:[%s662] sm:$0xff]
        %v667 = vld [vmem:[%s662 + $0x8] sm:$0xff]
        %v668 = vld [vmem:[%s662 + $0x10] sm:$0xff]
        %v669 = vld [vmem:[%s662 + $0x18] sm:$0xff]
        %v670 = vlaneseq
        %v671 = vand.u32 %v670, 127
        %672 = vset.pattern.permute.xlu0 0
        %673 = vperm.xlu0 %672, %v666
        %v674 = vpop.permute.xlu0 %673
        %675 = vset.pattern.permute.xlu0 0
        %676 = vperm.xlu0 %675, %v667
        %v677 = vpop.permute.xlu0 %676
        %678 = vset.pattern.permute.xlu0 0
        %679 = vperm.xlu0 %678, %v668
        %v680 = vpop.permute.xlu0 %679
        %681 = vset.pattern.permute.xlu0 0
        %682 = vperm.xlu0 %681, %v669
        %v683 = vpop.permute.xlu0 %682
        %vm684 = vcmp.eq.s32.totalorder %v674, %v671
        %vm685 = vcmp.eq.s32.totalorder %v677, %v671
        %vm686 = vcmp.eq.s32.totalorder %v680, %v671
        %vm687 = vcmp.eq.s32.totalorder %v683, %v671
        %v688 = vsel %vm684, 1.0, 0.0
        %v689 = vsel %vm685, 1.0, 0.0
        %v690 = vsel %vm686, 1.0, 0.0
        %v691 = vsel %vm687, 1.0, 0.0
        %v692 = vpack.c.bf16 %v689, %v688
        %v693 = vpack.c.bf16 %v691, %v690
        %v694 = vld [vmem:[%s1] sm:$0xff]
        %v695 = vld [vmem:[%s1 + $0x8] sm:$0xff]
        %v696 = vld [vmem:[%s1 + $0x10] sm:$0xff]
        %v697 = vld [vmem:[%s1 + $0x18] sm:$0xff]
        %v702 = vunpack.c.l.b16 %v694
        %v703 = vunpack.c.h.b16 %v694
        %v704 = vunpack.c.l.b16 %v695
        %v705 = vunpack.c.h.b16 %v695
        %v706 = vunpack.c.l.b16 %v696
        %v707 = vunpack.c.h.b16 %v696
        %v708 = vunpack.c.l.b16 %v697
        %v709 = vunpack.c.h.b16 %v697
        %v710 = vpack.c.b16 %v704, %v702
        %v711 = vpack.c.b16 %v705, %v703
        %v712 = vpack.c.b16 %v708, %v706
        %v713 = vpack.c.b16 %v709, %v707
        %vm718 = vcmask 261120
        %v720 = vsel %vm718, %v692, 0
        %v723 = vsel %vm718, %v693, 0
        %725 = vmatprep.subr.bf16.mxu0 %v711
        %726 = vmatpush1.bf16.msra.mxu0 %v710
        %727 = vmatprep.subr.bf16.mxu0 %v713
        %728 = vmatpush1.bf16.msra.mxu0 %v712
        %729 = vmatprep.subr.bf16.mxu0 0
        %730 = vmatpush1.bf16.msra.mxu0 0
        %731 = vmatprep.subr.bf16.mxu0 0
        %732 = vmatpush1.bf16.msra.mxu0 0
        %733 = vmatprep.subr.bf16.mxu0 0
        %734 = vmatpush1.bf16.msra.mxu0 0
        %735 = vmatprep.subr.bf16.mxu0 0
        %736 = vmatpush1.bf16.msra.mxu0 0
        %737 = vmatprep.subr.bf16.mxu0 0
        %738 = vmatpush1.bf16.msra.mxu0 0
        %739 = vmatprep.subr.bf16.mxu0 0
        %740 = vmatpush1.bf16.msra.mxu0 0
        %741 = vmatprep.subr.bf16.mxu0 0
        %742 = vmatpush1.bf16.msra.mxu0 0
        %743 = vmatprep.subr.bf16.mxu0 0
        %744 = vmatpush1.bf16.msra.mxu0 0
        %745 = vmatprep.subr.bf16.mxu0 0
        %746 = vmatpush1.bf16.msra.mxu0 0
        %747 = vmatprep.subr.bf16.mxu0 0
        %748 = vmatpush1.bf16.msra.mxu0 0
        %749 = vmatprep.subr.bf16.mxu0 0
        %750 = vmatpush1.bf16.msra.mxu0 0
        %751 = vmatprep.subr.bf16.mxu0 0
        %752 = vmatpush1.bf16.msra.mxu0 0
        %753 = vmatprep.subr.bf16.mxu0 0
        %754 = vmatpush1.bf16.msra.mxu0 0
        %755 = vmatprep.subr.bf16.mxu0 0
        %756 = vmatpush1.bf16.msra.mxu0 0
        %757 = vmatprep.mubr.bf16.mxu0 0
        %758 = vmatmul.mubr.bf16.gmra.mrb[0].mxu0 %v720
        %v759 = vpop.f32.mrb[0].mxu0
        %v760 = vadd.f32 0.0, %v759
        %v761 = vpop.f32.mrb[0].mxu0
        %v762 = vadd.f32 0.0, %v761
        %v763 = vpop.f32.mrb[0].mxu0
        %v764 = vadd.f32 0.0, %v763
        %v765 = vpop.f32.mrb[0].mxu0
        %v766 = vadd.f32 0.0, %v765
        %767 = vmatprep.mubr.bf16.mxu0 0
        %768 = vmatmul.mubr.bf16.gmra.mrb[0].mxu0 %v723
        %v769 = vpop.f32.mrb[0].mxu0
        %v770 = vadd.f32 0.0, %v769
        %v771 = vpop.f32.mrb[0].mxu0
        %v772 = vadd.f32 0.0, %v771
        %v773 = vpop.f32.mrb[0].mxu0
        %v774 = vadd.f32 0.0, %v773
        %v775 = vpop.f32.mrb[0].mxu0
        %v776 = vadd.f32 0.0, %v775
        %777 = vdwg.mxu0
        %v778 = vlaneseq
        %v779 = vshrl.u32 %v778, 7
        %v780 = vadd.s32 %v779, 8
        %v781 = vadd.s32 %v779, 16
        %v782 = vadd.s32 %v779, 24
        %vm783 = vcmp.lt.s32.totalorder %v779, 0
        %v784 = vsub.s32 0, %v779
        %v785 = vsel %vm783, %v784, %v779
        %v786 = vshrl.u32 %v785, 4
        %v787 = vand.u32 %v785, 15
        %v788 = vsub.s32 0, %v787
        %v789 = vsel %vm783, %v788, %v787
        %vm790 = vcmp.lt.s32.totalorder %v780, 0
        %v791 = vsub.s32 0, %v780
        %v792 = vsel %vm790, %v791, %v780
        %v793 = vshrl.u32 %v792, 4
        %v794 = vand.u32 %v792, 15
        %v795 = vsub.s32 0, %v794
        %v796 = vsel %vm790, %v795, %v794
        %vm797 = vcmp.lt.s32.totalorder %v781, 0
        %v798 = vsub.s32 0, %v781
        %v799 = vsel %vm797, %v798, %v781
        %v800 = vshrl.u32 %v799, 4
        %v801 = vand.u32 %v799, 15
        %v802 = vsub.s32 0, %v801
        %v803 = vsel %vm797, %v802, %v801
        %vm804 = vcmp.lt.s32.totalorder %v782, 0
        %v805 = vsub.s32 0, %v782
        %v806 = vsel %vm804, %v805, %v782
        %v807 = vshrl.u32 %v806, 4
        %v808 = vand.u32 %v806, 15
        %v809 = vsub.s32 0, %v808
        %v810 = vsel %vm804, %v809, %v808
        %vm811 = vcmp.ne.s32.totalorder %v789, 0
        %vm812 = vcmp.ne.s32.totalorder %v796, 0
        %vm813 = vcmp.ne.s32.totalorder %v803, 0
        %vm814 = vcmp.ne.s32.totalorder %v810, 0
        %vm815 = vcmp.lt.s32.totalorder %v789, 0
        %vm816 = vcmp.lt.s32.totalorder %v796, 0
        %vm817 = vcmp.lt.s32.totalorder %v803, 0
        %vm818 = vcmp.lt.s32.totalorder %v810, 0
        %vm819 = vmand %vm815, %vm811
        %vm820 = vmand %vm816, %vm812
        %vm821 = vmand %vm817, %vm813
        %vm822 = vmand %vm818, %vm814
        %v823 = vadd.s32 %v789, 16
        %v824 = vadd.s32 %v796, 16
        %v825 = vadd.s32 %v803, 16
        %v826 = vadd.s32 %v810, 16
        %v827 = vsel %vm819, %v823, %v789
        %v828 = vsel %vm820, %v824, %v796
        %v829 = vsel %vm821, %v825, %v803
        %v830 = vsel %vm822, %v826, %v810
        %v831 = vrot.slane %v760, 6
        %v832 = vrot.slane %v762, 6
        %v833 = vrot.slane %v764, 6
        %v834 = vrot.slane %v766, 6
        %v835 = vrot.slane %v770, 6
        %v836 = vrot.slane %v772, 6
        %v837 = vrot.slane %v774, 6
        %v838 = vrot.slane %v776, 6
        %vm839 = vcmp.lt.s32.totalorder %v779, 2
        %v840 = vsel %vm839, %v835, %v837
        %v841 = vsel %vm839, %v836, %v838
        %v842 = vsel %vm839, %v833, %v835
        %v843 = vsel %vm839, %v834, %v836
        %v844 = vsel %vm839, %v831, %v833
        %v845 = vsel %vm839, %v832, %v834
        %v846 = vsel %vm839, %v837, %v831
        %v847 = vsel %vm839, %v838, %v832
        %v848 = vadd.s32 %v827, 4294967294
        %v849 = vadd.s32 %v828, 4294967294
        %v850 = vadd.s32 %v829, 4294967294
        %v851 = vadd.s32 %v830, 4294967294
        %vm852 = vcmp.ge.s32.totalorder %v848, 0
        %vm853 = vcmp.ge.s32.totalorder %v849, 0
        %vm854 = vcmp.ge.s32.totalorder %v850, 0
        %vm855 = vcmp.ge.s32.totalorder %v851, 0
        %vm856 = vcmp.lt.s32.totalorder %v848, 16
        %vm857 = vcmp.lt.s32.totalorder %v849, 16
        %vm858 = vcmp.lt.s32.totalorder %v850, 16
        %vm859 = vcmp.lt.s32.totalorder %v851, 16
        %vm860 = vmand %vm852, %vm856
        %vm861 = vmand %vm853, %vm857
        %vm862 = vmand %vm854, %vm858
        %vm863 = vmand %vm855, %vm859
        %v864 = vsel %vm860, 1, 0
        %v865 = vsel %vm861, 1, 0
        %v866 = vsel %vm862, 1, 0
        %v867 = vsel %vm863, 1, 0
        %v868 = vcvt.s32.f32 %v864
        %v869 = vcvt.s32.f32 %v865
        %v870 = vcvt.s32.f32 %v866
        %v871 = vcvt.s32.f32 %v867
        %v872 = vmul.f32 %v846, %v868
        %v873 = vmul.f32 %v847, %v868
        %v874 = vmul.f32 %v844, %v869
        %v875 = vmul.f32 %v845, %v869
        %v876 = vmul.f32 %v842, %v870
        %v877 = vmul.f32 %v843, %v870
        %v878 = vmul.f32 %v840, %v871
        %v879 = vmul.f32 %v841, %v871
        %v880 = vrot.slane %v760, 7
        %v881 = vrot.slane %v762, 7
        %v882 = vrot.slane %v764, 7
        %v883 = vrot.slane %v766, 7
        %v884 = vrot.slane %v770, 7
        %v885 = vrot.slane %v772, 7
        %v886 = vrot.slane %v774, 7
        %v887 = vrot.slane %v776, 7
        %vm888 = vcmp.lt.s32.totalorder %v779, 1
        %v889 = vsel %vm888, %v884, %v886
        %v890 = vsel %vm888, %v885, %v887
        %v891 = vsel %vm888, %v882, %v884
        %v892 = vsel %vm888, %v883, %v885
        %v893 = vsel %vm888, %v880, %v882
        %v894 = vsel %vm888, %v881, %v883
        %v895 = vsel %vm888, %v886, %v880
        %v896 = vsel %vm888, %v887, %v881
        %v897 = vadd.s32 %v827, 4294967295
        %v898 = vadd.s32 %v828, 4294967295
        %v899 = vadd.s32 %v829, 4294967295
        %v900 = vadd.s32 %v830, 4294967295
        %vm901 = vcmp.ge.s32.totalorder %v897, 0
        %vm902 = vcmp.ge.s32.totalorder %v898, 0
        %vm903 = vcmp.ge.s32.totalorder %v899, 0
        %vm904 = vcmp.ge.s32.totalorder %v900, 0
        %vm905 = vcmp.lt.s32.totalorder %v897, 16
        %vm906 = vcmp.lt.s32.totalorder %v898, 16
        %vm907 = vcmp.lt.s32.totalorder %v899, 16
        %vm908 = vcmp.lt.s32.totalorder %v900, 16
        %vm909 = vmand %vm901, %vm905
        %vm910 = vmand %vm902, %vm906
        %vm911 = vmand %vm903, %vm907
        %vm912 = vmand %vm904, %vm908
        %v913 = vsel %vm909, 1, 0
        %v914 = vsel %vm910, 1, 0
        %v915 = vsel %vm911, 1, 0
        %v916 = vsel %vm912, 1, 0
        %v917 = vcvt.s32.f32 %v913
        %v918 = vcvt.s32.f32 %v914
        %v919 = vcvt.s32.f32 %v915
        %v920 = vcvt.s32.f32 %v916
        %v921 = vmul.f32 %v895, %v917
        %v922 = vmul.f32 %v896, %v917
        %v923 = vmul.f32 %v893, %v918
        %v924 = vmul.f32 %v894, %v918
        %v925 = vmul.f32 %v891, %v919
        %v926 = vmul.f32 %v892, %v919
        %v927 = vmul.f32 %v889, %v920
        %v928 = vmul.f32 %v890, %v920
        %v929 = vrot.slane %v760, 1
        %v930 = vrot.slane %v762, 1
        %v931 = vrot.slane %v764, 1
        %v932 = vrot.slane %v766, 1
        %v933 = vrot.slane %v770, 1
        %v934 = vrot.slane %v772, 1
        %v935 = vrot.slane %v774, 1
        %v936 = vrot.slane %v776, 1
        %vm937 = vcmp.lt.s32.totalorder %v779, 7
        %v938 = vsel %vm937, %v933, %v935
        %v939 = vsel %vm937, %v934, %v936
        %v940 = vsel %vm937, %v931, %v933
        %v941 = vsel %vm937, %v932, %v934
        %v942 = vsel %vm937, %v929, %v931
        %v943 = vsel %vm937, %v930, %v932
        %v944 = vsel %vm937, %v935, %v929
        %v945 = vsel %vm937, %v936, %v930
        %v946 = vadd.s32 %v827, 1
        %v947 = vadd.s32 %v828, 1
        %v948 = vadd.s32 %v829, 1
        %v949 = vadd.s32 %v830, 1
        %vm950 = vcmp.ge.s32.totalorder %v946, 0
        %vm951 = vcmp.ge.s32.totalorder %v947, 0
        %vm952 = vcmp.ge.s32.totalorder %v948, 0
        %vm953 = vcmp.ge.s32.totalorder %v949, 0
        %vm954 = vcmp.lt.s32.totalorder %v946, 16
        %vm955 = vcmp.lt.s32.totalorder %v947, 16
        %vm956 = vcmp.lt.s32.totalorder %v948, 16
        %vm957 = vcmp.lt.s32.totalorder %v949, 16
        %vm958 = vmand %vm950, %vm954
        %vm959 = vmand %vm951, %vm955
        %vm960 = vmand %vm952, %vm956
        %vm961 = vmand %vm953, %vm957
        %v962 = vsel %vm958, 1, 0
        %v963 = vsel %vm959, 1, 0
        %v964 = vsel %vm960, 1, 0
        %v965 = vsel %vm961, 1, 0
        %v966 = vcvt.s32.f32 %v962
        %v967 = vcvt.s32.f32 %v963
        %v968 = vcvt.s32.f32 %v964
        %v969 = vcvt.s32.f32 %v965
        %v970 = vmul.f32 %v942, %v966
        %v971 = vmul.f32 %v943, %v966
        %v972 = vmul.f32 %v940, %v967
        %v973 = vmul.f32 %v941, %v967
        %v974 = vmul.f32 %v938, %v968
        %v975 = vmul.f32 %v939, %v968
        %v976 = vmul.f32 %v944, %v969
        %v977 = vmul.f32 %v945, %v969
        %v978 = vrot.slane %v760, 2
        %v979 = vrot.slane %v762, 2
        %v980 = vrot.slane %v764, 2
        %v981 = vrot.slane %v766, 2
        %v982 = vrot.slane %v770, 2
        %v983 = vrot.slane %v772, 2
        %v984 = vrot.slane %v774, 2
        %v985 = vrot.slane %v776, 2
        %vm986 = vcmp.lt.s32.totalorder %v779, 6
        %v987 = vsel %vm986, %v982, %v984
        %v988 = vsel %vm986, %v983, %v985
        %v989 = vsel %vm986, %v980, %v982
        %v990 = vsel %vm986, %v981, %v983
        %v991 = vsel %vm986, %v978, %v980
        %v992 = vsel %vm986, %v979, %v981
        %v993 = vsel %vm986, %v984, %v978
        %v994 = vsel %vm986, %v985, %v979
        %v995 = vadd.s32 %v827, 2
        %v996 = vadd.s32 %v828, 2
        %v997 = vadd.s32 %v829, 2
        %v998 = vadd.s32 %v830, 2
        %vm999 = vcmp.ge.s32.totalorder %v995, 0
        %vm1000 = vcmp.ge.s32.totalorder %v996, 0
        %vm1001 = vcmp.ge.s32.totalorder %v997, 0
        %vm1002 = vcmp.ge.s32.totalorder %v998, 0
        %vm1003 = vcmp.lt.s32.totalorder %v995, 16
        %vm1004 = vcmp.lt.s32.totalorder %v996, 16
        %vm1005 = vcmp.lt.s32.totalorder %v997, 16
        %vm1006 = vcmp.lt.s32.totalorder %v998, 16
        %vm1007 = vmand %vm999, %vm1003
        %vm1008 = vmand %vm1000, %vm1004
        %vm1009 = vmand %vm1001, %vm1005
        %vm1010 = vmand %vm1002, %vm1006
        %v1011 = vsel %vm1007, 1, 0
        %v1012 = vsel %vm1008, 1, 0
        %v1013 = vsel %vm1009, 1, 0
        %v1014 = vsel %vm1010, 1, 0
        %v1015 = vcvt.s32.f32 %v1011
        %v1016 = vcvt.s32.f32 %v1012
        %v1017 = vcvt.s32.f32 %v1013
        %v1018 = vcvt.s32.f32 %v1014
        %v1019 = vmul.f32 %v991, %v1015
        %v1020 = vmul.f32 %v992, %v1015
        %v1021 = vmul.f32 %v989, %v1016
        %v1022 = vmul.f32 %v990, %v1016
        %v1023 = vmul.f32 %v987, %v1017
        %v1024 = vmul.f32 %v988, %v1017
        %v1025 = vmul.f32 %v993, %v1018
        %v1026 = vmul.f32 %v994, %v1018
        %v1027 = vpack.c.bf16 %v874, %v872
        %v1028 = vpack.c.bf16 %v875, %v873
        %v1029 = vpack.c.bf16 %v923, %v921
        %v1030 = vpack.c.bf16 %v924, %v922
        %v1031 = vpack.c.bf16 %v764, %v760
        %v1032 = vpack.c.bf16 %v766, %v762
        %v1033 = vpack.c.bf16 %v972, %v970
        %v1034 = vpack.c.bf16 %v973, %v971
        %v1035 = vpack.c.bf16 %v1021, %v1019
        %v1036 = vpack.c.bf16 %v1022, %v1020
        %v1037 = vpack.c.bf16 %v878, %v876
        %v1038 = vpack.c.bf16 %v879, %v877
        %v1039 = vpack.c.bf16 %v927, %v925
        %v1040 = vpack.c.bf16 %v928, %v926
        %v1041 = vpack.c.bf16 %v774, %v770
        %v1042 = vpack.c.bf16 %v776, %v772
        %v1043 = vpack.c.bf16 %v976, %v974
        %v1044 = vpack.c.bf16 %v977, %v975
        %v1045 = vpack.c.bf16 %v1025, %v1023
        %v1046 = vpack.c.bf16 %v1026, %v1024
        %v1047 = vld [vmem:[#allocation2] sm:$0xff]
        %v1048 = vld [vmem:[#allocation2 + $0x8] sm:$0xff]
        %v1049 = vld [vmem:[#allocation2 + $0x10] sm:$0xff]
        %v1050 = vld [vmem:[#allocation2 + $0x18] sm:$0xff]
        %v1051 = vld [vmem:[#allocation2 + $0x20] sm:$0xff]
        %v1052 = vld [vmem:[#allocation2 + $0x28] sm:$0xff]
        %v1053 = vld [vmem:[#allocation2 + $0x30] sm:$0xff]
        %v1054 = vld [vmem:[#allocation2 + $0x38] sm:$0xff]
        %v1055 = vld [vmem:[#allocation2 + $0x40] sm:$0xff]
        %v1056 = vld [vmem:[#allocation2 + $0x48] sm:$0xff]
        %v1057 = vld [vmem:[#allocation2 + $0x50] sm:$0xff]
        %v1058 = vld [vmem:[#allocation2 + $0x58] sm:$0xff]
        %v1059 = vld [vmem:[#allocation2 + $0x60] sm:$0xff]
        %v1060 = vld [vmem:[#allocation2 + $0x68] sm:$0xff]
        %v1061 = vld [vmem:[#allocation2 + $0x70] sm:$0xff]
        %v1062 = vld [vmem:[#allocation2 + $0x78] sm:$0xff]
        %v1063 = vld [vmem:[#allocation2 + $0x80] sm:$0xff]
        %v1064 = vld [vmem:[#allocation2 + $0x88] sm:$0xff]
        %v1065 = vld [vmem:[#allocation2 + $0x90] sm:$0xff]
        %v1066 = vld [vmem:[#allocation2 + $0x98] sm:$0xff]
        %v1067 = vld [vmem:[#allocation2 + $0xa0] sm:$0xff]
        %v1068 = vld [vmem:[#allocation2 + $0xa8] sm:$0xff]
        %v1069 = vld [vmem:[#allocation2 + $0xb0] sm:$0xff]
        %v1070 = vld [vmem:[#allocation2 + $0xb8] sm:$0xff]
        %v1071 = vld [vmem:[#allocation2 + $0xc0] sm:$0xff]
        %v1072 = vld [vmem:[#allocation2 + $0xc8] sm:$0xff]
        %v1073 = vld [vmem:[#allocation2 + $0xd0] sm:$0xff]
        %v1074 = vld [vmem:[#allocation2 + $0xd8] sm:$0xff]
        %v1075 = vld [vmem:[#allocation2 + $0xe0] sm:$0xff]
        %v1076 = vld [vmem:[#allocation2 + $0xe8] sm:$0xff]
        %v1077 = vld [vmem:[#allocation2 + $0xf0] sm:$0xff]
        %v1078 = vld [vmem:[#allocation2 + $0xf8] sm:$0xff]
        %v1079 = vld [vmem:[#allocation2 + $0x100] sm:$0xff]
        %v1080 = vld [vmem:[#allocation2 + $0x108] sm:$0xff]
        %v1081 = vld [vmem:[#allocation2 + $0x110] sm:$0xff]
        %v1082 = vld [vmem:[#allocation2 + $0x118] sm:$0xff]
        %v1083 = vld [vmem:[#allocation2 + $0x120] sm:$0xff]
        %v1084 = vld [vmem:[#allocation2 + $0x128] sm:$0xff]
        %v1085 = vld [vmem:[#allocation2 + $0x130] sm:$0xff]
        %v1086 = vld [vmem:[#allocation2 + $0x138] sm:$0xff]
        %v1087 = vld [vmem:[#allocation2 + $0x140] sm:$0xff]
        %v1088 = vld [vmem:[#allocation2 + $0x148] sm:$0xff]
        %v1089 = vld [vmem:[#allocation2 + $0x150] sm:$0xff]
        %v1090 = vld [vmem:[#allocation2 + $0x158] sm:$0xff]
        %v1091 = vld [vmem:[#allocation2 + $0x160] sm:$0xff]
        %v1092 = vld [vmem:[#allocation2 + $0x168] sm:$0xff]
        %v1093 = vld [vmem:[#allocation2 + $0x170] sm:$0xff]
        %v1094 = vld [vmem:[#allocation2 + $0x178] sm:$0xff]
        %v1095 = vld [vmem:[#allocation2 + $0x180] sm:$0xff]
        %v1096 = vld [vmem:[#allocation2 + $0x188] sm:$0xff]
        %v1097 = vld [vmem:[#allocation2 + $0x190] sm:$0xff]
        %v1098 = vld [vmem:[#allocation2 + $0x198] sm:$0xff]
        %v1099 = vld [vmem:[#allocation2 + $0x1a0] sm:$0xff]
        %v1100 = vld [vmem:[#allocation2 + $0x1a8] sm:$0xff]
        %v1101 = vld [vmem:[#allocation2 + $0x1b0] sm:$0xff]
        %v1102 = vld [vmem:[#allocation2 + $0x1b8] sm:$0xff]
        %v1103 = vld [vmem:[#allocation2 + $0x1c0] sm:$0xff]
        %v1104 = vld [vmem:[#allocation2 + $0x1c8] sm:$0xff]
        %v1105 = vld [vmem:[#allocation2 + $0x1d0] sm:$0xff]
        %v1106 = vld [vmem:[#allocation2 + $0x1d8] sm:$0xff]
        %v1107 = vld [vmem:[#allocation2 + $0x1e0] sm:$0xff]
        %v1108 = vld [vmem:[#allocation2 + $0x1e8] sm:$0xff]
        %v1109 = vld [vmem:[#allocation2 + $0x1f0] sm:$0xff]
        %v1110 = vld [vmem:[#allocation2 + $0x1f8] sm:$0xff]
        %v1111 = vld [vmem:[#allocation2 + $0x200] sm:$0xff]
        %v1112 = vld [vmem:[#allocation2 + $0x208] sm:$0xff]
        %v1113 = vld [vmem:[#allocation2 + $0x210] sm:$0xff]
        %v1114 = vld [vmem:[#allocation2 + $0x218] sm:$0xff]
        %v1115 = vld [vmem:[#allocation2 + $0x220] sm:$0xff]
        %v1116 = vld [vmem:[#allocation2 + $0x228] sm:$0xff]
        %v1117 = vld [vmem:[#allocation2 + $0x230] sm:$0xff]
        %v1118 = vld [vmem:[#allocation2 + $0x238] sm:$0xff]
        %v1119 = vld [vmem:[#allocation2 + $0x240] sm:$0xff]
        %v1120 = vld [vmem:[#allocation2 + $0x248] sm:$0xff]
        %v1121 = vld [vmem:[#allocation2 + $0x250] sm:$0xff]
        %v1122 = vld [vmem:[#allocation2 + $0x258] sm:$0xff]
        %v1123 = vld [vmem:[#allocation2 + $0x260] sm:$0xff]
        %v1124 = vld [vmem:[#allocation2 + $0x268] sm:$0xff]
        %v1125 = vld [vmem:[#allocation2 + $0x270] sm:$0xff]
        %v1126 = vld [vmem:[#allocation2 + $0x278] sm:$0xff]
        %v1127 = vld [vmem:[#allocation2 + $0x280] sm:$0xff]
        %v1128 = vld [vmem:[#allocation2 + $0x288] sm:$0xff]
        %v1129 = vld [vmem:[#allocation2 + $0x290] sm:$0xff]
        %v1130 = vld [vmem:[#allocation2 + $0x298] sm:$0xff]
        %v1131 = vld [vmem:[#allocation2 + $0x2a0] sm:$0xff]
        %v1132 = vld [vmem:[#allocation2 + $0x2a8] sm:$0xff]
        %v1133 = vld [vmem:[#allocation2 + $0x2b0] sm:$0xff]
        %v1134 = vld [vmem:[#allocation2 + $0x2b8] sm:$0xff]
        %v1135 = vld [vmem:[#allocation2 + $0x2c0] sm:$0xff]
        %v1136 = vld [vmem:[#allocation2 + $0x2c8] sm:$0xff]
        %v1137 = vld [vmem:[#allocation2 + $0x2d0] sm:$0xff]
        %v1138 = vld [vmem:[#allocation2 + $0x2d8] sm:$0xff]
        %v1139 = vld [vmem:[#allocation2 + $0x2e0] sm:$0xff]
        %v1140 = vld [vmem:[#allocation2 + $0x2e8] sm:$0xff]
        %v1141 = vld [vmem:[#allocation2 + $0x2f0] sm:$0xff]
        %v1142 = vld [vmem:[#allocation2 + $0x2f8] sm:$0xff]
        %v1143 = vld [vmem:[#allocation2 + $0x300] sm:$0xff]
        %v1144 = vld [vmem:[#allocation2 + $0x308] sm:$0xff]
        %v1145 = vld [vmem:[#allocation2 + $0x310] sm:$0xff]
        %v1146 = vld [vmem:[#allocation2 + $0x318] sm:$0xff]
        %v1147 = vld [vmem:[#allocation2 + $0x320] sm:$0xff]
        %v1148 = vld [vmem:[#allocation2 + $0x328] sm:$0xff]
        %v1149 = vld [vmem:[#allocation2 + $0x330] sm:$0xff]
        %v1150 = vld [vmem:[#allocation2 + $0x338] sm:$0xff]
        %v1151 = vld [vmem:[#allocation2 + $0x340] sm:$0xff]
        %v1152 = vld [vmem:[#allocation2 + $0x348] sm:$0xff]
        %v1153 = vld [vmem:[#allocation2 + $0x350] sm:$0xff]
        %v1154 = vld [vmem:[#allocation2 + $0x358] sm:$0xff]
        %v1155 = vld [vmem:[#allocation2 + $0x360] sm:$0xff]
        %v1156 = vld [vmem:[#allocation2 + $0x368] sm:$0xff]
        %v1157 = vld [vmem:[#allocation2 + $0x370] sm:$0xff]
        %v1158 = vld [vmem:[#allocation2 + $0x378] sm:$0xff]
        %v1159 = vld [vmem:[#allocation2 + $0x380] sm:$0xff]
        %v1160 = vld [vmem:[#allocation2 + $0x388] sm:$0xff]
        %v1161 = vld [vmem:[#allocation2 + $0x390] sm:$0xff]
        %v1162 = vld [vmem:[#allocation2 + $0x398] sm:$0xff]
        %v1163 = vld [vmem:[#allocation2 + $0x3a0] sm:$0xff]
        %v1164 = vld [vmem:[#allocation2 + $0x3a8] sm:$0xff]
        %v1165 = vld [vmem:[#allocation2 + $0x3b0] sm:$0xff]
        %v1166 = vld [vmem:[#allocation2 + $0x3b8] sm:$0xff]
        %v1167 = vld [vmem:[#allocation2 + $0x3c0] sm:$0xff]
        %v1168 = vld [vmem:[#allocation2 + $0x3c8] sm:$0xff]
        %v1169 = vld [vmem:[#allocation2 + $0x3d0] sm:$0xff]
        %v1170 = vld [vmem:[#allocation2 + $0x3d8] sm:$0xff]
        %v1171 = vld [vmem:[#allocation2 + $0x3e0] sm:$0xff]
        %v1172 = vld [vmem:[#allocation2 + $0x3e8] sm:$0xff]
        %v1173 = vld [vmem:[#allocation2 + $0x3f0] sm:$0xff]
        %v1174 = vld [vmem:[#allocation2 + $0x3f8] sm:$0xff]
        %v1175 = vld [vmem:[#allocation2 + $0x400] sm:$0xff]
        %v1176 = vld [vmem:[#allocation2 + $0x408] sm:$0xff]
        %v1177 = vld [vmem:[#allocation2 + $0x410] sm:$0xff]
        %v1178 = vld [vmem:[#allocation2 + $0x418] sm:$0xff]
        %v1179 = vld [vmem:[#allocation2 + $0x420] sm:$0xff]
        %v1180 = vld [vmem:[#allocation2 + $0x428] sm:$0xff]
        %v1181 = vld [vmem:[#allocation2 + $0x430] sm:$0xff]
        %v1182 = vld [vmem:[#allocation2 + $0x438] sm:$0xff]
        %v1183 = vld [vmem:[#allocation2 + $0x440] sm:$0xff]
        %v1184 = vld [vmem:[#allocation2 + $0x448] sm:$0xff]
        %v1185 = vld [vmem:[#allocation2 + $0x450] sm:$0xff]
        %v1186 = vld [vmem:[#allocation2 + $0x458] sm:$0xff]
        %v1187 = vld [vmem:[#allocation2 + $0x460] sm:$0xff]
        %v1188 = vld [vmem:[#allocation2 + $0x468] sm:$0xff]
        %v1189 = vld [vmem:[#allocation2 + $0x470] sm:$0xff]
        %v1190 = vld [vmem:[#allocation2 + $0x478] sm:$0xff]
        %v1191 = vld [vmem:[#allocation2 + $0x480] sm:$0xff]
        %v1192 = vld [vmem:[#allocation2 + $0x488] sm:$0xff]
        %v1193 = vld [vmem:[#allocation2 + $0x490] sm:$0xff]
        %v1194 = vld [vmem:[#allocation2 + $0x498] sm:$0xff]
        %v1195 = vld [vmem:[#allocation2 + $0x4a0] sm:$0xff]
        %v1196 = vld [vmem:[#allocation2 + $0x4a8] sm:$0xff]
        %v1197 = vld [vmem:[#allocation2 + $0x4b0] sm:$0xff]
        %v1198 = vld [vmem:[#allocation2 + $0x4b8] sm:$0xff]
        %v1199 = vld [vmem:[#allocation2 + $0x4c0] sm:$0xff]
        %v1200 = vld [vmem:[#allocation2 + $0x4c8] sm:$0xff]
        %v1201 = vld [vmem:[#allocation2 + $0x4d0] sm:$0xff]
        %v1202 = vld [vmem:[#allocation2 + $0x4d8] sm:$0xff]
        %v1203 = vld [vmem:[#allocation2 + $0x4e0] sm:$0xff]
        %v1204 = vld [vmem:[#allocation2 + $0x4e8] sm:$0xff]
        %v1205 = vld [vmem:[#allocation2 + $0x4f0] sm:$0xff]
        %v1206 = vld [vmem:[#allocation2 + $0x4f8] sm:$0xff]
        %v1207 = vld [vmem:[%s3] sm:$0x3]
        %v1209 = vlaneseq
        %v1210 = vshrl.u32 %v1209, 7
        %v1211 = vsub.s32 0, %v1210
        %v1212 = vrot.slane %v1207, %v1211
        %v1213 = vlaneseq
        %v1214 = vshrl.u32 %v1213, 7
        %v1215 = vsub.s32 1, %v1214
        %v1216 = vrot.slane %v1207, %v1215
        %v1379 = vunpack.c.l.b16 %v1047
        %v1380 = vunpack.c.h.b16 %v1047
        %v1381 = vunpack.c.l.b16 %v1048
        %v1382 = vunpack.c.h.b16 %v1048
        %v1383 = vunpack.c.l.b16 %v1049
        %v1384 = vunpack.c.h.b16 %v1049
        %v1385 = vunpack.c.l.b16 %v1050
        %v1386 = vunpack.c.h.b16 %v1050
        %v1387 = vunpack.c.l.b16 %v1051
        %v1388 = vunpack.c.h.b16 %v1051
        %v1389 = vunpack.c.l.b16 %v1052
        %v1390 = vunpack.c.h.b16 %v1052
        %v1391 = vunpack.c.l.b16 %v1053
        %v1392 = vunpack.c.h.b16 %v1053
        %v1393 = vunpack.c.l.b16 %v1054
        %v1394 = vunpack.c.h.b16 %v1054
        %v1395 = vunpack.c.l.b16 %v1055
        %v1396 = vunpack.c.h.b16 %v1055
        %v1397 = vunpack.c.l.b16 %v1056
        %v1398 = vunpack.c.h.b16 %v1056
        %v1399 = vunpack.c.l.b16 %v1057
        %v1400 = vunpack.c.h.b16 %v1057
        %v1401 = vunpack.c.l.b16 %v1058
        %v1402 = vunpack.c.h.b16 %v1058
        %v1403 = vunpack.c.l.b16 %v1059
        %v1404 = vunpack.c.h.b16 %v1059
        %v1405 = vunpack.c.l.b16 %v1060
        %v1406 = vunpack.c.h.b16 %v1060
        %v1407 = vunpack.c.l.b16 %v1061
        %v1408 = vunpack.c.h.b16 %v1061
        %v1409 = vunpack.c.l.b16 %v1062
        %v1410 = vunpack.c.h.b16 %v1062
        %v1411 = vunpack.c.l.b16 %v1063
        %v1412 = vunpack.c.h.b16 %v1063
        %v1413 = vunpack.c.l.b16 %v1064
        %v1414 = vunpack.c.h.b16 %v1064
        %v1415 = vunpack.c.l.b16 %v1065
        %v1416 = vunpack.c.h.b16 %v1065
        %v1417 = vunpack.c.l.b16 %v1066
        %v1418 = vunpack.c.h.b16 %v1066
        %v1419 = vunpack.c.l.b16 %v1067
        %v1420 = vunpack.c.h.b16 %v1067
        %v1421 = vunpack.c.l.b16 %v1068
        %v1422 = vunpack.c.h.b16 %v1068
        %v1423 = vunpack.c.l.b16 %v1069
        %v1424 = vunpack.c.h.b16 %v1069
        %v1425 = vunpack.c.l.b16 %v1070
        %v1426 = vunpack.c.h.b16 %v1070
        %v1427 = vunpack.c.l.b16 %v1071
        %v1428 = vunpack.c.h.b16 %v1071
        %v1429 = vunpack.c.l.b16 %v1072
        %v1430 = vunpack.c.h.b16 %v1072
        %v1431 = vunpack.c.l.b16 %v1073
        %v1432 = vunpack.c.h.b16 %v1073
        %v1433 = vunpack.c.l.b16 %v1074
        %v1434 = vunpack.c.h.b16 %v1074
        %v1435 = vunpack.c.l.b16 %v1075
        %v1436 = vunpack.c.h.b16 %v1075
        %v1437 = vunpack.c.l.b16 %v1076
        %v1438 = vunpack.c.h.b16 %v1076
        %v1439 = vunpack.c.l.b16 %v1077
        %v1440 = vunpack.c.h.b16 %v1077
        %v1441 = vunpack.c.l.b16 %v1078
        %v1442 = vunpack.c.h.b16 %v1078
        %v1443 = vunpack.c.l.b16 %v1079
        %v1444 = vunpack.c.h.b16 %v1079
        %v1445 = vunpack.c.l.b16 %v1080
        %v1446 = vunpack.c.h.b16 %v1080
        %v1447 = vunpack.c.l.b16 %v1081
        %v1448 = vunpack.c.h.b16 %v1081
        %v1449 = vunpack.c.l.b16 %v1082
        %v1450 = vunpack.c.h.b16 %v1082
        %v1451 = vunpack.c.l.b16 %v1083
        %v1452 = vunpack.c.h.b16 %v1083
        %v1453 = vunpack.c.l.b16 %v1084
        %v1454 = vunpack.c.h.b16 %v1084
        %v1455 = vunpack.c.l.b16 %v1085
        %v1456 = vunpack.c.h.b16 %v1085
        %v1457 = vunpack.c.l.b16 %v1086
        %v1458 = vunpack.c.h.b16 %v1086
        %v1459 = vunpack.c.l.b16 %v1087
        %v1460 = vunpack.c.h.b16 %v1087
        %v1461 = vunpack.c.l.b16 %v1088
        %v1462 = vunpack.c.h.b16 %v1088
        %v1463 = vunpack.c.l.b16 %v1089
        %v1464 = vunpack.c.h.b16 %v1089
        %v1465 = vunpack.c.l.b16 %v1090
        %v1466 = vunpack.c.h.b16 %v1090
        %v1467 = vunpack.c.l.b16 %v1091
        %v1468 = vunpack.c.h.b16 %v1091
        %v1469 = vunpack.c.l.b16 %v1092
        %v1470 = vunpack.c.h.b16 %v1092
        %v1471 = vunpack.c.l.b16 %v1093
        %v1472 = vunpack.c.h.b16 %v1093
        %v1473 = vunpack.c.l.b16 %v1094
        %v1474 = vunpack.c.h.b16 %v1094
        %v1475 = vunpack.c.l.b16 %v1095
        %v1476 = vunpack.c.h.b16 %v1095
        %v1477 = vunpack.c.l.b16 %v1096
        %v1478 = vunpack.c.h.b16 %v1096
        %v1479 = vunpack.c.l.b16 %v1097
        %v1480 = vunpack.c.h.b16 %v1097
        %v1481 = vunpack.c.l.b16 %v1098
        %v1482 = vunpack.c.h.b16 %v1098
        %v1483 = vunpack.c.l.b16 %v1099
        %v1484 = vunpack.c.h.b16 %v1099
        %v1485 = vunpack.c.l.b16 %v1100
        %v1486 = vunpack.c.h.b16 %v1100
        %v1487 = vunpack.c.l.b16 %v1101
        %v1488 = vunpack.c.h.b16 %v1101
        %v1489 = vunpack.c.l.b16 %v1102
        %v1490 = vunpack.c.h.b16 %v1102
        %v1491 = vunpack.c.l.b16 %v1103
        %v1492 = vunpack.c.h.b16 %v1103
        %v1493 = vunpack.c.l.b16 %v1104
        %v1494 = vunpack.c.h.b16 %v1104
        %v1495 = vunpack.c.l.b16 %v1105
        %v1496 = vunpack.c.h.b16 %v1105
        %v1497 = vunpack.c.l.b16 %v1106
        %v1498 = vunpack.c.h.b16 %v1106
        %v1499 = vunpack.c.l.b16 %v1107
        %v1500 = vunpack.c.h.b16 %v1107
        %v1501 = vunpack.c.l.b16 %v1108
        %v1502 = vunpack.c.h.b16 %v1108
        %v1503 = vunpack.c.l.b16 %v1109
        %v1504 = vunpack.c.h.b16 %v1109
        %v1505 = vunpack.c.l.b16 %v1110
        %v1506 = vunpack.c.h.b16 %v1110
        %v1507 = vunpack.c.l.b16 %v1111
        %v1508 = vunpack.c.h.b16 %v1111
        %v1509 = vunpack.c.l.b16 %v1112
        %v1510 = vunpack.c.h.b16 %v1112
        %v1511 = vunpack.c.l.b16 %v1113
        %v1512 = vunpack.c.h.b16 %v1113
        %v1513 = vunpack.c.l.b16 %v1114
        %v1514 = vunpack.c.h.b16 %v1114
        %v1515 = vunpack.c.l.b16 %v1115
        %v1516 = vunpack.c.h.b16 %v1115
        %v1517 = vunpack.c.l.b16 %v1116
        %v1518 = vunpack.c.h.b16 %v1116
        %v1519 = vunpack.c.l.b16 %v1117
        %v1520 = vunpack.c.h.b16 %v1117
        %v1521 = vunpack.c.l.b16 %v1118
        %v1522 = vunpack.c.h.b16 %v1118
        %v1523 = vunpack.c.l.b16 %v1119
        %v1524 = vunpack.c.h.b16 %v1119
        %v1525 = vunpack.c.l.b16 %v1120
        %v1526 = vunpack.c.h.b16 %v1120
        %v1527 = vunpack.c.l.b16 %v1121
        %v1528 = vunpack.c.h.b16 %v1121
        %v1529 = vunpack.c.l.b16 %v1122
        %v1530 = vunpack.c.h.b16 %v1122
        %v1531 = vunpack.c.l.b16 %v1123
        %v1532 = vunpack.c.h.b16 %v1123
        %v1533 = vunpack.c.l.b16 %v1124
        %v1534 = vunpack.c.h.b16 %v1124
        %v1535 = vunpack.c.l.b16 %v1125
        %v1536 = vunpack.c.h.b16 %v1125
        %v1537 = vunpack.c.l.b16 %v1126
        %v1538 = vunpack.c.h.b16 %v1126
        %v1539 = vunpack.c.l.b16 %v1127
        %v1540 = vunpack.c.h.b16 %v1127
        %v1541 = vunpack.c.l.b16 %v1128
        %v1542 = vunpack.c.h.b16 %v1128
        %v1543 = vunpack.c.l.b16 %v1129
        %v1544 = vunpack.c.h.b16 %v1129
        %v1545 = vunpack.c.l.b16 %v1130
        %v1546 = vunpack.c.h.b16 %v1130
        %v1547 = vunpack.c.l.b16 %v1131
        %v1548 = vunpack.c.h.b16 %v1131
        %v1549 = vunpack.c.l.b16 %v1132
        %v1550 = vunpack.c.h.b16 %v1132
        %v1551 = vunpack.c.l.b16 %v1133
        %v1552 = vunpack.c.h.b16 %v1133
        %v1553 = vunpack.c.l.b16 %v1134
        %v1554 = vunpack.c.h.b16 %v1134
        %v1555 = vunpack.c.l.b16 %v1135
        %v1556 = vunpack.c.h.b16 %v1135
        %v1557 = vunpack.c.l.b16 %v1136
        %v1558 = vunpack.c.h.b16 %v1136
        %v1559 = vunpack.c.l.b16 %v1137
        %v1560 = vunpack.c.h.b16 %v1137
        %v1561 = vunpack.c.l.b16 %v1138
        %v1562 = vunpack.c.h.b16 %v1138
        %v1563 = vunpack.c.l.b16 %v1139
        %v1564 = vunpack.c.h.b16 %v1139
        %v1565 = vunpack.c.l.b16 %v1140
        %v1566 = vunpack.c.h.b16 %v1140
        %v1567 = vunpack.c.l.b16 %v1141
        %v1568 = vunpack.c.h.b16 %v1141
        %v1569 = vunpack.c.l.b16 %v1142
        %v1570 = vunpack.c.h.b16 %v1142
        %v1571 = vunpack.c.l.b16 %v1143
        %v1572 = vunpack.c.h.b16 %v1143
        %v1573 = vunpack.c.l.b16 %v1144
        %v1574 = vunpack.c.h.b16 %v1144
        %v1575 = vunpack.c.l.b16 %v1145
        %v1576 = vunpack.c.h.b16 %v1145
        %v1577 = vunpack.c.l.b16 %v1146
        %v1578 = vunpack.c.h.b16 %v1146
        %v1579 = vunpack.c.l.b16 %v1147
        %v1580 = vunpack.c.h.b16 %v1147
        %v1581 = vunpack.c.l.b16 %v1148
        %v1582 = vunpack.c.h.b16 %v1148
        %v1583 = vunpack.c.l.b16 %v1149
        %v1584 = vunpack.c.h.b16 %v1149
        %v1585 = vunpack.c.l.b16 %v1150
        %v1586 = vunpack.c.h.b16 %v1150
        %v1587 = vunpack.c.l.b16 %v1151
        %v1588 = vunpack.c.h.b16 %v1151
        %v1589 = vunpack.c.l.b16 %v1152
        %v1590 = vunpack.c.h.b16 %v1152
        %v1591 = vunpack.c.l.b16 %v1153
        %v1592 = vunpack.c.h.b16 %v1153
        %v1593 = vunpack.c.l.b16 %v1154
        %v1594 = vunpack.c.h.b16 %v1154
        %v1595 = vunpack.c.l.b16 %v1155
        %v1596 = vunpack.c.h.b16 %v1155
        %v1597 = vunpack.c.l.b16 %v1156
        %v1598 = vunpack.c.h.b16 %v1156
        %v1599 = vunpack.c.l.b16 %v1157
        %v1600 = vunpack.c.h.b16 %v1157
        %v1601 = vunpack.c.l.b16 %v1158
        %v1602 = vunpack.c.h.b16 %v1158
        %v1603 = vunpack.c.l.b16 %v1159
        %v1604 = vunpack.c.h.b16 %v1159
        %v1605 = vunpack.c.l.b16 %v1160
        %v1606 = vunpack.c.h.b16 %v1160
        %v1607 = vunpack.c.l.b16 %v1161
        %v1608 = vunpack.c.h.b16 %v1161
        %v1609 = vunpack.c.l.b16 %v1162
        %v1610 = vunpack.c.h.b16 %v1162
        %v1611 = vunpack.c.l.b16 %v1163
        %v1612 = vunpack.c.h.b16 %v1163
        %v1613 = vunpack.c.l.b16 %v1164
        %v1614 = vunpack.c.h.b16 %v1164
        %v1615 = vunpack.c.l.b16 %v1165
        %v1616 = vunpack.c.h.b16 %v1165
        %v1617 = vunpack.c.l.b16 %v1166
        %v1618 = vunpack.c.h.b16 %v1166
        %v1619 = vunpack.c.l.b16 %v1167
        %v1620 = vunpack.c.h.b16 %v1167
        %v1621 = vunpack.c.l.b16 %v1168
        %v1622 = vunpack.c.h.b16 %v1168
        %v1623 = vunpack.c.l.b16 %v1169
        %v1624 = vunpack.c.h.b16 %v1169
        %v1625 = vunpack.c.l.b16 %v1170
        %v1626 = vunpack.c.h.b16 %v1170
        %v1627 = vunpack.c.l.b16 %v1171
        %v1628 = vunpack.c.h.b16 %v1171
        %v1629 = vunpack.c.l.b16 %v1172
        %v1630 = vunpack.c.h.b16 %v1172
        %v1631 = vunpack.c.l.b16 %v1173
        %v1632 = vunpack.c.h.b16 %v1173
        %v1633 = vunpack.c.l.b16 %v1174
        %v1634 = vunpack.c.h.b16 %v1174
        %v1635 = vunpack.c.l.b16 %v1175
        %v1636 = vunpack.c.h.b16 %v1175
        %v1637 = vunpack.c.l.b16 %v1176
        %v1638 = vunpack.c.h.b16 %v1176
        %v1639 = vunpack.c.l.b16 %v1177
        %v1640 = vunpack.c.h.b16 %v1177
        %v1641 = vunpack.c.l.b16 %v1178
        %v1642 = vunpack.c.h.b16 %v1178
        %v1643 = vunpack.c.l.b16 %v1179
        %v1644 = vunpack.c.h.b16 %v1179
        %v1645 = vunpack.c.l.b16 %v1180
        %v1646 = vunpack.c.h.b16 %v1180
        %v1647 = vunpack.c.l.b16 %v1181
        %v1648 = vunpack.c.h.b16 %v1181
        %v1649 = vunpack.c.l.b16 %v1182
        %v1650 = vunpack.c.h.b16 %v1182
        %v1651 = vunpack.c.l.b16 %v1183
        %v1652 = vunpack.c.h.b16 %v1183
        %v1653 = vunpack.c.l.b16 %v1184
        %v1654 = vunpack.c.h.b16 %v1184
        %v1655 = vunpack.c.l.b16 %v1185
        %v1656 = vunpack.c.h.b16 %v1185
        %v1657 = vunpack.c.l.b16 %v1186
        %v1658 = vunpack.c.h.b16 %v1186
        %v1659 = vunpack.c.l.b16 %v1187
        %v1660 = vunpack.c.h.b16 %v1187
        %v1661 = vunpack.c.l.b16 %v1188
        %v1662 = vunpack.c.h.b16 %v1188
        %v1663 = vunpack.c.l.b16 %v1189
        %v1664 = vunpack.c.h.b16 %v1189
        %v1665 = vunpack.c.l.b16 %v1190
        %v1666 = vunpack.c.h.b16 %v1190
        %v1667 = vunpack.c.l.b16 %v1191
        %v1668 = vunpack.c.h.b16 %v1191
        %v1669 = vunpack.c.l.b16 %v1192
        %v1670 = vunpack.c.h.b16 %v1192
        %v1671 = vunpack.c.l.b16 %v1193
        %v1672 = vunpack.c.h.b16 %v1193
        %v1673 = vunpack.c.l.b16 %v1194
        %v1674 = vunpack.c.h.b16 %v1194
        %v1675 = vunpack.c.l.b16 %v1195
        %v1676 = vunpack.c.h.b16 %v1195
        %v1677 = vunpack.c.l.b16 %v1196
        %v1678 = vunpack.c.h.b16 %v1196
        %v1679 = vunpack.c.l.b16 %v1197
        %v1680 = vunpack.c.h.b16 %v1197
        %v1681 = vunpack.c.l.b16 %v1198
        %v1682 = vunpack.c.h.b16 %v1198
        %v1683 = vunpack.c.l.b16 %v1199
        %v1684 = vunpack.c.h.b16 %v1199
        %v1685 = vunpack.c.l.b16 %v1200
        %v1686 = vunpack.c.h.b16 %v1200
        %v1687 = vunpack.c.l.b16 %v1201
        %v1688 = vunpack.c.h.b16 %v1201
        %v1689 = vunpack.c.l.b16 %v1202
        %v1690 = vunpack.c.h.b16 %v1202
        %v1691 = vunpack.c.l.b16 %v1203
        %v1692 = vunpack.c.h.b16 %v1203
        %v1693 = vunpack.c.l.b16 %v1204
        %v1694 = vunpack.c.h.b16 %v1204
        %v1695 = vunpack.c.l.b16 %v1205
        %v1696 = vunpack.c.h.b16 %v1205
        %v1697 = vunpack.c.l.b16 %v1206
        %v1698 = vunpack.c.h.b16 %v1206
        %v1699 = vpack.c.b16 %v1381, %v1379
        %v1700 = vpack.c.b16 %v1382, %v1380
        %v1701 = vpack.c.b16 %v1385, %v1383
        %v1702 = vpack.c.b16 %v1386, %v1384
        %v1703 = vpack.c.b16 %v1389, %v1387
        %v1704 = vpack.c.b16 %v1390, %v1388
        %v1705 = vpack.c.b16 %v1393, %v1391
        %v1706 = vpack.c.b16 %v1394, %v1392
        %v1707 = vpack.c.b16 %v1397, %v1395
        %v1708 = vpack.c.b16 %v1398, %v1396
        %v1709 = vpack.c.b16 %v1401, %v1399
        %v1710 = vpack.c.b16 %v1402, %v1400
        %v1711 = vpack.c.b16 %v1405, %v1403
        %v1712 = vpack.c.b16 %v1406, %v1404
        %v1713 = vpack.c.b16 %v1409, %v1407
        %v1714 = vpack.c.b16 %v1410, %v1408
        %v1715 = vpack.c.b16 %v1413, %v1411
        %v1716 = vpack.c.b16 %v1414, %v1412
        %v1717 = vpack.c.b16 %v1417, %v1415
        %v1718 = vpack.c.b16 %v1418, %v1416
        %v1719 = vpack.c.b16 %v1421, %v1419
        %v1720 = vpack.c.b16 %v1422, %v1420
        %v1721 = vpack.c.b16 %v1425, %v1423
        %v1722 = vpack.c.b16 %v1426, %v1424
        %v1723 = vpack.c.b16 %v1429, %v1427
        %v1724 = vpack.c.b16 %v1430, %v1428
        %v1725 = vpack.c.b16 %v1433, %v1431
        %v1726 = vpack.c.b16 %v1434, %v1432
        %v1727 = vpack.c.b16 %v1437, %v1435
        %v1728 = vpack.c.b16 %v1438, %v1436
        %v1729 = vpack.c.b16 %v1441, %v1439
        %v1730 = vpack.c.b16 %v1442, %v1440
        %v1731 = vpack.c.b16 %v1445, %v1443
        %v1732 = vpack.c.b16 %v1446, %v1444
        %v1733 = vpack.c.b16 %v1449, %v1447
        %v1734 = vpack.c.b16 %v1450, %v1448
        %v1735 = vpack.c.b16 %v1453, %v1451
        %v1736 = vpack.c.b16 %v1454, %v1452
        %v1737 = vpack.c.b16 %v1457, %v1455
        %v1738 = vpack.c.b16 %v1458, %v1456
        %v1739 = vpack.c.b16 %v1461, %v1459
        %v1740 = vpack.c.b16 %v1462, %v1460
        %v1741 = vpack.c.b16 %v1465, %v1463
        %v1742 = vpack.c.b16 %v1466, %v1464
        %v1743 = vpack.c.b16 %v1469, %v1467
        %v1744 = vpack.c.b16 %v1470, %v1468
        %v1745 = vpack.c.b16 %v1473, %v1471
        %v1746 = vpack.c.b16 %v1474, %v1472
        %v1747 = vpack.c.b16 %v1477, %v1475
        %v1748 = vpack.c.b16 %v1478, %v1476
        %v1749 = vpack.c.b16 %v1481, %v1479
        %v1750 = vpack.c.b16 %v1482, %v1480
        %v1751 = vpack.c.b16 %v1485, %v1483
        %v1752 = vpack.c.b16 %v1486, %v1484
        %v1753 = vpack.c.b16 %v1489, %v1487
        %v1754 = vpack.c.b16 %v1490, %v1488
        %v1755 = vpack.c.b16 %v1493, %v1491
        %v1756 = vpack.c.b16 %v1494, %v1492
        %v1757 = vpack.c.b16 %v1497, %v1495
        %v1758 = vpack.c.b16 %v1498, %v1496
        %v1759 = vpack.c.b16 %v1501, %v1499
        %v1760 = vpack.c.b16 %v1502, %v1500
        %v1761 = vpack.c.b16 %v1505, %v1503
        %v1762 = vpack.c.b16 %v1506, %v1504
        %v1763 = vpack.c.b16 %v1509, %v1507
        %v1764 = vpack.c.b16 %v1510, %v1508
        %v1765 = vpack.c.b16 %v1513, %v1511
        %v1766 = vpack.c.b16 %v1514, %v1512
        %v1767 = vpack.c.b16 %v1517, %v1515
        %v1768 = vpack.c.b16 %v1518, %v1516
        %v1769 = vpack.c.b16 %v1521, %v1519
        %v1770 = vpack.c.b16 %v1522, %v1520
        %v1771 = vpack.c.b16 %v1525, %v1523
        %v1772 = vpack.c.b16 %v1526, %v1524
        %v1773 = vpack.c.b16 %v1529, %v1527
        %v1774 = vpack.c.b16 %v1530, %v1528
        %v1775 = vpack.c.b16 %v1533, %v1531
        %v1776 = vpack.c.b16 %v1534, %v1532
        %v1777 = vpack.c.b16 %v1537, %v1535
        %v1778 = vpack.c.b16 %v1538, %v1536
        %v1779 = vpack.c.b16 %v1541, %v1539
        %v1780 = vpack.c.b16 %v1542, %v1540
        %v1781 = vpack.c.b16 %v1545, %v1543
        %v1782 = vpack.c.b16 %v1546, %v1544
        %v1783 = vpack.c.b16 %v1549, %v1547
        %v1784 = vpack.c.b16 %v1550, %v1548
        %v1785 = vpack.c.b16 %v1553, %v1551
        %v1786 = vpack.c.b16 %v1554, %v1552
        %v1787 = vpack.c.b16 %v1557, %v1555
        %v1788 = vpack.c.b16 %v1558, %v1556
        %v1789 = vpack.c.b16 %v1561, %v1559
        %v1790 = vpack.c.b16 %v1562, %v1560
        %v1791 = vpack.c.b16 %v1565, %v1563
        %v1792 = vpack.c.b16 %v1566, %v1564
        %v1793 = vpack.c.b16 %v1569, %v1567
        %v1794 = vpack.c.b16 %v1570, %v1568
        %v1795 = vpack.c.b16 %v1573, %v1571
        %v1796 = vpack.c.b16 %v1574, %v1572
        %v1797 = vpack.c.b16 %v1577, %v1575
        %v1798 = vpack.c.b16 %v1578, %v1576
        %v1799 = vpack.c.b16 %v1581, %v1579
        %v1800 = vpack.c.b16 %v1582, %v1580
        %v1801 = vpack.c.b16 %v1585, %v1583
        %v1802 = vpack.c.b16 %v1586, %v1584
        %v1803 = vpack.c.b16 %v1589, %v1587
        %v1804 = vpack.c.b16 %v1590, %v1588
        %v1805 = vpack.c.b16 %v1593, %v1591
        %v1806 = vpack.c.b16 %v1594, %v1592
        %v1807 = vpack.c.b16 %v1597, %v1595
        %v1808 = vpack.c.b16 %v1598, %v1596
        %v1809 = vpack.c.b16 %v1601, %v1599
        %v1810 = vpack.c.b16 %v1602, %v1600
        %v1811 = vpack.c.b16 %v1605, %v1603
        %v1812 = vpack.c.b16 %v1606, %v1604
        %v1813 = vpack.c.b16 %v1609, %v1607
        %v1814 = vpack.c.b16 %v1610, %v1608
        %v1815 = vpack.c.b16 %v1613, %v1611
        %v1816 = vpack.c.b16 %v1614, %v1612
        %v1817 = vpack.c.b16 %v1617, %v1615
        %v1818 = vpack.c.b16 %v1618, %v1616
        %v1819 = vpack.c.b16 %v1621, %v1619
        %v1820 = vpack.c.b16 %v1622, %v1620
        %v1821 = vpack.c.b16 %v1625, %v1623
        %v1822 = vpack.c.b16 %v1626, %v1624
        %v1823 = vpack.c.b16 %v1629, %v1627
        %v1824 = vpack.c.b16 %v1630, %v1628
        %v1825 = vpack.c.b16 %v1633, %v1631
        %v1826 = vpack.c.b16 %v1634, %v1632
        %v1827 = vpack.c.b16 %v1637, %v1635
        %v1828 = vpack.c.b16 %v1638, %v1636
        %v1829 = vpack.c.b16 %v1641, %v1639
        %v1830 = vpack.c.b16 %v1642, %v1640
        %v1831 = vpack.c.b16 %v1645, %v1643
        %v1832 = vpack.c.b16 %v1646, %v1644
        %v1833 = vpack.c.b16 %v1649, %v1647
        %v1834 = vpack.c.b16 %v1650, %v1648
        %v1835 = vpack.c.b16 %v1653, %v1651
        %v1836 = vpack.c.b16 %v1654, %v1652
        %v1837 = vpack.c.b16 %v1657, %v1655
        %v1838 = vpack.c.b16 %v1658, %v1656
        %v1839 = vpack.c.b16 %v1661, %v1659
        %v1840 = vpack.c.b16 %v1662, %v1660
        %v1841 = vpack.c.b16 %v1665, %v1663
        %v1842 = vpack.c.b16 %v1666, %v1664
        %v1843 = vpack.c.b16 %v1669, %v1667
        %v1844 = vpack.c.b16 %v1670, %v1668
        %v1845 = vpack.c.b16 %v1673, %v1671
        %v1846 = vpack.c.b16 %v1674, %v1672
        %v1847 = vpack.c.b16 %v1677, %v1675
        %v1848 = vpack.c.b16 %v1678, %v1676
        %v1849 = vpack.c.b16 %v1681, %v1679
        %v1850 = vpack.c.b16 %v1682, %v1680
        %v1851 = vpack.c.b16 %v1685, %v1683
        %v1852 = vpack.c.b16 %v1686, %v1684
        %v1853 = vpack.c.b16 %v1689, %v1687
        %v1854 = vpack.c.b16 %v1690, %v1688
        %v1855 = vpack.c.b16 %v1693, %v1691
        %v1856 = vpack.c.b16 %v1694, %v1692
        %v1857 = vpack.c.b16 %v1697, %v1695
        %v1858 = vpack.c.b16 %v1698, %v1696
        %2019 = vmatprep.subr.bf16.mxu0 %v1700
        %2020 = vmatpush1.bf16.msra.mxu0 %v1699
        %2021 = vmatprep.subr.bf16.mxu0 %v1702
        %2022 = vmatpush1.bf16.msra.mxu0 %v1701
        %2023 = vmatprep.subr.bf16.mxu0 %v1704
        %2024 = vmatpush1.bf16.msra.mxu0 %v1703
        %2025 = vmatprep.subr.bf16.mxu0 %v1706
        %2026 = vmatpush1.bf16.msra.mxu0 %v1705
        %2027 = vmatprep.subr.bf16.mxu0 %v1708
        %2028 = vmatpush1.bf16.msra.mxu0 %v1707
        %2029 = vmatprep.subr.bf16.mxu0 %v1710
        %2030 = vmatpush1.bf16.msra.mxu0 %v1709
        %2031 = vmatprep.subr.bf16.mxu0 %v1712
        %2032 = vmatpush1.bf16.msra.mxu0 %v1711
        %2033 = vmatprep.subr.bf16.mxu0 %v1714
        %2034 = vmatpush1.bf16.msra.mxu0 %v1713
        %2035 = vmatprep.subr.bf16.mxu0 %v1716
        %2036 = vmatpush1.bf16.msra.mxu0 %v1715
        %2037 = vmatprep.subr.bf16.mxu0 %v1718
        %2038 = vmatpush1.bf16.msra.mxu0 %v1717
        %2039 = vmatprep.subr.bf16.mxu0 %v1720
        %2040 = vmatpush1.bf16.msra.mxu0 %v1719
        %2041 = vmatprep.subr.bf16.mxu0 %v1722
        %2042 = vmatpush1.bf16.msra.mxu0 %v1721
        %2043 = vmatprep.subr.bf16.mxu0 %v1724
        %2044 = vmatpush1.bf16.msra.mxu0 %v1723
        %2045 = vmatprep.subr.bf16.mxu0 %v1726
        %2046 = vmatpush1.bf16.msra.mxu0 %v1725
        %2047 = vmatprep.subr.bf16.mxu0 %v1728
        %2048 = vmatpush1.bf16.msra.mxu0 %v1727
        %2049 = vmatprep.subr.bf16.mxu0 %v1730
        %2050 = vmatpush1.bf16.msra.mxu0 %v1729
        %2051 = vmatprep.mubr.bf16.mxu0 %v1028
        %2052 = vmatmul.mubr.bf16.gmra.mrb[0].mxu0 %v1027
        %v2053 = vpop.f32.mrb[0].mxu0
        %v2054 = vadd.f32 %v1212, %v2053
        %v2055 = vpop.f32.mrb[0].mxu0
        %v2056 = vadd.f32 %v1216, %v2055
        %v2057 = vpop.f32.mrb[0].mxu0
        %v2058 = vadd.f32 %v1212, %v2057
        %v2059 = vpop.f32.mrb[0].mxu0
        %v2060 = vadd.f32 %v1216, %v2059
        %2061 = vmatprep.mubr.bf16.mxu0 %v1038
        %2062 = vmatmul.mubr.bf16.gmra.mrb[0].mxu0 %v1037
        %v2063 = vpop.f32.mrb[0].mxu0
        %v2064 = vadd.f32 %v1212, %v2063
        %v2065 = vpop.f32.mrb[0].mxu0
        %v2066 = vadd.f32 %v1216, %v2065
        %v2067 = vpop.f32.mrb[0].mxu0
        %v2068 = vadd.f32 %v1212, %v2067
        %v2069 = vpop.f32.mrb[0].mxu0
        %v2070 = vadd.f32 %v1216, %v2069
        %2071 = vdwg.mxu0
        %2072 = vmatprep.subr.bf16.mxu0 %v1732
        %2073 = vmatpush1.bf16.msra.mxu0 %v1731
        %2074 = vmatprep.subr.bf16.mxu0 %v1734
        %2075 = vmatpush1.bf16.msra.mxu0 %v1733
        %2076 = vmatprep.subr.bf16.mxu0 %v1736
        %2077 = vmatpush1.bf16.msra.mxu0 %v1735
        %2078 = vmatprep.subr.bf16.mxu0 %v1738
        %2079 = vmatpush1.bf16.msra.mxu0 %v1737
        %2080 = vmatprep.subr.bf16.mxu0 %v1740
        %2081 = vmatpush1.bf16.msra.mxu0 %v1739
        %2082 = vmatprep.subr.bf16.mxu0 %v1742
        %2083 = vmatpush1.bf16.msra.mxu0 %v1741
        %2084 = vmatprep.subr.bf16.mxu0 %v1744
        %2085 = vmatpush1.bf16.msra.mxu0 %v1743
        %2086 = vmatprep.subr.bf16.mxu0 %v1746
        %2087 = vmatpush1.bf16.msra.mxu0 %v1745
        %2088 = vmatprep.subr.bf16.mxu0 %v1748
        %2089 = vmatpush1.bf16.msra.mxu0 %v1747
        %2090 = vmatprep.subr.bf16.mxu0 %v1750
        %2091 = vmatpush1.bf16.msra.mxu0 %v1749
        %2092 = vmatprep.subr.bf16.mxu0 %v1752
        %2093 = vmatpush1.bf16.msra.mxu0 %v1751
        %2094 = vmatprep.subr.bf16.mxu0 %v1754
        %2095 = vmatpush1.bf16.msra.mxu0 %v1753
        %2096 = vmatprep.subr.bf16.mxu0 %v1756
        %2097 = vmatpush1.bf16.msra.mxu0 %v1755
        %2098 = vmatprep.subr.bf16.mxu0 %v1758
        %2099 = vmatpush1.bf16.msra.mxu0 %v1757
        %2100 = vmatprep.subr.bf16.mxu0 %v1760
        %2101 = vmatpush1.bf16.msra.mxu0 %v1759
        %2102 = vmatprep.subr.bf16.mxu0 %v1762
        %2103 = vmatpush1.bf16.msra.mxu0 %v1761
        %2104 = vmatprep.mubr.bf16.mxu0 %v1030
        %2105 = vmatmul.mubr.bf16.gmra.mrb[0].mxu0 %v1029
        %v2106 = vpop.f32.mrb[0].mxu0
        %v2107 = vadd.f32 %v2054, %v2106
        %v2108 = vpop.f32.mrb[0].mxu0
        %v2109 = vadd.f32 %v2056, %v2108
        %v2110 = vpop.f32.mrb[0].mxu0
        %v2111 = vadd.f32 %v2058, %v2110
        %v2112 = vpop.f32.mrb[0].mxu0
        %v2113 = vadd.f32 %v2060, %v2112
        %2114 = vmatprep.mubr.bf16.mxu0 %v1040
        %2115 = vmatmul.mubr.bf16.gmra.mrb[0].mxu0 %v1039
        %v2116 = vpop.f32.mrb[0].mxu0
        %v2117 = vadd.f32 %v2064, %v2116
        %v2118 = vpop.f32.mrb[0].mxu0
        %v2119 = vadd.f32 %v2066, %v2118
        %v2120 = vpop.f32.mrb[0].mxu0
        %v2121 = vadd.f32 %v2068, %v2120
        %v2122 = vpop.f32.mrb[0].mxu0
        %v2123 = vadd.f32 %v2070, %v2122
        %2124 = vdwg.mxu0
        %2125 = vmatprep.subr.bf16.mxu0 %v1764
        %2126 = vmatpush1.bf16.msra.mxu0 %v1763
        %2127 = vmatprep.subr.bf16.mxu0 %v1766
        %2128 = vmatpush1.bf16.msra.mxu0 %v1765
        %2129 = vmatprep.subr.bf16.mxu0 %v1768
        %2130 = vmatpush1.bf16.msra.mxu0 %v1767
        %2131 = vmatprep.subr.bf16.mxu0 %v1770
        %2132 = vmatpush1.bf16.msra.mxu0 %v1769
        %2133 = vmatprep.subr.bf16.mxu0 %v1772
        %2134 = vmatpush1.bf16.msra.mxu0 %v1771
        %2135 = vmatprep.subr.bf16.mxu0 %v1774
        %2136 = vmatpush1.bf16.msra.mxu0 %v1773
        %2137 = vmatprep.subr.bf16.mxu0 %v1776
        %2138 = vmatpush1.bf16.msra.mxu0 %v1775
        %2139 = vmatprep.subr.bf16.mxu0 %v1778
        %2140 = vmatpush1.bf16.msra.mxu0 %v1777
        %2141 = vmatprep.subr.bf16.mxu0 %v1780
        %2142 = vmatpush1.bf16.msra.mxu0 %v1779
        %2143 = vmatprep.subr.bf16.mxu0 %v1782
        %2144 = vmatpush1.bf16.msra.mxu0 %v1781
        %2145 = vmatprep.subr.bf16.mxu0 %v1784
        %2146 = vmatpush1.bf16.msra.mxu0 %v1783
        %2147 = vmatprep.subr.bf16.mxu0 %v1786
        %2148 = vmatpush1.bf16.msra.mxu0 %v1785
        %2149 = vmatprep.subr.bf16.mxu0 %v1788
        %2150 = vmatpush1.bf16.msra.mxu0 %v1787
        %2151 = vmatprep.subr.bf16.mxu0 %v1790
        %2152 = vmatpush1.bf16.msra.mxu0 %v1789
        %2153 = vmatprep.subr.bf16.mxu0 %v1792
        %2154 = vmatpush1.bf16.msra.mxu0 %v1791
        %2155 = vmatprep.subr.bf16.mxu0 %v1794
        %2156 = vmatpush1.bf16.msra.mxu0 %v1793
        %2157 = vmatprep.mubr.bf16.mxu0 %v1032
        %2158 = vmatmul.mubr.bf16.gmra.mrb[0].mxu0 %v1031
        %v2159 = vpop.f32.mrb[0].mxu0
        %v2160 = vadd.f32 %v2107, %v2159
        %v2161 = vpop.f32.mrb[0].mxu0
        %v2162 = vadd.f32 %v2109, %v2161
        %v2163 = vpop.f32.mrb[0].mxu0
        %v2164 = vadd.f32 %v2111, %v2163
        %v2165 = vpop.f32.mrb[0].mxu0
        %v2166 = vadd.f32 %v2113, %v2165
        %2167 = vmatprep.mubr.bf16.mxu0 %v1042
        %2168 = vmatmul.mubr.bf16.gmra.mrb[0].mxu0 %v1041
        %v2169 = vpop.f32.mrb[0].mxu0
        %v2170 = vadd.f32 %v2117, %v2169
        %v2171 = vpop.f32.mrb[0].mxu0
        %v2172 = vadd.f32 %v2119, %v2171
        %v2173 = vpop.f32.mrb[0].mxu0
        %v2174 = vadd.f32 %v2121, %v2173
        %v2175 = vpop.f32.mrb[0].mxu0
        %v2176 = vadd.f32 %v2123, %v2175
        %2177 = vdwg.mxu0
        %2178 = vmatprep.subr.bf16.mxu0 %v1796
        %2179 = vmatpush1.bf16.msra.mxu0 %v1795
        %2180 = vmatprep.subr.bf16.mxu0 %v1798
        %2181 = vmatpush1.bf16.msra.mxu0 %v1797
        %2182 = vmatprep.subr.bf16.mxu0 %v1800
        %2183 = vmatpush1.bf16.msra.mxu0 %v1799
        %2184 = vmatprep.subr.bf16.mxu0 %v1802
        %2185 = vmatpush1.bf16.msra.mxu0 %v1801
        %2186 = vmatprep.subr.bf16.mxu0 %v1804
        %2187 = vmatpush1.bf16.msra.mxu0 %v1803
        %2188 = vmatprep.subr.bf16.mxu0 %v1806
        %2189 = vmatpush1.bf16.msra.mxu0 %v1805
        %2190 = vmatprep.subr.bf16.mxu0 %v1808
        %2191 = vmatpush1.bf16.msra.mxu0 %v1807
        %2192 = vmatprep.subr.bf16.mxu0 %v1810
        %2193 = vmatpush1.bf16.msra.mxu0 %v1809
        %2194 = vmatprep.subr.bf16.mxu0 %v1812
        %2195 = vmatpush1.bf16.msra.mxu0 %v1811
        %2196 = vmatprep.subr.bf16.mxu0 %v1814
        %2197 = vmatpush1.bf16.msra.mxu0 %v1813
        %2198 = vmatprep.subr.bf16.mxu0 %v1816
        %2199 = vmatpush1.bf16.msra.mxu0 %v1815
        %2200 = vmatprep.subr.bf16.mxu0 %v1818
        %2201 = vmatpush1.bf16.msra.mxu0 %v1817
        %2202 = vmatprep.subr.bf16.mxu0 %v1820
        %2203 = vmatpush1.bf16.msra.mxu0 %v1819
        %2204 = vmatprep.subr.bf16.mxu0 %v1822
        %2205 = vmatpush1.bf16.msra.mxu0 %v1821
        %2206 = vmatprep.subr.bf16.mxu0 %v1824
        %2207 = vmatpush1.bf16.msra.mxu0 %v1823
        %2208 = vmatprep.subr.bf16.mxu0 %v1826
        %2209 = vmatpush1.bf16.msra.mxu0 %v1825
        %2210 = vmatprep.mubr.bf16.mxu0 %v1034
        %2211 = vmatmul.mubr.bf16.gmra.mrb[0].mxu0 %v1033
        %v2212 = vpop.f32.mrb[0].mxu0
        %v2213 = vadd.f32 %v2160, %v2212
        %v2214 = vpop.f32.mrb[0].mxu0
        %v2215 = vadd.f32 %v2162, %v2214
        %v2216 = vpop.f32.mrb[0].mxu0
        %v2217 = vadd.f32 %v2164, %v2216
        %v2218 = vpop.f32.mrb[0].mxu0
        %v2219 = vadd.f32 %v2166, %v2218
        %2220 = vmatprep.mubr.bf16.mxu0 %v1044
        %2221 = vmatmul.mubr.bf16.gmra.mrb[0].mxu0 %v1043
        %v2222 = vpop.f32.mrb[0].mxu0
        %v2223 = vadd.f32 %v2170, %v2222
        %v2224 = vpop.f32.mrb[0].mxu0
        %v2225 = vadd.f32 %v2172, %v2224
        %v2226 = vpop.f32.mrb[0].mxu0
        %v2227 = vadd.f32 %v2174, %v2226
        %v2228 = vpop.f32.mrb[0].mxu0
        %v2229 = vadd.f32 %v2176, %v2228
        %2230 = vdwg.mxu0
        %2231 = vmatprep.subr.bf16.mxu0 %v1828
        %2232 = vmatpush1.bf16.msra.mxu0 %v1827
        %2233 = vmatprep.subr.bf16.mxu0 %v1830
        %2234 = vmatpush1.bf16.msra.mxu0 %v1829
        %2235 = vmatprep.subr.bf16.mxu0 %v1832
        %2236 = vmatpush1.bf16.msra.mxu0 %v1831
        %2237 = vmatprep.subr.bf16.mxu0 %v1834
        %2238 = vmatpush1.bf16.msra.mxu0 %v1833
        %2239 = vmatprep.subr.bf16.mxu0 %v1836
        %2240 = vmatpush1.bf16.msra.mxu0 %v1835
        %2241 = vmatprep.subr.bf16.mxu0 %v1838
        %2242 = vmatpush1.bf16.msra.mxu0 %v1837
        %2243 = vmatprep.subr.bf16.mxu0 %v1840
        %2244 = vmatpush1.bf16.msra.mxu0 %v1839
        %2245 = vmatprep.subr.bf16.mxu0 %v1842
        %2246 = vmatpush1.bf16.msra.mxu0 %v1841
        %2247 = vmatprep.subr.bf16.mxu0 %v1844
        %2248 = vmatpush1.bf16.msra.mxu0 %v1843
        %2249 = vmatprep.subr.bf16.mxu0 %v1846
        %2250 = vmatpush1.bf16.msra.mxu0 %v1845
        %2251 = vmatprep.subr.bf16.mxu0 %v1848
        %2252 = vmatpush1.bf16.msra.mxu0 %v1847
        %2253 = vmatprep.subr.bf16.mxu0 %v1850
        %2254 = vmatpush1.bf16.msra.mxu0 %v1849
        %2255 = vmatprep.subr.bf16.mxu0 %v1852
        %2256 = vmatpush1.bf16.msra.mxu0 %v1851
        %2257 = vmatprep.subr.bf16.mxu0 %v1854
        %2258 = vmatpush1.bf16.msra.mxu0 %v1853
        %2259 = vmatprep.subr.bf16.mxu0 %v1856
        %2260 = vmatpush1.bf16.msra.mxu0 %v1855
        %2261 = vmatprep.subr.bf16.mxu0 %v1858
        %2262 = vmatpush1.bf16.msra.mxu0 %v1857
        %2263 = vmatprep.mubr.bf16.mxu0 %v1036
        %2264 = vmatmul.mubr.bf16.gmra.mrb[0].mxu0 %v1035
        %v2265 = vpop.f32.mrb[0].mxu0
        %v2266 = vadd.f32 %v2213, %v2265
        %v2267 = vpop.f32.mrb[0].mxu0
        %v2268 = vadd.f32 %v2215, %v2267
        %v2269 = vpop.f32.mrb[0].mxu0
        %v2270 = vadd.f32 %v2217, %v2269
        %v2271 = vpop.f32.mrb[0].mxu0
        %v2272 = vadd.f32 %v2219, %v2271
        %2273 = vmatprep.mubr.bf16.mxu0 %v1046
        %2274 = vmatmul.mubr.bf16.gmra.mrb[0].mxu0 %v1045
        %v2275 = vpop.f32.mrb[0].mxu0
        %v2276 = vadd.f32 %v2223, %v2275
        %v2277 = vpop.f32.mrb[0].mxu0
        %v2278 = vadd.f32 %v2225, %v2277
        %v2279 = vpop.f32.mrb[0].mxu0
        %v2280 = vadd.f32 %v2227, %v2279
        %v2281 = vpop.f32.mrb[0].mxu0
        %v2282 = vadd.f32 %v2229, %v2281
        %2283 = vdwg.mxu0
        %v2284 = vmax.f32 %v2266, 0.0
        %v2285 = vmax.f32 %v2268, 0.0
        %v2286 = vmax.f32 %v2270, 0.0
        %v2287 = vmax.f32 %v2272, 0.0
        %v2288 = vmax.f32 %v2276, 0.0
        %v2289 = vmax.f32 %v2278, 0.0
        %v2290 = vmax.f32 %v2280, 0.0
        %v2291 = vmax.f32 %v2282, 0.0
        %v2292 = vpack.c.bf16 %v2286, %v2284
        %v2293 = vpack.c.bf16 %v2287, %v2285
        %v2294 = vpack.c.bf16 %v2290, %v2288
        %v2295 = vpack.c.bf16 %v2291, %v2289
        %v2296 = vld [vmem:[#allocation5] sm:$0xff]
        %v2297 = vld [vmem:[#allocation5 + $0x8] sm:$0xff]
        %v2298 = vld [vmem:[#allocation5 + $0x10] sm:$0xff]
        %v2299 = vld [vmem:[#allocation5 + $0x18] sm:$0xff]
        %v2300 = vld [vmem:[#allocation5 + $0x20] sm:$0xff]
        %v2301 = vld [vmem:[#allocation5 + $0x28] sm:$0xff]
        %v2302 = vld [vmem:[#allocation5 + $0x30] sm:$0xff]
        %v2303 = vld [vmem:[#allocation5 + $0x38] sm:$0xff]
        %v2304 = vld [vmem:[#allocation5 + $0x40] sm:$0xff]
        %v2305 = vld [vmem:[#allocation5 + $0x48] sm:$0xff]
        %v2306 = vld [vmem:[#allocation5 + $0x50] sm:$0xff]
        %v2307 = vld [vmem:[#allocation5 + $0x58] sm:$0xff]
        %v2308 = vld [vmem:[#allocation5 + $0x60] sm:$0xff]
        %v2309 = vld [vmem:[#allocation5 + $0x68] sm:$0xff]
        %v2310 = vld [vmem:[#allocation5 + $0x70] sm:$0xff]
        %v2311 = vld [vmem:[#allocation5 + $0x78] sm:$0xff]
        %v2312 = vld [vmem:[#allocation5 + $0x80] sm:$0xff]
        %v2313 = vld [vmem:[#allocation5 + $0x88] sm:$0xff]
        %v2314 = vld [vmem:[#allocation5 + $0x90] sm:$0xff]
        %v2315 = vld [vmem:[#allocation5 + $0x98] sm:$0xff]
        %v2316 = vld [vmem:[#allocation5 + $0xa0] sm:$0xff]
        %v2317 = vld [vmem:[#allocation5 + $0xa8] sm:$0xff]
        %v2318 = vld [vmem:[#allocation5 + $0xb0] sm:$0xff]
        %v2319 = vld [vmem:[#allocation5 + $0xb8] sm:$0xff]
        %v2320 = vld [vmem:[#allocation5 + $0xc0] sm:$0xff]
        %v2321 = vld [vmem:[#allocation5 + $0xc8] sm:$0xff]
        %v2322 = vld [vmem:[#allocation5 + $0xd0] sm:$0xff]
        %v2323 = vld [vmem:[#allocation5 + $0xd8] sm:$0xff]
        %v2324 = vld [vmem:[#allocation5 + $0xe0] sm:$0xff]
        %v2325 = vld [vmem:[#allocation5 + $0xe8] sm:$0xff]
        %v2326 = vld [vmem:[#allocation5 + $0xf0] sm:$0xff]
        %v2327 = vld [vmem:[#allocation5 + $0xf8] sm:$0xff]
        %v2328 = vld [vmem:[%s5] sm:$0x3]
        %v2330 = vlaneseq
        %v2331 = vshrl.u32 %v2330, 7
        %v2332 = vsub.s32 0, %v2331
        %v2333 = vrot.slane %v2328, %v2332
        %v2334 = vlaneseq
        %v2335 = vshrl.u32 %v2334, 7
        %v2336 = vsub.s32 1, %v2335
        %v2337 = vrot.slane %v2328, %v2336
        %v2372 = vunpack.c.l.b16 %v2296
        %v2373 = vunpack.c.h.b16 %v2296
        %v2374 = vunpack.c.l.b16 %v2297
        %v2375 = vunpack.c.h.b16 %v2297
        %v2376 = vunpack.c.l.b16 %v2298
        %v2377 = vunpack.c.h.b16 %v2298
        %v2378 = vunpack.c.l.b16 %v2299
        %v2379 = vunpack.c.h.b16 %v2299
        %v2380 = vunpack.c.l.b16 %v2300
        %v2381 = vunpack.c.h.b16 %v2300
        %v2382 = vunpack.c.l.b16 %v2301
        %v2383 = vunpack.c.h.b16 %v2301
        %v2384 = vunpack.c.l.b16 %v2302
        %v2385 = vunpack.c.h.b16 %v2302
        %v2386 = vunpack.c.l.b16 %v2303
        %v2387 = vunpack.c.h.b16 %v2303
        %v2388 = vunpack.c.l.b16 %v2304
        %v2389 = vunpack.c.h.b16 %v2304
        %v2390 = vunpack.c.l.b16 %v2305
        %v2391 = vunpack.c.h.b16 %v2305
        %v2392 = vunpack.c.l.b16 %v2306
        %v2393 = vunpack.c.h.b16 %v2306
        %v2394 = vunpack.c.l.b16 %v2307
        %v2395 = vunpack.c.h.b16 %v2307
        %v2396 = vunpack.c.l.b16 %v2308
        %v2397 = vunpack.c.h.b16 %v2308
        %v2398 = vunpack.c.l.b16 %v2309
        %v2399 = vunpack.c.h.b16 %v2309
        %v2400 = vunpack.c.l.b16 %v2310
        %v2401 = vunpack.c.h.b16 %v2310
        %v2402 = vunpack.c.l.b16 %v2311
        %v2403 = vunpack.c.h.b16 %v2311
        %v2404 = vunpack.c.l.b16 %v2312
        %v2405 = vunpack.c.h.b16 %v2312
        %v2406 = vunpack.c.l.b16 %v2313
        %v2407 = vunpack.c.h.b16 %v2313
        %v2408 = vunpack.c.l.b16 %v2314
        %v2409 = vunpack.c.h.b16 %v2314
        %v2410 = vunpack.c.l.b16 %v2315
        %v2411 = vunpack.c.h.b16 %v2315
        %v2412 = vunpack.c.l.b16 %v2316
        %v2413 = vunpack.c.h.b16 %v2316
        %v2414 = vunpack.c.l.b16 %v2317
        %v2415 = vunpack.c.h.b16 %v2317
        %v2416 = vunpack.c.l.b16 %v2318
        %v2417 = vunpack.c.h.b16 %v2318
        %v2418 = vunpack.c.l.b16 %v2319
        %v2419 = vunpack.c.h.b16 %v2319
        %v2420 = vunpack.c.l.b16 %v2320
        %v2421 = vunpack.c.h.b16 %v2320
        %v2422 = vunpack.c.l.b16 %v2321
        %v2423 = vunpack.c.h.b16 %v2321
        %v2424 = vunpack.c.l.b16 %v2322
        %v2425 = vunpack.c.h.b16 %v2322
        %v2426 = vunpack.c.l.b16 %v2323
        %v2427 = vunpack.c.h.b16 %v2323
        %v2428 = vunpack.c.l.b16 %v2324
        %v2429 = vunpack.c.h.b16 %v2324
        %v2430 = vunpack.c.l.b16 %v2325
        %v2431 = vunpack.c.h.b16 %v2325
        %v2432 = vunpack.c.l.b16 %v2326
        %v2433 = vunpack.c.h.b16 %v2326
        %v2434 = vunpack.c.l.b16 %v2327
        %v2435 = vunpack.c.h.b16 %v2327
        %v2436 = vpack.c.b16 %v2374, %v2372
        %v2437 = vpack.c.b16 %v2375, %v2373
        %v2438 = vpack.c.b16 %v2378, %v2376
        %v2439 = vpack.c.b16 %v2379, %v2377
        %v2440 = vpack.c.b16 %v2382, %v2380
        %v2441 = vpack.c.b16 %v2383, %v2381
        %v2442 = vpack.c.b16 %v2386, %v2384
        %v2443 = vpack.c.b16 %v2387, %v2385
        %v2444 = vpack.c.b16 %v2390, %v2388
        %v2445 = vpack.c.b16 %v2391, %v2389
        %v2446 = vpack.c.b16 %v2394, %v2392
        %v2447 = vpack.c.b16 %v2395, %v2393
        %v2448 = vpack.c.b16 %v2398, %v2396
        %v2449 = vpack.c.b16 %v2399, %v2397
        %v2450 = vpack.c.b16 %v2402, %v2400
        %v2451 = vpack.c.b16 %v2403, %v2401
        %v2452 = vpack.c.b16 %v2406, %v2404
        %v2453 = vpack.c.b16 %v2407, %v2405
        %v2454 = vpack.c.b16 %v2410, %v2408
        %v2455 = vpack.c.b16 %v2411, %v2409
        %v2456 = vpack.c.b16 %v2414, %v2412
        %v2457 = vpack.c.b16 %v2415, %v2413
        %v2458 = vpack.c.b16 %v2418, %v2416
        %v2459 = vpack.c.b16 %v2419, %v2417
        %v2460 = vpack.c.b16 %v2422, %v2420
        %v2461 = vpack.c.b16 %v2423, %v2421
        %v2462 = vpack.c.b16 %v2426, %v2424
        %v2463 = vpack.c.b16 %v2427, %v2425
        %v2464 = vpack.c.b16 %v2430, %v2428
        %v2465 = vpack.c.b16 %v2431, %v2429
        %v2466 = vpack.c.b16 %v2434, %v2432
        %v2467 = vpack.c.b16 %v2435, %v2433
        %2500 = vmatprep.subr.bf16.mxu0 %v2437
        %2501 = vmatpush1.bf16.msra.mxu0 %v2436
        %2502 = vmatprep.subr.bf16.mxu0 %v2439
        %2503 = vmatpush1.bf16.msra.mxu0 %v2438
        %2504 = vmatprep.subr.bf16.mxu0 %v2441
        %2505 = vmatpush1.bf16.msra.mxu0 %v2440
        %2506 = vmatprep.subr.bf16.mxu0 %v2443
        %2507 = vmatpush1.bf16.msra.mxu0 %v2442
        %2508 = vmatprep.subr.bf16.mxu0 %v2445
        %2509 = vmatpush1.bf16.msra.mxu0 %v2444
        %2510 = vmatprep.subr.bf16.mxu0 %v2447
        %2511 = vmatpush1.bf16.msra.mxu0 %v2446
        %2512 = vmatprep.subr.bf16.mxu0 %v2449
        %2513 = vmatpush1.bf16.msra.mxu0 %v2448
        %2514 = vmatprep.subr.bf16.mxu0 %v2451
        %2515 = vmatpush1.bf16.msra.mxu0 %v2450
        %2516 = vmatprep.subr.bf16.mxu0 %v2453
        %2517 = vmatpush1.bf16.msra.mxu0 %v2452
        %2518 = vmatprep.subr.bf16.mxu0 %v2455
        %2519 = vmatpush1.bf16.msra.mxu0 %v2454
        %2520 = vmatprep.subr.bf16.mxu0 %v2457
        %2521 = vmatpush1.bf16.msra.mxu0 %v2456
        %2522 = vmatprep.subr.bf16.mxu0 %v2459
        %2523 = vmatpush1.bf16.msra.mxu0 %v2458
        %2524 = vmatprep.subr.bf16.mxu0 %v2461
        %2525 = vmatpush1.bf16.msra.mxu0 %v2460
        %2526 = vmatprep.subr.bf16.mxu0 %v2463
        %2527 = vmatpush1.bf16.msra.mxu0 %v2462
        %2528 = vmatprep.subr.bf16.mxu0 %v2465
        %2529 = vmatpush1.bf16.msra.mxu0 %v2464
        %2530 = vmatprep.subr.bf16.mxu0 %v2467
        %2531 = vmatpush1.bf16.msra.mxu0 %v2466
        %2532 = vmatprep.mubr.bf16.mxu0 %v2293
        %2533 = vmatmul.mubr.bf16.gmra.mrb[0].mxu0 %v2292
        %v2534 = vpop.f32.mrb[0].mxu0
        %v2535 = vadd.f32 %v2333, %v2534
        %v2536 = vpop.f32.mrb[0].mxu0
        %v2537 = vadd.f32 %v2337, %v2536
        %v2538 = vpop.f32.mrb[0].mxu0
        %v2539 = vadd.f32 %v2333, %v2538
        %v2540 = vpop.f32.mrb[0].mxu0
        %v2541 = vadd.f32 %v2337, %v2540
        %2542 = vmatprep.mubr.bf16.mxu0 %v2295
        %2543 = vmatmul.mubr.bf16.gmra.mrb[0].mxu0 %v2294
        %v2544 = vpop.f32.mrb[0].mxu0
        %v2545 = vadd.f32 %v2333, %v2544
        %v2546 = vpop.f32.mrb[0].mxu0
        %v2547 = vadd.f32 %v2337, %v2546
        %v2548 = vpop.f32.mrb[0].mxu0
        %v2549 = vadd.f32 %v2333, %v2548
        %v2550 = vpop.f32.mrb[0].mxu0
        %v2551 = vadd.f32 %v2337, %v2550
        %2552 = vdwg.mxu0
        %v2553 = vpack.c.bf16 %v2539, %v2535
        %v2554 = vpack.c.bf16 %v2541, %v2537
        %v2555 = vpack.c.bf16 %v2549, %v2545
        %v2556 = vpack.c.bf16 %v2551, %v2547
        %v2557 = vld [vmem:[#allocation7] sm:$0xff]
        %v2558 = vld [vmem:[#allocation7 + $0x8] sm:$0xff]
        %v2559 = vld [vmem:[#allocation7 + $0x10] sm:$0xff]
        %v2560 = vld [vmem:[#allocation7 + $0x18] sm:$0xff]
        %v2561 = vld [vmem:[#allocation7 + $0x20] sm:$0xff]
        %v2562 = vld [vmem:[#allocation7 + $0x28] sm:$0xff]
        %v2563 = vld [vmem:[#allocation7 + $0x30] sm:$0xff]
        %v2564 = vld [vmem:[#allocation7 + $0x38] sm:$0xff]
        %v2565 = vld [vmem:[#allocation7 + $0x40] sm:$0xff]
        %v2566 = vld [vmem:[#allocation7 + $0x48] sm:$0xff]
        %v2567 = vld [vmem:[#allocation7 + $0x50] sm:$0xff]
        %v2568 = vld [vmem:[#allocation7 + $0x58] sm:$0xff]
        %v2569 = vld [vmem:[#allocation7 + $0x60] sm:$0xff]
        %v2570 = vld [vmem:[#allocation7 + $0x68] sm:$0xff]
        %v2571 = vld [vmem:[#allocation7 + $0x70] sm:$0xff]
        %v2572 = vld [vmem:[#allocation7 + $0x78] sm:$0xff]
        %v2573 = vld [vmem:[#allocation7 + $0x80] sm:$0xff]
        %v2574 = vld [vmem:[#allocation7 + $0x88] sm:$0xff]
        %v2575 = vld [vmem:[#allocation7 + $0x90] sm:$0xff]
        %v2576 = vld [vmem:[#allocation7 + $0x98] sm:$0xff]
        %v2577 = vld [vmem:[#allocation7 + $0xa0] sm:$0xff]
        %v2578 = vld [vmem:[#allocation7 + $0xa8] sm:$0xff]
        %v2579 = vld [vmem:[#allocation7 + $0xb0] sm:$0xff]
        %v2580 = vld [vmem:[#allocation7 + $0xb8] sm:$0xff]
        %v2581 = vld [vmem:[#allocation7 + $0xc0] sm:$0xff]
        %v2582 = vld [vmem:[#allocation7 + $0xc8] sm:$0xff]
        %v2583 = vld [vmem:[#allocation7 + $0xd0] sm:$0xff]
        %v2584 = vld [vmem:[#allocation7 + $0xd8] sm:$0xff]
        %v2585 = vld [vmem:[#allocation7 + $0xe0] sm:$0xff]
        %v2586 = vld [vmem:[#allocation7 + $0xe8] sm:$0xff]
        %v2587 = vld [vmem:[#allocation7 + $0xf0] sm:$0xff]
        %v2588 = vld [vmem:[#allocation7 + $0xf8] sm:$0xff]
        %v2589 = vld [vmem:[#allocation7 + $0x100] sm:$0xff]
        %v2590 = vld [vmem:[#allocation7 + $0x108] sm:$0xff]
        %v2591 = vld [vmem:[#allocation7 + $0x110] sm:$0xff]
        %v2592 = vld [vmem:[#allocation7 + $0x118] sm:$0xff]
        %v2593 = vld [vmem:[#allocation7 + $0x120] sm:$0xff]
        %v2594 = vld [vmem:[#allocation7 + $0x128] sm:$0xff]
        %v2595 = vld [vmem:[#allocation7 + $0x130] sm:$0xff]
        %v2596 = vld [vmem:[#allocation7 + $0x138] sm:$0xff]
        %v2597 = vld [vmem:[#allocation7 + $0x140] sm:$0xff]
        %v2598 = vld [vmem:[#allocation7 + $0x148] sm:$0xff]
        %v2599 = vld [vmem:[#allocation7 + $0x150] sm:$0xff]
        %v2600 = vld [vmem:[#allocation7 + $0x158] sm:$0xff]
        %v2601 = vld [vmem:[#allocation7 + $0x160] sm:$0xff]
        %v2602 = vld [vmem:[#allocation7 + $0x168] sm:$0xff]
        %v2603 = vld [vmem:[#allocation7 + $0x170] sm:$0xff]
        %v2604 = vld [vmem:[#allocation7 + $0x178] sm:$0xff]
        %v2605 = vld [vmem:[#allocation7 + $0x180] sm:$0xff]
        %v2606 = vld [vmem:[#allocation7 + $0x188] sm:$0xff]
        %v2607 = vld [vmem:[#allocation7 + $0x190] sm:$0xff]
        %v2608 = vld [vmem:[#allocation7 + $0x198] sm:$0xff]
        %v2609 = vld [vmem:[#allocation7 + $0x1a0] sm:$0xff]
        %v2610 = vld [vmem:[#allocation7 + $0x1a8] sm:$0xff]
        %v2611 = vld [vmem:[#allocation7 + $0x1b0] sm:$0xff]
        %v2612 = vld [vmem:[#allocation7 + $0x1b8] sm:$0xff]
        %v2613 = vld [vmem:[#allocation7 + $0x1c0] sm:$0xff]
        %v2614 = vld [vmem:[#allocation7 + $0x1c8] sm:$0xff]
        %v2615 = vld [vmem:[#allocation7 + $0x1d0] sm:$0xff]
        %v2616 = vld [vmem:[#allocation7 + $0x1d8] sm:$0xff]
        %v2617 = vld [vmem:[#allocation7 + $0x1e0] sm:$0xff]
        %v2618 = vld [vmem:[#allocation7 + $0x1e8] sm:$0xff]
        %v2619 = vld [vmem:[#allocation7 + $0x1f0] sm:$0xff]
        %v2620 = vld [vmem:[#allocation7 + $0x1f8] sm:$0xff]
        %v2621 = vld [vmem:[#allocation7 + $0x200] sm:$0xff]
        %v2622 = vld [vmem:[#allocation7 + $0x208] sm:$0xff]
        %v2623 = vld [vmem:[#allocation7 + $0x210] sm:$0xff]
        %v2624 = vld [vmem:[#allocation7 + $0x218] sm:$0xff]
        %v2625 = vld [vmem:[#allocation7 + $0x220] sm:$0xff]
        %v2626 = vld [vmem:[#allocation7 + $0x228] sm:$0xff]
        %v2627 = vld [vmem:[#allocation7 + $0x230] sm:$0xff]
        %v2628 = vld [vmem:[#allocation7 + $0x238] sm:$0xff]
        %v2629 = vld [vmem:[#allocation7 + $0x240] sm:$0xff]
        %v2630 = vld [vmem:[#allocation7 + $0x248] sm:$0xff]
        %v2631 = vld [vmem:[#allocation7 + $0x250] sm:$0xff]
        %v2632 = vld [vmem:[#allocation7 + $0x258] sm:$0xff]
        %v2633 = vld [vmem:[#allocation7 + $0x260] sm:$0xff]
        %v2634 = vld [vmem:[#allocation7 + $0x268] sm:$0xff]
        %v2635 = vld [vmem:[#allocation7 + $0x270] sm:$0xff]
        %v2636 = vld [vmem:[#allocation7 + $0x278] sm:$0xff]
        %v2637 = vld [vmem:[#allocation7 + $0x280] sm:$0xff]
        %v2638 = vld [vmem:[#allocation7 + $0x288] sm:$0xff]
        %v2639 = vld [vmem:[#allocation7 + $0x290] sm:$0xff]
        %v2640 = vld [vmem:[#allocation7 + $0x298] sm:$0xff]
        %v2641 = vld [vmem:[#allocation7 + $0x2a0] sm:$0xff]
        %v2642 = vld [vmem:[#allocation7 + $0x2a8] sm:$0xff]
        %v2643 = vld [vmem:[#allocation7 + $0x2b0] sm:$0xff]
        %v2644 = vld [vmem:[#allocation7 + $0x2b8] sm:$0xff]
        %v2645 = vld [vmem:[#allocation7 + $0x2c0] sm:$0xff]
        %v2646 = vld [vmem:[#allocation7 + $0x2c8] sm:$0xff]
        %v2647 = vld [vmem:[#allocation7 + $0x2d0] sm:$0xff]
        %v2648 = vld [vmem:[#allocation7 + $0x2d8] sm:$0xff]
        %v2649 = vld [vmem:[#allocation7 + $0x2e0] sm:$0xff]
        %v2650 = vld [vmem:[#allocation7 + $0x2e8] sm:$0xff]
        %v2651 = vld [vmem:[#allocation7 + $0x2f0] sm:$0xff]
        %v2652 = vld [vmem:[#allocation7 + $0x2f8] sm:$0xff]
        %v2653 = vld [vmem:[%s7] sm:$0x3f]
        %v2655 = vlaneseq
        %v2656 = vshrl.u32 %v2655, 7
        %v2657 = vsub.s32 0, %v2656
        %v2658 = vrot.slane %v2653, %v2657
        %v2659 = vlaneseq
        %v2660 = vshrl.u32 %v2659, 7
        %v2661 = vsub.s32 1, %v2660
        %v2662 = vrot.slane %v2653, %v2661
        %v2663 = vlaneseq
        %v2664 = vshrl.u32 %v2663, 7
        %v2665 = vsub.s32 2, %v2664
        %v2666 = vrot.slane %v2653, %v2665
        %v2667 = vlaneseq
        %v2668 = vshrl.u32 %v2667, 7
        %v2669 = vsub.s32 3, %v2668
        %v2670 = vrot.slane %v2653, %v2669
        %v2671 = vlaneseq
        %v2672 = vshrl.u32 %v2671, 7
        %v2673 = vsub.s32 4, %v2672
        %v2674 = vrot.slane %v2653, %v2673
        %v2675 = vlaneseq
        %v2676 = vshrl.u32 %v2675, 7
        %v2677 = vsub.s32 5, %v2676
        %v2678 = vrot.slane %v2653, %v2677
        %v2781 = vunpack.c.l.b16 %v2557
        %v2782 = vunpack.c.h.b16 %v2557
        %v2783 = vunpack.c.l.b16 %v2558
        %v2784 = vunpack.c.h.b16 %v2558
        %v2785 = vunpack.c.l.b16 %v2559
        %v2786 = vunpack.c.h.b16 %v2559
        %v2787 = vunpack.c.l.b16 %v2560
        %v2788 = vunpack.c.h.b16 %v2560
        %v2789 = vunpack.c.l.b16 %v2561
        %v2790 = vunpack.c.h.b16 %v2561
        %v2791 = vunpack.c.l.b16 %v2562
        %v2792 = vunpack.c.h.b16 %v2562
        %v2793 = vunpack.c.l.b16 %v2563
        %v2794 = vunpack.c.h.b16 %v2563
        %v2795 = vunpack.c.l.b16 %v2564
        %v2796 = vunpack.c.h.b16 %v2564
        %v2797 = vunpack.c.l.b16 %v2565
        %v2798 = vunpack.c.h.b16 %v2565
        %v2799 = vunpack.c.l.b16 %v2566
        %v2800 = vunpack.c.h.b16 %v2566
        %v2801 = vunpack.c.l.b16 %v2567
        %v2802 = vunpack.c.h.b16 %v2567
        %v2803 = vunpack.c.l.b16 %v2568
        %v2804 = vunpack.c.h.b16 %v2568
        %v2805 = vunpack.c.l.b16 %v2569
        %v2806 = vunpack.c.h.b16 %v2569
        %v2807 = vunpack.c.l.b16 %v2570
        %v2808 = vunpack.c.h.b16 %v2570
        %v2809 = vunpack.c.l.b16 %v2571
        %v2810 = vunpack.c.h.b16 %v2571
        %v2811 = vunpack.c.l.b16 %v2572
        %v2812 = vunpack.c.h.b16 %v2572
        %v2813 = vunpack.c.l.b16 %v2573
        %v2814 = vunpack.c.h.b16 %v2573
        %v2815 = vunpack.c.l.b16 %v2574
        %v2816 = vunpack.c.h.b16 %v2574
        %v2817 = vunpack.c.l.b16 %v2575
        %v2818 = vunpack.c.h.b16 %v2575
        %v2819 = vunpack.c.l.b16 %v2576
        %v2820 = vunpack.c.h.b16 %v2576
        %v2821 = vunpack.c.l.b16 %v2577
        %v2822 = vunpack.c.h.b16 %v2577
        %v2823 = vunpack.c.l.b16 %v2578
        %v2824 = vunpack.c.h.b16 %v2578
        %v2825 = vunpack.c.l.b16 %v2579
        %v2826 = vunpack.c.h.b16 %v2579
        %v2827 = vunpack.c.l.b16 %v2580
        %v2828 = vunpack.c.h.b16 %v2580
        %v2829 = vunpack.c.l.b16 %v2581
        %v2830 = vunpack.c.h.b16 %v2581
        %v2831 = vunpack.c.l.b16 %v2582
        %v2832 = vunpack.c.h.b16 %v2582
        %v2833 = vunpack.c.l.b16 %v2583
        %v2834 = vunpack.c.h.b16 %v2583
        %v2835 = vunpack.c.l.b16 %v2584
        %v2836 = vunpack.c.h.b16 %v2584
        %v2837 = vunpack.c.l.b16 %v2585
        %v2838 = vunpack.c.h.b16 %v2585
        %v2839 = vunpack.c.l.b16 %v2586
        %v2840 = vunpack.c.h.b16 %v2586
        %v2841 = vunpack.c.l.b16 %v2587
        %v2842 = vunpack.c.h.b16 %v2587
        %v2843 = vunpack.c.l.b16 %v2588
        %v2844 = vunpack.c.h.b16 %v2588
        %v2845 = vunpack.c.l.b16 %v2589
        %v2846 = vunpack.c.h.b16 %v2589
        %v2847 = vunpack.c.l.b16 %v2590
        %v2848 = vunpack.c.h.b16 %v2590
        %v2849 = vunpack.c.l.b16 %v2591
        %v2850 = vunpack.c.h.b16 %v2591
        %v2851 = vunpack.c.l.b16 %v2592
        %v2852 = vunpack.c.h.b16 %v2592
        %v2853 = vunpack.c.l.b16 %v2593
        %v2854 = vunpack.c.h.b16 %v2593
        %v2855 = vunpack.c.l.b16 %v2594
        %v2856 = vunpack.c.h.b16 %v2594
        %v2857 = vunpack.c.l.b16 %v2595
        %v2858 = vunpack.c.h.b16 %v2595
        %v2859 = vunpack.c.l.b16 %v2596
        %v2860 = vunpack.c.h.b16 %v2596
        %v2861 = vunpack.c.l.b16 %v2597
        %v2862 = vunpack.c.h.b16 %v2597
        %v2863 = vunpack.c.l.b16 %v2598
        %v2864 = vunpack.c.h.b16 %v2598
        %v2865 = vunpack.c.l.b16 %v2599
        %v2866 = vunpack.c.h.b16 %v2599
        %v2867 = vunpack.c.l.b16 %v2600
        %v2868 = vunpack.c.h.b16 %v2600
        %v2869 = vunpack.c.l.b16 %v2601
        %v2870 = vunpack.c.h.b16 %v2601
        %v2871 = vunpack.c.l.b16 %v2602
        %v2872 = vunpack.c.h.b16 %v2602
        %v2873 = vunpack.c.l.b16 %v2603
        %v2874 = vunpack.c.h.b16 %v2603
        %v2875 = vunpack.c.l.b16 %v2604
        %v2876 = vunpack.c.h.b16 %v2604
        %v2877 = vunpack.c.l.b16 %v2605
        %v2878 = vunpack.c.h.b16 %v2605
        %v2879 = vunpack.c.l.b16 %v2606
        %v2880 = vunpack.c.h.b16 %v2606
        %v2881 = vunpack.c.l.b16 %v2607
        %v2882 = vunpack.c.h.b16 %v2607
        %v2883 = vunpack.c.l.b16 %v2608
        %v2884 = vunpack.c.h.b16 %v2608
        %v2885 = vunpack.c.l.b16 %v2609
        %v2886 = vunpack.c.h.b16 %v2609
        %v2887 = vunpack.c.l.b16 %v2610
        %v2888 = vunpack.c.h.b16 %v2610
        %v2889 = vunpack.c.l.b16 %v2611
        %v2890 = vunpack.c.h.b16 %v2611
        %v2891 = vunpack.c.l.b16 %v2612
        %v2892 = vunpack.c.h.b16 %v2612
        %v2893 = vunpack.c.l.b16 %v2613
        %v2894 = vunpack.c.h.b16 %v2613
        %v2895 = vunpack.c.l.b16 %v2614
        %v2896 = vunpack.c.h.b16 %v2614
        %v2897 = vunpack.c.l.b16 %v2615
        %v2898 = vunpack.c.h.b16 %v2615
        %v2899 = vunpack.c.l.b16 %v2616
        %v2900 = vunpack.c.h.b16 %v2616
        %v2901 = vunpack.c.l.b16 %v2617
        %v2902 = vunpack.c.h.b16 %v2617
        %v2903 = vunpack.c.l.b16 %v2618
        %v2904 = vunpack.c.h.b16 %v2618
        %v2905 = vunpack.c.l.b16 %v2619
        %v2906 = vunpack.c.h.b16 %v2619
        %v2907 = vunpack.c.l.b16 %v2620
        %v2908 = vunpack.c.h.b16 %v2620
        %v2909 = vunpack.c.l.b16 %v2621
        %v2910 = vunpack.c.h.b16 %v2621
        %v2911 = vunpack.c.l.b16 %v2622
        %v2912 = vunpack.c.h.b16 %v2622
        %v2913 = vunpack.c.l.b16 %v2623
        %v2914 = vunpack.c.h.b16 %v2623
        %v2915 = vunpack.c.l.b16 %v2624
        %v2916 = vunpack.c.h.b16 %v2624
        %v2917 = vunpack.c.l.b16 %v2625
        %v2918 = vunpack.c.h.b16 %v2625
        %v2919 = vunpack.c.l.b16 %v2626
        %v2920 = vunpack.c.h.b16 %v2626
        %v2921 = vunpack.c.l.b16 %v2627
        %v2922 = vunpack.c.h.b16 %v2627
        %v2923 = vunpack.c.l.b16 %v2628
        %v2924 = vunpack.c.h.b16 %v2628
        %v2925 = vunpack.c.l.b16 %v2629
        %v2926 = vunpack.c.h.b16 %v2629
        %v2927 = vunpack.c.l.b16 %v2630
        %v2928 = vunpack.c.h.b16 %v2630
        %v2929 = vunpack.c.l.b16 %v2631
        %v2930 = vunpack.c.h.b16 %v2631
        %v2931 = vunpack.c.l.b16 %v2632
        %v2932 = vunpack.c.h.b16 %v2632
        %v2933 = vunpack.c.l.b16 %v2633
        %v2934 = vunpack.c.h.b16 %v2633
        %v2935 = vunpack.c.l.b16 %v2634
        %v2936 = vunpack.c.h.b16 %v2634
        %v2937 = vunpack.c.l.b16 %v2635
        %v2938 = vunpack.c.h.b16 %v2635
        %v2939 = vunpack.c.l.b16 %v2636
        %v2940 = vunpack.c.h.b16 %v2636
        %v2941 = vunpack.c.l.b16 %v2637
        %v2942 = vunpack.c.h.b16 %v2637
        %v2943 = vunpack.c.l.b16 %v2638
        %v2944 = vunpack.c.h.b16 %v2638
        %v2945 = vunpack.c.l.b16 %v2639
        %v2946 = vunpack.c.h.b16 %v2639
        %v2947 = vunpack.c.l.b16 %v2640
        %v2948 = vunpack.c.h.b16 %v2640
        %v2949 = vunpack.c.l.b16 %v2641
        %v2950 = vunpack.c.h.b16 %v2641
        %v2951 = vunpack.c.l.b16 %v2642
        %v2952 = vunpack.c.h.b16 %v2642
        %v2953 = vunpack.c.l.b16 %v2643
        %v2954 = vunpack.c.h.b16 %v2643
        %v2955 = vunpack.c.l.b16 %v2644
        %v2956 = vunpack.c.h.b16 %v2644
        %v2957 = vunpack.c.l.b16 %v2645
        %v2958 = vunpack.c.h.b16 %v2645
        %v2959 = vunpack.c.l.b16 %v2646
        %v2960 = vunpack.c.h.b16 %v2646
        %v2961 = vunpack.c.l.b16 %v2647
        %v2962 = vunpack.c.h.b16 %v2647
        %v2963 = vunpack.c.l.b16 %v2648
        %v2964 = vunpack.c.h.b16 %v2648
        %v2965 = vunpack.c.l.b16 %v2649
        %v2966 = vunpack.c.h.b16 %v2649
        %v2967 = vunpack.c.l.b16 %v2650
        %v2968 = vunpack.c.h.b16 %v2650
        %v2969 = vunpack.c.l.b16 %v2651
        %v2970 = vunpack.c.h.b16 %v2651
        %v2971 = vunpack.c.l.b16 %v2652
        %v2972 = vunpack.c.h.b16 %v2652
        %v2973 = vpack.c.b16 %v2787, %v2781
        %v2974 = vpack.c.b16 %v2788, %v2782
        %v2975 = vpack.c.b16 %v2789, %v2783
        %v2976 = vpack.c.b16 %v2790, %v2784
        %v2977 = vpack.c.b16 %v2791, %v2785
        %v2978 = vpack.c.b16 %v2792, %v2786
        %v2979 = vpack.c.b16 %v2799, %v2793
        %v2980 = vpack.c.b16 %v2800, %v2794
        %v2981 = vpack.c.b16 %v2801, %v2795
        %v2982 = vpack.c.b16 %v2802, %v2796
        %v2983 = vpack.c.b16 %v2803, %v2797
        %v2984 = vpack.c.b16 %v2804, %v2798
        %v2985 = vpack.c.b16 %v2811, %v2805
        %v2986 = vpack.c.b16 %v2812, %v2806
        %v2987 = vpack.c.b16 %v2813, %v2807
        %v2988 = vpack.c.b16 %v2814, %v2808
        %v2989 = vpack.c.b16 %v2815, %v2809
        %v2990 = vpack.c.b16 %v2816, %v2810
        %v2991 = vpack.c.b16 %v2823, %v2817
        %v2992 = vpack.c.b16 %v2824, %v2818
        %v2993 = vpack.c.b16 %v2825, %v2819
        %v2994 = vpack.c.b16 %v2826, %v2820
        %v2995 = vpack.c.b16 %v2827, %v2821
        %v2996 = vpack.c.b16 %v2828, %v2822
        %v2997 = vpack.c.b16 %v2835, %v2829
        %v2998 = vpack.c.b16 %v2836, %v2830
        %v2999 = vpack.c.b16 %v2837, %v2831
        %v3000 = vpack.c.b16 %v2838, %v2832
        %v3001 = vpack.c.b16 %v2839, %v2833
        %v3002 = vpack.c.b16 %v2840, %v2834
        %v3003 = vpack.c.b16 %v2847, %v2841
        %v3004 = vpack.c.b16 %v2848, %v2842
        %v3005 = vpack.c.b16 %v2849, %v2843
        %v3006 = vpack.c.b16 %v2850, %v2844
        %v3007 = vpack.c.b16 %v2851, %v2845
        %v3008 = vpack.c.b16 %v2852, %v2846
        %v3009 = vpack.c.b16 %v2859, %v2853
        %v3010 = vpack.c.b16 %v2860, %v2854
        %v3011 = vpack.c.b16 %v2861, %v2855
        %v3012 = vpack.c.b16 %v2862, %v2856
        %v3013 = vpack.c.b16 %v2863, %v2857
        %v3014 = vpack.c.b16 %v2864, %v2858
        %v3015 = vpack.c.b16 %v2871, %v2865
        %v3016 = vpack.c.b16 %v2872, %v2866
        %v3017 = vpack.c.b16 %v2873, %v2867
        %v3018 = vpack.c.b16 %v2874, %v2868
        %v3019 = vpack.c.b16 %v2875, %v2869
        %v3020 = vpack.c.b16 %v2876, %v2870
        %v3021 = vpack.c.b16 %v2883, %v2877
        %v3022 = vpack.c.b16 %v2884, %v2878
        %v3023 = vpack.c.b16 %v2885, %v2879
        %v3024 = vpack.c.b16 %v2886, %v2880
        %v3025 = vpack.c.b16 %v2887, %v2881
        %v3026 = vpack.c.b16 %v2888, %v2882
        %v3027 = vpack.c.b16 %v2895, %v2889
        %v3028 = vpack.c.b16 %v2896, %v2890
        %v3029 = vpack.c.b16 %v2897, %v2891
        %v3030 = vpack.c.b16 %v2898, %v2892
        %v3031 = vpack.c.b16 %v2899, %v2893
        %v3032 = vpack.c.b16 %v2900, %v2894
        %v3033 = vpack.c.b16 %v2907, %v2901
        %v3034 = vpack.c.b16 %v2908, %v2902
        %v3035 = vpack.c.b16 %v2909, %v2903
        %v3036 = vpack.c.b16 %v2910, %v2904
        %v3037 = vpack.c.b16 %v2911, %v2905
        %v3038 = vpack.c.b16 %v2912, %v2906
        %v3039 = vpack.c.b16 %v2919, %v2913
        %v3040 = vpack.c.b16 %v2920, %v2914
        %v3041 = vpack.c.b16 %v2921, %v2915
        %v3042 = vpack.c.b16 %v2922, %v2916
        %v3043 = vpack.c.b16 %v2923, %v2917
        %v3044 = vpack.c.b16 %v2924, %v2918
        %v3045 = vpack.c.b16 %v2931, %v2925
        %v3046 = vpack.c.b16 %v2932, %v2926
        %v3047 = vpack.c.b16 %v2933, %v2927
        %v3048 = vpack.c.b16 %v2934, %v2928
        %v3049 = vpack.c.b16 %v2935, %v2929
        %v3050 = vpack.c.b16 %v2936, %v2930
        %v3051 = vpack.c.b16 %v2943, %v2937
        %v3052 = vpack.c.b16 %v2944, %v2938
        %v3053 = vpack.c.b16 %v2945, %v2939
        %v3054 = vpack.c.b16 %v2946, %v2940
        %v3055 = vpack.c.b16 %v2947, %v2941
        %v3056 = vpack.c.b16 %v2948, %v2942
        %v3057 = vpack.c.b16 %v2955, %v2949
        %v3058 = vpack.c.b16 %v2956, %v2950
        %v3059 = vpack.c.b16 %v2957, %v2951
        %v3060 = vpack.c.b16 %v2958, %v2952
        %v3061 = vpack.c.b16 %v2959, %v2953
        %v3062 = vpack.c.b16 %v2960, %v2954
        %v3063 = vpack.c.b16 %v2967, %v2961
        %v3064 = vpack.c.b16 %v2968, %v2962
        %v3065 = vpack.c.b16 %v2969, %v2963
        %v3066 = vpack.c.b16 %v2970, %v2964
        %v3067 = vpack.c.b16 %v2971, %v2965
        %v3068 = vpack.c.b16 %v2972, %v2966
        %3165 = vmatprep.subr.bf16.mxu0 %v2974
        %3166 = vmatpush1.bf16.msra.mxu0 %v2973
        %3167 = vmatprep.subr.bf16.mxu0 %v2980
        %3168 = vmatpush1.bf16.msra.mxu0 %v2979
        %3169 = vmatprep.subr.bf16.mxu0 %v2986
        %3170 = vmatpush1.bf16.msra.mxu0 %v2985
        %3171 = vmatprep.subr.bf16.mxu0 %v2992
        %3172 = vmatpush1.bf16.msra.mxu0 %v2991
        %3173 = vmatprep.subr.bf16.mxu0 %v2998
        %3174 = vmatpush1.bf16.msra.mxu0 %v2997
        %3175 = vmatprep.subr.bf16.mxu0 %v3004
        %3176 = vmatpush1.bf16.msra.mxu0 %v3003
        %3177 = vmatprep.subr.bf16.mxu0 %v3010
        %3178 = vmatpush1.bf16.msra.mxu0 %v3009
        %3179 = vmatprep.subr.bf16.mxu0 %v3016
        %3180 = vmatpush1.bf16.msra.mxu0 %v3015
        %3181 = vmatprep.subr.bf16.mxu0 %v3022
        %3182 = vmatpush1.bf16.msra.mxu0 %v3021
        %3183 = vmatprep.subr.bf16.mxu0 %v3028
        %3184 = vmatpush1.bf16.msra.mxu0 %v3027
        %3185 = vmatprep.subr.bf16.mxu0 %v3034
        %3186 = vmatpush1.bf16.msra.mxu0 %v3033
        %3187 = vmatprep.subr.bf16.mxu0 %v3040
        %3188 = vmatpush1.bf16.msra.mxu0 %v3039
        %3189 = vmatprep.subr.bf16.mxu0 %v3046
        %3190 = vmatpush1.bf16.msra.mxu0 %v3045
        %3191 = vmatprep.subr.bf16.mxu0 %v3052
        %3192 = vmatpush1.bf16.msra.mxu0 %v3051
        %3193 = vmatprep.subr.bf16.mxu0 %v3058
        %3194 = vmatpush1.bf16.msra.mxu0 %v3057
        %3195 = vmatprep.subr.bf16.mxu0 %v3064
        %3196 = vmatpush1.bf16.msra.mxu0 %v3063
        %3197 = vmatprep.mubr.bf16.mxu0 %v2554
        %3198 = vmatmul.mubr.bf16.gmra.mrb[0].mxu0 %v2553
        %v3199 = vpop.f32.mrb[0].mxu0
        %v3200 = vadd.f32 %v2658, %v3199
        %v3201 = vpop.f32.mrb[0].mxu0
        %v3202 = vadd.f32 %v2662, %v3201
        %v3203 = vpop.f32.mrb[0].mxu0
        %v3204 = vadd.f32 %v2658, %v3203
        %v3205 = vpop.f32.mrb[0].mxu0
        %v3206 = vadd.f32 %v2662, %v3205
        %3207 = vmatprep.mubr.bf16.mxu0 %v2556
        %3208 = vmatmul.mubr.bf16.gmra.mrb[0].mxu0 %v2555
        %v3209 = vpop.f32.mrb[0].mxu0
        %v3210 = vadd.f32 %v2658, %v3209
        %v3211 = vpop.f32.mrb[0].mxu0
        %v3212 = vadd.f32 %v2662, %v3211
        %v3213 = vpop.f32.mrb[0].mxu0
        %v3214 = vadd.f32 %v2658, %v3213
        %v3215 = vpop.f32.mrb[0].mxu0
        %v3216 = vadd.f32 %v2662, %v3215
        %3217 = vdwg.mxu0
        %3218 = vmatprep.subr.bf16.mxu0 %v2976
        %3219 = vmatpush1.bf16.msra.mxu0 %v2975
        %3220 = vmatprep.subr.bf16.mxu0 %v2982
        %3221 = vmatpush1.bf16.msra.mxu0 %v2981
        %3222 = vmatprep.subr.bf16.mxu0 %v2988
        %3223 = vmatpush1.bf16.msra.mxu0 %v2987
        %3224 = vmatprep.subr.bf16.mxu0 %v2994
        %3225 = vmatpush1.bf16.msra.mxu0 %v2993
        %3226 = vmatprep.subr.bf16.mxu0 %v3000
        %3227 = vmatpush1.bf16.msra.mxu0 %v2999
        %3228 = vmatprep.subr.bf16.mxu0 %v3006
        %3229 = vmatpush1.bf16.msra.mxu0 %v3005
        %3230 = vmatprep.subr.bf16.mxu0 %v3012
        %3231 = vmatpush1.bf16.msra.mxu0 %v3011
        %3232 = vmatprep.subr.bf16.mxu0 %v3018
        %3233 = vmatpush1.bf16.msra.mxu0 %v3017
        %3234 = vmatprep.subr.bf16.mxu0 %v3024
        %3235 = vmatpush1.bf16.msra.mxu0 %v3023
        %3236 = vmatprep.subr.bf16.mxu0 %v3030
        %3237 = vmatpush1.bf16.msra.mxu0 %v3029
        %3238 = vmatprep.subr.bf16.mxu0 %v3036
        %3239 = vmatpush1.bf16.msra.mxu0 %v3035
        %3240 = vmatprep.subr.bf16.mxu0 %v3042
        %3241 = vmatpush1.bf16.msra.mxu0 %v3041
        %3242 = vmatprep.subr.bf16.mxu0 %v3048
        %3243 = vmatpush1.bf16.msra.mxu0 %v3047
        %3244 = vmatprep.subr.bf16.mxu0 %v3054
        %3245 = vmatpush1.bf16.msra.mxu0 %v3053
        %3246 = vmatprep.subr.bf16.mxu0 %v3060
        %3247 = vmatpush1.bf16.msra.mxu0 %v3059
        %3248 = vmatprep.subr.bf16.mxu0 %v3066
        %3249 = vmatpush1.bf16.msra.mxu0 %v3065
        %3250 = vmatprep.mubr.bf16.mxu0 %v2554
        %3251 = vmatmul.mubr.bf16.gmra.mrb[0].mxu0 %v2553
        %v3252 = vpop.f32.mrb[0].mxu0
        %v3253 = vadd.f32 %v2666, %v3252
        %v3254 = vpop.f32.mrb[0].mxu0
        %v3255 = vadd.f32 %v2670, %v3254
        %v3256 = vpop.f32.mrb[0].mxu0
        %v3257 = vadd.f32 %v2666, %v3256
        %v3258 = vpop.f32.mrb[0].mxu0
        %v3259 = vadd.f32 %v2670, %v3258
        %3260 = vmatprep.mubr.bf16.mxu0 %v2556
        %3261 = vmatmul.mubr.bf16.gmra.mrb[0].mxu0 %v2555
        %v3262 = vpop.f32.mrb[0].mxu0
        %v3263 = vadd.f32 %v2666, %v3262
        %v3264 = vpop.f32.mrb[0].mxu0
        %v3265 = vadd.f32 %v2670, %v3264
        %v3266 = vpop.f32.mrb[0].mxu0
        %v3267 = vadd.f32 %v2666, %v3266
        %v3268 = vpop.f32.mrb[0].mxu0
        %v3269 = vadd.f32 %v2670, %v3268
        %3270 = vdwg.mxu0
        %3271 = vmatprep.subr.bf16.mxu0 %v2978
        %3272 = vmatpush1.bf16.msra.mxu0 %v2977
        %3273 = vmatprep.subr.bf16.mxu0 %v2984
        %3274 = vmatpush1.bf16.msra.mxu0 %v2983
        %3275 = vmatprep.subr.bf16.mxu0 %v2990
        %3276 = vmatpush1.bf16.msra.mxu0 %v2989
        %3277 = vmatprep.subr.bf16.mxu0 %v2996
        %3278 = vmatpush1.bf16.msra.mxu0 %v2995
        %3279 = vmatprep.subr.bf16.mxu0 %v3002
        %3280 = vmatpush1.bf16.msra.mxu0 %v3001
        %3281 = vmatprep.subr.bf16.mxu0 %v3008
        %3282 = vmatpush1.bf16.msra.mxu0 %v3007
        %3283 = vmatprep.subr.bf16.mxu0 %v3014
        %3284 = vmatpush1.bf16.msra.mxu0 %v3013
        %3285 = vmatprep.subr.bf16.mxu0 %v3020
        %3286 = vmatpush1.bf16.msra.mxu0 %v3019
        %3287 = vmatprep.subr.bf16.mxu0 %v3026
        %3288 = vmatpush1.bf16.msra.mxu0 %v3025
        %3289 = vmatprep.subr.bf16.mxu0 %v3032
        %3290 = vmatpush1.bf16.msra.mxu0 %v3031
        %3291 = vmatprep.subr.bf16.mxu0 %v3038
        %3292 = vmatpush1.bf16.msra.mxu0 %v3037
        %3293 = vmatprep.subr.bf16.mxu0 %v3044
        %3294 = vmatpush1.bf16.msra.mxu0 %v3043
        %3295 = vmatprep.subr.bf16.mxu0 %v3050
        %3296 = vmatpush1.bf16.msra.mxu0 %v3049
        %3297 = vmatprep.subr.bf16.mxu0 %v3056
        %3298 = vmatpush1.bf16.msra.mxu0 %v3055
        %3299 = vmatprep.subr.bf16.mxu0 %v3062
        %3300 = vmatpush1.bf16.msra.mxu0 %v3061
        %3301 = vmatprep.subr.bf16.mxu0 %v3068
        %3302 = vmatpush1.bf16.msra.mxu0 %v3067
        %3303 = vmatprep.mubr.bf16.mxu0 %v2554
        %3304 = vmatmul.mubr.bf16.gmra.mrb[0].mxu0 %v2553
        %v3305 = vpop.f32.mrb[0].mxu0
        %v3306 = vadd.f32 %v2674, %v3305
        %v3307 = vpop.f32.mrb[0].mxu0
        %v3308 = vadd.f32 %v2678, %v3307
        %v3309 = vpop.f32.mrb[0].mxu0
        %v3310 = vadd.f32 %v2674, %v3309
        %v3311 = vpop.f32.mrb[0].mxu0
        %v3312 = vadd.f32 %v2678, %v3311
        %3313 = vmatprep.mubr.bf16.mxu0 %v2556
        %3314 = vmatmul.mubr.bf16.gmra.mrb[0].mxu0 %v2555
        %v3315 = vpop.f32.mrb[0].mxu0
        %v3316 = vadd.f32 %v2674, %v3315
        %v3317 = vpop.f32.mrb[0].mxu0
        %v3318 = vadd.f32 %v2678, %v3317
        %v3319 = vpop.f32.mrb[0].mxu0
        %v3320 = vadd.f32 %v2674, %v3319
        %v3321 = vpop.f32.mrb[0].mxu0
        %v3322 = vadd.f32 %v2678, %v3321
        %3323 = vdwg.mxu0
        %v3324 = vpack.c.bf16 %v3204, %v3200
        %v3325 = vpack.c.bf16 %v3214, %v3210
        %v3326 = vpack.c.bf16 %v3257, %v3253
        %v3327 = vpack.c.bf16 %v3267, %v3263
        %v3328 = vpack.c.bf16 %v3310, %v3306
        %v3329 = vpack.c.bf16 %v3320, %v3316
        %v3331 = vsel %vm718, %v3324, 0
        %v3334 = vsel %vm718, %v3326, 0
        %3336 = vmatprep.subr.bf16.mxu0 0
        %3337 = vmatpush1.bf16.xpose.msra.mxu0 %v3334
        %3338 = vmatprep.subr.bf16.mxu0 0
        %3339 = vmatpush1.bf16.xpose.msra.mxu0 0
        %3340 = vmatprep.subr.bf16.mxu0 0
        %3341 = vmatpush1.bf16.xpose.msra.mxu0 0
        %3342 = vmatprep.subr.bf16.mxu0 0
        %3343 = vmatpush1.bf16.xpose.msra.mxu0 0
        %3344 = vmatprep.subr.bf16.mxu0 0
        %3345 = vmatpush1.bf16.xpose.msra.mxu0 0
        %3346 = vmatprep.subr.bf16.mxu0 0
        %3347 = vmatpush1.bf16.xpose.msra.mxu0 0
        %3348 = vmatprep.subr.bf16.mxu0 0
        %3349 = vmatpush1.bf16.xpose.msra.mxu0 0
        %3350 = vmatprep.subr.bf16.mxu0 0
        %3351 = vmatpush1.bf16.xpose.msra.mxu0 0
        %3352 = vmatprep.subr.bf16.mxu0 0
        %3353 = vmatpush1.bf16.xpose.msra.mxu0 0
        %3354 = vmatprep.subr.bf16.mxu0 0
        %3355 = vmatpush1.bf16.xpose.msra.mxu0 0
        %3356 = vmatprep.subr.bf16.mxu0 0
        %3357 = vmatpush1.bf16.xpose.msra.mxu0 0
        %3358 = vmatprep.subr.bf16.mxu0 0
        %3359 = vmatpush1.bf16.xpose.msra.mxu0 0
        %3360 = vmatprep.subr.bf16.mxu0 0
        %3361 = vmatpush1.bf16.xpose.msra.mxu0 0
        %3362 = vmatprep.subr.bf16.mxu0 0
        %3363 = vmatpush1.bf16.xpose.msra.mxu0 0
        %3364 = vmatprep.subr.bf16.mxu0 0
        %3365 = vmatpush1.bf16.xpose.msra.mxu0 0
        %3366 = vmatprep.subr.bf16.mxu0 0
        %3367 = vmatpush1.bf16.xpose.msra.mxu0 0
        %3368 = vmatprep.mubr.bf16.mxu0 0
        %3369 = vmatmul.mubr.bf16.gmra.mrb[0].mxu0 %v3331
        %v3370 = vpop.f32.mrb[0].mxu0
        %v3371 = vadd.f32 0.0, %v3370
        %v3372 = vpop.f32.mrb[0].mxu0
        %v3373 = vpop.f32.mrb[0].mxu0
        %v3374 = vadd.f32 0.0, %v3373
        %v3375 = vpop.f32.mrb[0].mxu0
        %3376 = vdwg.mxu0
        %v3378 = vsel %vm718, %v3325, 0
        %v3381 = vsel %vm718, %v3327, 0
        %3383 = vmatprep.subr.bf16.mxu0 0
        %3384 = vmatpush1.bf16.xpose.msra.mxu0 %v3381
        %3385 = vmatprep.subr.bf16.mxu0 0
        %3386 = vmatpush1.bf16.xpose.msra.mxu0 0
        %3387 = vmatprep.subr.bf16.mxu0 0
        %3388 = vmatpush1.bf16.xpose.msra.mxu0 0
        %3389 = vmatprep.subr.bf16.mxu0 0
        %3390 = vmatpush1.bf16.xpose.msra.mxu0 0
        %3391 = vmatprep.subr.bf16.mxu0 0
        %3392 = vmatpush1.bf16.xpose.msra.mxu0 0
        %3393 = vmatprep.subr.bf16.mxu0 0
        %3394 = vmatpush1.bf16.xpose.msra.mxu0 0
        %3395 = vmatprep.subr.bf16.mxu0 0
        %3396 = vmatpush1.bf16.xpose.msra.mxu0 0
        %3397 = vmatprep.subr.bf16.mxu0 0
        %3398 = vmatpush1.bf16.xpose.msra.mxu0 0
        %3399 = vmatprep.subr.bf16.mxu0 0
        %3400 = vmatpush1.bf16.xpose.msra.mxu0 0
        %3401 = vmatprep.subr.bf16.mxu0 0
        %3402 = vmatpush1.bf16.xpose.msra.mxu0 0
        %3403 = vmatprep.subr.bf16.mxu0 0
        %3404 = vmatpush1.bf16.xpose.msra.mxu0 0
        %3405 = vmatprep.subr.bf16.mxu0 0
        %3406 = vmatpush1.bf16.xpose.msra.mxu0 0
        %3407 = vmatprep.subr.bf16.mxu0 0
        %3408 = vmatpush1.bf16.xpose.msra.mxu0 0
        %3409 = vmatprep.subr.bf16.mxu0 0
        %3410 = vmatpush1.bf16.xpose.msra.mxu0 0
        %3411 = vmatprep.subr.bf16.mxu0 0
        %3412 = vmatpush1.bf16.xpose.msra.mxu0 0
        %3413 = vmatprep.subr.bf16.mxu0 0
        %3414 = vmatpush1.bf16.xpose.msra.mxu0 0
        %3415 = vmatprep.mubr.bf16.mxu0 0
        %3416 = vmatmul.mubr.bf16.gmra.mrb[0].mxu0 %v3378
        %v3417 = vpop.f32.mrb[0].mxu0
        %v3418 = vadd.f32 0.0, %v3417
        %v3419 = vpop.f32.mrb[0].mxu0
        %v3420 = vpop.f32.mrb[0].mxu0
        %v3421 = vadd.f32 0.0, %v3420
        %v3422 = vpop.f32.mrb[0].mxu0
        %3423 = vdwg.mxu0
        %vm3424 = vcmask 130048
        %v3425 = vsel %vm3424, %v3371, -inf
        %3426 = vmax.xlane.f32.xlu0 %v3425
        %v3427 = vpop.xlane.xlu0 %3426
        %v3428 = vsel %vm3424, %v3374, -inf
        %3429 = vmax.xlane.f32.xlu0 %v3428
        %v3430 = vpop.xlane.xlu0 %3429
        %v3431 = vsel %vm3424, %v3418, -inf
        %3432 = vmax.xlane.f32.xlu0 %v3431
        %v3433 = vpop.xlane.xlu0 %3432
        %v3434 = vsel %vm3424, %v3421, -inf
        %3435 = vmax.xlane.f32.xlu0 %v3434
        %v3436 = vpop.xlane.xlu0 %3435
        %v3437 = vsub.f32 %v3371, %v3427
        %v3438 = vsub.f32 %v3374, %v3430
        %v3439 = vsub.f32 %v3418, %v3433
        %v3440 = vsub.f32 %v3421, %v3436
        %v3441 = vmul.f32 %v3437, 1.442695
        %v3442 = vpow.pop %v3441
        %v3443 = vmul.f32 %v3438, 1.442695
        %v3444 = vpow.pop %v3443
        %v3445 = vmul.f32 %v3439, 1.442695
        %v3446 = vpow.pop %v3445
        %v3447 = vmul.f32 %v3440, 1.442695
        %v3448 = vpow.pop %v3447
        %v3449 = vsel %vm3424, %v3442, 0.0
        %3450 = vadd.xlane.f32.xlu0 %v3449
        %v3451 = vpop.xlane.xlu0 %3450
        %v3452 = vsel %vm3424, %v3444, 0.0
        %3453 = vadd.xlane.f32.xlu0 %v3452
        %v3454 = vpop.xlane.xlu0 %3453
        %v3455 = vsel %vm3424, %v3446, 0.0
        %3456 = vadd.xlane.f32.xlu0 %v3455
        %v3457 = vpop.xlane.xlu0 %3456
        %v3458 = vsel %vm3424, %v3448, 0.0
        %3459 = vadd.xlane.f32.xlu0 %v3458
        %v3460 = vpop.xlane.xlu0 %3459
        %v3461 = vrcp.pop %v3451
        %v3462 = vrcp.pop %v3454
        %v3463 = vrcp.pop %v3457
        %v3464 = vrcp.pop %v3460
        %v3465 = vmul.f32 %v3442, %v3461
        %v3466 = vmul.f32 %v3444, %v3462
        %v3467 = vmul.f32 %v3446, %v3463
        %v3468 = vmul.f32 %v3448, %v3464
        %v3469 = vpack.c.bf16 %v3466, %v3465
        %v3470 = vpack.c.bf16 %v3468, %v3467
        %v3472 = vsel %vm3424, %v3469, 0
        %3474 = vmatprep.subr.bf16.mxu0 0
        %3475 = vmatpush1.bf16.msra.mxu0 %v3328
        %3476 = vmatprep.subr.bf16.mxu0 0
        %3477 = vmatpush1.bf16.msra.mxu0 0
        %3478 = vmatprep.subr.bf16.mxu0 0
        %3479 = vmatpush1.bf16.msra.mxu0 0
        %3480 = vmatprep.subr.bf16.mxu0 0
        %3481 = vmatpush1.bf16.msra.mxu0 0
        %3482 = vmatprep.subr.bf16.mxu0 0
        %3483 = vmatpush1.bf16.msra.mxu0 0
        %3484 = vmatprep.subr.bf16.mxu0 0
        %3485 = vmatpush1.bf16.msra.mxu0 0
        %3486 = vmatprep.subr.bf16.mxu0 0
        %3487 = vmatpush1.bf16.msra.mxu0 0
        %3488 = vmatprep.subr.bf16.mxu0 0
        %3489 = vmatpush1.bf16.msra.mxu0 0
        %3490 = vmatprep.subr.bf16.mxu0 0
        %3491 = vmatpush1.bf16.msra.mxu0 0
        %3492 = vmatprep.subr.bf16.mxu0 0
        %3493 = vmatpush1.bf16.msra.mxu0 0
        %3494 = vmatprep.subr.bf16.mxu0 0
        %3495 = vmatpush1.bf16.msra.mxu0 0
        %3496 = vmatprep.subr.bf16.mxu0 0
        %3497 = vmatpush1.bf16.msra.mxu0 0
        %3498 = vmatprep.subr.bf16.mxu0 0
        %3499 = vmatpush1.bf16.msra.mxu0 0
        %3500 = vmatprep.subr.bf16.mxu0 0
        %3501 = vmatpush1.bf16.msra.mxu0 0
        %3502 = vmatprep.subr.bf16.mxu0 0
        %3503 = vmatpush1.bf16.msra.mxu0 0
        %3504 = vmatprep.subr.bf16.mxu0 0
        %3505 = vmatpush1.bf16.msra.mxu0 0
        %3506 = vmatprep.mubr.bf16.mxu0 0
        %3507 = vmatmul.mubr.bf16.gmra.mrb[0].mxu0 %v3472
        %v3508 = vpop.f32.mrb[0].mxu0
        %v3509 = vadd.f32 0.0, %v3508
        %v3510 = vpop.f32.mrb[0].mxu0
        %v3511 = vpop.f32.mrb[0].mxu0
        %v3512 = vadd.f32 0.0, %v3511
        %v3513 = vpop.f32.mrb[0].mxu0
        %3514 = vdwg.mxu0
        %v3516 = vsel %vm3424, %v3470, 0
        %3518 = vmatprep.subr.bf16.mxu0 0
        %3519 = vmatpush1.bf16.msra.mxu0 %v3329
        %3520 = vmatprep.subr.bf16.mxu0 0
        %3521 = vmatpush1.bf16.msra.mxu0 0
        %3522 = vmatprep.subr.bf16.mxu0 0
        %3523 = vmatpush1.bf16.msra.mxu0 0
        %3524 = vmatprep.subr.bf16.mxu0 0
        %3525 = vmatpush1.bf16.msra.mxu0 0
        %3526 = vmatprep.subr.bf16.mxu0 0
        %3527 = vmatpush1.bf16.msra.mxu0 0
        %3528 = vmatprep.subr.bf16.mxu0 0
        %3529 = vmatpush1.bf16.msra.mxu0 0
        %3530 = vmatprep.subr.bf16.mxu0 0
        %3531 = vmatpush1.bf16.msra.mxu0 0
        %3532 = vmatprep.subr.bf16.mxu0 0
        %3533 = vmatpush1.bf16.msra.mxu0 0
        %3534 = vmatprep.subr.bf16.mxu0 0
        %3535 = vmatpush1.bf16.msra.mxu0 0
        %3536 = vmatprep.subr.bf16.mxu0 0
        %3537 = vmatpush1.bf16.msra.mxu0 0
        %3538 = vmatprep.subr.bf16.mxu0 0
        %3539 = vmatpush1.bf16.msra.mxu0 0
        %3540 = vmatprep.subr.bf16.mxu0 0
        %3541 = vmatpush1.bf16.msra.mxu0 0
        %3542 = vmatprep.subr.bf16.mxu0 0
        %3543 = vmatpush1.bf16.msra.mxu0 0
        %3544 = vmatprep.subr.bf16.mxu0 0
        %3545 = vmatpush1.bf16.msra.mxu0 0
        %3546 = vmatprep.subr.bf16.mxu0 0
        %3547 = vmatpush1.bf16.msra.mxu0 0
        %3548 = vmatprep.subr.bf16.mxu0 0
        %3549 = vmatpush1.bf16.msra.mxu0 0
        %3550 = vmatprep.mubr.bf16.mxu0 0
        %3551 = vmatmul.mubr.bf16.gmra.mrb[0].mxu0 %v3516
        %v3552 = vpop.f32.mrb[0].mxu0
        %v3553 = vadd.f32 0.0, %v3552
        %v3554 = vpop.f32.mrb[0].mxu0
        %v3555 = vpop.f32.mrb[0].mxu0
        %v3556 = vadd.f32 0.0, %v3555
        %v3557 = vpop.f32.mrb[0].mxu0
        %3558 = vdwg.mxu0
        %3560 = vrot.lane.b32.xlu0 %v3324, 96
        %v3561 = vpop.permute.xlu0 %3560
        %3563 = vrot.lane.b32.xlu0 %v3326, 96
        %v3564 = vpop.permute.xlu0 %3563
        %v3566 = vsel %vm718, %v3561, 0
        %v3569 = vsel %vm718, %v3564, 0
        %3571 = vmatprep.subr.bf16.mxu0 0
        %3572 = vmatpush1.bf16.xpose.msra.mxu0 %v3569
        %3573 = vmatprep.subr.bf16.mxu0 0
        %3574 = vmatpush1.bf16.xpose.msra.mxu0 0
        %3575 = vmatprep.subr.bf16.mxu0 0
        %3576 = vmatpush1.bf16.xpose.msra.mxu0 0
        %3577 = vmatprep.subr.bf16.mxu0 0
        %3578 = vmatpush1.bf16.xpose.msra.mxu0 0
        %3579 = vmatprep.subr.bf16.mxu0 0
        %3580 = vmatpush1.bf16.xpose.msra.mxu0 0
        %3581 = vmatprep.subr.bf16.mxu0 0
        %3582 = vmatpush1.bf16.xpose.msra.mxu0 0
        %3583 = vmatprep.subr.bf16.mxu0 0
        %3584 = vmatpush1.bf16.xpose.msra.mxu0 0
        %3585 = vmatprep.subr.bf16.mxu0 0
        %3586 = vmatpush1.bf16.xpose.msra.mxu0 0
        %3587 = vmatprep.subr.bf16.mxu0 0
        %3588 = vmatpush1.bf16.xpose.msra.mxu0 0
        %3589 = vmatprep.subr.bf16.mxu0 0
        %3590 = vmatpush1.bf16.xpose.msra.mxu0 0
        %3591 = vmatprep.subr.bf16.mxu0 0
        %3592 = vmatpush1.bf16.xpose.msra.mxu0 0
        %3593 = vmatprep.subr.bf16.mxu0 0
        %3594 = vmatpush1.bf16.xpose.msra.mxu0 0
        %3595 = vmatprep.subr.bf16.mxu0 0
        %3596 = vmatpush1.bf16.xpose.msra.mxu0 0
        %3597 = vmatprep.subr.bf16.mxu0 0
        %3598 = vmatpush1.bf16.xpose.msra.mxu0 0
        %3599 = vmatprep.subr.bf16.mxu0 0
        %3600 = vmatpush1.bf16.xpose.msra.mxu0 0
        %3601 = vmatprep.subr.bf16.mxu0 0
        %3602 = vmatpush1.bf16.xpose.msra.mxu0 0
        %3603 = vmatprep.mubr.bf16.mxu0 0
        %3604 = vmatmul.mubr.bf16.gmra.mrb[0].mxu0 %v3566
        %v3605 = vpop.f32.mrb[0].mxu0
        %v3606 = vadd.f32 0.0, %v3605
        %v3607 = vpop.f32.mrb[0].mxu0
        %v3608 = vpop.f32.mrb[0].mxu0
        %v3609 = vadd.f32 0.0, %v3608
        %v3610 = vpop.f32.mrb[0].mxu0
        %3611 = vdwg.mxu0
        %3613 = vrot.lane.b32.xlu0 %v3325, 96
        %v3614 = vpop.permute.xlu0 %3613
        %3616 = vrot.lane.b32.xlu0 %v3327, 96
        %v3617 = vpop.permute.xlu0 %3616
        %v3619 = vsel %vm718, %v3614, 0
        %v3622 = vsel %vm718, %v3617, 0
        %3624 = vmatprep.subr.bf16.mxu0 0
        %3625 = vmatpush1.bf16.xpose.msra.mxu0 %v3622
        %3626 = vmatprep.subr.bf16.mxu0 0
        %3627 = vmatpush1.bf16.xpose.msra.mxu0 0
        %3628 = vmatprep.subr.bf16.mxu0 0
        %3629 = vmatpush1.bf16.xpose.msra.mxu0 0
        %3630 = vmatprep.subr.bf16.mxu0 0
        %3631 = vmatpush1.bf16.xpose.msra.mxu0 0
        %3632 = vmatprep.subr.bf16.mxu0 0
        %3633 = vmatpush1.bf16.xpose.msra.mxu0 0
        %3634 = vmatprep.subr.bf16.mxu0 0
        %3635 = vmatpush1.bf16.xpose.msra.mxu0 0
        %3636 = vmatprep.subr.bf16.mxu0 0
        %3637 = vmatpush1.bf16.xpose.msra.mxu0 0
        %3638 = vmatprep.subr.bf16.mxu0 0
        %3639 = vmatpush1.bf16.xpose.msra.mxu0 0
        %3640 = vmatprep.subr.bf16.mxu0 0
        %3641 = vmatpush1.bf16.xpose.msra.mxu0 0
        %3642 = vmatprep.subr.bf16.mxu0 0
        %3643 = vmatpush1.bf16.xpose.msra.mxu0 0
        %3644 = vmatprep.subr.bf16.mxu0 0
        %3645 = vmatpush1.bf16.xpose.msra.mxu0 0
        %3646 = vmatprep.subr.bf16.mxu0 0
        %3647 = vmatpush1.bf16.xpose.msra.mxu0 0
        %3648 = vmatprep.subr.bf16.mxu0 0
        %3649 = vmatpush1.bf16.xpose.msra.mxu0 0
        %3650 = vmatprep.subr.bf16.mxu0 0
        %3651 = vmatpush1.bf16.xpose.msra.mxu0 0
        %3652 = vmatprep.subr.bf16.mxu0 0
        %3653 = vmatpush1.bf16.xpose.msra.mxu0 0
        %3654 = vmatprep.subr.bf16.mxu0 0
        %3655 = vmatpush1.bf16.xpose.msra.mxu0 0
        %3656 = vmatprep.mubr.bf16.mxu0 0
        %3657 = vmatmul.mubr.bf16.gmra.mrb[0].mxu0 %v3619
        %v3658 = vpop.f32.mrb[0].mxu0
        %v3659 = vadd.f32 0.0, %v3658
        %v3660 = vpop.f32.mrb[0].mxu0
        %v3661 = vpop.f32.mrb[0].mxu0
        %v3662 = vadd.f32 0.0, %v3661
        %v3663 = vpop.f32.mrb[0].mxu0
        %3664 = vdwg.mxu0
        %v3665 = vsel %vm3424, %v3606, -inf
        %3666 = vmax.xlane.f32.xlu0 %v3665
        %v3667 = vpop.xlane.xlu0 %3666
        %v3668 = vsel %vm3424, %v3609, -inf
        %3669 = vmax.xlane.f32.xlu0 %v3668
        %v3670 = vpop.xlane.xlu0 %3669
        %v3671 = vsel %vm3424, %v3659, -inf
        %3672 = vmax.xlane.f32.xlu0 %v3671
        %v3673 = vpop.xlane.xlu0 %3672
        %v3674 = vsel %vm3424, %v3662, -inf
        %3675 = vmax.xlane.f32.xlu0 %v3674
        %v3676 = vpop.xlane.xlu0 %3675
        %v3677 = vsub.f32 %v3606, %v3667
        %v3678 = vsub.f32 %v3609, %v3670
        %v3679 = vsub.f32 %v3659, %v3673
        %v3680 = vsub.f32 %v3662, %v3676
        %v3681 = vmul.f32 %v3677, 1.442695
        %v3682 = vpow.pop %v3681
        %v3683 = vmul.f32 %v3678, 1.442695
        %v3684 = vpow.pop %v3683
        %v3685 = vmul.f32 %v3679, 1.442695
        %v3686 = vpow.pop %v3685
        %v3687 = vmul.f32 %v3680, 1.442695
        %v3688 = vpow.pop %v3687
        %v3689 = vsel %vm3424, %v3682, 0.0
        %3690 = vadd.xlane.f32.xlu0 %v3689
        %v3691 = vpop.xlane.xlu0 %3690
        %v3692 = vsel %vm3424, %v3684, 0.0
        %3693 = vadd.xlane.f32.xlu0 %v3692
        %v3694 = vpop.xlane.xlu0 %3693
        %v3695 = vsel %vm3424, %v3686, 0.0
        %3696 = vadd.xlane.f32.xlu0 %v3695
        %v3697 = vpop.xlane.xlu0 %3696
        %v3698 = vsel %vm3424, %v3688, 0.0
        %3699 = vadd.xlane.f32.xlu0 %v3698
        %v3700 = vpop.xlane.xlu0 %3699
        %v3701 = vrcp.pop %v3691
        %v3702 = vrcp.pop %v3694
        %v3703 = vrcp.pop %v3697
        %v3704 = vrcp.pop %v3700
        %v3705 = vmul.f32 %v3682, %v3701
        %v3706 = vmul.f32 %v3684, %v3702
        %v3707 = vmul.f32 %v3686, %v3703
        %v3708 = vmul.f32 %v3688, %v3704
        %v3709 = vpack.c.bf16 %v3706, %v3705
        %v3710 = vpack.c.bf16 %v3708, %v3707
        %3712 = vrot.lane.b32.xlu0 %v3328, 96
        %v3713 = vpop.permute.xlu0 %3712
        %v3716 = vsel %vm3424, %v3709, 0
        %3718 = vmatprep.subr.bf16.mxu0 0
        %3719 = vmatpush1.bf16.msra.mxu0 %v3713
        %3720 = vmatprep.subr.bf16.mxu0 0
        %3721 = vmatpush1.bf16.msra.mxu0 0
        %3722 = vmatprep.subr.bf16.mxu0 0
        %3723 = vmatpush1.bf16.msra.mxu0 0
        %3724 = vmatprep.subr.bf16.mxu0 0
        %3725 = vmatpush1.bf16.msra.mxu0 0
        %3726 = vmatprep.subr.bf16.mxu0 0
        %3727 = vmatpush1.bf16.msra.mxu0 0
        %3728 = vmatprep.subr.bf16.mxu0 0
        %3729 = vmatpush1.bf16.msra.mxu0 0
        %3730 = vmatprep.subr.bf16.mxu0 0
        %3731 = vmatpush1.bf16.msra.mxu0 0
        %3732 = vmatprep.subr.bf16.mxu0 0
        %3733 = vmatpush1.bf16.msra.mxu0 0
        %3734 = vmatprep.subr.bf16.mxu0 0
        %3735 = vmatpush1.bf16.msra.mxu0 0
        %3736 = vmatprep.subr.bf16.mxu0 0
        %3737 = vmatpush1.bf16.msra.mxu0 0
        %3738 = vmatprep.subr.bf16.mxu0 0
        %3739 = vmatpush1.bf16.msra.mxu0 0
        %3740 = vmatprep.subr.bf16.mxu0 0
        %3741 = vmatpush1.bf16.msra.mxu0 0
        %3742 = vmatprep.subr.bf16.mxu0 0
        %3743 = vmatpush1.bf16.msra.mxu0 0
        %3744 = vmatprep.subr.bf16.mxu0 0
        %3745 = vmatpush1.bf16.msra.mxu0 0
        %3746 = vmatprep.subr.bf16.mxu0 0
        %3747 = vmatpush1.bf16.msra.mxu0 0
        %3748 = vmatprep.subr.bf16.mxu0 0
        %3749 = vmatpush1.bf16.msra.mxu0 0
        %3750 = vmatprep.mubr.bf16.mxu0 0
        %3751 = vmatmul.mubr.bf16.gmra.mrb[0].mxu0 %v3716
        %v3752 = vpop.f32.mrb[0].mxu0
        %v3753 = vadd.f32 0.0, %v3752
        %v3754 = vpop.f32.mrb[0].mxu0
        %v3755 = vpop.f32.mrb[0].mxu0
        %v3756 = vadd.f32 0.0, %v3755
        %v3757 = vpop.f32.mrb[0].mxu0
        %3758 = vdwg.mxu0
        %3760 = vrot.lane.b32.xlu0 %v3329, 96
        %v3761 = vpop.permute.xlu0 %3760
        %v3764 = vsel %vm3424, %v3710, 0
        %3766 = vmatprep.subr.bf16.mxu0 0
        %3767 = vmatpush1.bf16.msra.mxu0 %v3761
        %3768 = vmatprep.subr.bf16.mxu0 0
        %3769 = vmatpush1.bf16.msra.mxu0 0
        %3770 = vmatprep.subr.bf16.mxu0 0
        %3771 = vmatpush1.bf16.msra.mxu0 0
        %3772 = vmatprep.subr.bf16.mxu0 0
        %3773 = vmatpush1.bf16.msra.mxu0 0
        %3774 = vmatprep.subr.bf16.mxu0 0
        %3775 = vmatpush1.bf16.msra.mxu0 0
        %3776 = vmatprep.subr.bf16.mxu0 0
        %3777 = vmatpush1.bf16.msra.mxu0 0
        %3778 = vmatprep.subr.bf16.mxu0 0
        %3779 = vmatpush1.bf16.msra.mxu0 0
        %3780 = vmatprep.subr.bf16.mxu0 0
        %3781 = vmatpush1.bf16.msra.mxu0 0
        %3782 = vmatprep.subr.bf16.mxu0 0
        %3783 = vmatpush1.bf16.msra.mxu0 0
        %3784 = vmatprep.subr.bf16.mxu0 0
        %3785 = vmatpush1.bf16.msra.mxu0 0
        %3786 = vmatprep.subr.bf16.mxu0 0
        %3787 = vmatpush1.bf16.msra.mxu0 0
        %3788 = vmatprep.subr.bf16.mxu0 0
        %3789 = vmatpush1.bf16.msra.mxu0 0
        %3790 = vmatprep.subr.bf16.mxu0 0
        %3791 = vmatpush1.bf16.msra.mxu0 0
        %3792 = vmatprep.subr.bf16.mxu0 0
        %3793 = vmatpush1.bf16.msra.mxu0 0
        %3794 = vmatprep.subr.bf16.mxu0 0
        %3795 = vmatpush1.bf16.msra.mxu0 0
        %3796 = vmatprep.subr.bf16.mxu0 0
        %3797 = vmatpush1.bf16.msra.mxu0 0
        %3798 = vmatprep.mubr.bf16.mxu0 0
        %3799 = vmatmul.mubr.bf16.gmra.mrb[0].mxu0 %v3764
        %v3800 = vpop.f32.mrb[0].mxu0
        %v3801 = vadd.f32 0.0, %v3800
        %v3802 = vpop.f32.mrb[0].mxu0
        %v3803 = vpop.f32.mrb[0].mxu0
        %v3804 = vadd.f32 0.0, %v3803
        %v3805 = vpop.f32.mrb[0].mxu0
        %3806 = vdwg.mxu0
        %3807 = vrot.lane.b32.xlu0 %v3324, 64
        %v3808 = vpop.permute.xlu0 %3807
        %3809 = vrot.lane.b32.xlu0 %v3326, 64
        %v3810 = vpop.permute.xlu0 %3809
        %v3812 = vsel %vm718, %v3808, 0
        %v3815 = vsel %vm718, %v3810, 0
        %3817 = vmatprep.subr.bf16.mxu0 0
        %3818 = vmatpush1.bf16.xpose.msra.mxu0 %v3815
        %3819 = vmatprep.subr.bf16.mxu0 0
        %3820 = vmatpush1.bf16.xpose.msra.mxu0 0
        %3821 = vmatprep.subr.bf16.mxu0 0
        %3822 = vmatpush1.bf16.xpose.msra.mxu0 0
        %3823 = vmatprep.subr.bf16.mxu0 0
        %3824 = vmatpush1.bf16.xpose.msra.mxu0 0
        %3825 = vmatprep.subr.bf16.mxu0 0
        %3826 = vmatpush1.bf16.xpose.msra.mxu0 0
        %3827 = vmatprep.subr.bf16.mxu0 0
        %3828 = vmatpush1.bf16.xpose.msra.mxu0 0
        %3829 = vmatprep.subr.bf16.mxu0 0
        %3830 = vmatpush1.bf16.xpose.msra.mxu0 0
        %3831 = vmatprep.subr.bf16.mxu0 0
        %3832 = vmatpush1.bf16.xpose.msra.mxu0 0
        %3833 = vmatprep.subr.bf16.mxu0 0
        %3834 = vmatpush1.bf16.xpose.msra.mxu0 0
        %3835 = vmatprep.subr.bf16.mxu0 0
        %3836 = vmatpush1.bf16.xpose.msra.mxu0 0
        %3837 = vmatprep.subr.bf16.mxu0 0
        %3838 = vmatpush1.bf16.xpose.msra.mxu0 0
        %3839 = vmatprep.subr.bf16.mxu0 0
        %3840 = vmatpush1.bf16.xpose.msra.mxu0 0
        %3841 = vmatprep.subr.bf16.mxu0 0
        %3842 = vmatpush1.bf16.xpose.msra.mxu0 0
        %3843 = vmatprep.subr.bf16.mxu0 0
        %3844 = vmatpush1.bf16.xpose.msra.mxu0 0
        %3845 = vmatprep.subr.bf16.mxu0 0
        %3846 = vmatpush1.bf16.xpose.msra.mxu0 0
        %3847 = vmatprep.subr.bf16.mxu0 0
        %3848 = vmatpush1.bf16.xpose.msra.mxu0 0
        %3849 = vmatprep.mubr.bf16.mxu0 0
        %3850 = vmatmul.mubr.bf16.gmra.mrb[0].mxu0 %v3812
        %v3851 = vpop.f32.mrb[0].mxu0
        %v3852 = vadd.f32 0.0, %v3851
        %v3853 = vpop.f32.mrb[0].mxu0
        %v3854 = vpop.f32.mrb[0].mxu0
        %v3855 = vadd.f32 0.0, %v3854
        %v3856 = vpop.f32.mrb[0].mxu0
        %3857 = vdwg.mxu0
        %3858 = vrot.lane.b32.xlu0 %v3325, 64
        %v3859 = vpop.permute.xlu0 %3858
        %3860 = vrot.lane.b32.xlu0 %v3327, 64
        %v3861 = vpop.permute.xlu0 %3860
        %v3863 = vsel %vm718, %v3859, 0
        %v3866 = vsel %vm718, %v3861, 0
        %3868 = vmatprep.subr.bf16.mxu0 0
        %3869 = vmatpush1.bf16.xpose.msra.mxu0 %v3866
        %3870 = vmatprep.subr.bf16.mxu0 0
        %3871 = vmatpush1.bf16.xpose.msra.mxu0 0
        %3872 = vmatprep.subr.bf16.mxu0 0
        %3873 = vmatpush1.bf16.xpose.msra.mxu0 0
        %3874 = vmatprep.subr.bf16.mxu0 0
        %3875 = vmatpush1.bf16.xpose.msra.mxu0 0
        %3876 = vmatprep.subr.bf16.mxu0 0
        %3877 = vmatpush1.bf16.xpose.msra.mxu0 0
        %3878 = vmatprep.subr.bf16.mxu0 0
        %3879 = vmatpush1.bf16.xpose.msra.mxu0 0
        %3880 = vmatprep.subr.bf16.mxu0 0
        %3881 = vmatpush1.bf16.xpose.msra.mxu0 0
        %3882 = vmatprep.subr.bf16.mxu0 0
        %3883 = vmatpush1.bf16.xpose.msra.mxu0 0
        %3884 = vmatprep.subr.bf16.mxu0 0
        %3885 = vmatpush1.bf16.xpose.msra.mxu0 0
        %3886 = vmatprep.subr.bf16.mxu0 0
        %3887 = vmatpush1.bf16.xpose.msra.mxu0 0
        %3888 = vmatprep.subr.bf16.mxu0 0
        %3889 = vmatpush1.bf16.xpose.msra.mxu0 0
        %3890 = vmatprep.subr.bf16.mxu0 0
        %3891 = vmatpush1.bf16.xpose.msra.mxu0 0
        %3892 = vmatprep.subr.bf16.mxu0 0
        %3893 = vmatpush1.bf16.xpose.msra.mxu0 0
        %3894 = vmatprep.subr.bf16.mxu0 0
        %3895 = vmatpush1.bf16.xpose.msra.mxu0 0
        %3896 = vmatprep.subr.bf16.mxu0 0
        %3897 = vmatpush1.bf16.xpose.msra.mxu0 0
        %3898 = vmatprep.subr.bf16.mxu0 0
        %3899 = vmatpush1.bf16.xpose.msra.mxu0 0
        %3900 = vmatprep.mubr.bf16.mxu0 0
        %3901 = vmatmul.mubr.bf16.gmra.mrb[0].mxu0 %v3863
        %v3902 = vpop.f32.mrb[0].mxu0
        %v3903 = vadd.f32 0.0, %v3902
        %v3904 = vpop.f32.mrb[0].mxu0
        %v3905 = vpop.f32.mrb[0].mxu0
        %v3906 = vadd.f32 0.0, %v3905
        %v3907 = vpop.f32.mrb[0].mxu0
        %3908 = vdwg.mxu0
        %v3909 = vsel %vm3424, %v3852, -inf
        %3910 = vmax.xlane.f32.xlu0 %v3909
        %v3911 = vpop.xlane.xlu0 %3910
        %v3912 = vsel %vm3424, %v3855, -inf
        %3913 = vmax.xlane.f32.xlu0 %v3912
        %v3914 = vpop.xlane.xlu0 %3913
        %v3915 = vsel %vm3424, %v3903, -inf
        %3916 = vmax.xlane.f32.xlu0 %v3915
        %v3917 = vpop.xlane.xlu0 %3916
        %v3918 = vsel %vm3424, %v3906, -inf
        %3919 = vmax.xlane.f32.xlu0 %v3918
        %v3920 = vpop.xlane.xlu0 %3919
        %v3921 = vsub.f32 %v3852, %v3911
        %v3922 = vsub.f32 %v3855, %v3914
        %v3923 = vsub.f32 %v3903, %v3917
        %v3924 = vsub.f32 %v3906, %v3920
        %v3925 = vmul.f32 %v3921, 1.442695
        %v3926 = vpow.pop %v3925
        %v3927 = vmul.f32 %v3922, 1.442695
        %v3928 = vpow.pop %v3927
        %v3929 = vmul.f32 %v3923, 1.442695
        %v3930 = vpow.pop %v3929
        %v3931 = vmul.f32 %v3924, 1.442695
        %v3932 = vpow.pop %v3931
        %v3933 = vsel %vm3424, %v3926, 0.0
        %3934 = vadd.xlane.f32.xlu0 %v3933
        %v3935 = vpop.xlane.xlu0 %3934
        %v3936 = vsel %vm3424, %v3928, 0.0
        %3937 = vadd.xlane.f32.xlu0 %v3936
        %v3938 = vpop.xlane.xlu0 %3937
        %v3939 = vsel %vm3424, %v3930, 0.0
        %3940 = vadd.xlane.f32.xlu0 %v3939
        %v3941 = vpop.xlane.xlu0 %3940
        %v3942 = vsel %vm3424, %v3932, 0.0
        %3943 = vadd.xlane.f32.xlu0 %v3942
        %v3944 = vpop.xlane.xlu0 %3943
        %v3945 = vrcp.pop %v3935
        %v3946 = vrcp.pop %v3938
        %v3947 = vrcp.pop %v3941
        %v3948 = vrcp.pop %v3944
        %v3949 = vmul.f32 %v3926, %v3945
        %v3950 = vmul.f32 %v3928, %v3946
        %v3951 = vmul.f32 %v3930, %v3947
        %v3952 = vmul.f32 %v3932, %v3948
        %v3953 = vpack.c.bf16 %v3950, %v3949
        %v3954 = vpack.c.bf16 %v3952, %v3951
        %3955 = vrot.lane.b32.xlu0 %v3328, 64
        %v3956 = vpop.permute.xlu0 %3955
        %v3959 = vsel %vm3424, %v3953, 0
        %3961 = vmatprep.subr.bf16.mxu0 0
        %3962 = vmatpush1.bf16.msra.mxu0 %v3956
        %3963 = vmatprep.subr.bf16.mxu0 0
        %3964 = vmatpush1.bf16.msra.mxu0 0
        %3965 = vmatprep.subr.bf16.mxu0 0
        %3966 = vmatpush1.bf16.msra.mxu0 0
        %3967 = vmatprep.subr.bf16.mxu0 0
        %3968 = vmatpush1.bf16.msra.mxu0 0
        %3969 = vmatprep.subr.bf16.mxu0 0
        %3970 = vmatpush1.bf16.msra.mxu0 0
        %3971 = vmatprep.subr.bf16.mxu0 0
        %3972 = vmatpush1.bf16.msra.mxu0 0
        %3973 = vmatprep.subr.bf16.mxu0 0
        %3974 = vmatpush1.bf16.msra.mxu0 0
        %3975 = vmatprep.subr.bf16.mxu0 0
        %3976 = vmatpush1.bf16.msra.mxu0 0
        %3977 = vmatprep.subr.bf16.mxu0 0
        %3978 = vmatpush1.bf16.msra.mxu0 0
        %3979 = vmatprep.subr.bf16.mxu0 0
        %3980 = vmatpush1.bf16.msra.mxu0 0
        %3981 = vmatprep.subr.bf16.mxu0 0
        %3982 = vmatpush1.bf16.msra.mxu0 0
        %3983 = vmatprep.subr.bf16.mxu0 0
        %3984 = vmatpush1.bf16.msra.mxu0 0
        %3985 = vmatprep.subr.bf16.mxu0 0
        %3986 = vmatpush1.bf16.msra.mxu0 0
        %3987 = vmatprep.subr.bf16.mxu0 0
        %3988 = vmatpush1.bf16.msra.mxu0 0
        %3989 = vmatprep.subr.bf16.mxu0 0
        %3990 = vmatpush1.bf16.msra.mxu0 0
        %3991 = vmatprep.subr.bf16.mxu0 0
        %3992 = vmatpush1.bf16.msra.mxu0 0
        %3993 = vmatprep.mubr.bf16.mxu0 0
        %3994 = vmatmul.mubr.bf16.gmra.mrb[0].mxu0 %v3959
        %v3995 = vpop.f32.mrb[0].mxu0
        %v3996 = vadd.f32 0.0, %v3995
        %v3997 = vpop.f32.mrb[0].mxu0
        %v3998 = vpop.f32.mrb[0].mxu0
        %v3999 = vadd.f32 0.0, %v3998
        %v4000 = vpop.f32.mrb[0].mxu0
        %4001 = vdwg.mxu0
        %4002 = vrot.lane.b32.xlu0 %v3329, 64
        %v4003 = vpop.permute.xlu0 %4002
        %v4006 = vsel %vm3424, %v3954, 0
        %4008 = vmatprep.subr.bf16.mxu0 0
        %4009 = vmatpush1.bf16.msra.mxu0 %v4003
        %4010 = vmatprep.subr.bf16.mxu0 0
        %4011 = vmatpush1.bf16.msra.mxu0 0
        %4012 = vmatprep.subr.bf16.mxu0 0
        %4013 = vmatpush1.bf16.msra.mxu0 0
        %4014 = vmatprep.subr.bf16.mxu0 0
        %4015 = vmatpush1.bf16.msra.mxu0 0
        %4016 = vmatprep.subr.bf16.mxu0 0
        %4017 = vmatpush1.bf16.msra.mxu0 0
        %4018 = vmatprep.subr.bf16.mxu0 0
        %4019 = vmatpush1.bf16.msra.mxu0 0
        %4020 = vmatprep.subr.bf16.mxu0 0
        %4021 = vmatpush1.bf16.msra.mxu0 0
        %4022 = vmatprep.subr.bf16.mxu0 0
        %4023 = vmatpush1.bf16.msra.mxu0 0
        %4024 = vmatprep.subr.bf16.mxu0 0
        %4025 = vmatpush1.bf16.msra.mxu0 0
        %4026 = vmatprep.subr.bf16.mxu0 0
        %4027 = vmatpush1.bf16.msra.mxu0 0
        %4028 = vmatprep.subr.bf16.mxu0 0
        %4029 = vmatpush1.bf16.msra.mxu0 0
        %4030 = vmatprep.subr.bf16.mxu0 0
        %4031 = vmatpush1.bf16.msra.mxu0 0
        %4032 = vmatprep.subr.bf16.mxu0 0
        %4033 = vmatpush1.bf16.msra.mxu0 0
        %4034 = vmatprep.subr.bf16.mxu0 0
        %4035 = vmatpush1.bf16.msra.mxu0 0
        %4036 = vmatprep.subr.bf16.mxu0 0
        %4037 = vmatpush1.bf16.msra.mxu0 0
        %4038 = vmatprep.subr.bf16.mxu0 0
        %4039 = vmatpush1.bf16.msra.mxu0 0
        %4040 = vmatprep.mubr.bf16.mxu0 0
        %4041 = vmatmul.mubr.bf16.gmra.mrb[0].mxu0 %v4006
        %v4042 = vpop.f32.mrb[0].mxu0
        %v4043 = vadd.f32 0.0, %v4042
        %v4044 = vpop.f32.mrb[0].mxu0
        %v4045 = vpop.f32.mrb[0].mxu0
        %v4046 = vadd.f32 0.0, %v4045
        %v4047 = vpop.f32.mrb[0].mxu0
        %4048 = vdwg.mxu0
        %4049 = vrot.lane.b32.xlu0 %v3324, 32
        %v4050 = vpop.permute.xlu0 %4049
        %4051 = vrot.lane.b32.xlu0 %v3326, 32
        %v4052 = vpop.permute.xlu0 %4051
        %v4054 = vsel %vm718, %v4050, 0
        %v4057 = vsel %vm718, %v4052, 0
        %4059 = vmatprep.subr.bf16.mxu0 0
        %4060 = vmatpush1.bf16.xpose.msra.mxu0 %v4057
        %4061 = vmatprep.subr.bf16.mxu0 0
        %4062 = vmatpush1.bf16.xpose.msra.mxu0 0
        %4063 = vmatprep.subr.bf16.mxu0 0
        %4064 = vmatpush1.bf16.xpose.msra.mxu0 0
        %4065 = vmatprep.subr.bf16.mxu0 0
        %4066 = vmatpush1.bf16.xpose.msra.mxu0 0
        %4067 = vmatprep.subr.bf16.mxu0 0
        %4068 = vmatpush1.bf16.xpose.msra.mxu0 0
        %4069 = vmatprep.subr.bf16.mxu0 0
        %4070 = vmatpush1.bf16.xpose.msra.mxu0 0
        %4071 = vmatprep.subr.bf16.mxu0 0
        %4072 = vmatpush1.bf16.xpose.msra.mxu0 0
        %4073 = vmatprep.subr.bf16.mxu0 0
        %4074 = vmatpush1.bf16.xpose.msra.mxu0 0
        %4075 = vmatprep.subr.bf16.mxu0 0
        %4076 = vmatpush1.bf16.xpose.msra.mxu0 0
        %4077 = vmatprep.subr.bf16.mxu0 0
        %4078 = vmatpush1.bf16.xpose.msra.mxu0 0
        %4079 = vmatprep.subr.bf16.mxu0 0
        %4080 = vmatpush1.bf16.xpose.msra.mxu0 0
        %4081 = vmatprep.subr.bf16.mxu0 0
        %4082 = vmatpush1.bf16.xpose.msra.mxu0 0
        %4083 = vmatprep.subr.bf16.mxu0 0
        %4084 = vmatpush1.bf16.xpose.msra.mxu0 0
        %4085 = vmatprep.subr.bf16.mxu0 0
        %4086 = vmatpush1.bf16.xpose.msra.mxu0 0
        %4087 = vmatprep.subr.bf16.mxu0 0
        %4088 = vmatpush1.bf16.xpose.msra.mxu0 0
        %4089 = vmatprep.subr.bf16.mxu0 0
        %4090 = vmatpush1.bf16.xpose.msra.mxu0 0
        %4091 = vmatprep.mubr.bf16.mxu0 0
        %4092 = vmatmul.mubr.bf16.gmra.mrb[0].mxu0 %v4054
        %v4093 = vpop.f32.mrb[0].mxu0
        %v4094 = vadd.f32 0.0, %v4093
        %v4095 = vpop.f32.mrb[0].mxu0
        %v4096 = vpop.f32.mrb[0].mxu0
        %v4097 = vadd.f32 0.0, %v4096
        %v4098 = vpop.f32.mrb[0].mxu0
        %4099 = vdwg.mxu0
        %4100 = vrot.lane.b32.xlu0 %v3325, 32
        %v4101 = vpop.permute.xlu0 %4100
        %4102 = vrot.lane.b32.xlu0 %v3327, 32
        %v4103 = vpop.permute.xlu0 %4102
        %v4105 = vsel %vm718, %v4101, 0
        %v4108 = vsel %vm718, %v4103, 0
        %4110 = vmatprep.subr.bf16.mxu0 0
        %4111 = vmatpush1.bf16.xpose.msra.mxu0 %v4108
        %4112 = vmatprep.subr.bf16.mxu0 0
        %4113 = vmatpush1.bf16.xpose.msra.mxu0 0
        %4114 = vmatprep.subr.bf16.mxu0 0
        %4115 = vmatpush1.bf16.xpose.msra.mxu0 0
        %4116 = vmatprep.subr.bf16.mxu0 0
        %4117 = vmatpush1.bf16.xpose.msra.mxu0 0
        %4118 = vmatprep.subr.bf16.mxu0 0
        %4119 = vmatpush1.bf16.xpose.msra.mxu0 0
        %4120 = vmatprep.subr.bf16.mxu0 0
        %4121 = vmatpush1.bf16.xpose.msra.mxu0 0
        %4122 = vmatprep.subr.bf16.mxu0 0
        %4123 = vmatpush1.bf16.xpose.msra.mxu0 0
        %4124 = vmatprep.subr.bf16.mxu0 0
        %4125 = vmatpush1.bf16.xpose.msra.mxu0 0
        %4126 = vmatprep.subr.bf16.mxu0 0
        %4127 = vmatpush1.bf16.xpose.msra.mxu0 0
        %4128 = vmatprep.subr.bf16.mxu0 0
        %4129 = vmatpush1.bf16.xpose.msra.mxu0 0
        %4130 = vmatprep.subr.bf16.mxu0 0
        %4131 = vmatpush1.bf16.xpose.msra.mxu0 0
        %4132 = vmatprep.subr.bf16.mxu0 0
        %4133 = vmatpush1.bf16.xpose.msra.mxu0 0
        %4134 = vmatprep.subr.bf16.mxu0 0
        %4135 = vmatpush1.bf16.xpose.msra.mxu0 0
        %4136 = vmatprep.subr.bf16.mxu0 0
        %4137 = vmatpush1.bf16.xpose.msra.mxu0 0
        %4138 = vmatprep.subr.bf16.mxu0 0
        %4139 = vmatpush1.bf16.xpose.msra.mxu0 0
        %4140 = vmatprep.subr.bf16.mxu0 0
        %4141 = vmatpush1.bf16.xpose.msra.mxu0 0
        %4142 = vmatprep.mubr.bf16.mxu0 0
        %4143 = vmatmul.mubr.bf16.gmra.mrb[0].mxu0 %v4105
        %v4144 = vpop.f32.mrb[0].mxu0
        %v4145 = vadd.f32 0.0, %v4144
        %v4146 = vpop.f32.mrb[0].mxu0
        %v4147 = vpop.f32.mrb[0].mxu0
        %v4148 = vadd.f32 0.0, %v4147
        %v4149 = vpop.f32.mrb[0].mxu0
        %4150 = vdwg.mxu0
        %v4151 = vsel %vm3424, %v4094, -inf
        %4152 = vmax.xlane.f32.xlu0 %v4151
        %v4153 = vpop.xlane.xlu0 %4152
        %v4154 = vsel %vm3424, %v4097, -inf
        %4155 = vmax.xlane.f32.xlu0 %v4154
        %v4156 = vpop.xlane.xlu0 %4155
        %v4157 = vsel %vm3424, %v4145, -inf
        %4158 = vmax.xlane.f32.xlu0 %v4157
        %v4159 = vpop.xlane.xlu0 %4158
        %v4160 = vsel %vm3424, %v4148, -inf
        %4161 = vmax.xlane.f32.xlu0 %v4160
        %v4162 = vpop.xlane.xlu0 %4161
        %v4163 = vsub.f32 %v4094, %v4153
        %v4164 = vsub.f32 %v4097, %v4156
        %v4165 = vsub.f32 %v4145, %v4159
        %v4166 = vsub.f32 %v4148, %v4162
        %v4167 = vmul.f32 %v4163, 1.442695
        %v4168 = vpow.pop %v4167
        %v4169 = vmul.f32 %v4164, 1.442695
        %v4170 = vpow.pop %v4169
        %v4171 = vmul.f32 %v4165, 1.442695
        %v4172 = vpow.pop %v4171
        %v4173 = vmul.f32 %v4166, 1.442695
        %v4174 = vpow.pop %v4173
        %v4175 = vsel %vm3424, %v4168, 0.0
        %4176 = vadd.xlane.f32.xlu0 %v4175
        %v4177 = vpop.xlane.xlu0 %4176
        %v4178 = vsel %vm3424, %v4170, 0.0
        %4179 = vadd.xlane.f32.xlu0 %v4178
        %v4180 = vpop.xlane.xlu0 %4179
        %v4181 = vsel %vm3424, %v4172, 0.0
        %4182 = vadd.xlane.f32.xlu0 %v4181
        %v4183 = vpop.xlane.xlu0 %4182
        %v4184 = vsel %vm3424, %v4174, 0.0
        %4185 = vadd.xlane.f32.xlu0 %v4184
        %v4186 = vpop.xlane.xlu0 %4185
        %v4187 = vrcp.pop %v4177
        %v4188 = vrcp.pop %v4180
        %v4189 = vrcp.pop %v4183
        %v4190 = vrcp.pop %v4186
        %v4191 = vmul.f32 %v4168, %v4187
        %v4192 = vmul.f32 %v4170, %v4188
        %v4193 = vmul.f32 %v4172, %v4189
        %v4194 = vmul.f32 %v4174, %v4190
        %v4195 = vpack.c.bf16 %v4192, %v4191
        %v4196 = vpack.c.bf16 %v4194, %v4193
        %4197 = vrot.lane.b32.xlu0 %v3328, 32
        %v4198 = vpop.permute.xlu0 %4197
        %v4201 = vsel %vm3424, %v4195, 0
        %4203 = vmatprep.subr.bf16.mxu0 0
        %4204 = vmatpush1.bf16.msra.mxu0 %v4198
        %4205 = vmatprep.subr.bf16.mxu0 0
        %4206 = vmatpush1.bf16.msra.mxu0 0
        %4207 = vmatprep.subr.bf16.mxu0 0
        %4208 = vmatpush1.bf16.msra.mxu0 0
        %4209 = vmatprep.subr.bf16.mxu0 0
        %4210 = vmatpush1.bf16.msra.mxu0 0
        %4211 = vmatprep.subr.bf16.mxu0 0
        %4212 = vmatpush1.bf16.msra.mxu0 0
        %4213 = vmatprep.subr.bf16.mxu0 0
        %4214 = vmatpush1.bf16.msra.mxu0 0
        %4215 = vmatprep.subr.bf16.mxu0 0
        %4216 = vmatpush1.bf16.msra.mxu0 0
        %4217 = vmatprep.subr.bf16.mxu0 0
        %4218 = vmatpush1.bf16.msra.mxu0 0
        %4219 = vmatprep.subr.bf16.mxu0 0
        %4220 = vmatpush1.bf16.msra.mxu0 0
        %4221 = vmatprep.subr.bf16.mxu0 0
        %4222 = vmatpush1.bf16.msra.mxu0 0
        %4223 = vmatprep.subr.bf16.mxu0 0
        %4224 = vmatpush1.bf16.msra.mxu0 0
        %4225 = vmatprep.subr.bf16.mxu0 0
        %4226 = vmatpush1.bf16.msra.mxu0 0
        %4227 = vmatprep.subr.bf16.mxu0 0
        %4228 = vmatpush1.bf16.msra.mxu0 0
        %4229 = vmatprep.subr.bf16.mxu0 0
        %4230 = vmatpush1.bf16.msra.mxu0 0
        %4231 = vmatprep.subr.bf16.mxu0 0
        %4232 = vmatpush1.bf16.msra.mxu0 0
        %4233 = vmatprep.subr.bf16.mxu0 0
        %4234 = vmatpush1.bf16.msra.mxu0 0
        %4235 = vmatprep.mubr.bf16.mxu0 0
        %4236 = vmatmul.mubr.bf16.gmra.mrb[0].mxu0 %v4201
        %v4237 = vpop.f32.mrb[0].mxu0
        %v4238 = vadd.f32 0.0, %v4237
        %v4239 = vpop.f32.mrb[0].mxu0
        %v4240 = vpop.f32.mrb[0].mxu0
        %v4241 = vadd.f32 0.0, %v4240
        %v4242 = vpop.f32.mrb[0].mxu0
        %4243 = vdwg.mxu0
        %4244 = vrot.lane.b32.xlu0 %v3329, 32
        %v4245 = vpop.permute.xlu0 %4244
        %v4248 = vsel %vm3424, %v4196, 0
        %4250 = vmatprep.subr.bf16.mxu0 0
        %4251 = vmatpush1.bf16.msra.mxu0 %v4245
        %4252 = vmatprep.subr.bf16.mxu0 0
        %4253 = vmatpush1.bf16.msra.mxu0 0
        %4254 = vmatprep.subr.bf16.mxu0 0
        %4255 = vmatpush1.bf16.msra.mxu0 0
        %4256 = vmatprep.subr.bf16.mxu0 0
        %4257 = vmatpush1.bf16.msra.mxu0 0
        %4258 = vmatprep.subr.bf16.mxu0 0
        %4259 = vmatpush1.bf16.msra.mxu0 0
        %4260 = vmatprep.subr.bf16.mxu0 0
        %4261 = vmatpush1.bf16.msra.mxu0 0
        %4262 = vmatprep.subr.bf16.mxu0 0
        %4263 = vmatpush1.bf16.msra.mxu0 0
        %4264 = vmatprep.subr.bf16.mxu0 0
        %4265 = vmatpush1.bf16.msra.mxu0 0
        %4266 = vmatprep.subr.bf16.mxu0 0
        %4267 = vmatpush1.bf16.msra.mxu0 0
        %4268 = vmatprep.subr.bf16.mxu0 0
        %4269 = vmatpush1.bf16.msra.mxu0 0
        %4270 = vmatprep.subr.bf16.mxu0 0
        %4271 = vmatpush1.bf16.msra.mxu0 0
        %4272 = vmatprep.subr.bf16.mxu0 0
        %4273 = vmatpush1.bf16.msra.mxu0 0
        %4274 = vmatprep.subr.bf16.mxu0 0
        %4275 = vmatpush1.bf16.msra.mxu0 0
        %4276 = vmatprep.subr.bf16.mxu0 0
        %4277 = vmatpush1.bf16.msra.mxu0 0
        %4278 = vmatprep.subr.bf16.mxu0 0
        %4279 = vmatpush1.bf16.msra.mxu0 0
        %4280 = vmatprep.subr.bf16.mxu0 0
        %4281 = vmatpush1.bf16.msra.mxu0 0
        %4282 = vmatprep.mubr.bf16.mxu0 0
        %4283 = vmatmul.mubr.bf16.gmra.mrb[0].mxu0 %v4248
        %v4284 = vpop.f32.mrb[0].mxu0
        %v4285 = vadd.f32 0.0, %v4284
        %v4286 = vpop.f32.mrb[0].mxu0
        %v4287 = vpop.f32.mrb[0].mxu0
        %v4288 = vadd.f32 0.0, %v4287
        %v4289 = vpop.f32.mrb[0].mxu0
        %4290 = vdwg.mxu0
        %v4291 = vpack.c.bf16 %v3206, %v3202
        %v4292 = vpack.c.bf16 %v3216, %v3212
        %v4293 = vpack.c.bf16 %v3259, %v3255
        %v4294 = vpack.c.bf16 %v3269, %v3265
        %v4295 = vpack.c.bf16 %v3312, %v3308
        %v4296 = vpack.c.bf16 %v3322, %v3318
        %v4298 = vsel %vm718, %v4291, 0
        %v4301 = vsel %vm718, %v4293, 0
        %4303 = vmatprep.subr.bf16.mxu0 0
        %4304 = vmatpush1.bf16.xpose.msra.mxu0 %v4301
        %4305 = vmatprep.subr.bf16.mxu0 0
        %4306 = vmatpush1.bf16.xpose.msra.mxu0 0
        %4307 = vmatprep.subr.bf16.mxu0 0
        %4308 = vmatpush1.bf16.xpose.msra.mxu0 0
        %4309 = vmatprep.subr.bf16.mxu0 0
        %4310 = vmatpush1.bf16.xpose.msra.mxu0 0
        %4311 = vmatprep.subr.bf16.mxu0 0
        %4312 = vmatpush1.bf16.xpose.msra.mxu0 0
        %4313 = vmatprep.subr.bf16.mxu0 0
        %4314 = vmatpush1.bf16.xpose.msra.mxu0 0
        %4315 = vmatprep.subr.bf16.mxu0 0
        %4316 = vmatpush1.bf16.xpose.msra.mxu0 0
        %4317 = vmatprep.subr.bf16.mxu0 0
        %4318 = vmatpush1.bf16.xpose.msra.mxu0 0
        %4319 = vmatprep.subr.bf16.mxu0 0
        %4320 = vmatpush1.bf16.xpose.msra.mxu0 0
        %4321 = vmatprep.subr.bf16.mxu0 0
        %4322 = vmatpush1.bf16.xpose.msra.mxu0 0
        %4323 = vmatprep.subr.bf16.mxu0 0
        %4324 = vmatpush1.bf16.xpose.msra.mxu0 0
        %4325 = vmatprep.subr.bf16.mxu0 0
        %4326 = vmatpush1.bf16.xpose.msra.mxu0 0
        %4327 = vmatprep.subr.bf16.mxu0 0
        %4328 = vmatpush1.bf16.xpose.msra.mxu0 0
        %4329 = vmatprep.subr.bf16.mxu0 0
        %4330 = vmatpush1.bf16.xpose.msra.mxu0 0
        %4331 = vmatprep.subr.bf16.mxu0 0
        %4332 = vmatpush1.bf16.xpose.msra.mxu0 0
        %4333 = vmatprep.subr.bf16.mxu0 0
        %4334 = vmatpush1.bf16.xpose.msra.mxu0 0
        %4335 = vmatprep.mubr.bf16.mxu0 0
        %4336 = vmatmul.mubr.bf16.gmra.mrb[0].mxu0 %v4298
        %v4337 = vpop.f32.mrb[0].mxu0
        %v4338 = vadd.f32 0.0, %v4337
        %v4339 = vpop.f32.mrb[0].mxu0
        %v4340 = vpop.f32.mrb[0].mxu0
        %v4341 = vadd.f32 0.0, %v4340
        %v4342 = vpop.f32.mrb[0].mxu0
        %4343 = vdwg.mxu0
        %v4345 = vsel %vm718, %v4292, 0
        %v4348 = vsel %vm718, %v4294, 0
        %4350 = vmatprep.subr.bf16.mxu0 0
        %4351 = vmatpush1.bf16.xpose.msra.mxu0 %v4348
        %4352 = vmatprep.subr.bf16.mxu0 0
        %4353 = vmatpush1.bf16.xpose.msra.mxu0 0
        %4354 = vmatprep.subr.bf16.mxu0 0
        %4355 = vmatpush1.bf16.xpose.msra.mxu0 0
        %4356 = vmatprep.subr.bf16.mxu0 0
        %4357 = vmatpush1.bf16.xpose.msra.mxu0 0
        %4358 = vmatprep.subr.bf16.mxu0 0
        %4359 = vmatpush1.bf16.xpose.msra.mxu0 0
        %4360 = vmatprep.subr.bf16.mxu0 0
        %4361 = vmatpush1.bf16.xpose.msra.mxu0 0
        %4362 = vmatprep.subr.bf16.mxu0 0
        %4363 = vmatpush1.bf16.xpose.msra.mxu0 0
        %4364 = vmatprep.subr.bf16.mxu0 0
        %4365 = vmatpush1.bf16.xpose.msra.mxu0 0
        %4366 = vmatprep.subr.bf16.mxu0 0
        %4367 = vmatpush1.bf16.xpose.msra.mxu0 0
        %4368 = vmatprep.subr.bf16.mxu0 0
        %4369 = vmatpush1.bf16.xpose.msra.mxu0 0
        %4370 = vmatprep.subr.bf16.mxu0 0
        %4371 = vmatpush1.bf16.xpose.msra.mxu0 0
        %4372 = vmatprep.subr.bf16.mxu0 0
        %4373 = vmatpush1.bf16.xpose.msra.mxu0 0
        %4374 = vmatprep.subr.bf16.mxu0 0
        %4375 = vmatpush1.bf16.xpose.msra.mxu0 0
        %4376 = vmatprep.subr.bf16.mxu0 0
        %4377 = vmatpush1.bf16.xpose.msra.mxu0 0
        %4378 = vmatprep.subr.bf16.mxu0 0
        %4379 = vmatpush1.bf16.xpose.msra.mxu0 0
        %4380 = vmatprep.subr.bf16.mxu0 0
        %4381 = vmatpush1.bf16.xpose.msra.mxu0 0
        %4382 = vmatprep.mubr.bf16.mxu0 0
        %4383 = vmatmul.mubr.bf16.gmra.mrb[0].mxu0 %v4345
        %v4384 = vpop.f32.mrb[0].mxu0
        %v4385 = vadd.f32 0.0, %v4384
        %v4386 = vpop.f32.mrb[0].mxu0
        %v4387 = vpop.f32.mrb[0].mxu0
        %v4388 = vadd.f32 0.0, %v4387
        %v4389 = vpop.f32.mrb[0].mxu0
        %4390 = vdwg.mxu0
        %v4391 = vsel %vm3424, %v4338, -inf
        %4392 = vmax.xlane.f32.xlu0 %v4391
        %v4393 = vpop.xlane.xlu0 %4392
        %v4394 = vsel %vm3424, %v4341, -inf
        %4395 = vmax.xlane.f32.xlu0 %v4394
        %v4396 = vpop.xlane.xlu0 %4395
        %v4397 = vsel %vm3424, %v4385, -inf
        %4398 = vmax.xlane.f32.xlu0 %v4397
        %v4399 = vpop.xlane.xlu0 %4398
        %v4400 = vsel %vm3424, %v4388, -inf
        %4401 = vmax.xlane.f32.xlu0 %v4400
        %v4402 = vpop.xlane.xlu0 %4401
        %v4403 = vsub.f32 %v4338, %v4393
        %v4404 = vsub.f32 %v4341, %v4396
        %v4405 = vsub.f32 %v4385, %v4399
        %v4406 = vsub.f32 %v4388, %v4402
        %v4407 = vmul.f32 %v4403, 1.442695
        %v4408 = vpow.pop %v4407
        %v4409 = vmul.f32 %v4404, 1.442695
        %v4410 = vpow.pop %v4409
        %v4411 = vmul.f32 %v4405, 1.442695
        %v4412 = vpow.pop %v4411
        %v4413 = vmul.f32 %v4406, 1.442695
        %v4414 = vpow.pop %v4413
        %v4415 = vsel %vm3424, %v4408, 0.0
        %4416 = vadd.xlane.f32.xlu0 %v4415
        %v4417 = vpop.xlane.xlu0 %4416
        %v4418 = vsel %vm3424, %v4410, 0.0
        %4419 = vadd.xlane.f32.xlu0 %v4418
        %v4420 = vpop.xlane.xlu0 %4419
        %v4421 = vsel %vm3424, %v4412, 0.0
        %4422 = vadd.xlane.f32.xlu0 %v4421
        %v4423 = vpop.xlane.xlu0 %4422
        %v4424 = vsel %vm3424, %v4414, 0.0
        %4425 = vadd.xlane.f32.xlu0 %v4424
        %v4426 = vpop.xlane.xlu0 %4425
        %v4427 = vrcp.pop %v4417
        %v4428 = vrcp.pop %v4420
        %v4429 = vrcp.pop %v4423
        %v4430 = vrcp.pop %v4426
        %v4431 = vmul.f32 %v4408, %v4427
        %v4432 = vmul.f32 %v4410, %v4428
        %v4433 = vmul.f32 %v4412, %v4429
        %v4434 = vmul.f32 %v4414, %v4430
        %v4435 = vpack.c.bf16 %v4432, %v4431
        %v4436 = vpack.c.bf16 %v4434, %v4433
        %v4438 = vsel %vm3424, %v4435, 0
        %4440 = vmatprep.subr.bf16.mxu0 0
        %4441 = vmatpush1.bf16.msra.mxu0 %v4295
        %4442 = vmatprep.subr.bf16.mxu0 0
        %4443 = vmatpush1.bf16.msra.mxu0 0
        %4444 = vmatprep.subr.bf16.mxu0 0
        %4445 = vmatpush1.bf16.msra.mxu0 0
        %4446 = vmatprep.subr.bf16.mxu0 0
        %4447 = vmatpush1.bf16.msra.mxu0 0
        %4448 = vmatprep.subr.bf16.mxu0 0
        %4449 = vmatpush1.bf16.msra.mxu0 0
        %4450 = vmatprep.subr.bf16.mxu0 0
        %4451 = vmatpush1.bf16.msra.mxu0 0
        %4452 = vmatprep.subr.bf16.mxu0 0
        %4453 = vmatpush1.bf16.msra.mxu0 0
        %4454 = vmatprep.subr.bf16.mxu0 0
        %4455 = vmatpush1.bf16.msra.mxu0 0
        %4456 = vmatprep.subr.bf16.mxu0 0
        %4457 = vmatpush1.bf16.msra.mxu0 0
        %4458 = vmatprep.subr.bf16.mxu0 0
        %4459 = vmatpush1.bf16.msra.mxu0 0
        %4460 = vmatprep.subr.bf16.mxu0 0
        %4461 = vmatpush1.bf16.msra.mxu0 0
        %4462 = vmatprep.subr.bf16.mxu0 0
        %4463 = vmatpush1.bf16.msra.mxu0 0
        %4464 = vmatprep.subr.bf16.mxu0 0
        %4465 = vmatpush1.bf16.msra.mxu0 0
        %4466 = vmatprep.subr.bf16.mxu0 0
        %4467 = vmatpush1.bf16.msra.mxu0 0
        %4468 = vmatprep.subr.bf16.mxu0 0
        %4469 = vmatpush1.bf16.msra.mxu0 0
        %4470 = vmatprep.subr.bf16.mxu0 0
        %4471 = vmatpush1.bf16.msra.mxu0 0
        %4472 = vmatprep.mubr.bf16.mxu0 0
        %4473 = vmatmul.mubr.bf16.gmra.mrb[0].mxu0 %v4438
        %v4474 = vpop.f32.mrb[0].mxu0
        %v4475 = vadd.f32 0.0, %v4474
        %v4476 = vpop.f32.mrb[0].mxu0
        %v4477 = vpop.f32.mrb[0].mxu0
        %v4478 = vadd.f32 0.0, %v4477
        %v4479 = vpop.f32.mrb[0].mxu0
        %4480 = vdwg.mxu0
        %v4482 = vsel %vm3424, %v4436, 0
        %4484 = vmatprep.subr.bf16.mxu0 0
        %4485 = vmatpush1.bf16.msra.mxu0 %v4296
        %4486 = vmatprep.subr.bf16.mxu0 0
        %4487 = vmatpush1.bf16.msra.mxu0 0
        %4488 = vmatprep.subr.bf16.mxu0 0
        %4489 = vmatpush1.bf16.msra.mxu0 0
        %4490 = vmatprep.subr.bf16.mxu0 0
        %4491 = vmatpush1.bf16.msra.mxu0 0
        %4492 = vmatprep.subr.bf16.mxu0 0
        %4493 = vmatpush1.bf16.msra.mxu0 0
        %4494 = vmatprep.subr.bf16.mxu0 0
        %4495 = vmatpush1.bf16.msra.mxu0 0
        %4496 = vmatprep.subr.bf16.mxu0 0
        %4497 = vmatpush1.bf16.msra.mxu0 0
        %4498 = vmatprep.subr.bf16.mxu0 0
        %4499 = vmatpush1.bf16.msra.mxu0 0
        %4500 = vmatprep.subr.bf16.mxu0 0
        %4501 = vmatpush1.bf16.msra.mxu0 0
        %4502 = vmatprep.subr.bf16.mxu0 0
        %4503 = vmatpush1.bf16.msra.mxu0 0
        %4504 = vmatprep.subr.bf16.mxu0 0
        %4505 = vmatpush1.bf16.msra.mxu0 0
        %4506 = vmatprep.subr.bf16.mxu0 0
        %4507 = vmatpush1.bf16.msra.mxu0 0
        %4508 = vmatprep.subr.bf16.mxu0 0
        %4509 = vmatpush1.bf16.msra.mxu0 0
        %4510 = vmatprep.subr.bf16.mxu0 0
        %4511 = vmatpush1.bf16.msra.mxu0 0
        %4512 = vmatprep.subr.bf16.mxu0 0
        %4513 = vmatpush1.bf16.msra.mxu0 0
        %4514 = vmatprep.subr.bf16.mxu0 0
        %4515 = vmatpush1.bf16.msra.mxu0 0
        %4516 = vmatprep.mubr.bf16.mxu0 0
        %4517 = vmatmul.mubr.bf16.gmra.mrb[0].mxu0 %v4482
        %v4518 = vpop.f32.mrb[0].mxu0
        %v4519 = vadd.f32 0.0, %v4518
        %v4520 = vpop.f32.mrb[0].mxu0
        %v4521 = vpop.f32.mrb[0].mxu0
        %v4522 = vadd.f32 0.0, %v4521
        %v4523 = vpop.f32.mrb[0].mxu0
        %4524 = vdwg.mxu0
        %4526 = vrot.lane.b32.xlu0 %v4291, 96
        %v4527 = vpop.permute.xlu0 %4526
        %4529 = vrot.lane.b32.xlu0 %v4293, 96
        %v4530 = vpop.permute.xlu0 %4529
        %v4532 = vsel %vm718, %v4527, 0
        %v4535 = vsel %vm718, %v4530, 0
        %4537 = vmatprep.subr.bf16.mxu0 0
        %4538 = vmatpush1.bf16.xpose.msra.mxu0 %v4535
        %4539 = vmatprep.subr.bf16.mxu0 0
        %4540 = vmatpush1.bf16.xpose.msra.mxu0 0
        %4541 = vmatprep.subr.bf16.mxu0 0
        %4542 = vmatpush1.bf16.xpose.msra.mxu0 0
        %4543 = vmatprep.subr.bf16.mxu0 0
        %4544 = vmatpush1.bf16.xpose.msra.mxu0 0
        %4545 = vmatprep.subr.bf16.mxu0 0
        %4546 = vmatpush1.bf16.xpose.msra.mxu0 0
        %4547 = vmatprep.subr.bf16.mxu0 0
        %4548 = vmatpush1.bf16.xpose.msra.mxu0 0
        %4549 = vmatprep.subr.bf16.mxu0 0
        %4550 = vmatpush1.bf16.xpose.msra.mxu0 0
        %4551 = vmatprep.subr.bf16.mxu0 0
        %4552 = vmatpush1.bf16.xpose.msra.mxu0 0
        %4553 = vmatprep.subr.bf16.mxu0 0
        %4554 = vmatpush1.bf16.xpose.msra.mxu0 0
        %4555 = vmatprep.subr.bf16.mxu0 0
        %4556 = vmatpush1.bf16.xpose.msra.mxu0 0
        %4557 = vmatprep.subr.bf16.mxu0 0
        %4558 = vmatpush1.bf16.xpose.msra.mxu0 0
        %4559 = vmatprep.subr.bf16.mxu0 0
        %4560 = vmatpush1.bf16.xpose.msra.mxu0 0
        %4561 = vmatprep.subr.bf16.mxu0 0
        %4562 = vmatpush1.bf16.xpose.msra.mxu0 0
        %4563 = vmatprep.subr.bf16.mxu0 0
        %4564 = vmatpush1.bf16.xpose.msra.mxu0 0
        %4565 = vmatprep.subr.bf16.mxu0 0
        %4566 = vmatpush1.bf16.xpose.msra.mxu0 0
        %4567 = vmatprep.subr.bf16.mxu0 0
        %4568 = vmatpush1.bf16.xpose.msra.mxu0 0
        %4569 = vmatprep.mubr.bf16.mxu0 0
        %4570 = vmatmul.mubr.bf16.gmra.mrb[0].mxu0 %v4532
        %v4571 = vpop.f32.mrb[0].mxu0
        %v4572 = vadd.f32 0.0, %v4571
        %v4573 = vpop.f32.mrb[0].mxu0
        %v4574 = vpop.f32.mrb[0].mxu0
        %v4575 = vadd.f32 0.0, %v4574
        %v4576 = vpop.f32.mrb[0].mxu0
        %4577 = vdwg.mxu0
        %4579 = vrot.lane.b32.xlu0 %v4292, 96
        %v4580 = vpop.permute.xlu0 %4579
        %4582 = vrot.lane.b32.xlu0 %v4294, 96
        %v4583 = vpop.permute.xlu0 %4582
        %v4585 = vsel %vm718, %v4580, 0
        %v4588 = vsel %vm718, %v4583, 0
        %4590 = vmatprep.subr.bf16.mxu0 0
        %4591 = vmatpush1.bf16.xpose.msra.mxu0 %v4588
        %4592 = vmatprep.subr.bf16.mxu0 0
        %4593 = vmatpush1.bf16.xpose.msra.mxu0 0
        %4594 = vmatprep.subr.bf16.mxu0 0
        %4595 = vmatpush1.bf16.xpose.msra.mxu0 0
        %4596 = vmatprep.subr.bf16.mxu0 0
        %4597 = vmatpush1.bf16.xpose.msra.mxu0 0
        %4598 = vmatprep.subr.bf16.mxu0 0
        %4599 = vmatpush1.bf16.xpose.msra.mxu0 0
        %4600 = vmatprep.subr.bf16.mxu0 0
        %4601 = vmatpush1.bf16.xpose.msra.mxu0 0
        %4602 = vmatprep.subr.bf16.mxu0 0
        %4603 = vmatpush1.bf16.xpose.msra.mxu0 0
        %4604 = vmatprep.subr.bf16.mxu0 0
        %4605 = vmatpush1.bf16.xpose.msra.mxu0 0
        %4606 = vmatprep.subr.bf16.mxu0 0
        %4607 = vmatpush1.bf16.xpose.msra.mxu0 0
        %4608 = vmatprep.subr.bf16.mxu0 0
        %4609 = vmatpush1.bf16.xpose.msra.mxu0 0
        %4610 = vmatprep.subr.bf16.mxu0 0
        %4611 = vmatpush1.bf16.xpose.msra.mxu0 0
        %4612 = vmatprep.subr.bf16.mxu0 0
        %4613 = vmatpush1.bf16.xpose.msra.mxu0 0
        %4614 = vmatprep.subr.bf16.mxu0 0
        %4615 = vmatpush1.bf16.xpose.msra.mxu0 0
        %4616 = vmatprep.subr.bf16.mxu0 0
        %4617 = vmatpush1.bf16.xpose.msra.mxu0 0
        %4618 = vmatprep.subr.bf16.mxu0 0
        %4619 = vmatpush1.bf16.xpose.msra.mxu0 0
        %4620 = vmatprep.subr.bf16.mxu0 0
        %4621 = vmatpush1.bf16.xpose.msra.mxu0 0
        %4622 = vmatprep.mubr.bf16.mxu0 0
        %4623 = vmatmul.mubr.bf16.gmra.mrb[0].mxu0 %v4585
        %v4624 = vpop.f32.mrb[0].mxu0
        %v4625 = vadd.f32 0.0, %v4624
        %v4626 = vpop.f32.mrb[0].mxu0
        %v4627 = vpop.f32.mrb[0].mxu0
        %v4628 = vadd.f32 0.0, %v4627
        %v4629 = vpop.f32.mrb[0].mxu0
        %4630 = vdwg.mxu0
        %v4631 = vsel %vm3424, %v4572, -inf
        %4632 = vmax.xlane.f32.xlu0 %v4631
        %v4633 = vpop.xlane.xlu0 %4632
        %v4634 = vsel %vm3424, %v4575, -inf
        %4635 = vmax.xlane.f32.xlu0 %v4634
        %v4636 = vpop.xlane.xlu0 %4635
        %v4637 = vsel %vm3424, %v4625, -inf
        %4638 = vmax.xlane.f32.xlu0 %v4637
        %v4639 = vpop.xlane.xlu0 %4638
        %v4640 = vsel %vm3424, %v4628, -inf
        %4641 = vmax.xlane.f32.xlu0 %v4640
        %v4642 = vpop.xlane.xlu0 %4641
        %v4643 = vsub.f32 %v4572, %v4633
        %v4644 = vsub.f32 %v4575, %v4636
        %v4645 = vsub.f32 %v4625, %v4639
        %v4646 = vsub.f32 %v4628, %v4642
        %v4647 = vmul.f32 %v4643, 1.442695
        %v4648 = vpow.pop %v4647
        %v4649 = vmul.f32 %v4644, 1.442695
        %v4650 = vpow.pop %v4649
        %v4651 = vmul.f32 %v4645, 1.442695
        %v4652 = vpow.pop %v4651
        %v4653 = vmul.f32 %v4646, 1.442695
        %v4654 = vpow.pop %v4653
        %v4655 = vsel %vm3424, %v4648, 0.0
        %4656 = vadd.xlane.f32.xlu0 %v4655
        %v4657 = vpop.xlane.xlu0 %4656
        %v4658 = vsel %vm3424, %v4650, 0.0
        %4659 = vadd.xlane.f32.xlu0 %v4658
        %v4660 = vpop.xlane.xlu0 %4659
        %v4661 = vsel %vm3424, %v4652, 0.0
        %4662 = vadd.xlane.f32.xlu0 %v4661
        %v4663 = vpop.xlane.xlu0 %4662
        %v4664 = vsel %vm3424, %v4654, 0.0
        %4665 = vadd.xlane.f32.xlu0 %v4664
        %v4666 = vpop.xlane.xlu0 %4665
        %v4667 = vrcp.pop %v4657
        %v4668 = vrcp.pop %v4660
        %v4669 = vrcp.pop %v4663
        %v4670 = vrcp.pop %v4666
        %v4671 = vmul.f32 %v4648, %v4667
        %v4672 = vmul.f32 %v4650, %v4668
        %v4673 = vmul.f32 %v4652, %v4669
        %v4674 = vmul.f32 %v4654, %v4670
        %v4675 = vpack.c.bf16 %v4672, %v4671
        %v4676 = vpack.c.bf16 %v4674, %v4673
        %4678 = vrot.lane.b32.xlu0 %v4295, 96
        %v4679 = vpop.permute.xlu0 %4678
        %v4682 = vsel %vm3424, %v4675, 0
        %4684 = vmatprep.subr.bf16.mxu0 0
        %4685 = vmatpush1.bf16.msra.mxu0 %v4679
        %4686 = vmatprep.subr.bf16.mxu0 0
        %4687 = vmatpush1.bf16.msra.mxu0 0
        %4688 = vmatprep.subr.bf16.mxu0 0
        %4689 = vmatpush1.bf16.msra.mxu0 0
        %4690 = vmatprep.subr.bf16.mxu0 0
        %4691 = vmatpush1.bf16.msra.mxu0 0
        %4692 = vmatprep.subr.bf16.mxu0 0
        %4693 = vmatpush1.bf16.msra.mxu0 0
        %4694 = vmatprep.subr.bf16.mxu0 0
        %4695 = vmatpush1.bf16.msra.mxu0 0
        %4696 = vmatprep.subr.bf16.mxu0 0
        %4697 = vmatpush1.bf16.msra.mxu0 0
        %4698 = vmatprep.subr.bf16.mxu0 0
        %4699 = vmatpush1.bf16.msra.mxu0 0
        %4700 = vmatprep.subr.bf16.mxu0 0
        %4701 = vmatpush1.bf16.msra.mxu0 0
        %4702 = vmatprep.subr.bf16.mxu0 0
        %4703 = vmatpush1.bf16.msra.mxu0 0
        %4704 = vmatprep.subr.bf16.mxu0 0
        %4705 = vmatpush1.bf16.msra.mxu0 0
        %4706 = vmatprep.subr.bf16.mxu0 0
        %4707 = vmatpush1.bf16.msra.mxu0 0
        %4708 = vmatprep.subr.bf16.mxu0 0
        %4709 = vmatpush1.bf16.msra.mxu0 0
        %4710 = vmatprep.subr.bf16.mxu0 0
        %4711 = vmatpush1.bf16.msra.mxu0 0
        %4712 = vmatprep.subr.bf16.mxu0 0
        %4713 = vmatpush1.bf16.msra.mxu0 0
        %4714 = vmatprep.subr.bf16.mxu0 0
        %4715 = vmatpush1.bf16.msra.mxu0 0
        %4716 = vmatprep.mubr.bf16.mxu0 0
        %4717 = vmatmul.mubr.bf16.gmra.mrb[0].mxu0 %v4682
        %v4718 = vpop.f32.mrb[0].mxu0
        %v4719 = vadd.f32 0.0, %v4718
        %v4720 = vpop.f32.mrb[0].mxu0
        %v4721 = vpop.f32.mrb[0].mxu0
        %v4722 = vadd.f32 0.0, %v4721
        %v4723 = vpop.f32.mrb[0].mxu0
        %4724 = vdwg.mxu0
        %4726 = vrot.lane.b32.xlu0 %v4296, 96
        %v4727 = vpop.permute.xlu0 %4726
        %v4730 = vsel %vm3424, %v4676, 0
        %4732 = vmatprep.subr.bf16.mxu0 0
        %4733 = vmatpush1.bf16.msra.mxu0 %v4727
        %4734 = vmatprep.subr.bf16.mxu0 0
        %4735 = vmatpush1.bf16.msra.mxu0 0
        %4736 = vmatprep.subr.bf16.mxu0 0
        %4737 = vmatpush1.bf16.msra.mxu0 0
        %4738 = vmatprep.subr.bf16.mxu0 0
        %4739 = vmatpush1.bf16.msra.mxu0 0
        %4740 = vmatprep.subr.bf16.mxu0 0
        %4741 = vmatpush1.bf16.msra.mxu0 0
        %4742 = vmatprep.subr.bf16.mxu0 0
        %4743 = vmatpush1.bf16.msra.mxu0 0
        %4744 = vmatprep.subr.bf16.mxu0 0
        %4745 = vmatpush1.bf16.msra.mxu0 0
        %4746 = vmatprep.subr.bf16.mxu0 0
        %4747 = vmatpush1.bf16.msra.mxu0 0
        %4748 = vmatprep.subr.bf16.mxu0 0
        %4749 = vmatpush1.bf16.msra.mxu0 0
        %4750 = vmatprep.subr.bf16.mxu0 0
        %4751 = vmatpush1.bf16.msra.mxu0 0
        %4752 = vmatprep.subr.bf16.mxu0 0
        %4753 = vmatpush1.bf16.msra.mxu0 0
        %4754 = vmatprep.subr.bf16.mxu0 0
        %4755 = vmatpush1.bf16.msra.mxu0 0
        %4756 = vmatprep.subr.bf16.mxu0 0
        %4757 = vmatpush1.bf16.msra.mxu0 0
        %4758 = vmatprep.subr.bf16.mxu0 0
        %4759 = vmatpush1.bf16.msra.mxu0 0
        %4760 = vmatprep.subr.bf16.mxu0 0
        %4761 = vmatpush1.bf16.msra.mxu0 0
        %4762 = vmatprep.subr.bf16.mxu0 0
        %4763 = vmatpush1.bf16.msra.mxu0 0
        %4764 = vmatprep.mubr.bf16.mxu0 0
        %4765 = vmatmul.mubr.bf16.gmra.mrb[0].mxu0 %v4730
        %v4766 = vpop.f32.mrb[0].mxu0
        %v4767 = vadd.f32 0.0, %v4766
        %v4768 = vpop.f32.mrb[0].mxu0
        %v4769 = vpop.f32.mrb[0].mxu0
        %v4770 = vadd.f32 0.0, %v4769
        %v4771 = vpop.f32.mrb[0].mxu0
        %4772 = vdwg.mxu0
        %4773 = vrot.lane.b32.xlu0 %v4291, 64
        %v4774 = vpop.permute.xlu0 %4773
        %4775 = vrot.lane.b32.xlu0 %v4293, 64
        %v4776 = vpop.permute.xlu0 %4775
        %v4778 = vsel %vm718, %v4774, 0
        %v4781 = vsel %vm718, %v4776, 0
        %4783 = vmatprep.subr.bf16.mxu0 0
        %4784 = vmatpush1.bf16.xpose.msra.mxu0 %v4781
        %4785 = vmatprep.subr.bf16.mxu0 0
        %4786 = vmatpush1.bf16.xpose.msra.mxu0 0
        %4787 = vmatprep.subr.bf16.mxu0 0
        %4788 = vmatpush1.bf16.xpose.msra.mxu0 0
        %4789 = vmatprep.subr.bf16.mxu0 0
        %4790 = vmatpush1.bf16.xpose.msra.mxu0 0
        %4791 = vmatprep.subr.bf16.mxu0 0
        %4792 = vmatpush1.bf16.xpose.msra.mxu0 0
        %4793 = vmatprep.subr.bf16.mxu0 0
        %4794 = vmatpush1.bf16.xpose.msra.mxu0 0
        %4795 = vmatprep.subr.bf16.mxu0 0
        %4796 = vmatpush1.bf16.xpose.msra.mxu0 0
        %4797 = vmatprep.subr.bf16.mxu0 0
        %4798 = vmatpush1.bf16.xpose.msra.mxu0 0
        %4799 = vmatprep.subr.bf16.mxu0 0
        %4800 = vmatpush1.bf16.xpose.msra.mxu0 0
        %4801 = vmatprep.subr.bf16.mxu0 0
        %4802 = vmatpush1.bf16.xpose.msra.mxu0 0
        %4803 = vmatprep.subr.bf16.mxu0 0
        %4804 = vmatpush1.bf16.xpose.msra.mxu0 0
        %4805 = vmatprep.subr.bf16.mxu0 0
        %4806 = vmatpush1.bf16.xpose.msra.mxu0 0
        %4807 = vmatprep.subr.bf16.mxu0 0
        %4808 = vmatpush1.bf16.xpose.msra.mxu0 0
        %4809 = vmatprep.subr.bf16.mxu0 0
        %4810 = vmatpush1.bf16.xpose.msra.mxu0 0
        %4811 = vmatprep.subr.bf16.mxu0 0
        %4812 = vmatpush1.bf16.xpose.msra.mxu0 0
        %4813 = vmatprep.subr.bf16.mxu0 0
        %4814 = vmatpush1.bf16.xpose.msra.mxu0 0
        %4815 = vmatprep.mubr.bf16.mxu0 0
        %4816 = vmatmul.mubr.bf16.gmra.mrb[0].mxu0 %v4778
        %v4817 = vpop.f32.mrb[0].mxu0
        %v4818 = vadd.f32 0.0, %v4817
        %v4819 = vpop.f32.mrb[0].mxu0
        %v4820 = vpop.f32.mrb[0].mxu0
        %v4821 = vadd.f32 0.0, %v4820
        %v4822 = vpop.f32.mrb[0].mxu0
        %4823 = vdwg.mxu0
        %4824 = vrot.lane.b32.xlu0 %v4292, 64
        %v4825 = vpop.permute.xlu0 %4824
        %4826 = vrot.lane.b32.xlu0 %v4294, 64
        %v4827 = vpop.permute.xlu0 %4826
        %v4829 = vsel %vm718, %v4825, 0
        %v4832 = vsel %vm718, %v4827, 0
        %4834 = vmatprep.subr.bf16.mxu0 0
        %4835 = vmatpush1.bf16.xpose.msra.mxu0 %v4832
        %4836 = vmatprep.subr.bf16.mxu0 0
        %4837 = vmatpush1.bf16.xpose.msra.mxu0 0
        %4838 = vmatprep.subr.bf16.mxu0 0
        %4839 = vmatpush1.bf16.xpose.msra.mxu0 0
        %4840 = vmatprep.subr.bf16.mxu0 0
        %4841 = vmatpush1.bf16.xpose.msra.mxu0 0
        %4842 = vmatprep.subr.bf16.mxu0 0
        %4843 = vmatpush1.bf16.xpose.msra.mxu0 0
        %4844 = vmatprep.subr.bf16.mxu0 0
        %4845 = vmatpush1.bf16.xpose.msra.mxu0 0
        %4846 = vmatprep.subr.bf16.mxu0 0
        %4847 = vmatpush1.bf16.xpose.msra.mxu0 0
        %4848 = vmatprep.subr.bf16.mxu0 0
        %4849 = vmatpush1.bf16.xpose.msra.mxu0 0
        %4850 = vmatprep.subr.bf16.mxu0 0
        %4851 = vmatpush1.bf16.xpose.msra.mxu0 0
        %4852 = vmatprep.subr.bf16.mxu0 0
        %4853 = vmatpush1.bf16.xpose.msra.mxu0 0
        %4854 = vmatprep.subr.bf16.mxu0 0
        %4855 = vmatpush1.bf16.xpose.msra.mxu0 0
        %4856 = vmatprep.subr.bf16.mxu0 0
        %4857 = vmatpush1.bf16.xpose.msra.mxu0 0
        %4858 = vmatprep.subr.bf16.mxu0 0
        %4859 = vmatpush1.bf16.xpose.msra.mxu0 0
        %4860 = vmatprep.subr.bf16.mxu0 0
        %4861 = vmatpush1.bf16.xpose.msra.mxu0 0
        %4862 = vmatprep.subr.bf16.mxu0 0
        %4863 = vmatpush1.bf16.xpose.msra.mxu0 0
        %4864 = vmatprep.subr.bf16.mxu0 0
        %4865 = vmatpush1.bf16.xpose.msra.mxu0 0
        %4866 = vmatprep.mubr.bf16.mxu0 0
        %4867 = vmatmul.mubr.bf16.gmra.mrb[0].mxu0 %v4829
        %v4868 = vpop.f32.mrb[0].mxu0
        %v4869 = vadd.f32 0.0, %v4868
        %v4870 = vpop.f32.mrb[0].mxu0
        %v4871 = vpop.f32.mrb[0].mxu0
        %v4872 = vadd.f32 0.0, %v4871
        %v4873 = vpop.f32.mrb[0].mxu0
        %4874 = vdwg.mxu0
        %v4875 = vsel %vm3424, %v4818, -inf
        %4876 = vmax.xlane.f32.xlu0 %v4875
        %v4877 = vpop.xlane.xlu0 %4876
        %v4878 = vsel %vm3424, %v4821, -inf
        %4879 = vmax.xlane.f32.xlu0 %v4878
        %v4880 = vpop.xlane.xlu0 %4879
        %v4881 = vsel %vm3424, %v4869, -inf
        %4882 = vmax.xlane.f32.xlu0 %v4881
        %v4883 = vpop.xlane.xlu0 %4882
        %v4884 = vsel %vm3424, %v4872, -inf
        %4885 = vmax.xlane.f32.xlu0 %v4884
        %v4886 = vpop.xlane.xlu0 %4885
        %v4887 = vsub.f32 %v4818, %v4877
        %v4888 = vsub.f32 %v4821, %v4880
        %v4889 = vsub.f32 %v4869, %v4883
        %v4890 = vsub.f32 %v4872, %v4886
        %v4891 = vmul.f32 %v4887, 1.442695
        %v4892 = vpow.pop %v4891
        %v4893 = vmul.f32 %v4888, 1.442695
        %v4894 = vpow.pop %v4893
        %v4895 = vmul.f32 %v4889, 1.442695
        %v4896 = vpow.pop %v4895
        %v4897 = vmul.f32 %v4890, 1.442695
        %v4898 = vpow.pop %v4897
        %v4899 = vsel %vm3424, %v4892, 0.0
        %4900 = vadd.xlane.f32.xlu0 %v4899
        %v4901 = vpop.xlane.xlu0 %4900
        %v4902 = vsel %vm3424, %v4894, 0.0
        %4903 = vadd.xlane.f32.xlu0 %v4902
        %v4904 = vpop.xlane.xlu0 %4903
        %v4905 = vsel %vm3424, %v4896, 0.0
        %4906 = vadd.xlane.f32.xlu0 %v4905
        %v4907 = vpop.xlane.xlu0 %4906
        %v4908 = vsel %vm3424, %v4898, 0.0
        %4909 = vadd.xlane.f32.xlu0 %v4908
        %v4910 = vpop.xlane.xlu0 %4909
        %v4911 = vrcp.pop %v4901
        %v4912 = vrcp.pop %v4904
        %v4913 = vrcp.pop %v4907
        %v4914 = vrcp.pop %v4910
        %v4915 = vmul.f32 %v4892, %v4911
        %v4916 = vmul.f32 %v4894, %v4912
        %v4917 = vmul.f32 %v4896, %v4913
        %v4918 = vmul.f32 %v4898, %v4914
        %v4919 = vpack.c.bf16 %v4916, %v4915
        %v4920 = vpack.c.bf16 %v4918, %v4917
        %4921 = vrot.lane.b32.xlu0 %v4295, 64
        %v4922 = vpop.permute.xlu0 %4921
        %v4925 = vsel %vm3424, %v4919, 0
        %4927 = vmatprep.subr.bf16.mxu0 0
        %4928 = vmatpush1.bf16.msra.mxu0 %v4922
        %4929 = vmatprep.subr.bf16.mxu0 0
        %4930 = vmatpush1.bf16.msra.mxu0 0
        %4931 = vmatprep.subr.bf16.mxu0 0
        %4932 = vmatpush1.bf16.msra.mxu0 0
        %4933 = vmatprep.subr.bf16.mxu0 0
        %4934 = vmatpush1.bf16.msra.mxu0 0
        %4935 = vmatprep.subr.bf16.mxu0 0
        %4936 = vmatpush1.bf16.msra.mxu0 0
        %4937 = vmatprep.subr.bf16.mxu0 0
        %4938 = vmatpush1.bf16.msra.mxu0 0
        %4939 = vmatprep.subr.bf16.mxu0 0
        %4940 = vmatpush1.bf16.msra.mxu0 0
        %4941 = vmatprep.subr.bf16.mxu0 0
        %4942 = vmatpush1.bf16.msra.mxu0 0
        %4943 = vmatprep.subr.bf16.mxu0 0
        %4944 = vmatpush1.bf16.msra.mxu0 0
        %4945 = vmatprep.subr.bf16.mxu0 0
        %4946 = vmatpush1.bf16.msra.mxu0 0
        %4947 = vmatprep.subr.bf16.mxu0 0
        %4948 = vmatpush1.bf16.msra.mxu0 0
        %4949 = vmatprep.subr.bf16.mxu0 0
        %4950 = vmatpush1.bf16.msra.mxu0 0
        %4951 = vmatprep.subr.bf16.mxu0 0
        %4952 = vmatpush1.bf16.msra.mxu0 0
        %4953 = vmatprep.subr.bf16.mxu0 0
        %4954 = vmatpush1.bf16.msra.mxu0 0
        %4955 = vmatprep.subr.bf16.mxu0 0
        %4956 = vmatpush1.bf16.msra.mxu0 0
        %4957 = vmatprep.subr.bf16.mxu0 0
        %4958 = vmatpush1.bf16.msra.mxu0 0
        %4959 = vmatprep.mubr.bf16.mxu0 0
        %4960 = vmatmul.mubr.bf16.gmra.mrb[0].mxu0 %v4925
        %v4961 = vpop.f32.mrb[0].mxu0
        %v4962 = vadd.f32 0.0, %v4961
        %v4963 = vpop.f32.mrb[0].mxu0
        %v4964 = vpop.f32.mrb[0].mxu0
        %v4965 = vadd.f32 0.0, %v4964
        %v4966 = vpop.f32.mrb[0].mxu0
        %4967 = vdwg.mxu0
        %4968 = vrot.lane.b32.xlu0 %v4296, 64
        %v4969 = vpop.permute.xlu0 %4968
        %v4972 = vsel %vm3424, %v4920, 0
        %4974 = vmatprep.subr.bf16.mxu0 0
        %4975 = vmatpush1.bf16.msra.mxu0 %v4969
        %4976 = vmatprep.subr.bf16.mxu0 0
        %4977 = vmatpush1.bf16.msra.mxu0 0
        %4978 = vmatprep.subr.bf16.mxu0 0
        %4979 = vmatpush1.bf16.msra.mxu0 0
        %4980 = vmatprep.subr.bf16.mxu0 0
        %4981 = vmatpush1.bf16.msra.mxu0 0
        %4982 = vmatprep.subr.bf16.mxu0 0
        %4983 = vmatpush1.bf16.msra.mxu0 0
        %4984 = vmatprep.subr.bf16.mxu0 0
        %4985 = vmatpush1.bf16.msra.mxu0 0
        %4986 = vmatprep.subr.bf16.mxu0 0
        %4987 = vmatpush1.bf16.msra.mxu0 0
        %4988 = vmatprep.subr.bf16.mxu0 0
        %4989 = vmatpush1.bf16.msra.mxu0 0
        %4990 = vmatprep.subr.bf16.mxu0 0
        %4991 = vmatpush1.bf16.msra.mxu0 0
        %4992 = vmatprep.subr.bf16.mxu0 0
        %4993 = vmatpush1.bf16.msra.mxu0 0
        %4994 = vmatprep.subr.bf16.mxu0 0
        %4995 = vmatpush1.bf16.msra.mxu0 0
        %4996 = vmatprep.subr.bf16.mxu0 0
        %4997 = vmatpush1.bf16.msra.mxu0 0
        %4998 = vmatprep.subr.bf16.mxu0 0
        %4999 = vmatpush1.bf16.msra.mxu0 0
        %5000 = vmatprep.subr.bf16.mxu0 0
        %5001 = vmatpush1.bf16.msra.mxu0 0
        %5002 = vmatprep.subr.bf16.mxu0 0
        %5003 = vmatpush1.bf16.msra.mxu0 0
        %5004 = vmatprep.subr.bf16.mxu0 0
        %5005 = vmatpush1.bf16.msra.mxu0 0
        %5006 = vmatprep.mubr.bf16.mxu0 0
        %5007 = vmatmul.mubr.bf16.gmra.mrb[0].mxu0 %v4972
        %v5008 = vpop.f32.mrb[0].mxu0
        %v5009 = vadd.f32 0.0, %v5008
        %v5010 = vpop.f32.mrb[0].mxu0
        %v5011 = vpop.f32.mrb[0].mxu0
        %v5012 = vadd.f32 0.0, %v5011
        %v5013 = vpop.f32.mrb[0].mxu0
        %5014 = vdwg.mxu0
        %5015 = vrot.lane.b32.xlu0 %v4291, 32
        %v5016 = vpop.permute.xlu0 %5015
        %5017 = vrot.lane.b32.xlu0 %v4293, 32
        %v5018 = vpop.permute.xlu0 %5017
        %v5020 = vsel %vm718, %v5016, 0
        %v5023 = vsel %vm718, %v5018, 0
        %5025 = vmatprep.subr.bf16.mxu0 0
        %5026 = vmatpush1.bf16.xpose.msra.mxu0 %v5023
        %5027 = vmatprep.subr.bf16.mxu0 0
        %5028 = vmatpush1.bf16.xpose.msra.mxu0 0
        %5029 = vmatprep.subr.bf16.mxu0 0
        %5030 = vmatpush1.bf16.xpose.msra.mxu0 0
        %5031 = vmatprep.subr.bf16.mxu0 0
        %5032 = vmatpush1.bf16.xpose.msra.mxu0 0
        %5033 = vmatprep.subr.bf16.mxu0 0
        %5034 = vmatpush1.bf16.xpose.msra.mxu0 0
        %5035 = vmatprep.subr.bf16.mxu0 0
        %5036 = vmatpush1.bf16.xpose.msra.mxu0 0
        %5037 = vmatprep.subr.bf16.mxu0 0
        %5038 = vmatpush1.bf16.xpose.msra.mxu0 0
        %5039 = vmatprep.subr.bf16.mxu0 0
        %5040 = vmatpush1.bf16.xpose.msra.mxu0 0
        %5041 = vmatprep.subr.bf16.mxu0 0
        %5042 = vmatpush1.bf16.xpose.msra.mxu0 0
        %5043 = vmatprep.subr.bf16.mxu0 0
        %5044 = vmatpush1.bf16.xpose.msra.mxu0 0
        %5045 = vmatprep.subr.bf16.mxu0 0
        %5046 = vmatpush1.bf16.xpose.msra.mxu0 0
        %5047 = vmatprep.subr.bf16.mxu0 0
        %5048 = vmatpush1.bf16.xpose.msra.mxu0 0
        %5049 = vmatprep.subr.bf16.mxu0 0
        %5050 = vmatpush1.bf16.xpose.msra.mxu0 0
        %5051 = vmatprep.subr.bf16.mxu0 0
        %5052 = vmatpush1.bf16.xpose.msra.mxu0 0
        %5053 = vmatprep.subr.bf16.mxu0 0
        %5054 = vmatpush1.bf16.xpose.msra.mxu0 0
        %5055 = vmatprep.subr.bf16.mxu0 0
        %5056 = vmatpush1.bf16.xpose.msra.mxu0 0
        %5057 = vmatprep.mubr.bf16.mxu0 0
        %5058 = vmatmul.mubr.bf16.gmra.mrb[0].mxu0 %v5020
        %v5059 = vpop.f32.mrb[0].mxu0
        %v5060 = vadd.f32 0.0, %v5059
        %v5061 = vpop.f32.mrb[0].mxu0
        %v5062 = vpop.f32.mrb[0].mxu0
        %v5063 = vadd.f32 0.0, %v5062
        %v5064 = vpop.f32.mrb[0].mxu0
        %5065 = vdwg.mxu0
        %5066 = vrot.lane.b32.xlu0 %v4292, 32
        %v5067 = vpop.permute.xlu0 %5066
        %5068 = vrot.lane.b32.xlu0 %v4294, 32
        %v5069 = vpop.permute.xlu0 %5068
        %v5071 = vsel %vm718, %v5067, 0
        %v5074 = vsel %vm718, %v5069, 0
        %5076 = vmatprep.subr.bf16.mxu0 0
        %5077 = vmatpush1.bf16.xpose.msra.mxu0 %v5074
        %5078 = vmatprep.subr.bf16.mxu0 0
        %5079 = vmatpush1.bf16.xpose.msra.mxu0 0
        %5080 = vmatprep.subr.bf16.mxu0 0
        %5081 = vmatpush1.bf16.xpose.msra.mxu0 0
        %5082 = vmatprep.subr.bf16.mxu0 0
        %5083 = vmatpush1.bf16.xpose.msra.mxu0 0
        %5084 = vmatprep.subr.bf16.mxu0 0
        %5085 = vmatpush1.bf16.xpose.msra.mxu0 0
        %5086 = vmatprep.subr.bf16.mxu0 0
        %5087 = vmatpush1.bf16.xpose.msra.mxu0 0
        %5088 = vmatprep.subr.bf16.mxu0 0
        %5089 = vmatpush1.bf16.xpose.msra.mxu0 0
        %5090 = vmatprep.subr.bf16.mxu0 0
        %5091 = vmatpush1.bf16.xpose.msra.mxu0 0
        %5092 = vmatprep.subr.bf16.mxu0 0
        %5093 = vmatpush1.bf16.xpose.msra.mxu0 0
        %5094 = vmatprep.subr.bf16.mxu0 0
        %5095 = vmatpush1.bf16.xpose.msra.mxu0 0
        %5096 = vmatprep.subr.bf16.mxu0 0
        %5097 = vmatpush1.bf16.xpose.msra.mxu0 0
        %5098 = vmatprep.subr.bf16.mxu0 0
        %5099 = vmatpush1.bf16.xpose.msra.mxu0 0
        %5100 = vmatprep.subr.bf16.mxu0 0
        %5101 = vmatpush1.bf16.xpose.msra.mxu0 0
        %5102 = vmatprep.subr.bf16.mxu0 0
        %5103 = vmatpush1.bf16.xpose.msra.mxu0 0
        %5104 = vmatprep.subr.bf16.mxu0 0
        %5105 = vmatpush1.bf16.xpose.msra.mxu0 0
        %5106 = vmatprep.subr.bf16.mxu0 0
        %5107 = vmatpush1.bf16.xpose.msra.mxu0 0
        %5108 = vmatprep.mubr.bf16.mxu0 0
        %5109 = vmatmul.mubr.bf16.gmra.mrb[0].mxu0 %v5071
        %v5110 = vpop.f32.mrb[0].mxu0
        %v5111 = vadd.f32 0.0, %v5110
        %v5112 = vpop.f32.mrb[0].mxu0
        %v5113 = vpop.f32.mrb[0].mxu0
        %v5114 = vadd.f32 0.0, %v5113
        %v5115 = vpop.f32.mrb[0].mxu0
        %5116 = vdwg.mxu0
        %v5117 = vsel %vm3424, %v5060, -inf
        %5118 = vmax.xlane.f32.xlu0 %v5117
        %v5119 = vpop.xlane.xlu0 %5118
        %v5120 = vsel %vm3424, %v5063, -inf
        %5121 = vmax.xlane.f32.xlu0 %v5120
        %v5122 = vpop.xlane.xlu0 %5121
        %v5123 = vsel %vm3424, %v5111, -inf
        %5124 = vmax.xlane.f32.xlu0 %v5123
        %v5125 = vpop.xlane.xlu0 %5124
        %v5126 = vsel %vm3424, %v5114, -inf
        %5127 = vmax.xlane.f32.xlu0 %v5126
        %v5128 = vpop.xlane.xlu0 %5127
        %v5129 = vsub.f32 %v5060, %v5119
        %v5130 = vsub.f32 %v5063, %v5122
        %v5131 = vsub.f32 %v5111, %v5125
        %v5132 = vsub.f32 %v5114, %v5128
        %v5133 = vmul.f32 %v5129, 1.442695
        %v5134 = vpow.pop %v5133
        %v5135 = vmul.f32 %v5130, 1.442695
        %v5136 = vpow.pop %v5135
        %v5137 = vmul.f32 %v5131, 1.442695
        %v5138 = vpow.pop %v5137
        %v5139 = vmul.f32 %v5132, 1.442695
        %v5140 = vpow.pop %v5139
        %v5141 = vsel %vm3424, %v5134, 0.0
        %5142 = vadd.xlane.f32.xlu0 %v5141
        %v5143 = vpop.xlane.xlu0 %5142
        %v5144 = vsel %vm3424, %v5136, 0.0
        %5145 = vadd.xlane.f32.xlu0 %v5144
        %v5146 = vpop.xlane.xlu0 %5145
        %v5147 = vsel %vm3424, %v5138, 0.0
        %5148 = vadd.xlane.f32.xlu0 %v5147
        %v5149 = vpop.xlane.xlu0 %5148
        %v5150 = vsel %vm3424, %v5140, 0.0
        %5151 = vadd.xlane.f32.xlu0 %v5150
        %v5152 = vpop.xlane.xlu0 %5151
        %v5153 = vrcp.pop %v5143
        %v5154 = vrcp.pop %v5146
        %v5155 = vrcp.pop %v5149
        %v5156 = vrcp.pop %v5152
        %v5157 = vmul.f32 %v5134, %v5153
        %v5158 = vmul.f32 %v5136, %v5154
        %v5159 = vmul.f32 %v5138, %v5155
        %v5160 = vmul.f32 %v5140, %v5156
        %v5161 = vpack.c.bf16 %v5158, %v5157
        %v5162 = vpack.c.bf16 %v5160, %v5159
        %5163 = vrot.lane.b32.xlu0 %v4295, 32
        %v5164 = vpop.permute.xlu0 %5163
        %v5167 = vsel %vm3424, %v5161, 0
        %5169 = vmatprep.subr.bf16.mxu0 0
        %5170 = vmatpush1.bf16.msra.mxu0 %v5164
        %5171 = vmatprep.subr.bf16.mxu0 0
        %5172 = vmatpush1.bf16.msra.mxu0 0
        %5173 = vmatprep.subr.bf16.mxu0 0
        %5174 = vmatpush1.bf16.msra.mxu0 0
        %5175 = vmatprep.subr.bf16.mxu0 0
        %5176 = vmatpush1.bf16.msra.mxu0 0
        %5177 = vmatprep.subr.bf16.mxu0 0
        %5178 = vmatpush1.bf16.msra.mxu0 0
        %5179 = vmatprep.subr.bf16.mxu0 0
        %5180 = vmatpush1.bf16.msra.mxu0 0
        %5181 = vmatprep.subr.bf16.mxu0 0
        %5182 = vmatpush1.bf16.msra.mxu0 0
        %5183 = vmatprep.subr.bf16.mxu0 0
        %5184 = vmatpush1.bf16.msra.mxu0 0
        %5185 = vmatprep.subr.bf16.mxu0 0
        %5186 = vmatpush1.bf16.msra.mxu0 0
        %5187 = vmatprep.subr.bf16.mxu0 0
        %5188 = vmatpush1.bf16.msra.mxu0 0
        %5189 = vmatprep.subr.bf16.mxu0 0
        %5190 = vmatpush1.bf16.msra.mxu0 0
        %5191 = vmatprep.subr.bf16.mxu0 0
        %5192 = vmatpush1.bf16.msra.mxu0 0
        %5193 = vmatprep.subr.bf16.mxu0 0
        %5194 = vmatpush1.bf16.msra.mxu0 0
        %5195 = vmatprep.subr.bf16.mxu0 0
        %5196 = vmatpush1.bf16.msra.mxu0 0
        %5197 = vmatprep.subr.bf16.mxu0 0
        %5198 = vmatpush1.bf16.msra.mxu0 0
        %5199 = vmatprep.subr.bf16.mxu0 0
        %5200 = vmatpush1.bf16.msra.mxu0 0
        %5201 = vmatprep.mubr.bf16.mxu0 0
        %5202 = vmatmul.mubr.bf16.gmra.mrb[0].mxu0 %v5167
        %v5203 = vpop.f32.mrb[0].mxu0
        %v5204 = vadd.f32 0.0, %v5203
        %v5205 = vpop.f32.mrb[0].mxu0
        %v5206 = vpop.f32.mrb[0].mxu0
        %v5207 = vadd.f32 0.0, %v5206
        %v5208 = vpop.f32.mrb[0].mxu0
        %5209 = vdwg.mxu0
        %5210 = vrot.lane.b32.xlu0 %v4296, 32
        %v5211 = vpop.permute.xlu0 %5210
        %v5214 = vsel %vm3424, %v5162, 0
        %5216 = vmatprep.subr.bf16.mxu0 0
        %5217 = vmatpush1.bf16.msra.mxu0 %v5211
        %5218 = vmatprep.subr.bf16.mxu0 0
        %5219 = vmatpush1.bf16.msra.mxu0 0
        %5220 = vmatprep.subr.bf16.mxu0 0
        %5221 = vmatpush1.bf16.msra.mxu0 0
        %5222 = vmatprep.subr.bf16.mxu0 0
        %5223 = vmatpush1.bf16.msra.mxu0 0
        %5224 = vmatprep.subr.bf16.mxu0 0
        %5225 = vmatpush1.bf16.msra.mxu0 0
        %5226 = vmatprep.subr.bf16.mxu0 0
        %5227 = vmatpush1.bf16.msra.mxu0 0
        %5228 = vmatprep.subr.bf16.mxu0 0
        %5229 = vmatpush1.bf16.msra.mxu0 0
        %5230 = vmatprep.subr.bf16.mxu0 0
        %5231 = vmatpush1.bf16.msra.mxu0 0
        %5232 = vmatprep.subr.bf16.mxu0 0
        %5233 = vmatpush1.bf16.msra.mxu0 0
        %5234 = vmatprep.subr.bf16.mxu0 0
        %5235 = vmatpush1.bf16.msra.mxu0 0
        %5236 = vmatprep.subr.bf16.mxu0 0
        %5237 = vmatpush1.bf16.msra.mxu0 0
        %5238 = vmatprep.subr.bf16.mxu0 0
        %5239 = vmatpush1.bf16.msra.mxu0 0
        %5240 = vmatprep.subr.bf16.mxu0 0
        %5241 = vmatpush1.bf16.msra.mxu0 0
        %5242 = vmatprep.subr.bf16.mxu0 0
        %5243 = vmatpush1.bf16.msra.mxu0 0
        %5244 = vmatprep.subr.bf16.mxu0 0
        %5245 = vmatpush1.bf16.msra.mxu0 0
        %5246 = vmatprep.subr.bf16.mxu0 0
        %5247 = vmatpush1.bf16.msra.mxu0 0
        %5248 = vmatprep.mubr.bf16.mxu0 0
        %5249 = vmatmul.mubr.bf16.gmra.mrb[0].mxu0 %v5214
        %v5250 = vpop.f32.mrb[0].mxu0
        %v5251 = vadd.f32 0.0, %v5250
        %v5252 = vpop.f32.mrb[0].mxu0
        %v5253 = vpop.f32.mrb[0].mxu0
        %v5254 = vadd.f32 0.0, %v5253
        %v5255 = vpop.f32.mrb[0].mxu0
        %5256 = vdwg.mxu0
        %5261 = vrot.lane.b32.xlu0 %v3753, 32
        %v5262 = vpop.permute.xlu0 %5261
        %5263 = vrot.lane.b32.xlu0 %v3756, 32
        %v5264 = vpop.permute.xlu0 %5263
        %5265 = vrot.lane.b32.xlu0 %v3801, 32
        %v5266 = vpop.permute.xlu0 %5265
        %5267 = vrot.lane.b32.xlu0 %v3804, 32
        %v5268 = vpop.permute.xlu0 %5267
        %5277 = vrot.lane.b32.xlu0 %v3996, 64
        %v5278 = vpop.permute.xlu0 %5277
        %5279 = vrot.lane.b32.xlu0 %v3999, 64
        %v5280 = vpop.permute.xlu0 %5279
        %5281 = vrot.lane.b32.xlu0 %v4043, 64
        %v5282 = vpop.permute.xlu0 %5281
        %5283 = vrot.lane.b32.xlu0 %v4046, 64
        %v5284 = vpop.permute.xlu0 %5283
        %5293 = vrot.lane.b32.xlu0 %v4238, 96
        %v5294 = vpop.permute.xlu0 %5293
        %5295 = vrot.lane.b32.xlu0 %v4241, 96
        %v5296 = vpop.permute.xlu0 %5295
        %5297 = vrot.lane.b32.xlu0 %v4285, 96
        %v5298 = vpop.permute.xlu0 %5297
        %5299 = vrot.lane.b32.xlu0 %v4288, 96
        %v5300 = vpop.permute.xlu0 %5299
        %5309 = vrot.lane.b32.xlu0 %v4719, 32
        %v5310 = vpop.permute.xlu0 %5309
        %5311 = vrot.lane.b32.xlu0 %v4722, 32
        %v5312 = vpop.permute.xlu0 %5311
        %5313 = vrot.lane.b32.xlu0 %v4767, 32
        %v5314 = vpop.permute.xlu0 %5313
        %5315 = vrot.lane.b32.xlu0 %v4770, 32
        %v5316 = vpop.permute.xlu0 %5315
        %5325 = vrot.lane.b32.xlu0 %v4962, 64
        %v5326 = vpop.permute.xlu0 %5325
        %5327 = vrot.lane.b32.xlu0 %v4965, 64
        %v5328 = vpop.permute.xlu0 %5327
        %5329 = vrot.lane.b32.xlu0 %v5009, 64
        %v5330 = vpop.permute.xlu0 %5329
        %5331 = vrot.lane.b32.xlu0 %v5012, 64
        %v5332 = vpop.permute.xlu0 %5331
        %5341 = vrot.lane.b32.xlu0 %v5204, 96
        %v5342 = vpop.permute.xlu0 %5341
        %5343 = vrot.lane.b32.xlu0 %v5207, 96
        %v5344 = vpop.permute.xlu0 %5343
        %5345 = vrot.lane.b32.xlu0 %v5251, 96
        %v5346 = vpop.permute.xlu0 %5345
        %5347 = vrot.lane.b32.xlu0 %v5254, 96
        %v5348 = vpop.permute.xlu0 %5347
        %v5353 = vsel %vm718, %v3509, %v5262
        %v5354 = vsel %vm718, %v3512, %v5264
        %v5355 = vsel %vm718, %v3553, %v5266
        %v5356 = vsel %vm718, %v3556, %v5268
        %vm5357 = vcmask 523264
        %v5358 = vsel %vm5357, %v5353, %v5278
        %v5359 = vsel %vm5357, %v5354, %v5280
        %v5360 = vsel %vm5357, %v5355, %v5282
        %v5361 = vsel %vm5357, %v5356, %v5284
        %vm5362 = vcmask 785408
        %v5363 = vsel %vm5362, %v5358, %v5294
        %v5364 = vsel %vm5362, %v5359, %v5296
        %v5365 = vsel %vm5362, %v5360, %v5298
        %v5366 = vsel %vm5362, %v5361, %v5300
        %v5367 = vsel %vm718, %v4475, %v5310
        %v5368 = vsel %vm718, %v4478, %v5312
        %v5369 = vsel %vm718, %v4519, %v5314
        %v5370 = vsel %vm718, %v4522, %v5316
        %v5371 = vsel %vm5357, %v5367, %v5326
        %v5372 = vsel %vm5357, %v5368, %v5328
        %v5373 = vsel %vm5357, %v5369, %v5330
        %v5374 = vsel %vm5357, %v5370, %v5332
        %v5375 = vsel %vm5362, %v5371, %v5342
        %v5376 = vsel %vm5362, %v5372, %v5344
        %v5377 = vsel %vm5362, %v5373, %v5346
        %v5378 = vsel %vm5362, %v5374, %v5348
        %v5379 = vpack.c.bf16 %v5364, %v5363
        %v5380 = vpack.c.bf16 %v5376, %v5375
        %v5381 = vpack.c.bf16 %v5366, %v5365
        %v5382 = vpack.c.bf16 %v5378, %v5377
        %v5383 = vld [vmem:[#allocation8] sm:$0xff]
        %v5384 = vld [vmem:[#allocation8 + $0x8] sm:$0xff]
        %v5385 = vld [vmem:[#allocation8 + $0x10] sm:$0xff]
        %v5386 = vld [vmem:[#allocation8 + $0x18] sm:$0xff]
        %v5387 = vld [vmem:[#allocation8 + $0x20] sm:$0xff]
        %v5388 = vld [vmem:[#allocation8 + $0x28] sm:$0xff]
        %v5389 = vld [vmem:[#allocation8 + $0x30] sm:$0xff]
        %v5390 = vld [vmem:[#allocation8 + $0x38] sm:$0xff]
        %v5391 = vld [vmem:[#allocation8 + $0x40] sm:$0xff]
        %v5392 = vld [vmem:[#allocation8 + $0x48] sm:$0xff]
        %v5393 = vld [vmem:[#allocation8 + $0x50] sm:$0xff]
        %v5394 = vld [vmem:[#allocation8 + $0x58] sm:$0xff]
        %v5395 = vld [vmem:[#allocation8 + $0x60] sm:$0xff]
        %v5396 = vld [vmem:[#allocation8 + $0x68] sm:$0xff]
        %v5397 = vld [vmem:[#allocation8 + $0x70] sm:$0xff]
        %v5398 = vld [vmem:[#allocation8 + $0x78] sm:$0xff]
        %v5399 = vld [vmem:[#allocation8 + $0x80] sm:$0xff]
        %v5400 = vld [vmem:[#allocation8 + $0x88] sm:$0xff]
        %v5401 = vld [vmem:[#allocation8 + $0x90] sm:$0xff]
        %v5402 = vld [vmem:[#allocation8 + $0x98] sm:$0xff]
        %v5403 = vld [vmem:[#allocation8 + $0xa0] sm:$0xff]
        %v5404 = vld [vmem:[#allocation8 + $0xa8] sm:$0xff]
        %v5405 = vld [vmem:[#allocation8 + $0xb0] sm:$0xff]
        %v5406 = vld [vmem:[#allocation8 + $0xb8] sm:$0xff]
        %v5407 = vld [vmem:[#allocation8 + $0xc0] sm:$0xff]
        %v5408 = vld [vmem:[#allocation8 + $0xc8] sm:$0xff]
        %v5409 = vld [vmem:[#allocation8 + $0xd0] sm:$0xff]
        %v5410 = vld [vmem:[#allocation8 + $0xd8] sm:$0xff]
        %v5411 = vld [vmem:[#allocation8 + $0xe0] sm:$0xff]
        %v5412 = vld [vmem:[#allocation8 + $0xe8] sm:$0xff]
        %v5413 = vld [vmem:[#allocation8 + $0xf0] sm:$0xff]
        %v5414 = vld [vmem:[#allocation8 + $0xf8] sm:$0xff]
        %v5415 = vld [vmem:[%s9] sm:$0x3]
        %v5417 = vlaneseq
        %v5418 = vshrl.u32 %v5417, 7
        %v5419 = vsub.s32 0, %v5418
        %v5420 = vrot.slane %v5415, %v5419
        %v5421 = vlaneseq
        %v5422 = vshrl.u32 %v5421, 7
        %v5423 = vsub.s32 1, %v5422
        %v5424 = vrot.slane %v5415, %v5423
        %v5459 = vunpack.c.l.b16 %v5383
        %v5460 = vunpack.c.h.b16 %v5383
        %v5461 = vunpack.c.l.b16 %v5384
        %v5462 = vunpack.c.h.b16 %v5384
        %v5463 = vunpack.c.l.b16 %v5385
        %v5464 = vunpack.c.h.b16 %v5385
        %v5465 = vunpack.c.l.b16 %v5386
        %v5466 = vunpack.c.h.b16 %v5386
        %v5467 = vunpack.c.l.b16 %v5387
        %v5468 = vunpack.c.h.b16 %v5387
        %v5469 = vunpack.c.l.b16 %v5388
        %v5470 = vunpack.c.h.b16 %v5388
        %v5471 = vunpack.c.l.b16 %v5389
        %v5472 = vunpack.c.h.b16 %v5389
        %v5473 = vunpack.c.l.b16 %v5390
        %v5474 = vunpack.c.h.b16 %v5390
        %v5475 = vunpack.c.l.b16 %v5391
        %v5476 = vunpack.c.h.b16 %v5391
        %v5477 = vunpack.c.l.b16 %v5392
        %v5478 = vunpack.c.h.b16 %v5392
        %v5479 = vunpack.c.l.b16 %v5393
        %v5480 = vunpack.c.h.b16 %v5393
        %v5481 = vunpack.c.l.b16 %v5394
        %v5482 = vunpack.c.h.b16 %v5394
        %v5483 = vunpack.c.l.b16 %v5395
        %v5484 = vunpack.c.h.b16 %v5395
        %v5485 = vunpack.c.l.b16 %v5396
        %v5486 = vunpack.c.h.b16 %v5396
        %v5487 = vunpack.c.l.b16 %v5397
        %v5488 = vunpack.c.h.b16 %v5397
        %v5489 = vunpack.c.l.b16 %v5398
        %v5490 = vunpack.c.h.b16 %v5398
        %v5491 = vunpack.c.l.b16 %v5399
        %v5492 = vunpack.c.h.b16 %v5399
        %v5493 = vunpack.c.l.b16 %v5400
        %v5494 = vunpack.c.h.b16 %v5400
        %v5495 = vunpack.c.l.b16 %v5401
        %v5496 = vunpack.c.h.b16 %v5401
        %v5497 = vunpack.c.l.b16 %v5402
        %v5498 = vunpack.c.h.b16 %v5402
        %v5499 = vunpack.c.l.b16 %v5403
        %v5500 = vunpack.c.h.b16 %v5403
        %v5501 = vunpack.c.l.b16 %v5404
        %v5502 = vunpack.c.h.b16 %v5404
        %v5503 = vunpack.c.l.b16 %v5405
        %v5504 = vunpack.c.h.b16 %v5405
        %v5505 = vunpack.c.l.b16 %v5406
        %v5506 = vunpack.c.h.b16 %v5406
        %v5507 = vunpack.c.l.b16 %v5407
        %v5508 = vunpack.c.h.b16 %v5407
        %v5509 = vunpack.c.l.b16 %v5408
        %v5510 = vunpack.c.h.b16 %v5408
        %v5511 = vunpack.c.l.b16 %v5409
        %v5512 = vunpack.c.h.b16 %v5409
        %v5513 = vunpack.c.l.b16 %v5410
        %v5514 = vunpack.c.h.b16 %v5410
        %v5515 = vunpack.c.l.b16 %v5411
        %v5516 = vunpack.c.h.b16 %v5411
        %v5517 = vunpack.c.l.b16 %v5412
        %v5518 = vunpack.c.h.b16 %v5412
        %v5519 = vunpack.c.l.b16 %v5413
        %v5520 = vunpack.c.h.b16 %v5413
        %v5521 = vunpack.c.l.b16 %v5414
        %v5522 = vunpack.c.h.b16 %v5414
        %v5523 = vpack.c.b16 %v5461, %v5459
        %v5524 = vpack.c.b16 %v5462, %v5460
        %v5525 = vpack.c.b16 %v5465, %v5463
        %v5526 = vpack.c.b16 %v5466, %v5464
        %v5527 = vpack.c.b16 %v5469, %v5467
        %v5528 = vpack.c.b16 %v5470, %v5468
        %v5529 = vpack.c.b16 %v5473, %v5471
        %v5530 = vpack.c.b16 %v5474, %v5472
        %v5531 = vpack.c.b16 %v5477, %v5475
        %v5532 = vpack.c.b16 %v5478, %v5476
        %v5533 = vpack.c.b16 %v5481, %v5479
        %v5534 = vpack.c.b16 %v5482, %v5480
        %v5535 = vpack.c.b16 %v5485, %v5483
        %v5536 = vpack.c.b16 %v5486, %v5484
        %v5537 = vpack.c.b16 %v5489, %v5487
        %v5538 = vpack.c.b16 %v5490, %v5488
        %v5539 = vpack.c.b16 %v5493, %v5491
        %v5540 = vpack.c.b16 %v5494, %v5492
        %v5541 = vpack.c.b16 %v5497, %v5495
        %v5542 = vpack.c.b16 %v5498, %v5496
        %v5543 = vpack.c.b16 %v5501, %v5499
        %v5544 = vpack.c.b16 %v5502, %v5500
        %v5545 = vpack.c.b16 %v5505, %v5503
        %v5546 = vpack.c.b16 %v5506, %v5504
        %v5547 = vpack.c.b16 %v5509, %v5507
        %v5548 = vpack.c.b16 %v5510, %v5508
        %v5549 = vpack.c.b16 %v5513, %v5511
        %v5550 = vpack.c.b16 %v5514, %v5512
        %v5551 = vpack.c.b16 %v5517, %v5515
        %v5552 = vpack.c.b16 %v5518, %v5516
        %v5553 = vpack.c.b16 %v5521, %v5519
        %v5554 = vpack.c.b16 %v5522, %v5520
        %5587 = vmatprep.subr.bf16.mxu0 %v5524
        %5588 = vmatpush1.bf16.msra.mxu0 %v5523
        %5589 = vmatprep.subr.bf16.mxu0 %v5526
        %5590 = vmatpush1.bf16.msra.mxu0 %v5525
        %5591 = vmatprep.subr.bf16.mxu0 %v5528
        %5592 = vmatpush1.bf16.msra.mxu0 %v5527
        %5593 = vmatprep.subr.bf16.mxu0 %v5530
        %5594 = vmatpush1.bf16.msra.mxu0 %v5529
        %5595 = vmatprep.subr.bf16.mxu0 %v5532
        %5596 = vmatpush1.bf16.msra.mxu0 %v5531
        %5597 = vmatprep.subr.bf16.mxu0 %v5534
        %5598 = vmatpush1.bf16.msra.mxu0 %v5533
        %5599 = vmatprep.subr.bf16.mxu0 %v5536
        %5600 = vmatpush1.bf16.msra.mxu0 %v5535
        %5601 = vmatprep.subr.bf16.mxu0 %v5538
        %5602 = vmatpush1.bf16.msra.mxu0 %v5537
        %5603 = vmatprep.subr.bf16.mxu0 %v5540
        %5604 = vmatpush1.bf16.msra.mxu0 %v5539
        %5605 = vmatprep.subr.bf16.mxu0 %v5542
        %5606 = vmatpush1.bf16.msra.mxu0 %v5541
        %5607 = vmatprep.subr.bf16.mxu0 %v5544
        %5608 = vmatpush1.bf16.msra.mxu0 %v5543
        %5609 = vmatprep.subr.bf16.mxu0 %v5546
        %5610 = vmatpush1.bf16.msra.mxu0 %v5545
        %5611 = vmatprep.subr.bf16.mxu0 %v5548
        %5612 = vmatpush1.bf16.msra.mxu0 %v5547
        %5613 = vmatprep.subr.bf16.mxu0 %v5550
        %5614 = vmatpush1.bf16.msra.mxu0 %v5549
        %5615 = vmatprep.subr.bf16.mxu0 %v5552
        %5616 = vmatpush1.bf16.msra.mxu0 %v5551
        %5617 = vmatprep.subr.bf16.mxu0 %v5554
        %5618 = vmatpush1.bf16.msra.mxu0 %v5553
        %5619 = vmatprep.mubr.bf16.mxu0 %v5380
        %5620 = vmatmul.mubr.bf16.gmra.mrb[0].mxu0 %v5379
        %v5621 = vpop.f32.mrb[0].mxu0
        %v5622 = vadd.f32 %v5420, %v5621
        %v5623 = vpop.f32.mrb[0].mxu0
        %v5624 = vadd.f32 %v5424, %v5623
        %v5625 = vpop.f32.mrb[0].mxu0
        %v5626 = vadd.f32 %v5420, %v5625
        %v5627 = vpop.f32.mrb[0].mxu0
        %v5628 = vadd.f32 %v5424, %v5627
        %5629 = vmatprep.mubr.bf16.mxu0 %v5382
        %5630 = vmatmul.mubr.bf16.gmra.mrb[0].mxu0 %v5381
        %v5631 = vpop.f32.mrb[0].mxu0
        %v5632 = vadd.f32 %v5420, %v5631
        %v5633 = vpop.f32.mrb[0].mxu0
        %v5634 = vadd.f32 %v5424, %v5633
        %v5635 = vpop.f32.mrb[0].mxu0
        %v5636 = vadd.f32 %v5420, %v5635
        %v5637 = vpop.f32.mrb[0].mxu0
        %v5638 = vadd.f32 %v5424, %v5637
        %5639 = vdwg.mxu0
        %v5640 = vadd.f32 %v2535, %v5622
        %v5641 = vadd.f32 %v2537, %v5624
        %v5642 = vadd.f32 %v2539, %v5626
        %v5643 = vadd.f32 %v2541, %v5628
        %v5644 = vadd.f32 %v2545, %v5632
        %v5645 = vadd.f32 %v2547, %v5634
        %v5646 = vadd.f32 %v2549, %v5636
        %v5647 = vadd.f32 %v2551, %v5638
        %v5648 = vld [vmem:[%s10] sm:$0x3]
        %v5649 = vld [vmem:[%s11] sm:$0x3]
        %v5650 = vadd.f32 %v5640, %v5641
        %5651 = vadd.xlane.f32.xlu0 %v5650
        %v5652 = vpop.xlane.xlu0 %5651
        %v5653 = vadd.f32 %v5642, %v5643
        %5654 = vadd.xlane.f32.xlu0 %v5653
        %v5655 = vpop.xlane.xlu0 %5654
        %v5656 = vadd.f32 %v5644, %v5645
        %5657 = vadd.xlane.f32.xlu0 %v5656
        %v5658 = vpop.xlane.xlu0 %5657
        %v5659 = vadd.f32 %v5646, %v5647
        %5660 = vadd.xlane.f32.xlu0 %v5659
        %v5661 = vpop.xlane.xlu0 %5660
        %v5662 = vrcp.pop 256.0
        %v5663 = vmul.f32 %v5652, %v5662
        %v5664 = vmul.f32 %v5655, %v5662
        %v5665 = vmul.f32 %v5658, %v5662
        %v5666 = vmul.f32 %v5661, %v5662
        %v5667 = vsub.f32 %v5640, %v5663
        %v5668 = vsub.f32 %v5641, %v5663
        %v5669 = vsub.f32 %v5642, %v5664
        %v5670 = vsub.f32 %v5643, %v5664
        %v5671 = vsub.f32 %v5644, %v5665
        %v5672 = vsub.f32 %v5645, %v5665
        %v5673 = vsub.f32 %v5646, %v5666
        %v5674 = vsub.f32 %v5647, %v5666
        %v5675 = vmul.f32 %v5667, %v5667
        %v5676 = vmul.f32 %v5668, %v5668
        %v5677 = vmul.f32 %v5669, %v5669
        %v5678 = vmul.f32 %v5670, %v5670
        %v5679 = vmul.f32 %v5671, %v5671
        %v5680 = vmul.f32 %v5672, %v5672
        %v5681 = vmul.f32 %v5673, %v5673
        %v5682 = vmul.f32 %v5674, %v5674
        %v5683 = vadd.f32 %v5675, %v5676
        %5684 = vadd.xlane.f32.xlu0 %v5683
        %v5685 = vpop.xlane.xlu0 %5684
        %v5686 = vadd.f32 %v5677, %v5678
        %5687 = vadd.xlane.f32.xlu0 %v5686
        %v5688 = vpop.xlane.xlu0 %5687
        %v5689 = vadd.f32 %v5679, %v5680
        %5690 = vadd.xlane.f32.xlu0 %v5689
        %v5691 = vpop.xlane.xlu0 %5690
        %v5692 = vadd.f32 %v5681, %v5682
        %5693 = vadd.xlane.f32.xlu0 %v5692
        %v5694 = vpop.xlane.xlu0 %5693
        %v5695 = vmul.f32 %v5685, %v5662
        %v5696 = vmul.f32 %v5688, %v5662
        %v5697 = vmul.f32 %v5691, %v5662
        %v5698 = vmul.f32 %v5694, %v5662
        %v5699 = vadd.f32 %v5695, 1e-05
        %v5700 = vadd.f32 %v5696, 1e-05
        %v5701 = vadd.f32 %v5697, 1e-05
        %v5702 = vadd.f32 %v5698, 1e-05
        %v5703 = vrsqrt.pop %v5699
        %v5704 = vrsqrt.pop %v5700
        %v5705 = vrsqrt.pop %v5701
        %v5706 = vrsqrt.pop %v5702
        %v5707 = vmul.f32 %v5667, %v5703
        %v5708 = vmul.f32 %v5668, %v5703
        %v5709 = vmul.f32 %v5669, %v5704
        %v5710 = vmul.f32 %v5670, %v5704
        %v5711 = vmul.f32 %v5671, %v5705
        %v5712 = vmul.f32 %v5672, %v5705
        %v5713 = vmul.f32 %v5673, %v5706
        %v5714 = vmul.f32 %v5674, %v5706
        %v5716 = vlaneseq
        %v5717 = vshrl.u32 %v5716, 7
        %v5718 = vsub.s32 0, %v5717
        %v5719 = vrot.slane %v5648, %v5718
        %v5720 = vlaneseq
        %v5721 = vshrl.u32 %v5720, 7
        %v5722 = vsub.s32 1, %v5721
        %v5723 = vrot.slane %v5648, %v5722
        %v5726 = vmul.f32 %v5707, %v5719
        %v5727 = vmul.f32 %v5708, %v5723
        %v5728 = vmul.f32 %v5709, %v5719
        %v5729 = vmul.f32 %v5710, %v5723
        %v5730 = vmul.f32 %v5711, %v5719
        %v5731 = vmul.f32 %v5712, %v5723
        %v5732 = vmul.f32 %v5713, %v5719
        %v5733 = vmul.f32 %v5714, %v5723
        %v5735 = vlaneseq
        %v5736 = vshrl.u32 %v5735, 7
        %v5737 = vsub.s32 0, %v5736
        %v5738 = vrot.slane %v5649, %v5737
        %v5739 = vlaneseq
        %v5740 = vshrl.u32 %v5739, 7
        %v5741 = vsub.s32 1, %v5740
        %v5742 = vrot.slane %v5649, %v5741
        %v5745 = vadd.f32 %v5726, %v5738
        %v5746 = vadd.f32 %v5727, %v5742
        %v5747 = vadd.f32 %v5728, %v5738
        %v5748 = vadd.f32 %v5729, %v5742
        %v5749 = vadd.f32 %v5730, %v5738
        %v5750 = vadd.f32 %v5731, %v5742
        %v5751 = vadd.f32 %v5732, %v5738
        %v5752 = vadd.f32 %v5733, %v5742
        %v5753 = vpack.c.bf16 %v5747, %v5745
        %v5754 = vpack.c.bf16 %v5748, %v5746
        %v5755 = vpack.c.bf16 %v5751, %v5749
        %v5756 = vpack.c.bf16 %v5752, %v5750
        %v5757 = vld [vmem:[#allocation10] sm:$0xf]
        %v5758 = vld [vmem:[#allocation10 + $0x4] sm:$0xf]
        %v5759 = vld [vmem:[#allocation10 + $0x8] sm:$0xf]
        %v5760 = vld [vmem:[#allocation10 + $0xc] sm:$0xf]
        %v5761 = vld [vmem:[#allocation10 + $0x10] sm:$0xf]
        %v5762 = vld [vmem:[#allocation10 + $0x14] sm:$0xf]
        %v5763 = vld [vmem:[#allocation10 + $0x18] sm:$0xf]
        %v5764 = vld [vmem:[#allocation10 + $0x1c] sm:$0xf]
        %v5765 = vld [vmem:[#allocation10 + $0x20] sm:$0xf]
        %v5766 = vld [vmem:[#allocation10 + $0x24] sm:$0xf]
        %v5767 = vld [vmem:[#allocation10 + $0x28] sm:$0xf]
        %v5768 = vld [vmem:[#allocation10 + $0x2c] sm:$0xf]
        %v5769 = vld [vmem:[#allocation10 + $0x30] sm:$0xf]
        %v5770 = vld [vmem:[#allocation10 + $0x34] sm:$0xf]
        %v5771 = vld [vmem:[#allocation10 + $0x38] sm:$0xf]
        %v5772 = vld [vmem:[#allocation10 + $0x3c] sm:$0xf]
        %v5773 = vld [vmem:[#allocation10 + $0x40] sm:$0xf]
        %v5774 = vld [vmem:[#allocation10 + $0x44] sm:$0xf]
        %v5775 = vld [vmem:[#allocation10 + $0x48] sm:$0xf]
        %v5776 = vld [vmem:[#allocation10 + $0x4c] sm:$0xf]
        %v5777 = vld [vmem:[#allocation10 + $0x50] sm:$0xf]
        %v5778 = vld [vmem:[#allocation10 + $0x54] sm:$0xf]
        %v5779 = vld [vmem:[#allocation10 + $0x58] sm:$0xf]
        %v5780 = vld [vmem:[#allocation10 + $0x5c] sm:$0xf]
        %v5781 = vld [vmem:[#allocation10 + $0x60] sm:$0xf]
        %v5782 = vld [vmem:[#allocation10 + $0x64] sm:$0xf]
        %v5783 = vld [vmem:[#allocation10 + $0x68] sm:$0xf]
        %v5784 = vld [vmem:[#allocation10 + $0x6c] sm:$0xf]
        %v5785 = vld [vmem:[#allocation10 + $0x70] sm:$0xf]
        %v5786 = vld [vmem:[#allocation10 + $0x74] sm:$0xf]
        %v5787 = vld [vmem:[#allocation10 + $0x78] sm:$0xf]
        %v5788 = vld [vmem:[#allocation10 + $0x7c] sm:$0xf]
        %v5789 = vld [vmem:[%s13] sm:$0x1]
        %v5791 = vlaneseq
        %v5792 = vshrl.u32 %v5791, 7
        %v5793 = vsub.s32 0, %v5792
        %v5794 = vrot.slane %v5789, %v5793
        %v5828 = vunpack.c.l.b16 %v5757
        %v5829 = vunpack.c.l.b16 %v5758
        %v5830 = vunpack.c.l.b16 %v5759
        %v5831 = vunpack.c.l.b16 %v5760
        %v5832 = vunpack.c.l.b16 %v5761
        %v5833 = vunpack.c.l.b16 %v5762
        %v5834 = vunpack.c.l.b16 %v5763
        %v5835 = vunpack.c.l.b16 %v5764
        %v5836 = vunpack.c.l.b16 %v5765
        %v5837 = vunpack.c.l.b16 %v5766
        %v5838 = vunpack.c.l.b16 %v5767
        %v5839 = vunpack.c.l.b16 %v5768
        %v5840 = vunpack.c.l.b16 %v5769
        %v5841 = vunpack.c.l.b16 %v5770
        %v5842 = vunpack.c.l.b16 %v5771
        %v5843 = vunpack.c.l.b16 %v5772
        %v5844 = vunpack.c.l.b16 %v5773
        %v5845 = vunpack.c.l.b16 %v5774
        %v5846 = vunpack.c.l.b16 %v5775
        %v5847 = vunpack.c.l.b16 %v5776
        %v5848 = vunpack.c.l.b16 %v5777
        %v5849 = vunpack.c.l.b16 %v5778
        %v5850 = vunpack.c.l.b16 %v5779
        %v5851 = vunpack.c.l.b16 %v5780
        %v5852 = vunpack.c.l.b16 %v5781
        %v5853 = vunpack.c.l.b16 %v5782
        %v5854 = vunpack.c.l.b16 %v5783
        %v5855 = vunpack.c.l.b16 %v5784
        %v5856 = vunpack.c.l.b16 %v5785
        %v5857 = vunpack.c.l.b16 %v5786
        %v5858 = vunpack.c.l.b16 %v5787
        %v5859 = vunpack.c.l.b16 %v5788
        %v5860 = vpack.c.b16 %v5829, %v5828
        %v5861 = vpack.c.b16 %v5831, %v5830
        %v5862 = vpack.c.b16 %v5833, %v5832
        %v5863 = vpack.c.b16 %v5835, %v5834
        %v5864 = vpack.c.b16 %v5837, %v5836
        %v5865 = vpack.c.b16 %v5839, %v5838
        %v5866 = vpack.c.b16 %v5841, %v5840
        %v5867 = vpack.c.b16 %v5843, %v5842
        %v5868 = vpack.c.b16 %v5845, %v5844
        %v5869 = vpack.c.b16 %v5847, %v5846
        %v5870 = vpack.c.b16 %v5849, %v5848
        %v5871 = vpack.c.b16 %v5851, %v5850
        %v5872 = vpack.c.b16 %v5853, %v5852
        %v5873 = vpack.c.b16 %v5855, %v5854
        %v5874 = vpack.c.b16 %v5857, %v5856
        %v5875 = vpack.c.b16 %v5859, %v5858
        %5892 = vmatprep.subr.bf16.mxu0 0
        %5893 = vmatpush1.bf16.msra.mxu0 %v5860
        %5894 = vmatprep.subr.bf16.mxu0 0
        %5895 = vmatpush1.bf16.msra.mxu0 %v5861
        %5896 = vmatprep.subr.bf16.mxu0 0
        %5897 = vmatpush1.bf16.msra.mxu0 %v5862
        %5898 = vmatprep.subr.bf16.mxu0 0
        %5899 = vmatpush1.bf16.msra.mxu0 %v5863
        %5900 = vmatprep.subr.bf16.mxu0 0
        %5901 = vmatpush1.bf16.msra.mxu0 %v5864
        %5902 = vmatprep.subr.bf16.mxu0 0
        %5903 = vmatpush1.bf16.msra.mxu0 %v5865
        %5904 = vmatprep.subr.bf16.mxu0 0
        %5905 = vmatpush1.bf16.msra.mxu0 %v5866
        %5906 = vmatprep.subr.bf16.mxu0 0
        %5907 = vmatpush1.bf16.msra.mxu0 %v5867
        %5908 = vmatprep.subr.bf16.mxu0 0
        %5909 = vmatpush1.bf16.msra.mxu0 %v5868
        %5910 = vmatprep.subr.bf16.mxu0 0
        %5911 = vmatpush1.bf16.msra.mxu0 %v5869
        %5912 = vmatprep.subr.bf16.mxu0 0
        %5913 = vmatpush1.bf16.msra.mxu0 %v5870
        %5914 = vmatprep.subr.bf16.mxu0 0
        %5915 = vmatpush1.bf16.msra.mxu0 %v5871
        %5916 = vmatprep.subr.bf16.mxu0 0
        %5917 = vmatpush1.bf16.msra.mxu0 %v5872
        %5918 = vmatprep.subr.bf16.mxu0 0
        %5919 = vmatpush1.bf16.msra.mxu0 %v5873
        %5920 = vmatprep.subr.bf16.mxu0 0
        %5921 = vmatpush1.bf16.msra.mxu0 %v5874
        %5922 = vmatprep.subr.bf16.mxu0 0
        %5923 = vmatpush1.bf16.msra.mxu0 %v5875
        %5924 = vmatprep.mubr.bf16.mxu0 %v5754
        %5925 = vmatmul.mubr.bf16.gmra.mrb[0].mxu0 %v5753
        %v5926 = vpop.f32.mrb[0].mxu0
        %v5927 = vadd.f32 %v5794, %v5926
        %v5928 = vpop.f32.mrb[0].mxu0
        %v5929 = vpop.f32.mrb[0].mxu0
        %v5930 = vadd.f32 %v5794, %v5929
        %v5931 = vpop.f32.mrb[0].mxu0
        %5932 = vmatprep.mubr.bf16.mxu0 %v5756
        %5933 = vmatmul.mubr.bf16.gmra.mrb[0].mxu0 %v5755
        %v5934 = vpop.f32.mrb[0].mxu0
        %v5935 = vadd.f32 %v5794, %v5934
        %v5936 = vpop.f32.mrb[0].mxu0
        %v5937 = vpop.f32.mrb[0].mxu0
        %v5938 = vadd.f32 %v5794, %v5937
        %v5939 = vpop.f32.mrb[0].mxu0
        %5940 = vdwg.mxu0
        %v5941 = vmax.f32 %v5927, 0.0
        %v5942 = vmax.f32 %v5930, 0.0
        %v5943 = vmax.f32 %v5935, 0.0
        %v5944 = vmax.f32 %v5938, 0.0
        %v5945 = vpack.c.bf16 %v5942, %v5941
        %v5946 = vpack.c.bf16 %v5944, %v5943
        %v5947 = vld [vmem:[#allocation11] sm:$0xff]
        %v5948 = vld [vmem:[#allocation11 + $0x8] sm:$0xff]
        %v5949 = vld [vmem:[#allocation11 + $0x10] sm:$0xff]
        %v5950 = vld [vmem:[#allocation11 + $0x18] sm:$0xff]
        %v5951 = vld [vmem:[#allocation11 + $0x20] sm:$0xff]
        %v5952 = vld [vmem:[#allocation11 + $0x28] sm:$0xff]
        %v5953 = vld [vmem:[#allocation11 + $0x30] sm:$0xff]
        %v5954 = vld [vmem:[#allocation11 + $0x38] sm:$0xff]
        %v5955 = vld [vmem:[#allocation11 + $0x40] sm:$0xff]
        %v5956 = vld [vmem:[#allocation11 + $0x48] sm:$0xff]
        %v5957 = vld [vmem:[#allocation11 + $0x50] sm:$0xff]
        %v5958 = vld [vmem:[#allocation11 + $0x58] sm:$0xff]
        %v5959 = vld [vmem:[#allocation11 + $0x60] sm:$0xff]
        %v5960 = vld [vmem:[#allocation11 + $0x68] sm:$0xff]
        %v5961 = vld [vmem:[#allocation11 + $0x70] sm:$0xff]
        %v5962 = vld [vmem:[#allocation11 + $0x78] sm:$0xff]
        %v5963 = vld [vmem:[%s15] sm:$0x3]
        %v5965 = vlaneseq
        %v5966 = vshrl.u32 %v5965, 7
        %v5967 = vsub.s32 0, %v5966
        %v5968 = vrot.slane %v5963, %v5967
        %v5969 = vlaneseq
        %v5970 = vshrl.u32 %v5969, 7
        %v5971 = vsub.s32 1, %v5970
        %v5972 = vrot.slane %v5963, %v5971
        %v5991 = vunpack.c.l.b16 %v5947
        %v5992 = vunpack.c.h.b16 %v5947
        %v5993 = vunpack.c.l.b16 %v5948
        %v5994 = vunpack.c.h.b16 %v5948
        %v5995 = vunpack.c.l.b16 %v5949
        %v5996 = vunpack.c.h.b16 %v5949
        %v5997 = vunpack.c.l.b16 %v5950
        %v5998 = vunpack.c.h.b16 %v5950
        %v5999 = vunpack.c.l.b16 %v5951
        %v6000 = vunpack.c.h.b16 %v5951
        %v6001 = vunpack.c.l.b16 %v5952
        %v6002 = vunpack.c.h.b16 %v5952
        %v6003 = vunpack.c.l.b16 %v5953
        %v6004 = vunpack.c.h.b16 %v5953
        %v6005 = vunpack.c.l.b16 %v5954
        %v6006 = vunpack.c.h.b16 %v5954
        %v6007 = vunpack.c.l.b16 %v5955
        %v6008 = vunpack.c.h.b16 %v5955
        %v6009 = vunpack.c.l.b16 %v5956
        %v6010 = vunpack.c.h.b16 %v5956
        %v6011 = vunpack.c.l.b16 %v5957
        %v6012 = vunpack.c.h.b16 %v5957
        %v6013 = vunpack.c.l.b16 %v5958
        %v6014 = vunpack.c.h.b16 %v5958
        %v6015 = vunpack.c.l.b16 %v5959
        %v6016 = vunpack.c.h.b16 %v5959
        %v6017 = vunpack.c.l.b16 %v5960
        %v6018 = vunpack.c.h.b16 %v5960
        %v6019 = vunpack.c.l.b16 %v5961
        %v6020 = vunpack.c.h.b16 %v5961
        %v6021 = vunpack.c.l.b16 %v5962
        %v6022 = vunpack.c.h.b16 %v5962
        %v6023 = vpack.c.b16 %v5993, %v5991
        %v6024 = vpack.c.b16 %v5994, %v5992
        %v6025 = vpack.c.b16 %v5997, %v5995
        %v6026 = vpack.c.b16 %v5998, %v5996
        %v6027 = vpack.c.b16 %v6001, %v5999
        %v6028 = vpack.c.b16 %v6002, %v6000
        %v6029 = vpack.c.b16 %v6005, %v6003
        %v6030 = vpack.c.b16 %v6006, %v6004
        %v6031 = vpack.c.b16 %v6009, %v6007
        %v6032 = vpack.c.b16 %v6010, %v6008
        %v6033 = vpack.c.b16 %v6013, %v6011
        %v6034 = vpack.c.b16 %v6014, %v6012
        %v6035 = vpack.c.b16 %v6017, %v6015
        %v6036 = vpack.c.b16 %v6018, %v6016
        %v6037 = vpack.c.b16 %v6021, %v6019
        %v6038 = vpack.c.b16 %v6022, %v6020
        %6055 = vmatprep.subr.bf16.mxu0 %v6024
        %6056 = vmatpush1.bf16.msra.mxu0 %v6023
        %6057 = vmatprep.subr.bf16.mxu0 %v6026
        %6058 = vmatpush1.bf16.msra.mxu0 %v6025
        %6059 = vmatprep.subr.bf16.mxu0 %v6028
        %6060 = vmatpush1.bf16.msra.mxu0 %v6027
        %6061 = vmatprep.subr.bf16.mxu0 %v6030
        %6062 = vmatpush1.bf16.msra.mxu0 %v6029
        %6063 = vmatprep.subr.bf16.mxu0 %v6032
        %6064 = vmatpush1.bf16.msra.mxu0 %v6031
        %6065 = vmatprep.subr.bf16.mxu0 %v6034
        %6066 = vmatpush1.bf16.msra.mxu0 %v6033
        %6067 = vmatprep.subr.bf16.mxu0 %v6036
        %6068 = vmatpush1.bf16.msra.mxu0 %v6035
        %6069 = vmatprep.subr.bf16.mxu0 %v6038
        %6070 = vmatpush1.bf16.msra.mxu0 %v6037
        %6071 = vmatprep.subr.bf16.mxu0 0
        %6072 = vmatpush1.bf16.msra.mxu0 0
        %6073 = vmatprep.subr.bf16.mxu0 0
        %6074 = vmatpush1.bf16.msra.mxu0 0
        %6075 = vmatprep.subr.bf16.mxu0 0
        %6076 = vmatpush1.bf16.msra.mxu0 0
        %6077 = vmatprep.subr.bf16.mxu0 0
        %6078 = vmatpush1.bf16.msra.mxu0 0
        %6079 = vmatprep.subr.bf16.mxu0 0
        %6080 = vmatpush1.bf16.msra.mxu0 0
        %6081 = vmatprep.subr.bf16.mxu0 0
        %6082 = vmatpush1.bf16.msra.mxu0 0
        %6083 = vmatprep.subr.bf16.mxu0 0
        %6084 = vmatpush1.bf16.msra.mxu0 0
        %6085 = vmatprep.subr.bf16.mxu0 0
        %6086 = vmatpush1.bf16.msra.mxu0 0
        %6087 = vmatprep.mubr.bf16.mxu0 0
        %6088 = vmatmul.mubr.bf16.gmra.mrb[0].mxu0 %v5945
        %v6089 = vpop.f32.mrb[0].mxu0
        %v6090 = vadd.f32 %v5968, %v6089
        %v6091 = vpop.f32.mrb[0].mxu0
        %v6092 = vadd.f32 %v5972, %v6091
        %v6093 = vpop.f32.mrb[0].mxu0
        %v6094 = vadd.f32 %v5968, %v6093
        %v6095 = vpop.f32.mrb[0].mxu0
        %v6096 = vadd.f32 %v5972, %v6095
        %6097 = vmatprep.mubr.bf16.mxu0 0
        %6098 = vmatmul.mubr.bf16.gmra.mrb[0].mxu0 %v5946
        %v6099 = vpop.f32.mrb[0].mxu0
        %v6100 = vadd.f32 %v5968, %v6099
        %v6101 = vpop.f32.mrb[0].mxu0
        %v6102 = vadd.f32 %v5972, %v6101
        %v6103 = vpop.f32.mrb[0].mxu0
        %v6104 = vadd.f32 %v5968, %v6103
        %v6105 = vpop.f32.mrb[0].mxu0
        %v6106 = vadd.f32 %v5972, %v6105
        %6107 = vdwg.mxu0
        %v6108 = vadd.f32 %v5745, %v6090
        %v6109 = vadd.f32 %v5746, %v6092
        %v6110 = vadd.f32 %v5747, %v6094
        %v6111 = vadd.f32 %v5748, %v6096
        %v6112 = vadd.f32 %v5749, %v6100
        %v6113 = vadd.f32 %v5750, %v6102
        %v6114 = vadd.f32 %v5751, %v6104
        %v6115 = vadd.f32 %v5752, %v6106
        %v6116 = vld [vmem:[%s16] sm:$0x3]
        %v6117 = vld [vmem:[%s17] sm:$0x3]
        %v6118 = vadd.f32 %v6108, %v6109
        %6119 = vadd.xlane.f32.xlu0 %v6118
        %v6120 = vpop.xlane.xlu0 %6119
        %v6121 = vadd.f32 %v6110, %v6111
        %6122 = vadd.xlane.f32.xlu0 %v6121
        %v6123 = vpop.xlane.xlu0 %6122
        %v6124 = vadd.f32 %v6112, %v6113
        %6125 = vadd.xlane.f32.xlu0 %v6124
        %v6126 = vpop.xlane.xlu0 %6125
        %v6127 = vadd.f32 %v6114, %v6115
        %6128 = vadd.xlane.f32.xlu0 %v6127
        %v6129 = vpop.xlane.xlu0 %6128
        %v6130 = vmul.f32 %v6120, %v5662
        %v6131 = vmul.f32 %v6123, %v5662
        %v6132 = vmul.f32 %v6126, %v5662
        %v6133 = vmul.f32 %v6129, %v5662
        %v6134 = vsub.f32 %v6108, %v6130
        %v6135 = vsub.f32 %v6109, %v6130
        %v6136 = vsub.f32 %v6110, %v6131
        %v6137 = vsub.f32 %v6111, %v6131
        %v6138 = vsub.f32 %v6112, %v6132
        %v6139 = vsub.f32 %v6113, %v6132
        %v6140 = vsub.f32 %v6114, %v6133
        %v6141 = vsub.f32 %v6115, %v6133
        %v6142 = vmul.f32 %v6134, %v6134
        %v6143 = vmul.f32 %v6135, %v6135
        %v6144 = vmul.f32 %v6136, %v6136
        %v6145 = vmul.f32 %v6137, %v6137
        %v6146 = vmul.f32 %v6138, %v6138
        %v6147 = vmul.f32 %v6139, %v6139
        %v6148 = vmul.f32 %v6140, %v6140
        %v6149 = vmul.f32 %v6141, %v6141
        %v6150 = vadd.f32 %v6142, %v6143
        %6151 = vadd.xlane.f32.xlu0 %v6150
        %v6152 = vpop.xlane.xlu0 %6151
        %v6153 = vadd.f32 %v6144, %v6145
        %6154 = vadd.xlane.f32.xlu0 %v6153
        %v6155 = vpop.xlane.xlu0 %6154
        %v6156 = vadd.f32 %v6146, %v6147
        %6157 = vadd.xlane.f32.xlu0 %v6156
        %v6158 = vpop.xlane.xlu0 %6157
        %v6159 = vadd.f32 %v6148, %v6149
        %6160 = vadd.xlane.f32.xlu0 %v6159
        %v6161 = vpop.xlane.xlu0 %6160
        %v6162 = vmul.f32 %v6152, %v5662
        %v6163 = vmul.f32 %v6155, %v5662
        %v6164 = vmul.f32 %v6158, %v5662
        %v6165 = vmul.f32 %v6161, %v5662
        %v6166 = vadd.f32 %v6162, 1e-05
        %v6167 = vadd.f32 %v6163, 1e-05
        %v6168 = vadd.f32 %v6164, 1e-05
        %v6169 = vadd.f32 %v6165, 1e-05
        %v6170 = vrsqrt.pop %v6166
        %v6171 = vrsqrt.pop %v6167
        %v6172 = vrsqrt.pop %v6168
        %v6173 = vrsqrt.pop %v6169
        %v6174 = vmul.f32 %v6134, %v6170
        %v6175 = vmul.f32 %v6135, %v6170
        %v6176 = vmul.f32 %v6136, %v6171
        %v6177 = vmul.f32 %v6137, %v6171
        %v6178 = vmul.f32 %v6138, %v6172
        %v6179 = vmul.f32 %v6139, %v6172
        %v6180 = vmul.f32 %v6140, %v6173
        %v6181 = vmul.f32 %v6141, %v6173
        %v6183 = vlaneseq
        %v6184 = vshrl.u32 %v6183, 7
        %v6185 = vsub.s32 0, %v6184
        %v6186 = vrot.slane %v6116, %v6185
        %v6187 = vlaneseq
        %v6188 = vshrl.u32 %v6187, 7
        %v6189 = vsub.s32 1, %v6188
        %v6190 = vrot.slane %v6116, %v6189
        %v6193 = vmul.f32 %v6174, %v6186
        %v6194 = vmul.f32 %v6175, %v6190
        %v6195 = vmul.f32 %v6176, %v6186
        %v6196 = vmul.f32 %v6177, %v6190
        %v6197 = vmul.f32 %v6178, %v6186
        %v6198 = vmul.f32 %v6179, %v6190
        %v6199 = vmul.f32 %v6180, %v6186
        %v6200 = vmul.f32 %v6181, %v6190
        %v6202 = vlaneseq
        %v6203 = vshrl.u32 %v6202, 7
        %v6204 = vsub.s32 0, %v6203
        %v6205 = vrot.slane %v6117, %v6204
        %v6206 = vlaneseq
        %v6207 = vshrl.u32 %v6206, 7
        %v6208 = vsub.s32 1, %v6207
        %v6209 = vrot.slane %v6117, %v6208
        %v6212 = vadd.f32 %v6193, %v6205
        %v6213 = vadd.f32 %v6194, %v6209
        %v6214 = vadd.f32 %v6195, %v6205
        %v6215 = vadd.f32 %v6196, %v6209
        %v6216 = vadd.f32 %v6197, %v6205
        %v6217 = vadd.f32 %v6198, %v6209
        %v6218 = vadd.f32 %v6199, %v6205
        %v6219 = vadd.f32 %v6200, %v6209
        %6220 = vst [vmem:[%s657] sm:$0xff] %v6212
        %6221 = vst [vmem:[%s657 + $0x8] sm:$0xff] %v6213
        %6222 = vst [vmem:[%s657 + $0x10] sm:$0xff] %v6214
        %6223 = vst [vmem:[%s657 + $0x18] sm:$0xff] %v6215
        %6224 = vst [vmem:[%s657 + $0x20] sm:$0xff] %v6216
        %6225 = vst [vmem:[%s657 + $0x28] sm:$0xff] %v6217
        %6226 = vst [vmem:[%s657 + $0x30] sm:$0xff] %v6218
        %6227 = vst [vmem:[%s657 + $0x38] sm:$0xff] %v6219
        %s6228 = sand.u32 %s427, 1
        %s6229 = scalar_lea.sflag [#allocation4], %s6228
        %s6230 = sand.u32 %s427, 1
        %s6231 = smul.addr %s6230, 64
        %s6232 = scalar_lea.vmem [#allocation13], %s6231
        // Predicated region
        $region117: #{seq_encoder.1} parent=91 // pred_check
          %p6233 = pneg %p437
        $region118: #{seq_encoder.1} parent=91 // pred_check_branch
          %6235 = sbr.rel (%p6233) target = $region120
        $region119: #{seq_encoder.1} parent=91 // pred_region
          %s6236 = smul.u32 4, %s36
          %s6238 = ssub.s32 1024, 1024
          %6239 = vsyncadd %s6229, %s6238
          %s6240 = smul.addr %s6236, 2
          %s6241 = smul.addr %s6240, 128
          %s6242 = scalar_lea.hbm %s18, %s6241
          %s6243 = sshll.u32 %s6232, 4
          %s6244 = int_to_ptr.vmem [resolvable:$true] %s6243
          %6249 = dma.vmem_to_hbm [thread:$0]  %s6244, 1024, %s6242, %s6229, 256, 256, 16
        $region120: #{seq_encoder.1} parent=91 // pred_fallthru
          _
      $region92: #{seq_encoder.1} parent=5 // pred_fallthru
        _
      %p6250 = scmp.le.s32.totalorder 2, %s31
      // Predicated region
      $region121: #{seq_encoder.1} parent=5 // pred_check
        %p6251 = pneg %p6250
      $region122: #{seq_encoder.1} parent=5 // pred_check_branch
        %6253 = sbr.rel (%p6251) target = $region124
      $region123: #{seq_encoder.1} parent=5 // pred_region
        %s6254 = ssub.s32 %s31, 2
        // Predicated region
        $region125: #{seq_encoder.1} parent=123 // pred_check
          %p6255 = pneg %p443
        $region126: #{seq_encoder.1} parent=123 // pred_check_branch
          %6257 = sbr.rel (%p6255) target = $region128
        $region127: #{seq_encoder.1} parent=123 // pred_region
          %s6258 = sand.u32 %s428, 1
          %s6259 = scalar_lea.sflag [#allocation4], %s6258
          %s6260 = sand.u32 %s428, 1
          %s6261 = smul.addr %s6260, 64
          %s6262 = scalar_lea.vmem [#allocation13], %s6261
          %6263 = dma.done %s6259, 1024
        $region128: #{seq_encoder.1} parent=123 // pred_fallthru
          _
      $region124: #{seq_encoder.1} parent=5 // pred_fallthru
        _
    $region6: #{seq_encoder.1} parent=1 // loop_footer
      %s35 = sadd.s32 1, %s31
    $region7: #{seq_encoder.1} parent=1 // loop_footer_branch
      %30 = sbr.rel target = $region3
    $region8: #{seq_encoder.1} parent=1 // loop_exit
      _
    %6264 = vsyncpa [#allocation3], 1
    %s6265 = scalar_lea.sflag [#allocation3], 1
    %6266 = vsyncpa %s6265, 1
    %6267 = vsyncpa [#allocation6], 1
    %6268 = vsyncpa [#allocation9], 1
    %6269 = vsyncpa [#allocation12], 1
    %6270 = vsyncpa [#allocation4], 1
    %s6271 = scalar_lea.sflag [#allocation4], 1
    %6272 = vsyncpa %s6271, 1

</llo_original>
